<compile_context>
chip_gen: v6e
topology: v6e:2x2x1
jax: 0.10.0
libtpu: 0.0.40
codegen_flags: <defaults>
</compile_context>

<pallas_src>
import functools
import math

import jax
import jax.numpy as jnp
from jax import lax
from jax.experimental import pallas as pl
from jax.experimental.pallas import tpu as pltpu

MXU_DTYPE = jnp.bfloat16   # matmul operand dtype (accumulation is always f32)
LN_EPS = 1e-6
NEG_INF = -1e9


def _round_up(x, m):
    return ((x + m - 1) // m) * m


def _choose_row_tile(M, block_rows=256, sublane=16):
    """Row tile: a multiple of `sublane` (16 covers bf16 packing), dividing M
    exactly when possible (no pad/slice copies) and leaving >=2 grid steps so
    both v7x TensorCores get work on the 'parallel' axis."""
    if M >= sublane and M % sublane == 0:
        divisors = [t for t in range(sublane, min(block_rows, M) + 1, sublane)
                    if M % t == 0]
        multi = [t for t in divisors if M // t >= 2]
        return max(multi) if multi else max(divisors)
    return min(_round_up(block_rows, sublane), _round_up(max(M, 1), sublane))


# ----------------------------------------------------------------------------
# Pallas kernels
# ----------------------------------------------------------------------------
def _linear_kernel(*refs, activation, has_ln, has_res, has_post_ln, eps, mxu_dtype):
    """[optional pre-LN] -> x @ w^T + b -> [relu] -> [+res] -> [optional post-LN]."""
    it = iter(refs)
    x_ref = next(it)                       # [tm, K]  f32 or bf16
    w_ref = next(it)                       # [N, K]   bf16 (PyTorch Linear layout)
    b_ref = next(it)                       # [1, N]   f32
    g_ref = next(it) if has_ln else None
    be_ref = next(it) if has_ln else None
    r_ref = next(it) if has_res else None
    pg_ref = next(it) if has_post_ln else None
    pb_ref = next(it) if has_post_ln else None
    o_ref = next(it)                       # [tm, N]

    x = x_ref[...]
    if has_ln:                             # fused pre-LayerNorm (f32 statistics)
        x = x.astype(jnp.float32)
        mean = jnp.mean(x, axis=-1, keepdims=True)
        xc = x - mean
        var = jnp.mean(xc * xc, axis=-1, keepdims=True)
        x = (xc * lax.rsqrt(var + eps)) * g_ref[...] + be_ref[...]

    # NT matmul: contract on the last dims of both operands (no weight transpose).
    y = lax.dot_general(x.astype(mxu_dtype), w_ref[...].astype(mxu_dtype),
                        dimension_numbers=(((1,), (1,)), ((), ())),
                        preferred_element_type=jnp.float32)
    y = y + b_ref[...]
    if activation == "relu":
        y = jnp.maximum(y, 0.0)
    if has_res:
        y = y + r_ref[...]
    if has_post_ln:                        # fused post-LN (final enc/dec norm)
        mean = jnp.mean(y, axis=-1, keepdims=True)
        yc = y - mean
        var = jnp.mean(yc * yc, axis=-1, keepdims=True)
        y = (yc * lax.rsqrt(var + eps)) * pg_ref[...] + pb_ref[...]
    o_ref[...] = y.astype(o_ref.dtype)


def linear(x, w, b, *, activation=None, residual=None, ln=None, post_ln=None,
           out_dtype=jnp.float32, block_rows=256):
    """y = post_ln?([+res] act(pre_ln?(x) @ w.T + b)); x:[M,K], w:[N,K] bf16."""
    M, K = x.shape
    N = w.shape[0]
    tm = _choose_row_tile(M, block_rows)
    Mp = _round_up(M, tm)                  # normally Mp == M (tile divides M)

    xp = x if Mp == M else jnp.pad(x, ((0, Mp - M), (0, 0)))
    ops = [xp, w, b.reshape(1, N)]
    in_specs = [
        pl.BlockSpec((tm, K), lambda i: (i, 0)),
        pl.BlockSpec((N, K), lambda i: (0, 0)),    # resident across row tiles
        pl.BlockSpec((1, N), lambda i: (0, 0)),
    ]
    has_ln = ln is not None
    if has_ln:
        g, beta = ln
        ops += [g.reshape(1, K), beta.reshape(1, K)]
        in_specs += [pl.BlockSpec((1, K), lambda i: (0, 0)),
                     pl.BlockSpec((1, K), lambda i: (0, 0))]
    has_res = residual is not None
    if has_res:
        rp = residual if Mp == M else jnp.pad(residual, ((0, Mp - M), (0, 0)))
        ops.append(rp)
        in_specs.append(pl.BlockSpec((tm, N), lambda i: (i, 0)))
    has_post_ln = post_ln is not None
    if has_post_ln:
        pg, pb = post_ln
        ops += [pg.reshape(1, N), pb.reshape(1, N)]
        in_specs += [pl.BlockSpec((1, N), lambda i: (0, 0)),
                     pl.BlockSpec((1, N), lambda i: (0, 0))]

    out = pl.pallas_call(
        functools.partial(_linear_kernel, activation=activation, has_ln=has_ln,
                          has_res=has_res, has_post_ln=has_post_ln,
                          eps=LN_EPS, mxu_dtype=MXU_DTYPE),
        grid=(Mp // tm,),
        out_shape=jax.ShapeDtypeStruct((Mp, N), out_dtype),
        in_specs=in_specs,
        out_specs=pl.BlockSpec((tm, N), lambda i: (i, 0)),
        compiler_params=pltpu.CompilerParams(dimension_semantics=("parallel",)),
    )(*ops)
    return out if Mp == M else out[:M]


def _attn_fused_kernel(q_ref, k_ref, v_ref, kbias_ref, res_ref, wo_ref, bo_ref,
                       o_ref, *, scale, causal, mxu_dtype):
    """softmax(qk^T*scale + bias) v, fused with Wo projection + bias + residual."""
    q = q_ref[0]                                      # [H, Lq, Dh]   bf16
    k = k_ref[0]                                      # [H, Lkp, Dh]  bf16
    v = v_ref[0]                                      # [H, Lkp, Dh]  bf16
    H, Lq, _ = q.shape
    Lkp = k.shape[1]

    # scores: batched over heads, contracting Dh (no transposes), f32 acc.
    s = lax.dot_general(q, k, dimension_numbers=(((2,), (2,)), ((0,), (0,))),
                        preferred_element_type=jnp.float32) * scale    # [H,Lq,Lkp]
    s = s + kbias_ref[...]                            # [1,1,Lkp] key-padding bias
    if causal:
        rows = lax.broadcasted_iota(jnp.int32, (Lq, Lkp), 0)
        cols = lax.broadcasted_iota(jnp.int32, (Lq, Lkp), 1)
        s = s + jnp.where(cols > rows, NEG_INF, 0.0)[None]

    m = jnp.max(s, axis=-1, keepdims=True)
    p = jnp.exp(s - m)                                # unnormalized probs
    denom = jnp.sum(p, axis=-1, keepdims=True)
    ctx = lax.dot_general(p.astype(mxu_dtype), v,
                          dimension_numbers=(((2,), (1,)), ((0,), (0,))),
                          preferred_element_type=jnp.float32)          # [H,Lq,Dh]
    # normalize AFTER the PV matmul: multiply the smaller [H,Lq,Dh] tensor.
    ctx = ctx * pl.reciprocal(denom, approx=True)

    # fused output projection: out = sum_h ctx[h] @ wo[h]^T + bo + residual.
    wo = wo_ref[...]                                  # [H, D, Dh] bf16 (resident)
    out = res_ref[0] + bo_ref[...]                    # [Lq, D] f32
    for h in range(H):                                # static unroll (H small)
        out = out + lax.dot_general(ctx[h].astype(mxu_dtype), wo[h],
                                    dimension_numbers=(((1,), (1,)), ((), ())),
                                    preferred_element_type=jnp.float32)
    o_ref[0] = out.astype(o_ref.dtype)


def attention_with_output_proj(q, k, v, kbias, wo, bo, residual, *, causal=False):
    """q:[B,H,Lq,Dh], k/v:[B,H,Lkp,Dh] bf16, kbias:[B,1,Lkp] additive f32,
    wo:[H,D,Dh] bf16, bo:[D] f32, residual:[B,Lq,D] f32 -> [B,Lq,D] f32."""
    B, H, Lq, Dh = q.shape
    Lkp = k.shape[2]
    D = H * Dh
    scale = 1.0 / math.sqrt(Dh)
    return pl.pallas_call(
        functools.partial(_attn_fused_kernel, scale=scale, causal=causal,
                          mxu_dtype=MXU_DTYPE),
        grid=(B,),
        out_shape=jax.ShapeDtypeStruct((B, Lq, D), jnp.float32),
        in_specs=[
            pl.BlockSpec((1, H, Lq, Dh), lambda b: (b, 0, 0, 0)),
            pl.BlockSpec((1, H, Lkp, Dh), lambda b: (b, 0, 0, 0)),
            pl.BlockSpec((1, H, Lkp, Dh), lambda b: (b, 0, 0, 0)),
            pl.BlockSpec((1, 1, Lkp), lambda b: (b, 0, 0)),
            pl.BlockSpec((1, Lq, D), lambda b: (b, 0, 0)),
            pl.BlockSpec((H, D, Dh), lambda b: (0, 0, 0)),   # resident Wo
            pl.BlockSpec((1, D), lambda b: (0, 0)),
        ],
        out_specs=pl.BlockSpec((1, Lq, D), lambda b: (b, 0, 0)),  # lane-dense D
        compiler_params=pltpu.CompilerParams(dimension_semantics=("parallel",)),
    )(q, k, v, kbias, residual, wo, bo.reshape(1, D))


# ----------------------------------------------------------------------------
# Model building blocks (glue around the kernels)
# ----------------------------------------------------------------------------
def sinusoidal_pe(length, d):
    pos = jnp.arange(length, dtype=jnp.float32)[:, None]
    div = jnp.exp(jnp.arange(0, d, 2, dtype=jnp.float32) * (-math.log(10000.0) / d))
    pe = jnp.zeros((length, d), jnp.float32)
    pe = pe.at[:, 0::2].set(jnp.sin(pos * div))
    pe = pe.at[:, 1::2].set(jnp.cos(pos * div))
    return pe


def _key_bias(token_pad):
    """[B, Lk] bool key padding -> additive bias [B, 1, Lkp], Lkp multiple of 128."""
    B, Lk = token_pad.shape
    Lkp = max(128, _round_up(Lk, 128))
    kb = jnp.where(token_pad, NEG_INF, 0.0).astype(jnp.float32)[:, None, :]
    if Lkp != Lk:
        kb = jnp.pad(kb, ((0, 0), (0, 0), (0, Lkp - Lk)), constant_values=NEG_INF)
    return kb


def mha(p, q_in, kv_in, kbias, heads, *, ln=None, residual=None, causal=False,
        self_attention=True):
    """Multi-head attention with pre-LN fused into the Q(KV) projection and the
    Wo projection + residual fused into the attention kernel."""
    B, Lq, D = q_in.shape
    dh = D // heads

    if self_attention:
        qkv = linear(q_in.reshape(-1, D), p["wqkv"], p["bqkv"], ln=ln,
                     out_dtype=MXU_DTYPE)
        qkv = qkv.reshape(B, Lq, 3, heads, dh)
        # TODO(synk): head-split slices/transposes remain small XLA copies.
        q = qkv[:, :, 0].transpose(0, 2, 1, 3)                   # [B,H,Lq,dh]
        k = qkv[:, :, 1].transpose(0, 2, 1, 3)
        v = qkv[:, :, 2].transpose(0, 2, 1, 3)
    else:
        Lk = kv_in.shape[1]
        q = linear(q_in.reshape(-1, D), p["wq"], p["bq"], ln=ln, out_dtype=MXU_DTYPE)
        q = q.reshape(B, Lq, heads, dh).transpose(0, 2, 1, 3)
        kv = linear(kv_in.reshape(-1, D), p["wkv"], p["bkv"], out_dtype=MXU_DTYPE)
        kv = kv.reshape(B, Lk, 2, heads, dh)
        k = kv[:, :, 0].transpose(0, 2, 1, 3)
        v = kv[:, :, 1].transpose(0, 2, 1, 3)

    # pad key axis to the (128-multiple) length of kbias; extra keys are masked.
    Lk = k.shape[2]
    Lkp = kbias.shape[2]
    if Lkp != Lk:
        k = jnp.pad(k, ((0, 0), (0, 0), (0, Lkp - Lk), (0, 0)))
        v = jnp.pad(v, ((0, 0), (0, 0), (0, Lkp - Lk), (0, 0)))

    return attention_with_output_proj(q, k, v, kbias, p["wo"], p["bo"], residual,
                                      causal=causal)


def ffn(p, x, *, post_ln=None):
    """x + W2 relu(W1 LN(x)); LN, ReLU, residual (and optional final post-LN) fused."""
    B, L, D = x.shape
    x2 = x.reshape(-1, D)
    h = linear(x2, p["w1"], p["b1"], activation="relu",
               ln=(p["ln_g"], p["ln_b"]), out_dtype=MXU_DTYPE)
    out = linear(h, p["w2"], p["b2"], residual=x2, post_ln=post_ln)
    return out.reshape(B, L, D)


def encoder_forward(params, src_tm, pad_idx, heads):
    src = src_tm.T                                   # [B, Ls]
    B, Ls = src.shape
    D = params["src_emb"].shape[1]
    # TODO(synk): embedding gather + positional encoding stay in XLA.
    emb = jnp.take(params["src_emb"], src, axis=0) * math.sqrt(D) \
        + sinusoidal_pe(Ls, D)[None]
    pad = src == pad_idx
    src_kbias = _key_bias(pad)                       # built once, reused everywhere
    x = emb
    n = len(params["enc_layers"])
    for i, lp in enumerate(params["enc_layers"]):
        ln = lp["ln"] if i != 0 else None            # first layer: no pre-LN (OpenNMT)
        ctx = mha(lp["attn"], x, x, src_kbias, heads, ln=ln, residual=x)
        # final encoder LayerNorm is folded into the last FFN's W2 epilogue
        x = ffn(lp["ff"], ctx, post_ln=params["enc_ln"] if i == n - 1 else None)
    mask_hier = ~pad                                 # returned by encoder; unused here
    return x, src_kbias, mask_hier                   # x: [B, Ls, D]


def decoder_forward(params, tgt_tm, memory, src_kbias, pad_idx, heads):
    tgt = tgt_tm.T                                   # [B, Lt]
    B, Lt = tgt.shape
    D = params["tgt_emb"].shape[1]
    emb = jnp.take(params["tgt_emb"], tgt, axis=0) * math.sqrt(D) \
        + sinusoidal_pe(Lt, D)[None]
    tgt_kbias = _key_bias(tgt == pad_idx)            # causal term is built in-kernel
    x = emb
    n = len(params["dec_layers"])
    for i, lp in enumerate(params["dec_layers"]):
        q = mha(lp["self_attn"], x, x, tgt_kbias, heads, ln=lp["ln1"],
                residual=x, causal=True)
        mid = mha(lp["ctx_attn"], q, memory, src_kbias, heads, ln=lp["ln2"],
                  residual=q, self_attention=False)
        x = ffn(lp["ff"], mid, post_ln=params["dec_ln"] if i == n - 1 else None)
    return x.transpose(1, 0, 2)                      # [Lt, B, D] time-major


def summarizer_forward(params, src, tgt, *, pad_idx, heads):
    tgt = tgt[:-1]                                   # drop last time step, as in the module
    src_features, src_kbias, mask_hier = encoder_forward(params, src, pad_idx, heads)
    # init_decoder_state(src, src_features) only caches `src` for the memory
    # padding mask, carried here as src_kbias.
    return decoder_forward(params, tgt, src_features, src_kbias, pad_idx, heads)


# ----------------------------------------------------------------------------
# Parameter init (xavier_uniform for dim>1) and one-time host-side prep
# ----------------------------------------------------------------------------
def init_summarizer_params(key, *, vocab_size, emb_size, d_model, heads, d_ff,
                           enc_layers, dec_layers, pad_idx, share_embeddings=True):
    keys = iter(jax.random.split(key, 4096))

    def xavier(shape):
        fan_out, fan_in = shape
        a = math.sqrt(6.0 / (fan_in + fan_out))
        return jax.random.uniform(next(keys), shape, jnp.float32, -a, a)

    def self_attn_params(d):
        wq, wk, wv = xavier((d, d)), xavier((d, d)), xavier((d, d))
        return {"wqkv": jnp.concatenate([wq, wk, wv], axis=0),
                "bqkv": jnp.zeros((3 * d,), jnp.float32),
                "wo": xavier((d, d)), "bo": jnp.zeros((d,), jnp.float32)}

    def ctx_attn_params(d):
        wk, wv = xavier((d, d)), xavier((d, d))
        return {"wq": xavier((d, d)), "bq": jnp.zeros((d,), jnp.float32),
                "wkv": jnp.concatenate([wk, wv], axis=0),
                "bkv": jnp.zeros((2 * d,), jnp.float32),
                "wo": xavier((d, d)), "bo": jnp.zeros((d,), jnp.float32)}

    def ffn_params(d, dff):
        return {"w1": xavier((dff, d)), "b1": jnp.zeros((dff,), jnp.float32),
                "w2": xavier((d, dff)), "b2": jnp.zeros((d,), jnp.float32),
                "ln_g": jnp.ones((d,), jnp.float32), "ln_b": jnp.zeros((d,), jnp.float32)}

    ln = lambda d: (jnp.ones((d,), jnp.float32), jnp.zeros((d,), jnp.float32))

    src_emb = xavier((vocab_size, emb_size)).at[pad_idx].set(0.0)  # padding_idx row = 0
    tgt_emb = src_emb if share_embeddings else xavier((vocab_size, emb_size)).at[pad_idx].set(0.0)

    return {
        "src_emb": src_emb, "tgt_emb": tgt_emb,
        "enc_layers": [{"attn": self_attn_params(d_model), "ln": ln(d_model),
                        "ff": ffn_params(d_model, d_ff)} for _ in range(enc_layers)],
        "enc_ln": ln(d_model),
        "dec_layers": [{"self_attn": self_attn_params(d_model),
                        "ctx_attn": ctx_attn_params(d_model),
                        "ln1": ln(d_model), "ln2": ln(d_model),
                        "ff": ffn_params(d_model, d_ff)} for _ in range(dec_layers)],
        "dec_ln": ln(d_model),
    }
    # TODO(synk): generator (Linear(dec_hidden, vocab) + LogSoftmax) is built by
    # __init__ but never called in forward(), so it is not instantiated here.


def prepare_params(params, heads):
    """One-time host prep: bf16 matmul weights; Wo reshaped to [H, D, Dh] so the
    output projection can be fused into the attention kernel."""
    def prep_attn(ap):
        d = ap["wo"].shape[0]
        dh = d // heads
        out = dict(ap)
        for k in ("wqkv", "wq", "wkv"):
            if k in out:
                out[k] = out[k].astype(MXU_DTYPE)
        out["wo"] = (out["wo"].reshape(d, heads, dh)
                     .transpose(1, 0, 2).astype(MXU_DTYPE))        # [H, D, Dh]
        return out

    def prep_ff(fp):
        out = dict(fp)
        out["w1"] = out["w1"].astype(MXU_DTYPE)
        out["w2"] = out["w2"].astype(MXU_DTYPE)
        return out

    new = dict(params)
    new["enc_layers"] = [{"attn": prep_attn(lp["attn"]), "ln": lp["ln"],
                          "ff": prep_ff(lp["ff"])} for lp in params["enc_layers"]]
    new["dec_layers"] = [{"self_attn": prep_attn(lp["self_attn"]),
                          "ctx_attn": prep_attn(lp["ctx_attn"]),
                          "ln1": lp["ln1"], "ln2": lp["ln2"],
                          "ff": prep_ff(lp["ff"])} for lp in params["dec_layers"]]
    return new


# ----------------------------------------------------------------------------
# Demo
# ----------------------------------------------------------------------------
if __name__ == "__main__":
    VOCAB = 64
    EMB = D_MODEL = 128         # emb_size == enc_hidden_size == dec_hidden_size
    HEADS = 4
    FF = 256
    ENC_LAYERS = 2
    DEC_LAYERS = 2
    PAD_IDX = 1
    SRC_LEN, TGT_LEN, BATCH = 16, 9, 2

    root = jax.random.PRNGKey(0)
    k_param, k_src, k_tgt = jax.random.split(root, 3)

    params = init_summarizer_params(
        k_param, vocab_size=VOCAB, emb_size=EMB, d_model=D_MODEL, heads=HEADS,
        d_ff=FF, enc_layers=ENC_LAYERS, dec_layers=DEC_LAYERS, pad_idx=PAD_IDX,
        share_embeddings=True)
    params = prepare_params(params, heads=HEADS)   # one-time bf16 / Wo-layout prep

    # time-major token ids [seq, batch]
    src = jax.random.randint(k_src, (SRC_LEN, BATCH), 2, VOCAB, dtype=jnp.int32)
    tgt = jax.random.randint(k_tgt, (TGT_LEN, BATCH), 2, VOCAB, dtype=jnp.int32)
    src = src.at[-2:, 1].set(PAD_IDX)   # some padding to exercise the masks
    tgt = tgt.at[-1, 0].set(PAD_IDX)

    fwd = jax.jit(functools.partial(summarizer_forward, pad_idx=PAD_IDX, heads=HEADS))
    out = fwd(params, src, tgt)
    out = jax.block_until_ready(out)

    assert out.shape == (TGT_LEN - 1, BATCH, D_MODEL), out.shape
    assert bool(jnp.all(jnp.isfinite(out)))
    print("KERNEL_OK")
</pallas_src>

<mosaic_0001>
module attributes {stable_mosaic.version = 11 : i64} {
  func.func @_linear_kernel(%arg0: i32, %arg1: memref<16x128xf32, #tpu.memory_space<vmem>>, %arg2: memref<384x128xbf16, #tpu.memory_space<vmem>>, %arg3: memref<1x384xf32, #tpu.memory_space<vmem>>, %arg4: memref<1x128xf32, #tpu.memory_space<vmem>>, %arg5: memref<1x128xf32, #tpu.memory_space<vmem>>, %arg6: memref<16x384xbf16, #tpu.memory_space<vmem>>) attributes {dimension_semantics = [#tpu.dimension_semantics<parallel>], iteration_bounds = array<i64: 1>, scalar_prefetch = 0 : i64, scratch_operands = 0 : i64, tpu.core_type = #tpu.core_type<tc>, window_params = [{transform_indices = @transform_0, window_bounds = array<i64: 16, 128>}, {pipeline_mode = #tpu.pipeline_mode<synchronous>, transform_indices = @transform_1, window_bounds = array<i64: 384, 128>}, {pipeline_mode = #tpu.pipeline_mode<synchronous>, transform_indices = @transform_2, window_bounds = array<i64: 1, 384>}, {pipeline_mode = #tpu.pipeline_mode<synchronous>, transform_indices = @transform_3, window_bounds = array<i64: 1, 128>}, {pipeline_mode = #tpu.pipeline_mode<synchronous>, transform_indices = @transform_4, window_bounds = array<i64: 1, 128>}, {transform_indices = @transform_5, window_bounds = array<i64: 16, 384>}]} {
    %c0 = arith.constant 0 : index
    %c0_0 = arith.constant 0 : index
    %0 = vector.load %arg1[%c0, %c0_0] : memref<16x128xf32, #tpu.memory_space<vmem>>, vector<16x128xf32>
    %cst = arith.constant dense<0.000000e+00> : vector<16xf32>
    %1 = vector.multi_reduction <add>, %0, %cst [1] : vector<16x128xf32> to vector<16xf32>
    %2 = vector.shape_cast %1 : vector<16xf32> to vector<16x1xf32>
    %cst_1 = arith.constant 1.280000e+02 : f32
    %3 = vector.broadcast %cst_1 : f32 to vector<16x1xf32>
    %4 = arith.divf %2, %3 : vector<16x1xf32>
    %5 = vector.broadcast %4 : vector<16x1xf32> to vector<16x128xf32>
    %6 = arith.subf %0, %5 : vector<16x128xf32>
    %7 = arith.mulf %6, %6 : vector<16x128xf32>
    %cst_2 = arith.constant dense<0.000000e+00> : vector<16xf32>
    %8 = vector.multi_reduction <add>, %7, %cst_2 [1] : vector<16x128xf32> to vector<16xf32>
    %9 = vector.shape_cast %8 : vector<16xf32> to vector<16x1xf32>
    %cst_3 = arith.constant 1.280000e+02 : f32
    %10 = vector.broadcast %cst_3 : f32 to vector<16x1xf32>
    %11 = arith.divf %9, %10 : vector<16x1xf32>
    %cst_4 = arith.constant 9.99999997E-7 : f32
    %12 = vector.broadcast %cst_4 : f32 to vector<16x1xf32>
    %13 = arith.addf %11, %12 : vector<16x1xf32>
    %14 = math.rsqrt %13 : vector<16x1xf32>
    %15 = vector.broadcast %14 : vector<16x1xf32> to vector<16x128xf32>
    %16 = arith.mulf %6, %15 : vector<16x128xf32>
    %c0_5 = arith.constant 0 : index
    %c0_6 = arith.constant 0 : index
    %17 = vector.load %arg4[%c0_5, %c0_6] : memref<1x128xf32, #tpu.memory_space<vmem>>, vector<1x128xf32>
    %18 = vector.broadcast %17 : vector<1x128xf32> to vector<16x128xf32>
    %19 = arith.mulf %16, %18 : vector<16x128xf32>
    %c0_7 = arith.constant 0 : index
    %c0_8 = arith.constant 0 : index
    %20 = vector.load %arg5[%c0_7, %c0_8] : memref<1x128xf32, #tpu.memory_space<vmem>>, vector<1x128xf32>
    %21 = vector.broadcast %20 : vector<1x128xf32> to vector<16x128xf32>
    %22 = arith.addf %19, %21 : vector<16x128xf32>
    %23 = arith.truncf %22 : vector<16x128xf32> to vector<16x128xbf16>
    %c0_9 = arith.constant 0 : index
    %c0_10 = arith.constant 0 : index
    %24 = vector.load %arg2[%c0_9, %c0_10] : memref<384x128xbf16, #tpu.memory_space<vmem>>, vector<384x128xbf16>
    %cst_11 = arith.constant dense<0.000000e+00> : vector<16x384xf32>
    %25 = tpu.matmul %23, %24, %cst_11 {dimension_numbers = #tpu.dot_dimension_numbers<[1], [1], [0], [0], [0, 0, 1, 0], [], []>} : vector<16x128xbf16>, vector<384x128xbf16>, vector<16x384xf32> -> vector<16x384xf32>
    %c0_12 = arith.constant 0 : index
    %c0_13 = arith.constant 0 : index
    %26 = vector.load %arg3[%c0_12, %c0_13] : memref<1x384xf32, #tpu.memory_space<vmem>>, vector<1x384xf32>
    %27 = vector.broadcast %26 : vector<1x384xf32> to vector<16x384xf32>
    %28 = arith.addf %25, %27 : vector<16x384xf32>
    %29 = arith.truncf %28 : vector<16x384xf32> to vector<16x384xbf16>
    %c0_14 = arith.constant 0 : index
    %c0_15 = arith.constant 0 : index
    %30 = vector.load %arg6[%c0_14, %c0_15] : memref<16x384xbf16, #tpu.memory_space<vmem>>, vector<16x384xbf16>
    tpu.vector_store %arg6[%c0_14, %c0_15], %29 {strides = array<i32>} : memref<16x384xbf16, #tpu.memory_space<vmem>>, vector<16x384xbf16>,
    return
  }
  func.func @transform_0(%arg0: i32) -> (i32, i32) {
    %c0_i32 = arith.constant 0 : i32
    %c0_i32_0 = arith.constant 0 : i32
    return %arg0, %c0_i32 : i32, i32
  }
  func.func @transform_1(%arg0: i32) -> (i32, i32) {
    %c0_i32 = arith.constant 0 : i32
    %c0_i32_0 = arith.constant 0 : i32
    %c0_i32_1 = arith.constant 0 : i32
    return %c0_i32, %c0_i32_0 : i32, i32
  }
  func.func @transform_2(%arg0: i32) -> (i32, i32) {
    %c0_i32 = arith.constant 0 : i32
    %c0_i32_0 = arith.constant 0 : i32
    %c0_i32_1 = arith.constant 0 : i32
    return %c0_i32, %c0_i32_0 : i32, i32
  }
  func.func @transform_3(%arg0: i32) -> (i32, i32) {
    %c0_i32 = arith.constant 0 : i32
    %c0_i32_0 = arith.constant 0 : i32
    %c0_i32_1 = arith.constant 0 : i32
    return %c0_i32, %c0_i32_0 : i32, i32
  }
  func.func @transform_4(%arg0: i32) -> (i32, i32) {
    %c0_i32 = arith.constant 0 : i32
    %c0_i32_0 = arith.constant 0 : i32
    %c0_i32_1 = arith.constant 0 : i32
    return %c0_i32, %c0_i32_0 : i32, i32
  }
  func.func @transform_5(%arg0: i32) -> (i32, i32) {
    %c0_i32 = arith.constant 0 : i32
    %c0_i32_0 = arith.constant 0 : i32
    return %arg0, %c0_i32 : i32, i32
  }
}

module attributes {stable_mosaic.version = 11 : i64} {
  func.func @_attn_fused_kernel(%arg0: i32, %arg1: memref<1x4x8x32xbf16, #tpu.memory_space<vmem>>, %arg2: memref<1x4x128x32xbf16, #tpu.memory_space<vmem>>, %arg3: memref<1x4x128x32xbf16, #tpu.memory_space<vmem>>, %arg4: memref<1x1x128xf32, #tpu.memory_space<vmem>>, %arg5: memref<1x8x128xf32, #tpu.memory_space<vmem>>, %arg6: memref<4x128x32xbf16, #tpu.memory_space<vmem>>, %arg7: memref<1x128xf32, #tpu.memory_space<vmem>>, %arg8: memref<1x8x128xf32, #tpu.memory_space<vmem>>) attributes {dimension_semantics = [#tpu.dimension_semantics<parallel>], iteration_bounds = array<i64: 2>, scalar_prefetch = 0 : i64, scratch_operands = 0 : i64, tpu.core_type = #tpu.core_type<tc>, window_params = [{transform_indices = @transform_0, window_bounds = array<i64: 1, 4, 8, 32>}, {transform_indices = @transform_1, window_bounds = array<i64: 1, 4, 128, 32>}, {transform_indices = @transform_2, window_bounds = array<i64: 1, 4, 128, 32>}, {transform_indices = @transform_3, window_bounds = array<i64: 1, 1, 128>}, {transform_indices = @transform_4, window_bounds = array<i64: 1, 8, 128>}, {pipeline_mode = #tpu.pipeline_mode<synchronous>, transform_indices = @transform_5, window_bounds = array<i64: 4, 128, 32>}, {pipeline_mode = #tpu.pipeline_mode<synchronous>, transform_indices = @transform_6, window_bounds = array<i64: 1, 128>}, {transform_indices = @transform_7, window_bounds = array<i64: 1, 8, 128>}]} {
    %c0 = arith.constant 0 : index
    %c0_0 = arith.constant 0 : index
    %c0_1 = arith.constant 0 : index
    %c0_2 = arith.constant 0 : index
    %0 = vector.load %arg1[%c0, %c0_0, %c0_1, %c0_2] : memref<1x4x8x32xbf16, #tpu.memory_space<vmem>>, vector<1x4x8x32xbf16>
    %1 = vector.shape_cast %0 : vector<1x4x8x32xbf16> to vector<4x8x32xbf16>
    %c0_3 = arith.constant 0 : index
    %c0_4 = arith.constant 0 : index
    %c0_5 = arith.constant 0 : index
    %c0_6 = arith.constant 0 : index
    %2 = vector.load %arg2[%c0_3, %c0_4, %c0_5, %c0_6] : memref<1x4x128x32xbf16, #tpu.memory_space<vmem>>, vector<1x4x128x32xbf16>
    %3 = vector.shape_cast %2 : vector<1x4x128x32xbf16> to vector<4x128x32xbf16>
    %c0_7 = arith.constant 0 : index
    %c0_8 = arith.constant 0 : index
    %c0_9 = arith.constant 0 : index
    %c0_10 = arith.constant 0 : index
    %4 = vector.load %arg3[%c0_7, %c0_8, %c0_9, %c0_10] : memref<1x4x128x32xbf16, #tpu.memory_space<vmem>>, vector<1x4x128x32xbf16>
    %5 = vector.shape_cast %4 : vector<1x4x128x32xbf16> to vector<4x128x32xbf16>
    %cst = arith.constant dense<0.000000e+00> : vector<4x8x128xf32>
    %6 = tpu.matmul %1, %3, %cst {dimension_numbers = #tpu.dot_dimension_numbers<[2], [2], [1], [1], [0, 0, 0, 1, 1, 1], [0], [0]>} : vector<4x8x32xbf16>, vector<4x128x32xbf16>, vector<4x8x128xf32> -> vector<4x8x128xf32>
    %cst_11 = arith.constant 0.176776692 : f32
    %7 = vector.broadcast %cst_11 : f32 to vector<4x8x128xf32>
    %8 = arith.mulf %6, %7 : vector<4x8x128xf32>
    %c0_12 = arith.constant 0 : index
    %c0_13 = arith.constant 0 : index
    %c0_14 = arith.constant 0 : index
    %9 = vector.load %arg4[%c0_12, %c0_13, %c0_14] : memref<1x1x128xf32, #tpu.memory_space<vmem>>, vector<1x1x128xf32>
    %10 = vector.broadcast %9 : vector<1x1x128xf32> to vector<4x8x128xf32>
    %11 = arith.addf %8, %10 : vector<4x8x128xf32>
    %12 = tpu.iota {dimensions = array<i32: 0>} : vector<8x128xi32>
    %13 = tpu.iota {dimensions = array<i32: 1>} : vector<8x128xi32>
    %14 = arith.cmpi sgt, %13, %12 : vector<8x128xi32>
    %cst_15 = arith.constant -1.000000e+09 : f32
    %cst_16 = arith.constant 0.000000e+00 : f32
    %15 = vector.broadcast %cst_15 : f32 to vector<8x128xf32>
    %16 = vector.broadcast %cst_16 : f32 to vector<8x128xf32>
    %17 = arith.select %14, %15, %16 : vector<8x128xi1>, vector<8x128xf32>
    %18 = vector.shape_cast %17 : vector<8x128xf32> to vector<1x8x128xf32>
    %19 = vector.broadcast %18 : vector<1x8x128xf32> to vector<4x8x128xf32>
    %20 = arith.addf %11, %19 : vector<4x8x128xf32>
    %cst_17 = arith.constant dense<0xFF800000> : vector<4x8xf32>
    %21 = vector.multi_reduction <maximumf>, %20, %cst_17 [2] : vector<4x8x128xf32> to vector<4x8xf32>
    %22 = vector.shape_cast %21 : vector<4x8xf32> to vector<4x8x1xf32>
    %23 = vector.broadcast %22 : vector<4x8x1xf32> to vector<4x8x128xf32>
    %24 = arith.subf %20, %23 : vector<4x8x128xf32>
    %25 = math.exp %24 : vector<4x8x128xf32>
    %cst_18 = arith.constant dense<0.000000e+00> : vector<4x8xf32>
    %26 = vector.multi_reduction <add>, %25, %cst_18 [2] : vector<4x8x128xf32> to vector<4x8xf32>
    %27 = vector.shape_cast %26 : vector<4x8xf32> to vector<4x8x1xf32>
    %28 = arith.truncf %25 : vector<4x8x128xf32> to vector<4x8x128xbf16>
    %cst_19 = arith.constant dense<0.000000e+00> : vector<4x8x32xf32>
    %29 = tpu.matmul %28, %5, %cst_19 {dimension_numbers = #tpu.dot_dimension_numbers<[2], [1], [1], [2], [0, 0, 0, 1, 1, 2], [0], [0]>} : vector<4x8x128xbf16>, vector<4x128x32xbf16>, vector<4x8x32xf32> -> vector<4x8x32xf32>
    %30 = tpu.reciprocal %27 {approx = true} : vector<4x8x1xf32> -> vector<4x8x1xf32>
    %31 = vector.broadcast %30 : vector<4x8x1xf32> to vector<4x8x32xf32>
    %32 = arith.mulf %29, %31 : vector<4x8x32xf32>
    %c0_20 = arith.constant 0 : index
    %c0_21 = arith.constant 0 : index
    %c0_22 = arith.constant 0 : index
    %33 = vector.load %arg6[%c0_20, %c0_21, %c0_22] : memref<4x128x32xbf16, #tpu.memory_space<vmem>>, vector<4x128x32xbf16>
    %c0_23 = arith.constant 0 : index
    %c0_24 = arith.constant 0 : index
    %c0_25 = arith.constant 0 : index
    %34 = vector.load %arg5[%c0_23, %c0_24, %c0_25] : memref<1x8x128xf32, #tpu.memory_space<vmem>>, vector<1x8x128xf32>
    %35 = vector.shape_cast %34 : vector<1x8x128xf32> to vector<8x128xf32>
    %c0_26 = arith.constant 0 : index
    %c0_27 = arith.constant 0 : index
    %36 = vector.load %arg7[%c0_26, %c0_27] : memref<1x128xf32, #tpu.memory_space<vmem>>, vector<1x128xf32>
    %37 = vector.broadcast %36 : vector<1x128xf32> to vector<8x128xf32>
    %38 = arith.addf %35, %37 : vector<8x128xf32>
    %39 = vector.extract_strided_slice %32 {offsets = [0, 0, 0], sizes = [1, 8, 32], strides = [1, 1, 1]} : vector<4x8x32xf32> to vector<1x8x32xf32>
    %40 = vector.shape_cast %39 : vector<1x8x32xf32> to vector<8x32xf32>
    %41 = arith.truncf %40 : vector<8x32xf32> to vector<8x32xbf16>
    %42 = vector.extract_strided_slice %33 {offsets = [0, 0, 0], sizes = [1, 128, 32], strides = [1, 1, 1]} : vector<4x128x32xbf16> to vector<1x128x32xbf16>
    %43 = vector.shape_cast %42 : vector<1x128x32xbf16> to vector<128x32xbf16>
    %cst_28 = arith.constant dense<0.000000e+00> : vector<8x128xf32>
    %44 = tpu.matmul %41, %43, %cst_28 {dimension_numbers = #tpu.dot_dimension_numbers<[1], [1], [0], [0], [0, 0, 1, 0], [], []>} : vector<8x32xbf16>, vector<128x32xbf16>, vector<8x128xf32> -> vector<8x128xf32>
    %45 = arith.addf %38, %44 : vector<8x128xf32>
    %46 = vector.extract_strided_slice %32 {offsets = [1, 0, 0], sizes = [1, 8, 32], strides = [1, 1, 1]} : vector<4x8x32xf32> to vector<1x8x32xf32>
    %47 = vector.shape_cast %46 : vector<1x8x32xf32> to vector<8x32xf32>
    %48 = arith.truncf %47 : vector<8x32xf32> to vector<8x32xbf16>
    %49 = vector.extract_strided_slice %33 {offsets = [1, 0, 0], sizes = [1, 128, 32], strides = [1, 1, 1]} : vector<4x128x32xbf16> to vector<1x128x32xbf16>
    %50 = vector.shape_cast %49 : vector<1x128x32xbf16> to vector<128x32xbf16>
    %cst_29 = arith.constant dense<0.000000e+00> : vector<8x128xf32>
    %51 = tpu.matmul %48, %50, %cst_29 {dimension_numbers = #tpu.dot_dimension_numbers<[1], [1], [0], [0], [0, 0, 1, 0], [], []>} : vector<8x32xbf16>, vector<128x32xbf16>, vector<8x128xf32> -> vector<8x128xf32>
    %52 = arith.addf %45, %51 : vector<8x128xf32>
    %53 = vector.extract_strided_slice %32 {offsets = [2, 0, 0], sizes = [1, 8, 32], strides = [1, 1, 1]} : vector<4x8x32xf32> to vector<1x8x32xf32>
    %54 = vector.shape_cast %53 : vector<1x8x32xf32> to vector<8x32xf32>
    %55 = arith.truncf %54 : vector<8x32xf32> to vector<8x32xbf16>
    %56 = vector.extract_strided_slice %33 {offsets = [2, 0, 0], sizes = [1, 128, 32], strides = [1, 1, 1]} : vector<4x128x32xbf16> to vector<1x128x32xbf16>
    %57 = vector.shape_cast %56 : vector<1x128x32xbf16> to vector<128x32xbf16>
    %cst_30 = arith.constant dense<0.000000e+00> : vector<8x128xf32>
    %58 = tpu.matmul %55, %57, %cst_30 {dimension_numbers = #tpu.dot_dimension_numbers<[1], [1], [0], [0], [0, 0, 1, 0], [], []>} : vector<8x32xbf16>, vector<128x32xbf16>, vector<8x128xf32> -> vector<8x128xf32>
    %59 = arith.addf %52, %58 : vector<8x128xf32>
    %60 = vector.extract_strided_slice %32 {offsets = [3, 0, 0], sizes = [1, 8, 32], strides = [1, 1, 1]} : vector<4x8x32xf32> to vector<1x8x32xf32>
    %61 = vector.shape_cast %60 : vector<1x8x32xf32> to vector<8x32xf32>
    %62 = arith.truncf %61 : vector<8x32xf32> to vector<8x32xbf16>
    %63 = vector.extract_strided_slice %33 {offsets = [3, 0, 0], sizes = [1, 128, 32], strides = [1, 1, 1]} : vector<4x128x32xbf16> to vector<1x128x32xbf16>
    %64 = vector.shape_cast %63 : vector<1x128x32xbf16> to vector<128x32xbf16>
    %cst_31 = arith.constant dense<0.000000e+00> : vector<8x128xf32>
    %65 = tpu.matmul %62, %64, %cst_31 {dimension_numbers = #tpu.dot_dimension_numbers<[1], [1], [0], [0], [0, 0, 1, 0], [], []>} : vector<8x32xbf16>, vector<128x32xbf16>, vector<8x128xf32> -> vector<8x128xf32>
    %66 = arith.addf %59, %65 : vector<8x128xf32>
    %c0_32 = arith.constant 0 : index
    %c0_33 = arith.constant 0 : index
    %c0_34 = arith.constant 0 : index
    %67 = vector.load %arg8[%c0_32, %c0_33, %c0_34] : memref<1x8x128xf32, #tpu.memory_space<vmem>>, vector<1x8x128xf32>
    %68 = vector.shape_cast %67 : vector<1x8x128xf32> to vector<8x128xf32>
    %69 = vector.shape_cast %66 : vector<8x128xf32> to vector<1x8x128xf32>
    tpu.vector_store %arg8[%c0_32, %c0_33, %c0_34], %69 {strides = array<i32>} : memref<1x8x128xf32, #tpu.memory_space<vmem>>, vector<1x8x128xf32>,
    return
  }
  func.func @transform_0(%arg0: i32) -> (i32, i32, i32, i32) {
    %c0_i32 = arith.constant 0 : i32
    %c0_i32_0 = arith.constant 0 : i32
    %c0_i32_1 = arith.constant 0 : i32
    %c0_i32_2 = arith.constant 0 : i32
    return %arg0, %c0_i32, %c0_i32_0, %c0_i32_1 : i32, i32, i32, i32
  }
  func.func @transform_1(%arg0: i32) -> (i32, i32, i32, i32) {
    %c0_i32 = arith.constant 0 : i32
    %c0_i32_0 = arith.constant 0 : i32
    %c0_i32_1 = arith.constant 0 : i32
    %c0_i32_2 = arith.constant 0 : i32
    return %arg0, %c0_i32, %c0_i32_0, %c0_i32_1 : i32, i32, i32, i32
  }
  func.func @transform_2(%arg0: i32) -> (i32, i32, i32, i32) {
    %c0_i32 = arith.constant 0 : i32
    %c0_i32_0 = arith.constant 0 : i32
    %c0_i32_1 = arith.constant 0 : i32
    %c0_i32_2 = arith.constant 0 : i32
    return %arg0, %c0_i32, %c0_i32_0, %c0_i32_1 : i32, i32, i32, i32
  }
  func.func @transform_3(%arg0: i32) -> (i32, i32, i32) {
    %c0_i32 = arith.constant 0 : i32
    %c0_i32_0 = arith.constant 0 : i32
    %c0_i32_1 = arith.constant 0 : i32
    return %arg0, %c0_i32, %c0_i32_0 : i32, i32, i32
  }
  func.func @transform_4(%arg0: i32) -> (i32, i32, i32) {
    %c0_i32 = arith.constant 0 : i32
    %c0_i32_0 = arith.constant 0 : i32
    %c0_i32_1 = arith.constant 0 : i32
    return %arg0, %c0_i32, %c0_i32_0 : i32, i32, i32
  }
  func.func @transform_5(%arg0: i32) -> (i32, i32, i32) {
    %c0_i32 = arith.constant 0 : i32
    %c0_i32_0 = arith.constant 0 : i32
    %c0_i32_1 = arith.constant 0 : i32
    %c0_i32_2 = arith.constant 0 : i32
    return %c0_i32, %c0_i32_0, %c0_i32_1 : i32, i32, i32
  }
  func.func @transform_6(%arg0: i32) -> (i32, i32) {
    %c0_i32 = arith.constant 0 : i32
    %c0_i32_0 = arith.constant 0 : i32
    %c0_i32_1 = arith.constant 0 : i32
    return %c0_i32, %c0_i32_0 : i32, i32
  }
  func.func @transform_7(%arg0: i32) -> (i32, i32, i32) {
    %c0_i32 = arith.constant 0 : i32
    %c0_i32_0 = arith.constant 0 : i32
    %c0_i32_1 = arith.constant 0 : i32
    return %arg0, %c0_i32, %c0_i32_0 : i32, i32, i32
  }
}

module attributes {stable_mosaic.version = 11 : i64} {
  func.func @_linear_kernel(%arg0: i32, %arg1: memref<16x128xf32, #tpu.memory_space<vmem>>, %arg2: memref<128x128xbf16, #tpu.memory_space<vmem>>, %arg3: memref<1x128xf32, #tpu.memory_space<vmem>>, %arg4: memref<1x128xf32, #tpu.memory_space<vmem>>, %arg5: memref<1x128xf32, #tpu.memory_space<vmem>>, %arg6: memref<16x128xbf16, #tpu.memory_space<vmem>>) attributes {dimension_semantics = [#tpu.dimension_semantics<parallel>], iteration_bounds = array<i64: 1>, scalar_prefetch = 0 : i64, scratch_operands = 0 : i64, tpu.core_type = #tpu.core_type<tc>, window_params = [{transform_indices = @transform_0, window_bounds = array<i64: 16, 128>}, {pipeline_mode = #tpu.pipeline_mode<synchronous>, transform_indices = @transform_1, window_bounds = array<i64: 128, 128>}, {pipeline_mode = #tpu.pipeline_mode<synchronous>, transform_indices = @transform_2, window_bounds = array<i64: 1, 128>}, {pipeline_mode = #tpu.pipeline_mode<synchronous>, transform_indices = @transform_3, window_bounds = array<i64: 1, 128>}, {pipeline_mode = #tpu.pipeline_mode<synchronous>, transform_indices = @transform_4, window_bounds = array<i64: 1, 128>}, {transform_indices = @transform_5, window_bounds = array<i64: 16, 128>}]} {
    %c0 = arith.constant 0 : index
    %c0_0 = arith.constant 0 : index
    %0 = vector.load %arg1[%c0, %c0_0] : memref<16x128xf32, #tpu.memory_space<vmem>>, vector<16x128xf32>
    %cst = arith.constant dense<0.000000e+00> : vector<16xf32>
    %1 = vector.multi_reduction <add>, %0, %cst [1] : vector<16x128xf32> to vector<16xf32>
    %2 = vector.shape_cast %1 : vector<16xf32> to vector<16x1xf32>
    %cst_1 = arith.constant 1.280000e+02 : f32
    %3 = vector.broadcast %cst_1 : f32 to vector<16x1xf32>
    %4 = arith.divf %2, %3 : vector<16x1xf32>
    %5 = vector.broadcast %4 : vector<16x1xf32> to vector<16x128xf32>
    %6 = arith.subf %0, %5 : vector<16x128xf32>
    %7 = arith.mulf %6, %6 : vector<16x128xf32>
    %cst_2 = arith.constant dense<0.000000e+00> : vector<16xf32>
    %8 = vector.multi_reduction <add>, %7, %cst_2 [1] : vector<16x128xf32> to vector<16xf32>
    %9 = vector.shape_cast %8 : vector<16xf32> to vector<16x1xf32>
    %cst_3 = arith.constant 1.280000e+02 : f32
    %10 = vector.broadcast %cst_3 : f32 to vector<16x1xf32>
    %11 = arith.divf %9, %10 : vector<16x1xf32>
    %cst_4 = arith.constant 9.99999997E-7 : f32
    %12 = vector.broadcast %cst_4 : f32 to vector<16x1xf32>
    %13 = arith.addf %11, %12 : vector<16x1xf32>
    %14 = math.rsqrt %13 : vector<16x1xf32>
    %15 = vector.broadcast %14 : vector<16x1xf32> to vector<16x128xf32>
    %16 = arith.mulf %6, %15 : vector<16x128xf32>
    %c0_5 = arith.constant 0 : index
    %c0_6 = arith.constant 0 : index
    %17 = vector.load %arg4[%c0_5, %c0_6] : memref<1x128xf32, #tpu.memory_space<vmem>>, vector<1x128xf32>
    %18 = vector.broadcast %17 : vector<1x128xf32> to vector<16x128xf32>
    %19 = arith.mulf %16, %18 : vector<16x128xf32>
    %c0_7 = arith.constant 0 : index
    %c0_8 = arith.constant 0 : index
    %20 = vector.load %arg5[%c0_7, %c0_8] : memref<1x128xf32, #tpu.memory_space<vmem>>, vector<1x128xf32>
    %21 = vector.broadcast %20 : vector<1x128xf32> to vector<16x128xf32>
    %22 = arith.addf %19, %21 : vector<16x128xf32>
    %23 = arith.truncf %22 : vector<16x128xf32> to vector<16x128xbf16>
    %c0_9 = arith.constant 0 : index
    %c0_10 = arith.constant 0 : index
    %24 = vector.load %arg2[%c0_9, %c0_10] : memref<128x128xbf16, #tpu.memory_space<vmem>>, vector<128x128xbf16>
    %cst_11 = arith.constant dense<0.000000e+00> : vector<16x128xf32>
    %25 = tpu.matmul %23, %24, %cst_11 {dimension_numbers = #tpu.dot_dimension_numbers<[1], [1], [0], [0], [0, 0, 1, 0], [], []>} : vector<16x128xbf16>, vector<128x128xbf16>, vector<16x128xf32> -> vector<16x128xf32>
    %c0_12 = arith.constant 0 : index
    %c0_13 = arith.constant 0 : index
    %26 = vector.load %arg3[%c0_12, %c0_13] : memref<1x128xf32, #tpu.memory_space<vmem>>, vector<1x128xf32>
    %27 = vector.broadcast %26 : vector<1x128xf32> to vector<16x128xf32>
    %28 = arith.addf %25, %27 : vector<16x128xf32>
    %29 = arith.truncf %28 : vector<16x128xf32> to vector<16x128xbf16>
    %c0_14 = arith.constant 0 : index
    %c0_15 = arith.constant 0 : index
    %30 = vector.load %arg6[%c0_14, %c0_15] : memref<16x128xbf16, #tpu.memory_space<vmem>>, vector<16x128xbf16>
    tpu.vector_store %arg6[%c0_14, %c0_15], %29 {strides = array<i32>} : memref<16x128xbf16, #tpu.memory_space<vmem>>, vector<16x128xbf16>,
    return
  }
  func.func @transform_0(%arg0: i32) -> (i32, i32) {
    %c0_i32 = arith.constant 0 : i32
    %c0_i32_0 = arith.constant 0 : i32
    return %arg0, %c0_i32 : i32, i32
  }
  func.func @transform_1(%arg0: i32) -> (i32, i32) {
    %c0_i32 = arith.constant 0 : i32
    %c0_i32_0 = arith.constant 0 : i32
    %c0_i32_1 = arith.constant 0 : i32
    return %c0_i32, %c0_i32_0 : i32, i32
  }
  func.func @transform_2(%arg0: i32) -> (i32, i32) {
    %c0_i32 = arith.constant 0 : i32
    %c0_i32_0 = arith.constant 0 : i32
    %c0_i32_1 = arith.constant 0 : i32
    return %c0_i32, %c0_i32_0 : i32, i32
  }
  func.func @transform_3(%arg0: i32) -> (i32, i32) {
    %c0_i32 = arith.constant 0 : i32
    %c0_i32_0 = arith.constant 0 : i32
    %c0_i32_1 = arith.constant 0 : i32
    return %c0_i32, %c0_i32_0 : i32, i32
  }
  func.func @transform_4(%arg0: i32) -> (i32, i32) {
    %c0_i32 = arith.constant 0 : i32
    %c0_i32_0 = arith.constant 0 : i32
    %c0_i32_1 = arith.constant 0 : i32
    return %c0_i32, %c0_i32_0 : i32, i32
  }
  func.func @transform_5(%arg0: i32) -> (i32, i32) {
    %c0_i32 = arith.constant 0 : i32
    %c0_i32_0 = arith.constant 0 : i32
    return %arg0, %c0_i32 : i32, i32
  }
}

module attributes {stable_mosaic.version = 11 : i64} {
  func.func @_linear_kernel(%arg0: i32, %arg1: memref<16x128xf32, #tpu.memory_space<vmem>>, %arg2: memref<384x128xbf16, #tpu.memory_space<vmem>>, %arg3: memref<1x384xf32, #tpu.memory_space<vmem>>, %arg4: memref<16x384xbf16, #tpu.memory_space<vmem>>) attributes {dimension_semantics = [#tpu.dimension_semantics<parallel>], iteration_bounds = array<i64: 2>, scalar_prefetch = 0 : i64, scratch_operands = 0 : i64, tpu.core_type = #tpu.core_type<tc>, window_params = [{transform_indices = @transform_0, window_bounds = array<i64: 16, 128>}, {pipeline_mode = #tpu.pipeline_mode<synchronous>, transform_indices = @transform_1, window_bounds = array<i64: 384, 128>}, {pipeline_mode = #tpu.pipeline_mode<synchronous>, transform_indices = @transform_2, window_bounds = array<i64: 1, 384>}, {transform_indices = @transform_3, window_bounds = array<i64: 16, 384>}]} {
    %c0 = arith.constant 0 : index
    %c0_0 = arith.constant 0 : index
    %0 = vector.load %arg1[%c0, %c0_0] : memref<16x128xf32, #tpu.memory_space<vmem>>, vector<16x128xf32>
    %1 = arith.truncf %0 : vector<16x128xf32> to vector<16x128xbf16>
    %c0_1 = arith.constant 0 : index
    %c0_2 = arith.constant 0 : index
    %2 = vector.load %arg2[%c0_1, %c0_2] : memref<384x128xbf16, #tpu.memory_space<vmem>>, vector<384x128xbf16>
    %cst = arith.constant dense<0.000000e+00> : vector<16x384xf32>
    %3 = tpu.matmul %1, %2, %cst {dimension_numbers = #tpu.dot_dimension_numbers<[1], [1], [0], [0], [0, 0, 1, 0], [], []>} : vector<16x128xbf16>, vector<384x128xbf16>, vector<16x384xf32> -> vector<16x384xf32>
    %c0_3 = arith.constant 0 : index
    %c0_4 = arith.constant 0 : index
    %4 = vector.load %arg3[%c0_3, %c0_4] : memref<1x384xf32, #tpu.memory_space<vmem>>, vector<1x384xf32>
    %5 = vector.broadcast %4 : vector<1x384xf32> to vector<16x384xf32>
    %6 = arith.addf %3, %5 : vector<16x384xf32>
    %7 = arith.truncf %6 : vector<16x384xf32> to vector<16x384xbf16>
    %c0_5 = arith.constant 0 : index
    %c0_6 = arith.constant 0 : index
    %8 = vector.load %arg4[%c0_5, %c0_6] : memref<16x384xbf16, #tpu.memory_space<vmem>>, vector<16x384xbf16>
    tpu.vector_store %arg4[%c0_5, %c0_6], %7 {strides = array<i32>} : memref<16x384xbf16, #tpu.memory_space<vmem>>, vector<16x384xbf16>,
    return
  }
  func.func @transform_0(%arg0: i32) -> (i32, i32) {
    %c0_i32 = arith.constant 0 : i32
    %c0_i32_0 = arith.constant 0 : i32
    return %arg0, %c0_i32 : i32, i32
  }
  func.func @transform_1(%arg0: i32) -> (i32, i32) {
    %c0_i32 = arith.constant 0 : i32
    %c0_i32_0 = arith.constant 0 : i32
    %c0_i32_1 = arith.constant 0 : i32
    return %c0_i32, %c0_i32_0 : i32, i32
  }
  func.func @transform_2(%arg0: i32) -> (i32, i32) {
    %c0_i32 = arith.constant 0 : i32
    %c0_i32_0 = arith.constant 0 : i32
    %c0_i32_1 = arith.constant 0 : i32
    return %c0_i32, %c0_i32_0 : i32, i32
  }
  func.func @transform_3(%arg0: i32) -> (i32, i32) {
    %c0_i32 = arith.constant 0 : i32
    %c0_i32_0 = arith.constant 0 : i32
    return %arg0, %c0_i32 : i32, i32
  }
}

module attributes {stable_mosaic.version = 11 : i64} {
  func.func @_attn_fused_kernel(%arg0: i32, %arg1: memref<1x4x16x32xbf16, #tpu.memory_space<vmem>>, %arg2: memref<1x4x128x32xbf16, #tpu.memory_space<vmem>>, %arg3: memref<1x4x128x32xbf16, #tpu.memory_space<vmem>>, %arg4: memref<1x1x128xf32, #tpu.memory_space<vmem>>, %arg5: memref<1x16x128xf32, #tpu.memory_space<vmem>>, %arg6: memref<4x128x32xbf16, #tpu.memory_space<vmem>>, %arg7: memref<1x128xf32, #tpu.memory_space<vmem>>, %arg8: memref<1x16x128xf32, #tpu.memory_space<vmem>>) attributes {dimension_semantics = [#tpu.dimension_semantics<parallel>], iteration_bounds = array<i64: 2>, scalar_prefetch = 0 : i64, scratch_operands = 0 : i64, tpu.core_type = #tpu.core_type<tc>, window_params = [{transform_indices = @transform_0, window_bounds = array<i64: 1, 4, 16, 32>}, {transform_indices = @transform_1, window_bounds = array<i64: 1, 4, 128, 32>}, {transform_indices = @transform_2, window_bounds = array<i64: 1, 4, 128, 32>}, {transform_indices = @transform_3, window_bounds = array<i64: 1, 1, 128>}, {transform_indices = @transform_4, window_bounds = array<i64: 1, 16, 128>}, {pipeline_mode = #tpu.pipeline_mode<synchronous>, transform_indices = @transform_5, window_bounds = array<i64: 4, 128, 32>}, {pipeline_mode = #tpu.pipeline_mode<synchronous>, transform_indices = @transform_6, window_bounds = array<i64: 1, 128>}, {transform_indices = @transform_7, window_bounds = array<i64: 1, 16, 128>}]} {
    %c0 = arith.constant 0 : index
    %c0_0 = arith.constant 0 : index
    %c0_1 = arith.constant 0 : index
    %c0_2 = arith.constant 0 : index
    %0 = vector.load %arg1[%c0, %c0_0, %c0_1, %c0_2] : memref<1x4x16x32xbf16, #tpu.memory_space<vmem>>, vector<1x4x16x32xbf16>
    %1 = vector.shape_cast %0 : vector<1x4x16x32xbf16> to vector<4x16x32xbf16>
    %c0_3 = arith.constant 0 : index
    %c0_4 = arith.constant 0 : index
    %c0_5 = arith.constant 0 : index
    %c0_6 = arith.constant 0 : index
    %2 = vector.load %arg2[%c0_3, %c0_4, %c0_5, %c0_6] : memref<1x4x128x32xbf16, #tpu.memory_space<vmem>>, vector<1x4x128x32xbf16>
    %3 = vector.shape_cast %2 : vector<1x4x128x32xbf16> to vector<4x128x32xbf16>
    %c0_7 = arith.constant 0 : index
    %c0_8 = arith.constant 0 : index
    %c0_9 = arith.constant 0 : index
    %c0_10 = arith.constant 0 : index
    %4 = vector.load %arg3[%c0_7, %c0_8, %c0_9, %c0_10] : memref<1x4x128x32xbf16, #tpu.memory_space<vmem>>, vector<1x4x128x32xbf16>
    %5 = vector.shape_cast %4 : vector<1x4x128x32xbf16> to vector<4x128x32xbf16>
    %cst = arith.constant dense<0.000000e+00> : vector<4x16x128xf32>
    %6 = tpu.matmul %1, %3, %cst {dimension_numbers = #tpu.dot_dimension_numbers<[2], [2], [1], [1], [0, 0, 0, 1, 1, 1], [0], [0]>} : vector<4x16x32xbf16>, vector<4x128x32xbf16>, vector<4x16x128xf32> -> vector<4x16x128xf32>
    %cst_11 = arith.constant 0.176776692 : f32
    %7 = vector.broadcast %cst_11 : f32 to vector<4x16x128xf32>
    %8 = arith.mulf %6, %7 : vector<4x16x128xf32>
    %c0_12 = arith.constant 0 : index
    %c0_13 = arith.constant 0 : index
    %c0_14 = arith.constant 0 : index
    %9 = vector.load %arg4[%c0_12, %c0_13, %c0_14] : memref<1x1x128xf32, #tpu.memory_space<vmem>>, vector<1x1x128xf32>
    %10 = vector.broadcast %9 : vector<1x1x128xf32> to vector<4x16x128xf32>
    %11 = arith.addf %8, %10 : vector<4x16x128xf32>
    %cst_15 = arith.constant dense<0xFF800000> : vector<4x16xf32>
    %12 = vector.multi_reduction <maximumf>, %11, %cst_15 [2] : vector<4x16x128xf32> to vector<4x16xf32>
    %13 = vector.shape_cast %12 : vector<4x16xf32> to vector<4x16x1xf32>
    %14 = vector.broadcast %13 : vector<4x16x1xf32> to vector<4x16x128xf32>
    %15 = arith.subf %11, %14 : vector<4x16x128xf32>
    %16 = math.exp %15 : vector<4x16x128xf32>
    %cst_16 = arith.constant dense<0.000000e+00> : vector<4x16xf32>
    %17 = vector.multi_reduction <add>, %16, %cst_16 [2] : vector<4x16x128xf32> to vector<4x16xf32>
    %18 = vector.shape_cast %17 : vector<4x16xf32> to vector<4x16x1xf32>
    %19 = arith.truncf %16 : vector<4x16x128xf32> to vector<4x16x128xbf16>
    %cst_17 = arith.constant dense<0.000000e+00> : vector<4x16x32xf32>
    %20 = tpu.matmul %19, %5, %cst_17 {dimension_numbers = #tpu.dot_dimension_numbers<[2], [1], [1], [2], [0, 0, 0, 1, 1, 2], [0], [0]>} : vector<4x16x128xbf16>, vector<4x128x32xbf16>, vector<4x16x32xf32> -> vector<4x16x32xf32>
    %21 = tpu.reciprocal %18 {approx = true} : vector<4x16x1xf32> -> vector<4x16x1xf32>
    %22 = vector.broadcast %21 : vector<4x16x1xf32> to vector<4x16x32xf32>
    %23 = arith.mulf %20, %22 : vector<4x16x32xf32>
    %c0_18 = arith.constant 0 : index
    %c0_19 = arith.constant 0 : index
    %c0_20 = arith.constant 0 : index
    %24 = vector.load %arg6[%c0_18, %c0_19, %c0_20] : memref<4x128x32xbf16, #tpu.memory_space<vmem>>, vector<4x128x32xbf16>
    %c0_21 = arith.constant 0 : index
    %c0_22 = arith.constant 0 : index
    %c0_23 = arith.constant 0 : index
    %25 = vector.load %arg5[%c0_21, %c0_22, %c0_23] : memref<1x16x128xf32, #tpu.memory_space<vmem>>, vector<1x16x128xf32>
    %26 = vector.shape_cast %25 : vector<1x16x128xf32> to vector<16x128xf32>
    %c0_24 = arith.constant 0 : index
    %c0_25 = arith.constant 0 : index
    %27 = vector.load %arg7[%c0_24, %c0_25] : memref<1x128xf32, #tpu.memory_space<vmem>>, vector<1x128xf32>
    %28 = vector.broadcast %27 : vector<1x128xf32> to vector<16x128xf32>
    %29 = arith.addf %26, %28 : vector<16x128xf32>
    %30 = vector.extract_strided_slice %23 {offsets = [0, 0, 0], sizes = [1, 16, 32], strides = [1, 1, 1]} : vector<4x16x32xf32> to vector<1x16x32xf32>
    %31 = vector.shape_cast %30 : vector<1x16x32xf32> to vector<16x32xf32>
    %32 = arith.truncf %31 : vector<16x32xf32> to vector<16x32xbf16>
    %33 = vector.extract_strided_slice %24 {offsets = [0, 0, 0], sizes = [1, 128, 32], strides = [1, 1, 1]} : vector<4x128x32xbf16> to vector<1x128x32xbf16>
    %34 = vector.shape_cast %33 : vector<1x128x32xbf16> to vector<128x32xbf16>
    %cst_26 = arith.constant dense<0.000000e+00> : vector<16x128xf32>
    %35 = tpu.matmul %32, %34, %cst_26 {dimension_numbers = #tpu.dot_dimension_numbers<[1], [1], [0], [0], [0, 0, 1, 0], [], []>} : vector<16x32xbf16>, vector<128x32xbf16>, vector<16x128xf32> -> vector<16x128xf32>
    %36 = arith.addf %29, %35 : vector<16x128xf32>
    %37 = vector.extract_strided_slice %23 {offsets = [1, 0, 0], sizes = [1, 16, 32], strides = [1, 1, 1]} : vector<4x16x32xf32> to vector<1x16x32xf32>
    %38 = vector.shape_cast %37 : vector<1x16x32xf32> to vector<16x32xf32>
    %39 = arith.truncf %38 : vector<16x32xf32> to vector<16x32xbf16>
    %40 = vector.extract_strided_slice %24 {offsets = [1, 0, 0], sizes = [1, 128, 32], strides = [1, 1, 1]} : vector<4x128x32xbf16> to vector<1x128x32xbf16>
    %41 = vector.shape_cast %40 : vector<1x128x32xbf16> to vector<128x32xbf16>
    %cst_27 = arith.constant dense<0.000000e+00> : vector<16x128xf32>
    %42 = tpu.matmul %39, %41, %cst_27 {dimension_numbers = #tpu.dot_dimension_numbers<[1], [1], [0], [0], [0, 0, 1, 0], [], []>} : vector<16x32xbf16>, vector<128x32xbf16>, vector<16x128xf32> -> vector<16x128xf32>
    %43 = arith.addf %36, %42 : vector<16x128xf32>
    %44 = vector.extract_strided_slice %23 {offsets = [2, 0, 0], sizes = [1, 16, 32], strides = [1, 1, 1]} : vector<4x16x32xf32> to vector<1x16x32xf32>
    %45 = vector.shape_cast %44 : vector<1x16x32xf32> to vector<16x32xf32>
    %46 = arith.truncf %45 : vector<16x32xf32> to vector<16x32xbf16>
    %47 = vector.extract_strided_slice %24 {offsets = [2, 0, 0], sizes = [1, 128, 32], strides = [1, 1, 1]} : vector<4x128x32xbf16> to vector<1x128x32xbf16>
    %48 = vector.shape_cast %47 : vector<1x128x32xbf16> to vector<128x32xbf16>
    %cst_28 = arith.constant dense<0.000000e+00> : vector<16x128xf32>
    %49 = tpu.matmul %46, %48, %cst_28 {dimension_numbers = #tpu.dot_dimension_numbers<[1], [1], [0], [0], [0, 0, 1, 0], [], []>} : vector<16x32xbf16>, vector<128x32xbf16>, vector<16x128xf32> -> vector<16x128xf32>
    %50 = arith.addf %43, %49 : vector<16x128xf32>
    %51 = vector.extract_strided_slice %23 {offsets = [3, 0, 0], sizes = [1, 16, 32], strides = [1, 1, 1]} : vector<4x16x32xf32> to vector<1x16x32xf32>
    %52 = vector.shape_cast %51 : vector<1x16x32xf32> to vector<16x32xf32>
    %53 = arith.truncf %52 : vector<16x32xf32> to vector<16x32xbf16>
    %54 = vector.extract_strided_slice %24 {offsets = [3, 0, 0], sizes = [1, 128, 32], strides = [1, 1, 1]} : vector<4x128x32xbf16> to vector<1x128x32xbf16>
    %55 = vector.shape_cast %54 : vector<1x128x32xbf16> to vector<128x32xbf16>
    %cst_29 = arith.constant dense<0.000000e+00> : vector<16x128xf32>
    %56 = tpu.matmul %53, %55, %cst_29 {dimension_numbers = #tpu.dot_dimension_numbers<[1], [1], [0], [0], [0, 0, 1, 0], [], []>} : vector<16x32xbf16>, vector<128x32xbf16>, vector<16x128xf32> -> vector<16x128xf32>
    %57 = arith.addf %50, %56 : vector<16x128xf32>
    %c0_30 = arith.constant 0 : index
    %c0_31 = arith.constant 0 : index
    %c0_32 = arith.constant 0 : index
    %58 = vector.load %arg8[%c0_30, %c0_31, %c0_32] : memref<1x16x128xf32, #tpu.memory_space<vmem>>, vector<1x16x128xf32>
    %59 = vector.shape_cast %58 : vector<1x16x128xf32> to vector<16x128xf32>
    %60 = vector.shape_cast %57 : vector<16x128xf32> to vector<1x16x128xf32>
    tpu.vector_store %arg8[%c0_30, %c0_31, %c0_32], %60 {strides = array<i32>} : memref<1x16x128xf32, #tpu.memory_space<vmem>>, vector<1x16x128xf32>,
    return
  }
  func.func @transform_0(%arg0: i32) -> (i32, i32, i32, i32) {
    %c0_i32 = arith.constant 0 : i32
    %c0_i32_0 = arith.constant 0 : i32
    %c0_i32_1 = arith.constant 0 : i32
    %c0_i32_2 = arith.constant 0 : i32
    return %arg0, %c0_i32, %c0_i32_0, %c0_i32_1 : i32, i32, i32, i32
  }
  func.func @transform_1(%arg0: i32) -> (i32, i32, i32, i32) {
    %c0_i32 = arith.constant 0 : i32
    %c0_i32_0 = arith.constant 0 : i32
    %c0_i32_1 = arith.constant 0 : i32
    %c0_i32_2 = arith.constant 0 : i32
    return %arg0, %c0_i32, %c0_i32_0, %c0_i32_1 : i32, i32, i32, i32
  }
  func.func @transform_2(%arg0: i32) -> (i32, i32, i32, i32) {
    %c0_i32 = arith.constant 0 : i32
    %c0_i32_0 = arith.constant 0 : i32
    %c0_i32_1 = arith.constant 0 : i32
    %c0_i32_2 = arith.constant 0 : i32
    return %arg0, %c0_i32, %c0_i32_0, %c0_i32_1 : i32, i32, i32, i32
  }
  func.func @transform_3(%arg0: i32) -> (i32, i32, i32) {
    %c0_i32 = arith.constant 0 : i32
    %c0_i32_0 = arith.constant 0 : i32
    %c0_i32_1 = arith.constant 0 : i32
    return %arg0, %c0_i32, %c0_i32_0 : i32, i32, i32
  }
  func.func @transform_4(%arg0: i32) -> (i32, i32, i32) {
    %c0_i32 = arith.constant 0 : i32
    %c0_i32_0 = arith.constant 0 : i32
    %c0_i32_1 = arith.constant 0 : i32
    return %arg0, %c0_i32, %c0_i32_0 : i32, i32, i32
  }
  func.func @transform_5(%arg0: i32) -> (i32, i32, i32) {
    %c0_i32 = arith.constant 0 : i32
    %c0_i32_0 = arith.constant 0 : i32
    %c0_i32_1 = arith.constant 0 : i32
    %c0_i32_2 = arith.constant 0 : i32
    return %c0_i32, %c0_i32_0, %c0_i32_1 : i32, i32, i32
  }
  func.func @transform_6(%arg0: i32) -> (i32, i32) {
    %c0_i32 = arith.constant 0 : i32
    %c0_i32_0 = arith.constant 0 : i32
    %c0_i32_1 = arith.constant 0 : i32
    return %c0_i32, %c0_i32_0 : i32, i32
  }
  func.func @transform_7(%arg0: i32) -> (i32, i32, i32) {
    %c0_i32 = arith.constant 0 : i32
    %c0_i32_0 = arith.constant 0 : i32
    %c0_i32_1 = arith.constant 0 : i32
    return %arg0, %c0_i32, %c0_i32_0 : i32, i32, i32
  }
}

module attributes {stable_mosaic.version = 11 : i64} {
  func.func @_linear_kernel(%arg0: i32, %arg1: memref<16x128xf32, #tpu.memory_space<vmem>>, %arg2: memref<256x128xbf16, #tpu.memory_space<vmem>>, %arg3: memref<1x256xf32, #tpu.memory_space<vmem>>, %arg4: memref<1x128xf32, #tpu.memory_space<vmem>>, %arg5: memref<1x128xf32, #tpu.memory_space<vmem>>, %arg6: memref<16x256xbf16, #tpu.memory_space<vmem>>) attributes {dimension_semantics = [#tpu.dimension_semantics<parallel>], iteration_bounds = array<i64: 2>, scalar_prefetch = 0 : i64, scratch_operands = 0 : i64, tpu.core_type = #tpu.core_type<tc>, window_params = [{transform_indices = @transform_0, window_bounds = array<i64: 16, 128>}, {pipeline_mode = #tpu.pipeline_mode<synchronous>, transform_indices = @transform_1, window_bounds = array<i64: 256, 128>}, {pipeline_mode = #tpu.pipeline_mode<synchronous>, transform_indices = @transform_2, window_bounds = array<i64: 1, 256>}, {pipeline_mode = #tpu.pipeline_mode<synchronous>, transform_indices = @transform_3, window_bounds = array<i64: 1, 128>}, {pipeline_mode = #tpu.pipeline_mode<synchronous>, transform_indices = @transform_4, window_bounds = array<i64: 1, 128>}, {transform_indices = @transform_5, window_bounds = array<i64: 16, 256>}]} {
    %c0 = arith.constant 0 : index
    %c0_0 = arith.constant 0 : index
    %0 = vector.load %arg1[%c0, %c0_0] : memref<16x128xf32, #tpu.memory_space<vmem>>, vector<16x128xf32>
    %cst = arith.constant dense<0.000000e+00> : vector<16xf32>
    %1 = vector.multi_reduction <add>, %0, %cst [1] : vector<16x128xf32> to vector<16xf32>
    %2 = vector.shape_cast %1 : vector<16xf32> to vector<16x1xf32>
    %cst_1 = arith.constant 1.280000e+02 : f32
    %3 = vector.broadcast %cst_1 : f32 to vector<16x1xf32>
    %4 = arith.divf %2, %3 : vector<16x1xf32>
    %5 = vector.broadcast %4 : vector<16x1xf32> to vector<16x128xf32>
    %6 = arith.subf %0, %5 : vector<16x128xf32>
    %7 = arith.mulf %6, %6 : vector<16x128xf32>
    %cst_2 = arith.constant dense<0.000000e+00> : vector<16xf32>
    %8 = vector.multi_reduction <add>, %7, %cst_2 [1] : vector<16x128xf32> to vector<16xf32>
    %9 = vector.shape_cast %8 : vector<16xf32> to vector<16x1xf32>
    %cst_3 = arith.constant 1.280000e+02 : f32
    %10 = vector.broadcast %cst_3 : f32 to vector<16x1xf32>
    %11 = arith.divf %9, %10 : vector<16x1xf32>
    %cst_4 = arith.constant 9.99999997E-7 : f32
    %12 = vector.broadcast %cst_4 : f32 to vector<16x1xf32>
    %13 = arith.addf %11, %12 : vector<16x1xf32>
    %14 = math.rsqrt %13 : vector<16x1xf32>
    %15 = vector.broadcast %14 : vector<16x1xf32> to vector<16x128xf32>
    %16 = arith.mulf %6, %15 : vector<16x128xf32>
    %c0_5 = arith.constant 0 : index
    %c0_6 = arith.constant 0 : index
    %17 = vector.load %arg4[%c0_5, %c0_6] : memref<1x128xf32, #tpu.memory_space<vmem>>, vector<1x128xf32>
    %18 = vector.broadcast %17 : vector<1x128xf32> to vector<16x128xf32>
    %19 = arith.mulf %16, %18 : vector<16x128xf32>
    %c0_7 = arith.constant 0 : index
    %c0_8 = arith.constant 0 : index
    %20 = vector.load %arg5[%c0_7, %c0_8] : memref<1x128xf32, #tpu.memory_space<vmem>>, vector<1x128xf32>
    %21 = vector.broadcast %20 : vector<1x128xf32> to vector<16x128xf32>
    %22 = arith.addf %19, %21 : vector<16x128xf32>
    %23 = arith.truncf %22 : vector<16x128xf32> to vector<16x128xbf16>
    %c0_9 = arith.constant 0 : index
    %c0_10 = arith.constant 0 : index
    %24 = vector.load %arg2[%c0_9, %c0_10] : memref<256x128xbf16, #tpu.memory_space<vmem>>, vector<256x128xbf16>
    %cst_11 = arith.constant dense<0.000000e+00> : vector<16x256xf32>
    %25 = tpu.matmul %23, %24, %cst_11 {dimension_numbers = #tpu.dot_dimension_numbers<[1], [1], [0], [0], [0, 0, 1, 0], [], []>} : vector<16x128xbf16>, vector<256x128xbf16>, vector<16x256xf32> -> vector<16x256xf32>
    %c0_12 = arith.constant 0 : index
    %c0_13 = arith.constant 0 : index
    %26 = vector.load %arg3[%c0_12, %c0_13] : memref<1x256xf32, #tpu.memory_space<vmem>>, vector<1x256xf32>
    %27 = vector.broadcast %26 : vector<1x256xf32> to vector<16x256xf32>
    %28 = arith.addf %25, %27 : vector<16x256xf32>
    %cst_14 = arith.constant 0.000000e+00 : f32
    %29 = vector.broadcast %cst_14 : f32 to vector<16x256xf32>
    %30 = arith.maximumf %28, %29 : vector<16x256xf32>
    %31 = arith.truncf %30 : vector<16x256xf32> to vector<16x256xbf16>
    %c0_15 = arith.constant 0 : index
    %c0_16 = arith.constant 0 : index
    %32 = vector.load %arg6[%c0_15, %c0_16] : memref<16x256xbf16, #tpu.memory_space<vmem>>, vector<16x256xbf16>
    tpu.vector_store %arg6[%c0_15, %c0_16], %31 {strides = array<i32>} : memref<16x256xbf16, #tpu.memory_space<vmem>>, vector<16x256xbf16>,
    return
  }
  func.func @transform_0(%arg0: i32) -> (i32, i32) {
    %c0_i32 = arith.constant 0 : i32
    %c0_i32_0 = arith.constant 0 : i32
    return %arg0, %c0_i32 : i32, i32
  }
  func.func @transform_1(%arg0: i32) -> (i32, i32) {
    %c0_i32 = arith.constant 0 : i32
    %c0_i32_0 = arith.constant 0 : i32
    %c0_i32_1 = arith.constant 0 : i32
    return %c0_i32, %c0_i32_0 : i32, i32
  }
  func.func @transform_2(%arg0: i32) -> (i32, i32) {
    %c0_i32 = arith.constant 0 : i32
    %c0_i32_0 = arith.constant 0 : i32
    %c0_i32_1 = arith.constant 0 : i32
    return %c0_i32, %c0_i32_0 : i32, i32
  }
  func.func @transform_3(%arg0: i32) -> (i32, i32) {
    %c0_i32 = arith.constant 0 : i32
    %c0_i32_0 = arith.constant 0 : i32
    %c0_i32_1 = arith.constant 0 : i32
    return %c0_i32, %c0_i32_0 : i32, i32
  }
  func.func @transform_4(%arg0: i32) -> (i32, i32) {
    %c0_i32 = arith.constant 0 : i32
    %c0_i32_0 = arith.constant 0 : i32
    %c0_i32_1 = arith.constant 0 : i32
    return %c0_i32, %c0_i32_0 : i32, i32
  }
  func.func @transform_5(%arg0: i32) -> (i32, i32) {
    %c0_i32 = arith.constant 0 : i32
    %c0_i32_0 = arith.constant 0 : i32
    return %arg0, %c0_i32 : i32, i32
  }
}

module attributes {stable_mosaic.version = 11 : i64} {
  func.func @_linear_kernel(%arg0: i32, %arg1: memref<16x128xf32, #tpu.memory_space<vmem>>, %arg2: memref<384x128xbf16, #tpu.memory_space<vmem>>, %arg3: memref<1x384xf32, #tpu.memory_space<vmem>>, %arg4: memref<1x128xf32, #tpu.memory_space<vmem>>, %arg5: memref<1x128xf32, #tpu.memory_space<vmem>>, %arg6: memref<16x384xbf16, #tpu.memory_space<vmem>>) attributes {dimension_semantics = [#tpu.dimension_semantics<parallel>], iteration_bounds = array<i64: 2>, scalar_prefetch = 0 : i64, scratch_operands = 0 : i64, tpu.core_type = #tpu.core_type<tc>, window_params = [{transform_indices = @transform_0, window_bounds = array<i64: 16, 128>}, {pipeline_mode = #tpu.pipeline_mode<synchronous>, transform_indices = @transform_1, window_bounds = array<i64: 384, 128>}, {pipeline_mode = #tpu.pipeline_mode<synchronous>, transform_indices = @transform_2, window_bounds = array<i64: 1, 384>}, {pipeline_mode = #tpu.pipeline_mode<synchronous>, transform_indices = @transform_3, window_bounds = array<i64: 1, 128>}, {pipeline_mode = #tpu.pipeline_mode<synchronous>, transform_indices = @transform_4, window_bounds = array<i64: 1, 128>}, {transform_indices = @transform_5, window_bounds = array<i64: 16, 384>}]} {
    %c0 = arith.constant 0 : index
    %c0_0 = arith.constant 0 : index
    %0 = vector.load %arg1[%c0, %c0_0] : memref<16x128xf32, #tpu.memory_space<vmem>>, vector<16x128xf32>
    %cst = arith.constant dense<0.000000e+00> : vector<16xf32>
    %1 = vector.multi_reduction <add>, %0, %cst [1] : vector<16x128xf32> to vector<16xf32>
    %2 = vector.shape_cast %1 : vector<16xf32> to vector<16x1xf32>
    %cst_1 = arith.constant 1.280000e+02 : f32
    %3 = vector.broadcast %cst_1 : f32 to vector<16x1xf32>
    %4 = arith.divf %2, %3 : vector<16x1xf32>
    %5 = vector.broadcast %4 : vector<16x1xf32> to vector<16x128xf32>
    %6 = arith.subf %0, %5 : vector<16x128xf32>
    %7 = arith.mulf %6, %6 : vector<16x128xf32>
    %cst_2 = arith.constant dense<0.000000e+00> : vector<16xf32>
    %8 = vector.multi_reduction <add>, %7, %cst_2 [1] : vector<16x128xf32> to vector<16xf32>
    %9 = vector.shape_cast %8 : vector<16xf32> to vector<16x1xf32>
    %cst_3 = arith.constant 1.280000e+02 : f32
    %10 = vector.broadcast %cst_3 : f32 to vector<16x1xf32>
    %11 = arith.divf %9, %10 : vector<16x1xf32>
    %cst_4 = arith.constant 9.99999997E-7 : f32
    %12 = vector.broadcast %cst_4 : f32 to vector<16x1xf32>
    %13 = arith.addf %11, %12 : vector<16x1xf32>
    %14 = math.rsqrt %13 : vector<16x1xf32>
    %15 = vector.broadcast %14 : vector<16x1xf32> to vector<16x128xf32>
    %16 = arith.mulf %6, %15 : vector<16x128xf32>
    %c0_5 = arith.constant 0 : index
    %c0_6 = arith.constant 0 : index
    %17 = vector.load %arg4[%c0_5, %c0_6] : memref<1x128xf32, #tpu.memory_space<vmem>>, vector<1x128xf32>
    %18 = vector.broadcast %17 : vector<1x128xf32> to vector<16x128xf32>
    %19 = arith.mulf %16, %18 : vector<16x128xf32>
    %c0_7 = arith.constant 0 : index
    %c0_8 = arith.constant 0 : index
    %20 = vector.load %arg5[%c0_7, %c0_8] : memref<1x128xf32, #tpu.memory_space<vmem>>, vector<1x128xf32>
    %21 = vector.broadcast %20 : vector<1x128xf32> to vector<16x128xf32>
    %22 = arith.addf %19, %21 : vector<16x128xf32>
    %23 = arith.truncf %22 : vector<16x128xf32> to vector<16x128xbf16>
    %c0_9 = arith.constant 0 : index
    %c0_10 = arith.constant 0 : index
    %24 = vector.load %arg2[%c0_9, %c0_10] : memref<384x128xbf16, #tpu.memory_space<vmem>>, vector<384x128xbf16>
    %cst_11 = arith.constant dense<0.000000e+00> : vector<16x384xf32>
    %25 = tpu.matmul %23, %24, %cst_11 {dimension_numbers = #tpu.dot_dimension_numbers<[1], [1], [0], [0], [0, 0, 1, 0], [], []>} : vector<16x128xbf16>, vector<384x128xbf16>, vector<16x384xf32> -> vector<16x384xf32>
    %c0_12 = arith.constant 0 : index
    %c0_13 = arith.constant 0 : index
    %26 = vector.load %arg3[%c0_12, %c0_13] : memref<1x384xf32, #tpu.memory_space<vmem>>, vector<1x384xf32>
    %27 = vector.broadcast %26 : vector<1x384xf32> to vector<16x384xf32>
    %28 = arith.addf %25, %27 : vector<16x384xf32>
    %29 = arith.truncf %28 : vector<16x384xf32> to vector<16x384xbf16>
    %c0_14 = arith.constant 0 : index
    %c0_15 = arith.constant 0 : index
    %30 = vector.load %arg6[%c0_14, %c0_15] : memref<16x384xbf16, #tpu.memory_space<vmem>>, vector<16x384xbf16>
    tpu.vector_store %arg6[%c0_14, %c0_15], %29 {strides = array<i32>} : memref<16x384xbf16, #tpu.memory_space<vmem>>, vector<16x384xbf16>,
    return
  }
  func.func @transform_0(%arg0: i32) -> (i32, i32) {
    %c0_i32 = arith.constant 0 : i32
    %c0_i32_0 = arith.constant 0 : i32
    return %arg0, %c0_i32 : i32, i32
  }
  func.func @transform_1(%arg0: i32) -> (i32, i32) {
    %c0_i32 = arith.constant 0 : i32
    %c0_i32_0 = arith.constant 0 : i32
    %c0_i32_1 = arith.constant 0 : i32
    return %c0_i32, %c0_i32_0 : i32, i32
  }
  func.func @transform_2(%arg0: i32) -> (i32, i32) {
    %c0_i32 = arith.constant 0 : i32
    %c0_i32_0 = arith.constant 0 : i32
    %c0_i32_1 = arith.constant 0 : i32
    return %c0_i32, %c0_i32_0 : i32, i32
  }
  func.func @transform_3(%arg0: i32) -> (i32, i32) {
    %c0_i32 = arith.constant 0 : i32
    %c0_i32_0 = arith.constant 0 : i32
    %c0_i32_1 = arith.constant 0 : i32
    return %c0_i32, %c0_i32_0 : i32, i32
  }
  func.func @transform_4(%arg0: i32) -> (i32, i32) {
    %c0_i32 = arith.constant 0 : i32
    %c0_i32_0 = arith.constant 0 : i32
    %c0_i32_1 = arith.constant 0 : i32
    return %c0_i32, %c0_i32_0 : i32, i32
  }
  func.func @transform_5(%arg0: i32) -> (i32, i32) {
    %c0_i32 = arith.constant 0 : i32
    %c0_i32_0 = arith.constant 0 : i32
    return %arg0, %c0_i32 : i32, i32
  }
}

module attributes {stable_mosaic.version = 11 : i64} {
  func.func @_linear_kernel(%arg0: i32, %arg1: memref<16x256xbf16, #tpu.memory_space<vmem>>, %arg2: memref<128x256xbf16, #tpu.memory_space<vmem>>, %arg3: memref<1x128xf32, #tpu.memory_space<vmem>>, %arg4: memref<16x128xf32, #tpu.memory_space<vmem>>, %arg5: memref<16x128xf32, #tpu.memory_space<vmem>>) attributes {dimension_semantics = [#tpu.dimension_semantics<parallel>], iteration_bounds = array<i64: 2>, scalar_prefetch = 0 : i64, scratch_operands = 0 : i64, tpu.core_type = #tpu.core_type<tc>, window_params = [{transform_indices = @transform_0, window_bounds = array<i64: 16, 256>}, {pipeline_mode = #tpu.pipeline_mode<synchronous>, transform_indices = @transform_1, window_bounds = array<i64: 128, 256>}, {pipeline_mode = #tpu.pipeline_mode<synchronous>, transform_indices = @transform_2, window_bounds = array<i64: 1, 128>}, {transform_indices = @transform_3, window_bounds = array<i64: 16, 128>}, {transform_indices = @transform_4, window_bounds = array<i64: 16, 128>}]} {
    %c0 = arith.constant 0 : index
    %c0_0 = arith.constant 0 : index
    %0 = vector.load %arg1[%c0, %c0_0] : memref<16x256xbf16, #tpu.memory_space<vmem>>, vector<16x256xbf16>
    %c0_1 = arith.constant 0 : index
    %c0_2 = arith.constant 0 : index
    %1 = vector.load %arg2[%c0_1, %c0_2] : memref<128x256xbf16, #tpu.memory_space<vmem>>, vector<128x256xbf16>
    %cst = arith.constant dense<0.000000e+00> : vector<16x128xf32>
    %2 = tpu.matmul %0, %1, %cst {dimension_numbers = #tpu.dot_dimension_numbers<[1], [1], [0], [0], [0, 0, 1, 0], [], []>} : vector<16x256xbf16>, vector<128x256xbf16>, vector<16x128xf32> -> vector<16x128xf32>
    %c0_3 = arith.constant 0 : index
    %c0_4 = arith.constant 0 : index
    %3 = vector.load %arg3[%c0_3, %c0_4] : memref<1x128xf32, #tpu.memory_space<vmem>>, vector<1x128xf32>
    %4 = vector.broadcast %3 : vector<1x128xf32> to vector<16x128xf32>
    %5 = arith.addf %2, %4 : vector<16x128xf32>
    %c0_5 = arith.constant 0 : index
    %c0_6 = arith.constant 0 : index
    %6 = vector.load %arg4[%c0_5, %c0_6] : memref<16x128xf32, #tpu.memory_space<vmem>>, vector<16x128xf32>
    %7 = arith.addf %5, %6 : vector<16x128xf32>
    %c0_7 = arith.constant 0 : index
    %c0_8 = arith.constant 0 : index
    %8 = vector.load %arg5[%c0_7, %c0_8] : memref<16x128xf32, #tpu.memory_space<vmem>>, vector<16x128xf32>
    tpu.vector_store %arg5[%c0_7, %c0_8], %7 {strides = array<i32>} : memref<16x128xf32, #tpu.memory_space<vmem>>, vector<16x128xf32>,
    return
  }
  func.func @transform_0(%arg0: i32) -> (i32, i32) {
    %c0_i32 = arith.constant 0 : i32
    %c0_i32_0 = arith.constant 0 : i32
    return %arg0, %c0_i32 : i32, i32
  }
  func.func @transform_1(%arg0: i32) -> (i32, i32) {
    %c0_i32 = arith.constant 0 : i32
    %c0_i32_0 = arith.constant 0 : i32
    %c0_i32_1 = arith.constant 0 : i32
    return %c0_i32, %c0_i32_0 : i32, i32
  }
  func.func @transform_2(%arg0: i32) -> (i32, i32) {
    %c0_i32 = arith.constant 0 : i32
    %c0_i32_0 = arith.constant 0 : i32
    %c0_i32_1 = arith.constant 0 : i32
    return %c0_i32, %c0_i32_0 : i32, i32
  }
  func.func @transform_3(%arg0: i32) -> (i32, i32) {
    %c0_i32 = arith.constant 0 : i32
    %c0_i32_0 = arith.constant 0 : i32
    return %arg0, %c0_i32 : i32, i32
  }
  func.func @transform_4(%arg0: i32) -> (i32, i32) {
    %c0_i32 = arith.constant 0 : i32
    %c0_i32_0 = arith.constant 0 : i32
    return %arg0, %c0_i32 : i32, i32
  }
}

module attributes {stable_mosaic.version = 11 : i64} {
  func.func @_linear_kernel(%arg0: i32, %arg1: memref<16x256xbf16, #tpu.memory_space<vmem>>, %arg2: memref<128x256xbf16, #tpu.memory_space<vmem>>, %arg3: memref<1x128xf32, #tpu.memory_space<vmem>>, %arg4: memref<16x128xf32, #tpu.memory_space<vmem>>, %arg5: memref<1x128xf32, #tpu.memory_space<vmem>>, %arg6: memref<1x128xf32, #tpu.memory_space<vmem>>, %arg7: memref<16x128xf32, #tpu.memory_space<vmem>>) attributes {dimension_semantics = [#tpu.dimension_semantics<parallel>], iteration_bounds = array<i64: 2>, scalar_prefetch = 0 : i64, scratch_operands = 0 : i64, tpu.core_type = #tpu.core_type<tc>, window_params = [{transform_indices = @transform_0, window_bounds = array<i64: 16, 256>}, {pipeline_mode = #tpu.pipeline_mode<synchronous>, transform_indices = @transform_1, window_bounds = array<i64: 128, 256>}, {pipeline_mode = #tpu.pipeline_mode<synchronous>, transform_indices = @transform_2, window_bounds = array<i64: 1, 128>}, {transform_indices = @transform_3, window_bounds = array<i64: 16, 128>}, {pipeline_mode = #tpu.pipeline_mode<synchronous>, transform_indices = @transform_4, window_bounds = array<i64: 1, 128>}, {pipeline_mode = #tpu.pipeline_mode<synchronous>, transform_indices = @transform_5, window_bounds = array<i64: 1, 128>}, {transform_indices = @transform_6, window_bounds = array<i64: 16, 128>}]} {
    %c0 = arith.constant 0 : index
    %c0_0 = arith.constant 0 : index
    %0 = vector.load %arg1[%c0, %c0_0] : memref<16x256xbf16, #tpu.memory_space<vmem>>, vector<16x256xbf16>
    %c0_1 = arith.constant 0 : index
    %c0_2 = arith.constant 0 : index
    %1 = vector.load %arg2[%c0_1, %c0_2] : memref<128x256xbf16, #tpu.memory_space<vmem>>, vector<128x256xbf16>
    %cst = arith.constant dense<0.000000e+00> : vector<16x128xf32>
    %2 = tpu.matmul %0, %1, %cst {dimension_numbers = #tpu.dot_dimension_numbers<[1], [1], [0], [0], [0, 0, 1, 0], [], []>} : vector<16x256xbf16>, vector<128x256xbf16>, vector<16x128xf32> -> vector<16x128xf32>
    %c0_3 = arith.constant 0 : index
    %c0_4 = arith.constant 0 : index
    %3 = vector.load %arg3[%c0_3, %c0_4] : memref<1x128xf32, #tpu.memory_space<vmem>>, vector<1x128xf32>
    %4 = vector.broadcast %3 : vector<1x128xf32> to vector<16x128xf32>
    %5 = arith.addf %2, %4 : vector<16x128xf32>
    %c0_5 = arith.constant 0 : index
    %c0_6 = arith.constant 0 : index
    %6 = vector.load %arg4[%c0_5, %c0_6] : memref<16x128xf32, #tpu.memory_space<vmem>>, vector<16x128xf32>
    %7 = arith.addf %5, %6 : vector<16x128xf32>
    %cst_7 = arith.constant dense<0.000000e+00> : vector<16xf32>
    %8 = vector.multi_reduction <add>, %7, %cst_7 [1] : vector<16x128xf32> to vector<16xf32>
    %9 = vector.shape_cast %8 : vector<16xf32> to vector<16x1xf32>
    %cst_8 = arith.constant 1.280000e+02 : f32
    %10 = vector.broadcast %cst_8 : f32 to vector<16x1xf32>
    %11 = arith.divf %9, %10 : vector<16x1xf32>
    %12 = vector.broadcast %11 : vector<16x1xf32> to vector<16x128xf32>
    %13 = arith.subf %7, %12 : vector<16x128xf32>
    %14 = arith.mulf %13, %13 : vector<16x128xf32>
    %cst_9 = arith.constant dense<0.000000e+00> : vector<16xf32>
    %15 = vector.multi_reduction <add>, %14, %cst_9 [1] : vector<16x128xf32> to vector<16xf32>
    %16 = vector.shape_cast %15 : vector<16xf32> to vector<16x1xf32>
    %cst_10 = arith.constant 1.280000e+02 : f32
    %17 = vector.broadcast %cst_10 : f32 to vector<16x1xf32>
    %18 = arith.divf %16, %17 : vector<16x1xf32>
    %cst_11 = arith.constant 9.99999997E-7 : f32
    %19 = vector.broadcast %cst_11 : f32 to vector<16x1xf32>
    %20 = arith.addf %18, %19 : vector<16x1xf32>
    %21 = math.rsqrt %20 : vector<16x1xf32>
    %22 = vector.broadcast %21 : vector<16x1xf32> to vector<16x128xf32>
    %23 = arith.mulf %13, %22 : vector<16x128xf32>
    %c0_12 = arith.constant 0 : index
    %c0_13 = arith.constant 0 : index
    %24 = vector.load %arg5[%c0_12, %c0_13] : memref<1x128xf32, #tpu.memory_space<vmem>>, vector<1x128xf32>
    %25 = vector.broadcast %24 : vector<1x128xf32> to vector<16x128xf32>
    %26 = arith.mulf %23, %25 : vector<16x128xf32>
    %c0_14 = arith.constant 0 : index
    %c0_15 = arith.constant 0 : index
    %27 = vector.load %arg6[%c0_14, %c0_15] : memref<1x128xf32, #tpu.memory_space<vmem>>, vector<1x128xf32>
    %28 = vector.broadcast %27 : vector<1x128xf32> to vector<16x128xf32>
    %29 = arith.addf %26, %28 : vector<16x128xf32>
    %c0_16 = arith.constant 0 : index
    %c0_17 = arith.constant 0 : index
    %30 = vector.load %arg7[%c0_16, %c0_17] : memref<16x128xf32, #tpu.memory_space<vmem>>, vector<16x128xf32>
    tpu.vector_store %arg7[%c0_16, %c0_17], %29 {strides = array<i32>} : memref<16x128xf32, #tpu.memory_space<vmem>>, vector<16x128xf32>,
    return
  }
  func.func @transform_0(%arg0: i32) -> (i32, i32) {
    %c0_i32 = arith.constant 0 : i32
    %c0_i32_0 = arith.constant 0 : i32
    return %arg0, %c0_i32 : i32, i32
  }
  func.func @transform_1(%arg0: i32) -> (i32, i32) {
    %c0_i32 = arith.constant 0 : i32
    %c0_i32_0 = arith.constant 0 : i32
    %c0_i32_1 = arith.constant 0 : i32
    return %c0_i32, %c0_i32_0 : i32, i32
  }
  func.func @transform_2(%arg0: i32) -> (i32, i32) {
    %c0_i32 = arith.constant 0 : i32
    %c0_i32_0 = arith.constant 0 : i32
    %c0_i32_1 = arith.constant 0 : i32
    return %c0_i32, %c0_i32_0 : i32, i32
  }
  func.func @transform_3(%arg0: i32) -> (i32, i32) {
    %c0_i32 = arith.constant 0 : i32
    %c0_i32_0 = arith.constant 0 : i32
    return %arg0, %c0_i32 : i32, i32
  }
  func.func @transform_4(%arg0: i32) -> (i32, i32) {
    %c0_i32 = arith.constant 0 : i32
    %c0_i32_0 = arith.constant 0 : i32
    %c0_i32_1 = arith.constant 0 : i32
    return %c0_i32, %c0_i32_0 : i32, i32
  }
  func.func @transform_5(%arg0: i32) -> (i32, i32) {
    %c0_i32 = arith.constant 0 : i32
    %c0_i32_0 = arith.constant 0 : i32
    %c0_i32_1 = arith.constant 0 : i32
    return %c0_i32, %c0_i32_0 : i32, i32
  }
  func.func @transform_6(%arg0: i32) -> (i32, i32) {
    %c0_i32 = arith.constant 0 : i32
    %c0_i32_0 = arith.constant 0 : i32
    return %arg0, %c0_i32 : i32, i32
  }
}

module attributes {stable_mosaic.version = 11 : i64} {
  func.func @_linear_kernel(%arg0: i32, %arg1: memref<16x128xf32, #tpu.memory_space<vmem>>, %arg2: memref<256x128xbf16, #tpu.memory_space<vmem>>, %arg3: memref<1x256xf32, #tpu.memory_space<vmem>>, %arg4: memref<16x256xbf16, #tpu.memory_space<vmem>>) attributes {dimension_semantics = [#tpu.dimension_semantics<parallel>], iteration_bounds = array<i64: 2>, scalar_prefetch = 0 : i64, scratch_operands = 0 : i64, tpu.core_type = #tpu.core_type<tc>, window_params = [{transform_indices = @transform_0, window_bounds = array<i64: 16, 128>}, {pipeline_mode = #tpu.pipeline_mode<synchronous>, transform_indices = @transform_1, window_bounds = array<i64: 256, 128>}, {pipeline_mode = #tpu.pipeline_mode<synchronous>, transform_indices = @transform_2, window_bounds = array<i64: 1, 256>}, {transform_indices = @transform_3, window_bounds = array<i64: 16, 256>}]} {
    %c0 = arith.constant 0 : index
    %c0_0 = arith.constant 0 : index
    %0 = vector.load %arg1[%c0, %c0_0] : memref<16x128xf32, #tpu.memory_space<vmem>>, vector<16x128xf32>
    %1 = arith.truncf %0 : vector<16x128xf32> to vector<16x128xbf16>
    %c0_1 = arith.constant 0 : index
    %c0_2 = arith.constant 0 : index
    %2 = vector.load %arg2[%c0_1, %c0_2] : memref<256x128xbf16, #tpu.memory_space<vmem>>, vector<256x128xbf16>
    %cst = arith.constant dense<0.000000e+00> : vector<16x256xf32>
    %3 = tpu.matmul %1, %2, %cst {dimension_numbers = #tpu.dot_dimension_numbers<[1], [1], [0], [0], [0, 0, 1, 0], [], []>} : vector<16x128xbf16>, vector<256x128xbf16>, vector<16x256xf32> -> vector<16x256xf32>
    %c0_3 = arith.constant 0 : index
    %c0_4 = arith.constant 0 : index
    %4 = vector.load %arg3[%c0_3, %c0_4] : memref<1x256xf32, #tpu.memory_space<vmem>>, vector<1x256xf32>
    %5 = vector.broadcast %4 : vector<1x256xf32> to vector<16x256xf32>
    %6 = arith.addf %3, %5 : vector<16x256xf32>
    %7 = arith.truncf %6 : vector<16x256xf32> to vector<16x256xbf16>
    %c0_5 = arith.constant 0 : index
    %c0_6 = arith.constant 0 : index
    %8 = vector.load %arg4[%c0_5, %c0_6] : memref<16x256xbf16, #tpu.memory_space<vmem>>, vector<16x256xbf16>
    tpu.vector_store %arg4[%c0_5, %c0_6], %7 {strides = array<i32>} : memref<16x256xbf16, #tpu.memory_space<vmem>>, vector<16x256xbf16>,
    return
  }
  func.func @transform_0(%arg0: i32) -> (i32, i32) {
    %c0_i32 = arith.constant 0 : i32
    %c0_i32_0 = arith.constant 0 : i32
    return %arg0, %c0_i32 : i32, i32
  }
  func.func @transform_1(%arg0: i32) -> (i32, i32) {
    %c0_i32 = arith.constant 0 : i32
    %c0_i32_0 = arith.constant 0 : i32
    %c0_i32_1 = arith.constant 0 : i32
    return %c0_i32, %c0_i32_0 : i32, i32
  }
  func.func @transform_2(%arg0: i32) -> (i32, i32) {
    %c0_i32 = arith.constant 0 : i32
    %c0_i32_0 = arith.constant 0 : i32
    %c0_i32_1 = arith.constant 0 : i32
    return %c0_i32, %c0_i32_0 : i32, i32
  }
  func.func @transform_3(%arg0: i32) -> (i32, i32) {
    %c0_i32 = arith.constant 0 : i32
    %c0_i32_0 = arith.constant 0 : i32
    return %arg0, %c0_i32 : i32, i32
  }
}

module attributes {stable_mosaic.version = 11 : i64} {
  func.func @_linear_kernel(%arg0: i32, %arg1: memref<16x128xf32, #tpu.memory_space<vmem>>, %arg2: memref<256x128xbf16, #tpu.memory_space<vmem>>, %arg3: memref<1x256xf32, #tpu.memory_space<vmem>>, %arg4: memref<1x128xf32, #tpu.memory_space<vmem>>, %arg5: memref<1x128xf32, #tpu.memory_space<vmem>>, %arg6: memref<16x256xbf16, #tpu.memory_space<vmem>>) attributes {dimension_semantics = [#tpu.dimension_semantics<parallel>], iteration_bounds = array<i64: 1>, scalar_prefetch = 0 : i64, scratch_operands = 0 : i64, tpu.core_type = #tpu.core_type<tc>, window_params = [{transform_indices = @transform_0, window_bounds = array<i64: 16, 128>}, {pipeline_mode = #tpu.pipeline_mode<synchronous>, transform_indices = @transform_1, window_bounds = array<i64: 256, 128>}, {pipeline_mode = #tpu.pipeline_mode<synchronous>, transform_indices = @transform_2, window_bounds = array<i64: 1, 256>}, {pipeline_mode = #tpu.pipeline_mode<synchronous>, transform_indices = @transform_3, window_bounds = array<i64: 1, 128>}, {pipeline_mode = #tpu.pipeline_mode<synchronous>, transform_indices = @transform_4, window_bounds = array<i64: 1, 128>}, {transform_indices = @transform_5, window_bounds = array<i64: 16, 256>}]} {
    %c0 = arith.constant 0 : index
    %c0_0 = arith.constant 0 : index
    %0 = vector.load %arg1[%c0, %c0_0] : memref<16x128xf32, #tpu.memory_space<vmem>>, vector<16x128xf32>
    %cst = arith.constant dense<0.000000e+00> : vector<16xf32>
    %1 = vector.multi_reduction <add>, %0, %cst [1] : vector<16x128xf32> to vector<16xf32>
    %2 = vector.shape_cast %1 : vector<16xf32> to vector<16x1xf32>
    %cst_1 = arith.constant 1.280000e+02 : f32
    %3 = vector.broadcast %cst_1 : f32 to vector<16x1xf32>
    %4 = arith.divf %2, %3 : vector<16x1xf32>
    %5 = vector.broadcast %4 : vector<16x1xf32> to vector<16x128xf32>
    %6 = arith.subf %0, %5 : vector<16x128xf32>
    %7 = arith.mulf %6, %6 : vector<16x128xf32>
    %cst_2 = arith.constant dense<0.000000e+00> : vector<16xf32>
    %8 = vector.multi_reduction <add>, %7, %cst_2 [1] : vector<16x128xf32> to vector<16xf32>
    %9 = vector.shape_cast %8 : vector<16xf32> to vector<16x1xf32>
    %cst_3 = arith.constant 1.280000e+02 : f32
    %10 = vector.broadcast %cst_3 : f32 to vector<16x1xf32>
    %11 = arith.divf %9, %10 : vector<16x1xf32>
    %cst_4 = arith.constant 9.99999997E-7 : f32
    %12 = vector.broadcast %cst_4 : f32 to vector<16x1xf32>
    %13 = arith.addf %11, %12 : vector<16x1xf32>
    %14 = math.rsqrt %13 : vector<16x1xf32>
    %15 = vector.broadcast %14 : vector<16x1xf32> to vector<16x128xf32>
    %16 = arith.mulf %6, %15 : vector<16x128xf32>
    %c0_5 = arith.constant 0 : index
    %c0_6 = arith.constant 0 : index
    %17 = vector.load %arg4[%c0_5, %c0_6] : memref<1x128xf32, #tpu.memory_space<vmem>>, vector<1x128xf32>
    %18 = vector.broadcast %17 : vector<1x128xf32> to vector<16x128xf32>
    %19 = arith.mulf %16, %18 : vector<16x128xf32>
    %c0_7 = arith.constant 0 : index
    %c0_8 = arith.constant 0 : index
    %20 = vector.load %arg5[%c0_7, %c0_8] : memref<1x128xf32, #tpu.memory_space<vmem>>, vector<1x128xf32>
    %21 = vector.broadcast %20 : vector<1x128xf32> to vector<16x128xf32>
    %22 = arith.addf %19, %21 : vector<16x128xf32>
    %23 = arith.truncf %22 : vector<16x128xf32> to vector<16x128xbf16>
    %c0_9 = arith.constant 0 : index
    %c0_10 = arith.constant 0 : index
    %24 = vector.load %arg2[%c0_9, %c0_10] : memref<256x128xbf16, #tpu.memory_space<vmem>>, vector<256x128xbf16>
    %cst_11 = arith.constant dense<0.000000e+00> : vector<16x256xf32>
    %25 = tpu.matmul %23, %24, %cst_11 {dimension_numbers = #tpu.dot_dimension_numbers<[1], [1], [0], [0], [0, 0, 1, 0], [], []>} : vector<16x128xbf16>, vector<256x128xbf16>, vector<16x256xf32> -> vector<16x256xf32>
    %c0_12 = arith.constant 0 : index
    %c0_13 = arith.constant 0 : index
    %26 = vector.load %arg3[%c0_12, %c0_13] : memref<1x256xf32, #tpu.memory_space<vmem>>, vector<1x256xf32>
    %27 = vector.broadcast %26 : vector<1x256xf32> to vector<16x256xf32>
    %28 = arith.addf %25, %27 : vector<16x256xf32>
    %cst_14 = arith.constant 0.000000e+00 : f32
    %29 = vector.broadcast %cst_14 : f32 to vector<16x256xf32>
    %30 = arith.maximumf %28, %29 : vector<16x256xf32>
    %31 = arith.truncf %30 : vector<16x256xf32> to vector<16x256xbf16>
    %c0_15 = arith.constant 0 : index
    %c0_16 = arith.constant 0 : index
    %32 = vector.load %arg6[%c0_15, %c0_16] : memref<16x256xbf16, #tpu.memory_space<vmem>>, vector<16x256xbf16>
    tpu.vector_store %arg6[%c0_15, %c0_16], %31 {strides = array<i32>} : memref<16x256xbf16, #tpu.memory_space<vmem>>, vector<16x256xbf16>,
    return
  }
  func.func @transform_0(%arg0: i32) -> (i32, i32) {
    %c0_i32 = arith.constant 0 : i32
    %c0_i32_0 = arith.constant 0 : i32
    return %arg0, %c0_i32 : i32, i32
  }
  func.func @transform_1(%arg0: i32) -> (i32, i32) {
    %c0_i32 = arith.constant 0 : i32
    %c0_i32_0 = arith.constant 0 : i32
    %c0_i32_1 = arith.constant 0 : i32
    return %c0_i32, %c0_i32_0 : i32, i32
  }
  func.func @transform_2(%arg0: i32) -> (i32, i32) {
    %c0_i32 = arith.constant 0 : i32
    %c0_i32_0 = arith.constant 0 : i32
    %c0_i32_1 = arith.constant 0 : i32
    return %c0_i32, %c0_i32_0 : i32, i32
  }
  func.func @transform_3(%arg0: i32) -> (i32, i32) {
    %c0_i32 = arith.constant 0 : i32
    %c0_i32_0 = arith.constant 0 : i32
    %c0_i32_1 = arith.constant 0 : i32
    return %c0_i32, %c0_i32_0 : i32, i32
  }
  func.func @transform_4(%arg0: i32) -> (i32, i32) {
    %c0_i32 = arith.constant 0 : i32
    %c0_i32_0 = arith.constant 0 : i32
    %c0_i32_1 = arith.constant 0 : i32
    return %c0_i32, %c0_i32_0 : i32, i32
  }
  func.func @transform_5(%arg0: i32) -> (i32, i32) {
    %c0_i32 = arith.constant 0 : i32
    %c0_i32_0 = arith.constant 0 : i32
    return %arg0, %c0_i32 : i32, i32
  }
}

module attributes {stable_mosaic.version = 11 : i64} {
  func.func @_attn_fused_kernel(%arg0: i32, %arg1: memref<1x4x8x32xbf16, #tpu.memory_space<vmem>>, %arg2: memref<1x4x128x32xbf16, #tpu.memory_space<vmem>>, %arg3: memref<1x4x128x32xbf16, #tpu.memory_space<vmem>>, %arg4: memref<1x1x128xf32, #tpu.memory_space<vmem>>, %arg5: memref<1x8x128xf32, #tpu.memory_space<vmem>>, %arg6: memref<4x128x32xbf16, #tpu.memory_space<vmem>>, %arg7: memref<1x128xf32, #tpu.memory_space<vmem>>, %arg8: memref<1x8x128xf32, #tpu.memory_space<vmem>>) attributes {dimension_semantics = [#tpu.dimension_semantics<parallel>], iteration_bounds = array<i64: 2>, scalar_prefetch = 0 : i64, scratch_operands = 0 : i64, tpu.core_type = #tpu.core_type<tc>, window_params = [{transform_indices = @transform_0, window_bounds = array<i64: 1, 4, 8, 32>}, {transform_indices = @transform_1, window_bounds = array<i64: 1, 4, 128, 32>}, {transform_indices = @transform_2, window_bounds = array<i64: 1, 4, 128, 32>}, {transform_indices = @transform_3, window_bounds = array<i64: 1, 1, 128>}, {transform_indices = @transform_4, window_bounds = array<i64: 1, 8, 128>}, {pipeline_mode = #tpu.pipeline_mode<synchronous>, transform_indices = @transform_5, window_bounds = array<i64: 4, 128, 32>}, {pipeline_mode = #tpu.pipeline_mode<synchronous>, transform_indices = @transform_6, window_bounds = array<i64: 1, 128>}, {transform_indices = @transform_7, window_bounds = array<i64: 1, 8, 128>}]} {
    %c0 = arith.constant 0 : index
    %c0_0 = arith.constant 0 : index
    %c0_1 = arith.constant 0 : index
    %c0_2 = arith.constant 0 : index
    %0 = vector.load %arg1[%c0, %c0_0, %c0_1, %c0_2] : memref<1x4x8x32xbf16, #tpu.memory_space<vmem>>, vector<1x4x8x32xbf16>
    %1 = vector.shape_cast %0 : vector<1x4x8x32xbf16> to vector<4x8x32xbf16>
    %c0_3 = arith.constant 0 : index
    %c0_4 = arith.constant 0 : index
    %c0_5 = arith.constant 0 : index
    %c0_6 = arith.constant 0 : index
    %2 = vector.load %arg2[%c0_3, %c0_4, %c0_5, %c0_6] : memref<1x4x128x32xbf16, #tpu.memory_space<vmem>>, vector<1x4x128x32xbf16>
    %3 = vector.shape_cast %2 : vector<1x4x128x32xbf16> to vector<4x128x32xbf16>
    %c0_7 = arith.constant 0 : index
    %c0_8 = arith.constant 0 : index
    %c0_9 = arith.constant 0 : index
    %c0_10 = arith.constant 0 : index
    %4 = vector.load %arg3[%c0_7, %c0_8, %c0_9, %c0_10] : memref<1x4x128x32xbf16, #tpu.memory_space<vmem>>, vector<1x4x128x32xbf16>
    %5 = vector.shape_cast %4 : vector<1x4x128x32xbf16> to vector<4x128x32xbf16>
    %cst = arith.constant dense<0.000000e+00> : vector<4x8x128xf32>
    %6 = tpu.matmul %1, %3, %cst {dimension_numbers = #tpu.dot_dimension_numbers<[2], [2], [1], [1], [0, 0, 0, 1, 1, 1], [0], [0]>} : vector<4x8x32xbf16>, vector<4x128x32xbf16>, vector<4x8x128xf32> -> vector<4x8x128xf32>
    %cst_11 = arith.constant 0.176776692 : f32
    %7 = vector.broadcast %cst_11 : f32 to vector<4x8x128xf32>
    %8 = arith.mulf %6, %7 : vector<4x8x128xf32>
    %c0_12 = arith.constant 0 : index
    %c0_13 = arith.constant 0 : index
    %c0_14 = arith.constant 0 : index
    %9 = vector.load %arg4[%c0_12, %c0_13, %c0_14] : memref<1x1x128xf32, #tpu.memory_space<vmem>>, vector<1x1x128xf32>
    %10 = vector.broadcast %9 : vector<1x1x128xf32> to vector<4x8x128xf32>
    %11 = arith.addf %8, %10 : vector<4x8x128xf32>
    %cst_15 = arith.constant dense<0xFF800000> : vector<4x8xf32>
    %12 = vector.multi_reduction <maximumf>, %11, %cst_15 [2] : vector<4x8x128xf32> to vector<4x8xf32>
    %13 = vector.shape_cast %12 : vector<4x8xf32> to vector<4x8x1xf32>
    %14 = vector.broadcast %13 : vector<4x8x1xf32> to vector<4x8x128xf32>
    %15 = arith.subf %11, %14 : vector<4x8x128xf32>
    %16 = math.exp %15 : vector<4x8x128xf32>
    %cst_16 = arith.constant dense<0.000000e+00> : vector<4x8xf32>
    %17 = vector.multi_reduction <add>, %16, %cst_16 [2] : vector<4x8x128xf32> to vector<4x8xf32>
    %18 = vector.shape_cast %17 : vector<4x8xf32> to vector<4x8x1xf32>
    %19 = arith.truncf %16 : vector<4x8x128xf32> to vector<4x8x128xbf16>
    %cst_17 = arith.constant dense<0.000000e+00> : vector<4x8x32xf32>
    %20 = tpu.matmul %19, %5, %cst_17 {dimension_numbers = #tpu.dot_dimension_numbers<[2], [1], [1], [2], [0, 0, 0, 1, 1, 2], [0], [0]>} : vector<4x8x128xbf16>, vector<4x128x32xbf16>, vector<4x8x32xf32> -> vector<4x8x32xf32>
    %21 = tpu.reciprocal %18 {approx = true} : vector<4x8x1xf32> -> vector<4x8x1xf32>
    %22 = vector.broadcast %21 : vector<4x8x1xf32> to vector<4x8x32xf32>
    %23 = arith.mulf %20, %22 : vector<4x8x32xf32>
    %c0_18 = arith.constant 0 : index
    %c0_19 = arith.constant 0 : index
    %c0_20 = arith.constant 0 : index
    %24 = vector.load %arg6[%c0_18, %c0_19, %c0_20] : memref<4x128x32xbf16, #tpu.memory_space<vmem>>, vector<4x128x32xbf16>
    %c0_21 = arith.constant 0 : index
    %c0_22 = arith.constant 0 : index
    %c0_23 = arith.constant 0 : index
    %25 = vector.load %arg5[%c0_21, %c0_22, %c0_23] : memref<1x8x128xf32, #tpu.memory_space<vmem>>, vector<1x8x128xf32>
    %26 = vector.shape_cast %25 : vector<1x8x128xf32> to vector<8x128xf32>
    %c0_24 = arith.constant 0 : index
    %c0_25 = arith.constant 0 : index
    %27 = vector.load %arg7[%c0_24, %c0_25] : memref<1x128xf32, #tpu.memory_space<vmem>>, vector<1x128xf32>
    %28 = vector.broadcast %27 : vector<1x128xf32> to vector<8x128xf32>
    %29 = arith.addf %26, %28 : vector<8x128xf32>
    %30 = vector.extract_strided_slice %23 {offsets = [0, 0, 0], sizes = [1, 8, 32], strides = [1, 1, 1]} : vector<4x8x32xf32> to vector<1x8x32xf32>
    %31 = vector.shape_cast %30 : vector<1x8x32xf32> to vector<8x32xf32>
    %32 = arith.truncf %31 : vector<8x32xf32> to vector<8x32xbf16>
    %33 = vector.extract_strided_slice %24 {offsets = [0, 0, 0], sizes = [1, 128, 32], strides = [1, 1, 1]} : vector<4x128x32xbf16> to vector<1x128x32xbf16>
    %34 = vector.shape_cast %33 : vector<1x128x32xbf16> to vector<128x32xbf16>
    %cst_26 = arith.constant dense<0.000000e+00> : vector<8x128xf32>
    %35 = tpu.matmul %32, %34, %cst_26 {dimension_numbers = #tpu.dot_dimension_numbers<[1], [1], [0], [0], [0, 0, 1, 0], [], []>} : vector<8x32xbf16>, vector<128x32xbf16>, vector<8x128xf32> -> vector<8x128xf32>
    %36 = arith.addf %29, %35 : vector<8x128xf32>
    %37 = vector.extract_strided_slice %23 {offsets = [1, 0, 0], sizes = [1, 8, 32], strides = [1, 1, 1]} : vector<4x8x32xf32> to vector<1x8x32xf32>
    %38 = vector.shape_cast %37 : vector<1x8x32xf32> to vector<8x32xf32>
    %39 = arith.truncf %38 : vector<8x32xf32> to vector<8x32xbf16>
    %40 = vector.extract_strided_slice %24 {offsets = [1, 0, 0], sizes = [1, 128, 32], strides = [1, 1, 1]} : vector<4x128x32xbf16> to vector<1x128x32xbf16>
    %41 = vector.shape_cast %40 : vector<1x128x32xbf16> to vector<128x32xbf16>
    %cst_27 = arith.constant dense<0.000000e+00> : vector<8x128xf32>
    %42 = tpu.matmul %39, %41, %cst_27 {dimension_numbers = #tpu.dot_dimension_numbers<[1], [1], [0], [0], [0, 0, 1, 0], [], []>} : vector<8x32xbf16>, vector<128x32xbf16>, vector<8x128xf32> -> vector<8x128xf32>
    %43 = arith.addf %36, %42 : vector<8x128xf32>
    %44 = vector.extract_strided_slice %23 {offsets = [2, 0, 0], sizes = [1, 8, 32], strides = [1, 1, 1]} : vector<4x8x32xf32> to vector<1x8x32xf32>
    %45 = vector.shape_cast %44 : vector<1x8x32xf32> to vector<8x32xf32>
    %46 = arith.truncf %45 : vector<8x32xf32> to vector<8x32xbf16>
    %47 = vector.extract_strided_slice %24 {offsets = [2, 0, 0], sizes = [1, 128, 32], strides = [1, 1, 1]} : vector<4x128x32xbf16> to vector<1x128x32xbf16>
    %48 = vector.shape_cast %47 : vector<1x128x32xbf16> to vector<128x32xbf16>
    %cst_28 = arith.constant dense<0.000000e+00> : vector<8x128xf32>
    %49 = tpu.matmul %46, %48, %cst_28 {dimension_numbers = #tpu.dot_dimension_numbers<[1], [1], [0], [0], [0, 0, 1, 0], [], []>} : vector<8x32xbf16>, vector<128x32xbf16>, vector<8x128xf32> -> vector<8x128xf32>
    %50 = arith.addf %43, %49 : vector<8x128xf32>
    %51 = vector.extract_strided_slice %23 {offsets = [3, 0, 0], sizes = [1, 8, 32], strides = [1, 1, 1]} : vector<4x8x32xf32> to vector<1x8x32xf32>
    %52 = vector.shape_cast %51 : vector<1x8x32xf32> to vector<8x32xf32>
    %53 = arith.truncf %52 : vector<8x32xf32> to vector<8x32xbf16>
    %54 = vector.extract_strided_slice %24 {offsets = [3, 0, 0], sizes = [1, 128, 32], strides = [1, 1, 1]} : vector<4x128x32xbf16> to vector<1x128x32xbf16>
    %55 = vector.shape_cast %54 : vector<1x128x32xbf16> to vector<128x32xbf16>
    %cst_29 = arith.constant dense<0.000000e+00> : vector<8x128xf32>
    %56 = tpu.matmul %53, %55, %cst_29 {dimension_numbers = #tpu.dot_dimension_numbers<[1], [1], [0], [0], [0, 0, 1, 0], [], []>} : vector<8x32xbf16>, vector<128x32xbf16>, vector<8x128xf32> -> vector<8x128xf32>
    %57 = arith.addf %50, %56 : vector<8x128xf32>
    %c0_30 = arith.constant 0 : index
    %c0_31 = arith.constant 0 : index
    %c0_32 = arith.constant 0 : index
    %58 = vector.load %arg8[%c0_30, %c0_31, %c0_32] : memref<1x8x128xf32, #tpu.memory_space<vmem>>, vector<1x8x128xf32>
    %59 = vector.shape_cast %58 : vector<1x8x128xf32> to vector<8x128xf32>
    %60 = vector.shape_cast %57 : vector<8x128xf32> to vector<1x8x128xf32>
    tpu.vector_store %arg8[%c0_30, %c0_31, %c0_32], %60 {strides = array<i32>} : memref<1x8x128xf32, #tpu.memory_space<vmem>>, vector<1x8x128xf32>,
    return
  }
  func.func @transform_0(%arg0: i32) -> (i32, i32, i32, i32) {
    %c0_i32 = arith.constant 0 : i32
    %c0_i32_0 = arith.constant 0 : i32
    %c0_i32_1 = arith.constant 0 : i32
    %c0_i32_2 = arith.constant 0 : i32
    return %arg0, %c0_i32, %c0_i32_0, %c0_i32_1 : i32, i32, i32, i32
  }
  func.func @transform_1(%arg0: i32) -> (i32, i32, i32, i32) {
    %c0_i32 = arith.constant 0 : i32
    %c0_i32_0 = arith.constant 0 : i32
    %c0_i32_1 = arith.constant 0 : i32
    %c0_i32_2 = arith.constant 0 : i32
    return %arg0, %c0_i32, %c0_i32_0, %c0_i32_1 : i32, i32, i32, i32
  }
  func.func @transform_2(%arg0: i32) -> (i32, i32, i32, i32) {
    %c0_i32 = arith.constant 0 : i32
    %c0_i32_0 = arith.constant 0 : i32
    %c0_i32_1 = arith.constant 0 : i32
    %c0_i32_2 = arith.constant 0 : i32
    return %arg0, %c0_i32, %c0_i32_0, %c0_i32_1 : i32, i32, i32, i32
  }
  func.func @transform_3(%arg0: i32) -> (i32, i32, i32) {
    %c0_i32 = arith.constant 0 : i32
    %c0_i32_0 = arith.constant 0 : i32
    %c0_i32_1 = arith.constant 0 : i32
    return %arg0, %c0_i32, %c0_i32_0 : i32, i32, i32
  }
  func.func @transform_4(%arg0: i32) -> (i32, i32, i32) {
    %c0_i32 = arith.constant 0 : i32
    %c0_i32_0 = arith.constant 0 : i32
    %c0_i32_1 = arith.constant 0 : i32
    return %arg0, %c0_i32, %c0_i32_0 : i32, i32, i32
  }
  func.func @transform_5(%arg0: i32) -> (i32, i32, i32) {
    %c0_i32 = arith.constant 0 : i32
    %c0_i32_0 = arith.constant 0 : i32
    %c0_i32_1 = arith.constant 0 : i32
    %c0_i32_2 = arith.constant 0 : i32
    return %c0_i32, %c0_i32_0, %c0_i32_1 : i32, i32, i32
  }
  func.func @transform_6(%arg0: i32) -> (i32, i32) {
    %c0_i32 = arith.constant 0 : i32
    %c0_i32_0 = arith.constant 0 : i32
    %c0_i32_1 = arith.constant 0 : i32
    return %c0_i32, %c0_i32_0 : i32, i32
  }
  func.func @transform_7(%arg0: i32) -> (i32, i32, i32) {
    %c0_i32 = arith.constant 0 : i32
    %c0_i32_0 = arith.constant 0 : i32
    %c0_i32_1 = arith.constant 0 : i32
    return %arg0, %c0_i32, %c0_i32_0 : i32, i32, i32
  }
}

module attributes {stable_mosaic.version = 11 : i64} {
  func.func @_linear_kernel(%arg0: i32, %arg1: memref<16x256xbf16, #tpu.memory_space<vmem>>, %arg2: memref<128x256xbf16, #tpu.memory_space<vmem>>, %arg3: memref<1x128xf32, #tpu.memory_space<vmem>>, %arg4: memref<16x128xf32, #tpu.memory_space<vmem>>, %arg5: memref<16x128xf32, #tpu.memory_space<vmem>>) attributes {dimension_semantics = [#tpu.dimension_semantics<parallel>], iteration_bounds = array<i64: 1>, scalar_prefetch = 0 : i64, scratch_operands = 0 : i64, tpu.core_type = #tpu.core_type<tc>, window_params = [{transform_indices = @transform_0, window_bounds = array<i64: 16, 256>}, {pipeline_mode = #tpu.pipeline_mode<synchronous>, transform_indices = @transform_1, window_bounds = array<i64: 128, 256>}, {pipeline_mode = #tpu.pipeline_mode<synchronous>, transform_indices = @transform_2, window_bounds = array<i64: 1, 128>}, {transform_indices = @transform_3, window_bounds = array<i64: 16, 128>}, {transform_indices = @transform_4, window_bounds = array<i64: 16, 128>}]} {
    %c0 = arith.constant 0 : index
    %c0_0 = arith.constant 0 : index
    %0 = vector.load %arg1[%c0, %c0_0] : memref<16x256xbf16, #tpu.memory_space<vmem>>, vector<16x256xbf16>
    %c0_1 = arith.constant 0 : index
    %c0_2 = arith.constant 0 : index
    %1 = vector.load %arg2[%c0_1, %c0_2] : memref<128x256xbf16, #tpu.memory_space<vmem>>, vector<128x256xbf16>
    %cst = arith.constant dense<0.000000e+00> : vector<16x128xf32>
    %2 = tpu.matmul %0, %1, %cst {dimension_numbers = #tpu.dot_dimension_numbers<[1], [1], [0], [0], [0, 0, 1, 0], [], []>} : vector<16x256xbf16>, vector<128x256xbf16>, vector<16x128xf32> -> vector<16x128xf32>
    %c0_3 = arith.constant 0 : index
    %c0_4 = arith.constant 0 : index
    %3 = vector.load %arg3[%c0_3, %c0_4] : memref<1x128xf32, #tpu.memory_space<vmem>>, vector<1x128xf32>
    %4 = vector.broadcast %3 : vector<1x128xf32> to vector<16x128xf32>
    %5 = arith.addf %2, %4 : vector<16x128xf32>
    %c0_5 = arith.constant 0 : index
    %c0_6 = arith.constant 0 : index
    %6 = vector.load %arg4[%c0_5, %c0_6] : memref<16x128xf32, #tpu.memory_space<vmem>>, vector<16x128xf32>
    %7 = arith.addf %5, %6 : vector<16x128xf32>
    %c0_7 = arith.constant 0 : index
    %c0_8 = arith.constant 0 : index
    %8 = vector.load %arg5[%c0_7, %c0_8] : memref<16x128xf32, #tpu.memory_space<vmem>>, vector<16x128xf32>
    tpu.vector_store %arg5[%c0_7, %c0_8], %7 {strides = array<i32>} : memref<16x128xf32, #tpu.memory_space<vmem>>, vector<16x128xf32>,
    return
  }
  func.func @transform_0(%arg0: i32) -> (i32, i32) {
    %c0_i32 = arith.constant 0 : i32
    %c0_i32_0 = arith.constant 0 : i32
    return %arg0, %c0_i32 : i32, i32
  }
  func.func @transform_1(%arg0: i32) -> (i32, i32) {
    %c0_i32 = arith.constant 0 : i32
    %c0_i32_0 = arith.constant 0 : i32
    %c0_i32_1 = arith.constant 0 : i32
    return %c0_i32, %c0_i32_0 : i32, i32
  }
  func.func @transform_2(%arg0: i32) -> (i32, i32) {
    %c0_i32 = arith.constant 0 : i32
    %c0_i32_0 = arith.constant 0 : i32
    %c0_i32_1 = arith.constant 0 : i32
    return %c0_i32, %c0_i32_0 : i32, i32
  }
  func.func @transform_3(%arg0: i32) -> (i32, i32) {
    %c0_i32 = arith.constant 0 : i32
    %c0_i32_0 = arith.constant 0 : i32
    return %arg0, %c0_i32 : i32, i32
  }
  func.func @transform_4(%arg0: i32) -> (i32, i32) {
    %c0_i32 = arith.constant 0 : i32
    %c0_i32_0 = arith.constant 0 : i32
    return %arg0, %c0_i32 : i32, i32
  }
}

module attributes {stable_mosaic.version = 11 : i64} {
  func.func @_linear_kernel(%arg0: i32, %arg1: memref<16x256xbf16, #tpu.memory_space<vmem>>, %arg2: memref<128x256xbf16, #tpu.memory_space<vmem>>, %arg3: memref<1x128xf32, #tpu.memory_space<vmem>>, %arg4: memref<16x128xf32, #tpu.memory_space<vmem>>, %arg5: memref<1x128xf32, #tpu.memory_space<vmem>>, %arg6: memref<1x128xf32, #tpu.memory_space<vmem>>, %arg7: memref<16x128xf32, #tpu.memory_space<vmem>>) attributes {dimension_semantics = [#tpu.dimension_semantics<parallel>], iteration_bounds = array<i64: 1>, scalar_prefetch = 0 : i64, scratch_operands = 0 : i64, tpu.core_type = #tpu.core_type<tc>, window_params = [{transform_indices = @transform_0, window_bounds = array<i64: 16, 256>}, {pipeline_mode = #tpu.pipeline_mode<synchronous>, transform_indices = @transform_1, window_bounds = array<i64: 128, 256>}, {pipeline_mode = #tpu.pipeline_mode<synchronous>, transform_indices = @transform_2, window_bounds = array<i64: 1, 128>}, {transform_indices = @transform_3, window_bounds = array<i64: 16, 128>}, {pipeline_mode = #tpu.pipeline_mode<synchronous>, transform_indices = @transform_4, window_bounds = array<i64: 1, 128>}, {pipeline_mode = #tpu.pipeline_mode<synchronous>, transform_indices = @transform_5, window_bounds = array<i64: 1, 128>}, {transform_indices = @transform_6, window_bounds = array<i64: 16, 128>}]} {
    %c0 = arith.constant 0 : index
    %c0_0 = arith.constant 0 : index
    %0 = vector.load %arg1[%c0, %c0_0] : memref<16x256xbf16, #tpu.memory_space<vmem>>, vector<16x256xbf16>
    %c0_1 = arith.constant 0 : index
    %c0_2 = arith.constant 0 : index
    %1 = vector.load %arg2[%c0_1, %c0_2] : memref<128x256xbf16, #tpu.memory_space<vmem>>, vector<128x256xbf16>
    %cst = arith.constant dense<0.000000e+00> : vector<16x128xf32>
    %2 = tpu.matmul %0, %1, %cst {dimension_numbers = #tpu.dot_dimension_numbers<[1], [1], [0], [0], [0, 0, 1, 0], [], []>} : vector<16x256xbf16>, vector<128x256xbf16>, vector<16x128xf32> -> vector<16x128xf32>
    %c0_3 = arith.constant 0 : index
    %c0_4 = arith.constant 0 : index
    %3 = vector.load %arg3[%c0_3, %c0_4] : memref<1x128xf32, #tpu.memory_space<vmem>>, vector<1x128xf32>
    %4 = vector.broadcast %3 : vector<1x128xf32> to vector<16x128xf32>
    %5 = arith.addf %2, %4 : vector<16x128xf32>
    %c0_5 = arith.constant 0 : index
    %c0_6 = arith.constant 0 : index
    %6 = vector.load %arg4[%c0_5, %c0_6] : memref<16x128xf32, #tpu.memory_space<vmem>>, vector<16x128xf32>
    %7 = arith.addf %5, %6 : vector<16x128xf32>
    %cst_7 = arith.constant dense<0.000000e+00> : vector<16xf32>
    %8 = vector.multi_reduction <add>, %7, %cst_7 [1] : vector<16x128xf32> to vector<16xf32>
    %9 = vector.shape_cast %8 : vector<16xf32> to vector<16x1xf32>
    %cst_8 = arith.constant 1.280000e+02 : f32
    %10 = vector.broadcast %cst_8 : f32 to vector<16x1xf32>
    %11 = arith.divf %9, %10 : vector<16x1xf32>
    %12 = vector.broadcast %11 : vector<16x1xf32> to vector<16x128xf32>
    %13 = arith.subf %7, %12 : vector<16x128xf32>
    %14 = arith.mulf %13, %13 : vector<16x128xf32>
    %cst_9 = arith.constant dense<0.000000e+00> : vector<16xf32>
    %15 = vector.multi_reduction <add>, %14, %cst_9 [1] : vector<16x128xf32> to vector<16xf32>
    %16 = vector.shape_cast %15 : vector<16xf32> to vector<16x1xf32>
    %cst_10 = arith.constant 1.280000e+02 : f32
    %17 = vector.broadcast %cst_10 : f32 to vector<16x1xf32>
    %18 = arith.divf %16, %17 : vector<16x1xf32>
    %cst_11 = arith.constant 9.99999997E-7 : f32
    %19 = vector.broadcast %cst_11 : f32 to vector<16x1xf32>
    %20 = arith.addf %18, %19 : vector<16x1xf32>
    %21 = math.rsqrt %20 : vector<16x1xf32>
    %22 = vector.broadcast %21 : vector<16x1xf32> to vector<16x128xf32>
    %23 = arith.mulf %13, %22 : vector<16x128xf32>
    %c0_12 = arith.constant 0 : index
    %c0_13 = arith.constant 0 : index
    %24 = vector.load %arg5[%c0_12, %c0_13] : memref<1x128xf32, #tpu.memory_space<vmem>>, vector<1x128xf32>
    %25 = vector.broadcast %24 : vector<1x128xf32> to vector<16x128xf32>
    %26 = arith.mulf %23, %25 : vector<16x128xf32>
    %c0_14 = arith.constant 0 : index
    %c0_15 = arith.constant 0 : index
    %27 = vector.load %arg6[%c0_14, %c0_15] : memref<1x128xf32, #tpu.memory_space<vmem>>, vector<1x128xf32>
    %28 = vector.broadcast %27 : vector<1x128xf32> to vector<16x128xf32>
    %29 = arith.addf %26, %28 : vector<16x128xf32>
    %c0_16 = arith.constant 0 : index
    %c0_17 = arith.constant 0 : index
    %30 = vector.load %arg7[%c0_16, %c0_17] : memref<16x128xf32, #tpu.memory_space<vmem>>, vector<16x128xf32>
    tpu.vector_store %arg7[%c0_16, %c0_17], %29 {strides = array<i32>} : memref<16x128xf32, #tpu.memory_space<vmem>>, vector<16x128xf32>,
    return
  }
  func.func @transform_0(%arg0: i32) -> (i32, i32) {
    %c0_i32 = arith.constant 0 : i32
    %c0_i32_0 = arith.constant 0 : i32
    return %arg0, %c0_i32 : i32, i32
  }
  func.func @transform_1(%arg0: i32) -> (i32, i32) {
    %c0_i32 = arith.constant 0 : i32
    %c0_i32_0 = arith.constant 0 : i32
    %c0_i32_1 = arith.constant 0 : i32
    return %c0_i32, %c0_i32_0 : i32, i32
  }
  func.func @transform_2(%arg0: i32) -> (i32, i32) {
    %c0_i32 = arith.constant 0 : i32
    %c0_i32_0 = arith.constant 0 : i32
    %c0_i32_1 = arith.constant 0 : i32
    return %c0_i32, %c0_i32_0 : i32, i32
  }
  func.func @transform_3(%arg0: i32) -> (i32, i32) {
    %c0_i32 = arith.constant 0 : i32
    %c0_i32_0 = arith.constant 0 : i32
    return %arg0, %c0_i32 : i32, i32
  }
  func.func @transform_4(%arg0: i32) -> (i32, i32) {
    %c0_i32 = arith.constant 0 : i32
    %c0_i32_0 = arith.constant 0 : i32
    %c0_i32_1 = arith.constant 0 : i32
    return %c0_i32, %c0_i32_0 : i32, i32
  }
  func.func @transform_5(%arg0: i32) -> (i32, i32) {
    %c0_i32 = arith.constant 0 : i32
    %c0_i32_0 = arith.constant 0 : i32
    %c0_i32_1 = arith.constant 0 : i32
    return %c0_i32, %c0_i32_0 : i32, i32
  }
  func.func @transform_6(%arg0: i32) -> (i32, i32) {
    %c0_i32 = arith.constant 0 : i32
    %c0_i32_0 = arith.constant 0 : i32
    return %arg0, %c0_i32 : i32, i32
  }
}

</mosaic_0001>

<llo_original>
// kernel: summarizer_forward.30
$region0: #{summarizer_forward.30}
  #allocation0 [shape = 'u32[]', space=smem, size = 0x4, offset = 0x4, fixed_abs, tag = 'smem constant byte address 0x4 - core index']
  #allocation1 [shape = 'u32[144,128]{1,0:T(1,128)}', space=vmem, size = 0x12000, scoped, tag = 'internal scratch']
  %s0 = inlined_call_operand.vmem [shape: f32[16,128], index: 0, kind: input, shape index: {}]
  %s1 = inlined_call_operand.vmem [shape: bf16[384,128], index: 1, kind: input, shape index: {}]
  %s2 = inlined_call_operand.vmem [shape: f32[1,384], index: 2, kind: input, shape index: {}]
  %s3 = inlined_call_operand.vmem [shape: f32[1,128], index: 3, kind: input, shape index: {}]
  %s4 = inlined_call_operand.vmem [shape: f32[1,128], index: 4, kind: input, shape index: {}]
  %s5 = inlined_call_operand.vmem [shape: bf16[16,384], index: 5, kind: output, shape index: {}]
  %s6 = sld [smem:[#allocation0]]
  $region30: #{summarizer_forward.30} parent=0
    _
  %s8 = ssub.s32 1, %s6
  %s9 = scalar_select 0, %s8, %s6
  // Predicated region
  $region2: #{summarizer_forward.30} parent=0 // pred_check
    _
  $region3: #{summarizer_forward.30} parent=0 // pred_check_branch
    %11 = sbr.rel (0) target = $region5
  $region4: #{summarizer_forward.30} parent=0 // pred_region
    _
  $region5: #{summarizer_forward.30} parent=0 // pred_fallthru
    _
  // Predicated region
  $region6: #{summarizer_forward.30} parent=0 // pred_check
    _
  $region7: #{summarizer_forward.30} parent=0 // pred_check_branch
    %13 = sbr.rel (0) target = $region9
  $region8: #{summarizer_forward.30} parent=0 // pred_region
    _
  $region9: #{summarizer_forward.30} parent=0 // pred_fallthru
    _
  // Predicated region
  $region10: #{summarizer_forward.30} parent=0 // pred_check
    _
  $region11: #{summarizer_forward.30} parent=0 // pred_check_branch
    %15 = sbr.rel (0) target = $region13
  $region12: #{summarizer_forward.30} parent=0 // pred_region
    _
  $region13: #{summarizer_forward.30} parent=0 // pred_fallthru
    _
  // Predicated region
  $region14: #{summarizer_forward.30} parent=0 // pred_check
    _
  $region15: #{summarizer_forward.30} parent=0 // pred_check_branch
    %17 = sbr.rel (0) target = $region17
  $region16: #{summarizer_forward.30} parent=0 // pred_region
    _
  $region17: #{summarizer_forward.30} parent=0 // pred_fallthru
    _
  // Predicated region
  $region18: #{summarizer_forward.30} parent=0 // pred_check
    _
  $region19: #{summarizer_forward.30} parent=0 // pred_check_branch
    %19 = sbr.rel (0) target = $region21
  $region20: #{summarizer_forward.30} parent=0 // pred_region
    _
  $region21: #{summarizer_forward.30} parent=0 // pred_fallthru
    _
  %v21 = vld [vmem:[%s0] sm:$0xff]
  %v22 = vld [vmem:[%s0 + $0x8] sm:$0xff]
  %23 = vadd.xlane.f32.xlu0 %v21
  %v24 = vpop.xlane.xlu0 %23
  %25 = vadd.xlane.f32.xlu0 %v22
  %v26 = vpop.xlane.xlu0 %25
  %v27 = vrcp.pop 128.0
  %v28 = vmul.f32 %v24, %v27
  %v29 = vmul.f32 %v26, %v27
  %v30 = vsub.f32 %v21, %v28
  %v31 = vsub.f32 %v22, %v29
  %v32 = vmul.f32 %v30, %v30
  %v33 = vmul.f32 %v31, %v31
  %34 = vadd.xlane.f32.xlu0 %v32
  %v35 = vpop.xlane.xlu0 %34
  %36 = vadd.xlane.f32.xlu0 %v33
  %v37 = vpop.xlane.xlu0 %36
  %v38 = vmul.f32 %v35, %v27
  %v39 = vmul.f32 %v37, %v27
  %v40 = vadd.f32 %v38, 1e-06
  %v41 = vadd.f32 %v39, 1e-06
  %v42 = vrsqrt.pop %v40
  %v43 = vrsqrt.pop %v41
  %v44 = vmul.f32 %v30, %v42
  %v45 = vmul.f32 %v31, %v43
  %v46 = vld [vmem:[%s3] sm:$0x1]
  %v48 = vlaneseq
  %v49 = vshrl.u32 %v48, 7
  %v50 = vsub.s32 0, %v49
  %v51 = vrot.slane %v46, %v50
  %v53 = vmul.f32 %v44, %v51
  %v54 = vmul.f32 %v45, %v51
  %v55 = vld [vmem:[%s4] sm:$0x1]
  %v57 = vlaneseq
  %v58 = vshrl.u32 %v57, 7
  %v59 = vsub.s32 0, %v58
  %v60 = vrot.slane %v55, %v59
  %v62 = vadd.f32 %v53, %v60
  %v63 = vadd.f32 %v54, %v60
  %v64 = vpack.c.bf16 %v63, %v62
  %v65 = vld [vmem:[%s1] sm:$0xf]
  %v66 = vld [vmem:[%s1 + $0x4] sm:$0xf]
  %v67 = vld [vmem:[%s1 + $0x8] sm:$0xf]
  %v68 = vld [vmem:[%s1 + $0xc] sm:$0xf]
  %v69 = vld [vmem:[%s1 + $0x10] sm:$0xf]
  %v70 = vld [vmem:[%s1 + $0x14] sm:$0xf]
  %v71 = vld [vmem:[%s1 + $0x18] sm:$0xf]
  %v72 = vld [vmem:[%s1 + $0x1c] sm:$0xf]
  %v73 = vld [vmem:[%s1 + $0x20] sm:$0xf]
  %v74 = vld [vmem:[%s1 + $0x24] sm:$0xf]
  %v75 = vld [vmem:[%s1 + $0x28] sm:$0xf]
  %v76 = vld [vmem:[%s1 + $0x2c] sm:$0xf]
  %v77 = vld [vmem:[%s1 + $0x30] sm:$0xf]
  %v78 = vld [vmem:[%s1 + $0x34] sm:$0xf]
  %v79 = vld [vmem:[%s1 + $0x38] sm:$0xf]
  %v80 = vld [vmem:[%s1 + $0x3c] sm:$0xf]
  %v81 = vld [vmem:[%s1 + $0x40] sm:$0xf]
  %v82 = vld [vmem:[%s1 + $0x44] sm:$0xf]
  %v83 = vld [vmem:[%s1 + $0x48] sm:$0xf]
  %v84 = vld [vmem:[%s1 + $0x4c] sm:$0xf]
  %v85 = vld [vmem:[%s1 + $0x50] sm:$0xf]
  %v86 = vld [vmem:[%s1 + $0x54] sm:$0xf]
  %v87 = vld [vmem:[%s1 + $0x58] sm:$0xf]
  %v88 = vld [vmem:[%s1 + $0x5c] sm:$0xf]
  %v89 = vld [vmem:[%s1 + $0x60] sm:$0xf]
  %v90 = vld [vmem:[%s1 + $0x64] sm:$0xf]
  %v91 = vld [vmem:[%s1 + $0x68] sm:$0xf]
  %v92 = vld [vmem:[%s1 + $0x6c] sm:$0xf]
  %v93 = vld [vmem:[%s1 + $0x70] sm:$0xf]
  %v94 = vld [vmem:[%s1 + $0x74] sm:$0xf]
  %v95 = vld [vmem:[%s1 + $0x78] sm:$0xf]
  %v96 = vld [vmem:[%s1 + $0x7c] sm:$0xf]
  %v97 = vld [vmem:[%s1 + $0x80] sm:$0xf]
  %v98 = vld [vmem:[%s1 + $0x84] sm:$0xf]
  %v99 = vld [vmem:[%s1 + $0x88] sm:$0xf]
  %v100 = vld [vmem:[%s1 + $0x8c] sm:$0xf]
  %v101 = vld [vmem:[%s1 + $0x90] sm:$0xf]
  %v102 = vld [vmem:[%s1 + $0x94] sm:$0xf]
  %v103 = vld [vmem:[%s1 + $0x98] sm:$0xf]
  %v104 = vld [vmem:[%s1 + $0x9c] sm:$0xf]
  %v105 = vld [vmem:[%s1 + $0xa0] sm:$0xf]
  %v106 = vld [vmem:[%s1 + $0xa4] sm:$0xf]
  %v107 = vld [vmem:[%s1 + $0xa8] sm:$0xf]
  %v108 = vld [vmem:[%s1 + $0xac] sm:$0xf]
  %v109 = vld [vmem:[%s1 + $0xb0] sm:$0xf]
  %v110 = vld [vmem:[%s1 + $0xb4] sm:$0xf]
  %v111 = vld [vmem:[%s1 + $0xb8] sm:$0xf]
  %v112 = vld [vmem:[%s1 + $0xbc] sm:$0xf]
  %v113 = vld [vmem:[%s2] sm:$0x7]
  %v115 = vlaneseq
  %v116 = vshrl.u32 %v115, 7
  %v117 = vsub.s32 0, %v116
  %v118 = vrot.slane %v113, %v117
  %v119 = vlaneseq
  %v120 = vshrl.u32 %v119, 7
  %v121 = vsub.s32 1, %v120
  %v122 = vrot.slane %v113, %v121
  %v123 = vlaneseq
  %v124 = vshrl.u32 %v123, 7
  %v125 = vsub.s32 2, %v124
  %v126 = vrot.slane %v113, %v125
  %v178 = vunpack.c.l.b16 %v65
  %v179 = vunpack.c.l.b16 %v66
  %v180 = vunpack.c.l.b16 %v67
  %v181 = vunpack.c.l.b16 %v68
  %v182 = vunpack.c.l.b16 %v69
  %v183 = vunpack.c.l.b16 %v70
  %v184 = vunpack.c.l.b16 %v71
  %v185 = vunpack.c.l.b16 %v72
  %v186 = vunpack.c.l.b16 %v73
  %v187 = vunpack.c.l.b16 %v74
  %v188 = vunpack.c.l.b16 %v75
  %v189 = vunpack.c.l.b16 %v76
  %v190 = vunpack.c.l.b16 %v77
  %v191 = vunpack.c.l.b16 %v78
  %v192 = vunpack.c.l.b16 %v79
  %v193 = vunpack.c.l.b16 %v80
  %v194 = vunpack.c.l.b16 %v81
  %v195 = vunpack.c.l.b16 %v82
  %v196 = vunpack.c.l.b16 %v83
  %v197 = vunpack.c.l.b16 %v84
  %v198 = vunpack.c.l.b16 %v85
  %v199 = vunpack.c.l.b16 %v86
  %v200 = vunpack.c.l.b16 %v87
  %v201 = vunpack.c.l.b16 %v88
  %v202 = vunpack.c.l.b16 %v89
  %v203 = vunpack.c.l.b16 %v90
  %v204 = vunpack.c.l.b16 %v91
  %v205 = vunpack.c.l.b16 %v92
  %v206 = vunpack.c.l.b16 %v93
  %v207 = vunpack.c.l.b16 %v94
  %v208 = vunpack.c.l.b16 %v95
  %v209 = vunpack.c.l.b16 %v96
  %v210 = vunpack.c.l.b16 %v97
  %v211 = vunpack.c.l.b16 %v98
  %v212 = vunpack.c.l.b16 %v99
  %v213 = vunpack.c.l.b16 %v100
  %v214 = vunpack.c.l.b16 %v101
  %v215 = vunpack.c.l.b16 %v102
  %v216 = vunpack.c.l.b16 %v103
  %v217 = vunpack.c.l.b16 %v104
  %v218 = vunpack.c.l.b16 %v105
  %v219 = vunpack.c.l.b16 %v106
  %v220 = vunpack.c.l.b16 %v107
  %v221 = vunpack.c.l.b16 %v108
  %v222 = vunpack.c.l.b16 %v109
  %v223 = vunpack.c.l.b16 %v110
  %v224 = vunpack.c.l.b16 %v111
  %v225 = vunpack.c.l.b16 %v112
  %v226 = vpack.c.b16 %v179, %v178
  %v227 = vpack.c.b16 %v181, %v180
  %v228 = vpack.c.b16 %v183, %v182
  %v229 = vpack.c.b16 %v185, %v184
  %v230 = vpack.c.b16 %v187, %v186
  %v231 = vpack.c.b16 %v189, %v188
  %v232 = vpack.c.b16 %v191, %v190
  %v233 = vpack.c.b16 %v193, %v192
  %v234 = vpack.c.b16 %v195, %v194
  %v235 = vpack.c.b16 %v197, %v196
  %v236 = vpack.c.b16 %v199, %v198
  %v237 = vpack.c.b16 %v201, %v200
  %v238 = vpack.c.b16 %v203, %v202
  %v239 = vpack.c.b16 %v205, %v204
  %v240 = vpack.c.b16 %v207, %v206
  %v241 = vpack.c.b16 %v209, %v208
  %v242 = vpack.c.b16 %v211, %v210
  %v243 = vpack.c.b16 %v213, %v212
  %v244 = vpack.c.b16 %v215, %v214
  %v245 = vpack.c.b16 %v217, %v216
  %v246 = vpack.c.b16 %v219, %v218
  %v247 = vpack.c.b16 %v221, %v220
  %v248 = vpack.c.b16 %v223, %v222
  %v249 = vpack.c.b16 %v225, %v224
  %274 = vmatprep.subr.bf16.mxu0 0
  %275 = vmatpush1.bf16.xpose.msra.mxu0 %v233
  %276 = vmatprep.subr.bf16.mxu0 0
  %277 = vmatpush1.bf16.xpose.msra.mxu0 %v232
  %278 = vmatprep.subr.bf16.mxu0 0
  %279 = vmatpush1.bf16.xpose.msra.mxu0 %v231
  %280 = vmatprep.subr.bf16.mxu0 0
  %281 = vmatpush1.bf16.xpose.msra.mxu0 %v230
  %282 = vmatprep.subr.bf16.mxu0 0
  %283 = vmatpush1.bf16.xpose.msra.mxu0 %v229
  %284 = vmatprep.subr.bf16.mxu0 0
  %285 = vmatpush1.bf16.xpose.msra.mxu0 %v228
  %286 = vmatprep.subr.bf16.mxu0 0
  %287 = vmatpush1.bf16.xpose.msra.mxu0 %v227
  %288 = vmatprep.subr.bf16.mxu0 0
  %289 = vmatpush1.bf16.xpose.msra.mxu0 %v226
  %290 = vmatprep.subr.bf16.mxu0 0
  %291 = vmatpush2.bf16.xpose.msra.mxu0 %v241
  %292 = vmatprep.subr.bf16.mxu0 0
  %293 = vmatpush2.bf16.xpose.msra.mxu0 %v240
  %294 = vmatprep.subr.bf16.mxu0 0
  %295 = vmatpush2.bf16.xpose.msra.mxu0 %v239
  %296 = vmatprep.subr.bf16.mxu0 0
  %297 = vmatpush2.bf16.xpose.msra.mxu0 %v238
  %298 = vmatprep.subr.bf16.mxu0 0
  %299 = vmatpush2.bf16.xpose.msra.mxu0 %v237
  %300 = vmatprep.subr.bf16.mxu0 0
  %301 = vmatpush2.bf16.xpose.msra.mxu0 %v236
  %302 = vmatprep.subr.bf16.mxu0 0
  %303 = vmatpush2.bf16.xpose.msra.mxu0 %v235
  %304 = vmatprep.subr.bf16.mxu0 0
  %305 = vmatpush2.bf16.xpose.msra.mxu0 %v234
  %306 = vmatprep.mubr.bf16.mxu0 0
  %307 = vmatmul.mubr.bf16.gmra.mxu0 %v64
  %v308 = vpop.f32.mrf.mxu0
  %v309 = vadd.f32 %v118, %v308
  %v310 = vpop.f32.mrf.mxu0
  %v311 = vadd.f32 %v122, %v310
  %v312 = vpop.f32.mrf.mxu0
  %v313 = vadd.f32 %v118, %v312
  %v314 = vpop.f32.mrf.mxu0
  %v315 = vadd.f32 %v122, %v314
  %316 = vdwg.mxu0
  %317 = vmatprep.subr.bf16.mxu0 0
  %318 = vmatpush1.bf16.xpose.msra.mxu0 %v249
  %319 = vmatprep.subr.bf16.mxu0 0
  %320 = vmatpush1.bf16.xpose.msra.mxu0 %v248
  %321 = vmatprep.subr.bf16.mxu0 0
  %322 = vmatpush1.bf16.xpose.msra.mxu0 %v247
  %323 = vmatprep.subr.bf16.mxu0 0
  %324 = vmatpush1.bf16.xpose.msra.mxu0 %v246
  %325 = vmatprep.subr.bf16.mxu0 0
  %326 = vmatpush1.bf16.xpose.msra.mxu0 %v245
  %327 = vmatprep.subr.bf16.mxu0 0
  %328 = vmatpush1.bf16.xpose.msra.mxu0 %v244
  %329 = vmatprep.subr.bf16.mxu0 0
  %330 = vmatpush1.bf16.xpose.msra.mxu0 %v243
  %331 = vmatprep.subr.bf16.mxu0 0
  %332 = vmatpush1.bf16.xpose.msra.mxu0 %v242
  %333 = vmatprep.subr.bf16.mxu0 0
  %334 = vmatpush2.bf16.xpose.msra.mxu0 0
  %335 = vmatprep.subr.bf16.mxu0 0
  %336 = vmatpush2.bf16.xpose.msra.mxu0 0
  %337 = vmatprep.subr.bf16.mxu0 0
  %338 = vmatpush2.bf16.xpose.msra.mxu0 0
  %339 = vmatprep.subr.bf16.mxu0 0
  %340 = vmatpush2.bf16.xpose.msra.mxu0 0
  %341 = vmatprep.subr.bf16.mxu0 0
  %342 = vmatpush2.bf16.xpose.msra.mxu0 0
  %343 = vmatprep.subr.bf16.mxu0 0
  %344 = vmatpush2.bf16.xpose.msra.mxu0 0
  %345 = vmatprep.subr.bf16.mxu0 0
  %346 = vmatpush2.bf16.xpose.msra.mxu0 0
  %347 = vmatprep.subr.bf16.mxu0 0
  %348 = vmatpush2.bf16.xpose.msra.mxu0 0
  %349 = vmatprep.mubr.bf16.mxu0 0
  %350 = vmatmul.mubr.bf16.gmra.mxu0 %v64
  %v351 = vpop.f32.mrf.mxu0
  %v352 = vadd.f32 %v126, %v351
  %v353 = vpop.f32.mrf.mxu0
  %v354 = vpop.f32.mrf.mxu0
  %v355 = vadd.f32 %v126, %v354
  %v356 = vpop.f32.mrf.mxu0
  %357 = vdwg.mxu0
  %v358 = vpack.c.bf16 %v313, %v309
  %v359 = vpack.c.bf16 %v315, %v311
  %v360 = vpack.c.bf16 %v355, %v352
  %v364 = vunpack.c.l.b16 %v358
  %v365 = vunpack.c.l.b16 %v359
  %v366 = vunpack.c.l.b16 %v360
  %v367 = vunpack.c.h.b16 %v358
  %v368 = vunpack.c.h.b16 %v359
  %v369 = vunpack.c.h.b16 %v360
  %v370 = vpack.c.b16 %v365, %v364
  %v371 = vpack.c.b16 %v366, %v366
  %v372 = vpack.c.b16 %v368, %v367
  %v373 = vpack.c.b16 %v369, %v369
  %378 = vst [vmem:[%s5] sm:$0xff] %v370
  %379 = vst [vmem:[%s5 + $0x8] sm:$0xf] %v371
  %380 = vst [vmem:[%s5 + $0xc] sm:$0xff] %v372
  %381 = vst [vmem:[%s5 + $0x14] sm:$0xf] %v373
  // Predicated region
  $region22: #{summarizer_forward.30} parent=0 // pred_check
    _
  $region23: #{summarizer_forward.30} parent=0 // pred_check_branch
    %383 = sbr.rel (0) target = $region25
  $region24: #{summarizer_forward.30} parent=0 // pred_region
    _
  $region25: #{summarizer_forward.30} parent=0 // pred_fallthru
    _
  // Predicated region
  $region26: #{summarizer_forward.30} parent=0 // pred_check
    _
  $region27: #{summarizer_forward.30} parent=0 // pred_check_branch
    %385 = sbr.rel (0) target = $region29
  $region28: #{summarizer_forward.30} parent=0 // pred_region
    _
  $region29: #{summarizer_forward.30} parent=0 // pred_fallthru
    _

// kernel: summarizer_forward.32
$region0: #{summarizer_forward.32}
  #allocation0 [shape = 'u32[]', space=smem, size = 0x4, offset = 0x4, fixed_abs, tag = 'smem constant byte address 0x4 - core index']
  #allocation1 [shape = 'u32[144,128]{1,0:T(1,128)}', space=vmem, size = 0x12000, scoped, tag = 'internal scratch']
  %s0 = inlined_call_operand.vmem [shape: f32[16,128], index: 0, kind: input, shape index: {}]
  %s1 = inlined_call_operand.vmem [shape: bf16[128,128], index: 1, kind: input, shape index: {}]
  %s2 = inlined_call_operand.vmem [shape: f32[1,128], index: 2, kind: input, shape index: {}]
  %s3 = inlined_call_operand.vmem [shape: f32[1,128], index: 3, kind: input, shape index: {}]
  %s4 = inlined_call_operand.vmem [shape: f32[1,128], index: 4, kind: input, shape index: {}]
  %s5 = inlined_call_operand.vmem [shape: bf16[16,128], index: 5, kind: output, shape index: {}]
  %s6 = sld [smem:[#allocation0]]
  $region30: #{summarizer_forward.32} parent=0
    _
  %s8 = ssub.s32 1, %s6
  %s9 = scalar_select 0, %s8, %s6
  // Predicated region
  $region2: #{summarizer_forward.32} parent=0 // pred_check
    _
  $region3: #{summarizer_forward.32} parent=0 // pred_check_branch
    %11 = sbr.rel (0) target = $region5
  $region4: #{summarizer_forward.32} parent=0 // pred_region
    _
  $region5: #{summarizer_forward.32} parent=0 // pred_fallthru
    _
  // Predicated region
  $region6: #{summarizer_forward.32} parent=0 // pred_check
    _
  $region7: #{summarizer_forward.32} parent=0 // pred_check_branch
    %13 = sbr.rel (0) target = $region9
  $region8: #{summarizer_forward.32} parent=0 // pred_region
    _
  $region9: #{summarizer_forward.32} parent=0 // pred_fallthru
    _
  // Predicated region
  $region10: #{summarizer_forward.32} parent=0 // pred_check
    _
  $region11: #{summarizer_forward.32} parent=0 // pred_check_branch
    %15 = sbr.rel (0) target = $region13
  $region12: #{summarizer_forward.32} parent=0 // pred_region
    _
  $region13: #{summarizer_forward.32} parent=0 // pred_fallthru
    _
  // Predicated region
  $region14: #{summarizer_forward.32} parent=0 // pred_check
    _
  $region15: #{summarizer_forward.32} parent=0 // pred_check_branch
    %17 = sbr.rel (0) target = $region17
  $region16: #{summarizer_forward.32} parent=0 // pred_region
    _
  $region17: #{summarizer_forward.32} parent=0 // pred_fallthru
    _
  // Predicated region
  $region18: #{summarizer_forward.32} parent=0 // pred_check
    _
  $region19: #{summarizer_forward.32} parent=0 // pred_check_branch
    %19 = sbr.rel (0) target = $region21
  $region20: #{summarizer_forward.32} parent=0 // pred_region
    _
  $region21: #{summarizer_forward.32} parent=0 // pred_fallthru
    _
  %v21 = vld [vmem:[%s0] sm:$0xff]
  %v22 = vld [vmem:[%s0 + $0x8] sm:$0xff]
  %23 = vadd.xlane.f32.xlu0 %v21
  %v24 = vpop.xlane.xlu0 %23
  %25 = vadd.xlane.f32.xlu0 %v22
  %v26 = vpop.xlane.xlu0 %25
  %v27 = vrcp.pop 128.0
  %v28 = vmul.f32 %v24, %v27
  %v29 = vmul.f32 %v26, %v27
  %v30 = vsub.f32 %v21, %v28
  %v31 = vsub.f32 %v22, %v29
  %v32 = vmul.f32 %v30, %v30
  %v33 = vmul.f32 %v31, %v31
  %34 = vadd.xlane.f32.xlu0 %v32
  %v35 = vpop.xlane.xlu0 %34
  %36 = vadd.xlane.f32.xlu0 %v33
  %v37 = vpop.xlane.xlu0 %36
  %v38 = vmul.f32 %v35, %v27
  %v39 = vmul.f32 %v37, %v27
  %v40 = vadd.f32 %v38, 1e-06
  %v41 = vadd.f32 %v39, 1e-06
  %v42 = vrsqrt.pop %v40
  %v43 = vrsqrt.pop %v41
  %v44 = vmul.f32 %v30, %v42
  %v45 = vmul.f32 %v31, %v43
  %v46 = vld [vmem:[%s3] sm:$0x1]
  %v48 = vlaneseq
  %v49 = vshrl.u32 %v48, 7
  %v50 = vsub.s32 0, %v49
  %v51 = vrot.slane %v46, %v50
  %v53 = vmul.f32 %v44, %v51
  %v54 = vmul.f32 %v45, %v51
  %v55 = vld [vmem:[%s4] sm:$0x1]
  %v57 = vlaneseq
  %v58 = vshrl.u32 %v57, 7
  %v59 = vsub.s32 0, %v58
  %v60 = vrot.slane %v55, %v59
  %v62 = vadd.f32 %v53, %v60
  %v63 = vadd.f32 %v54, %v60
  %v64 = vpack.c.bf16 %v63, %v62
  %v65 = vld [vmem:[%s1] sm:$0xf]
  %v66 = vld [vmem:[%s1 + $0x4] sm:$0xf]
  %v67 = vld [vmem:[%s1 + $0x8] sm:$0xf]
  %v68 = vld [vmem:[%s1 + $0xc] sm:$0xf]
  %v69 = vld [vmem:[%s1 + $0x10] sm:$0xf]
  %v70 = vld [vmem:[%s1 + $0x14] sm:$0xf]
  %v71 = vld [vmem:[%s1 + $0x18] sm:$0xf]
  %v72 = vld [vmem:[%s1 + $0x1c] sm:$0xf]
  %v73 = vld [vmem:[%s1 + $0x20] sm:$0xf]
  %v74 = vld [vmem:[%s1 + $0x24] sm:$0xf]
  %v75 = vld [vmem:[%s1 + $0x28] sm:$0xf]
  %v76 = vld [vmem:[%s1 + $0x2c] sm:$0xf]
  %v77 = vld [vmem:[%s1 + $0x30] sm:$0xf]
  %v78 = vld [vmem:[%s1 + $0x34] sm:$0xf]
  %v79 = vld [vmem:[%s1 + $0x38] sm:$0xf]
  %v80 = vld [vmem:[%s1 + $0x3c] sm:$0xf]
  %v81 = vld [vmem:[%s2] sm:$0x1]
  %v83 = vlaneseq
  %v84 = vshrl.u32 %v83, 7
  %v85 = vsub.s32 0, %v84
  %v86 = vrot.slane %v81, %v85
  %v104 = vunpack.c.l.b16 %v65
  %v105 = vunpack.c.l.b16 %v66
  %v106 = vunpack.c.l.b16 %v67
  %v107 = vunpack.c.l.b16 %v68
  %v108 = vunpack.c.l.b16 %v69
  %v109 = vunpack.c.l.b16 %v70
  %v110 = vunpack.c.l.b16 %v71
  %v111 = vunpack.c.l.b16 %v72
  %v112 = vunpack.c.l.b16 %v73
  %v113 = vunpack.c.l.b16 %v74
  %v114 = vunpack.c.l.b16 %v75
  %v115 = vunpack.c.l.b16 %v76
  %v116 = vunpack.c.l.b16 %v77
  %v117 = vunpack.c.l.b16 %v78
  %v118 = vunpack.c.l.b16 %v79
  %v119 = vunpack.c.l.b16 %v80
  %v120 = vpack.c.b16 %v105, %v104
  %v121 = vpack.c.b16 %v107, %v106
  %v122 = vpack.c.b16 %v109, %v108
  %v123 = vpack.c.b16 %v111, %v110
  %v124 = vpack.c.b16 %v113, %v112
  %v125 = vpack.c.b16 %v115, %v114
  %v126 = vpack.c.b16 %v117, %v116
  %v127 = vpack.c.b16 %v119, %v118
  %136 = vmatprep.subr.bf16.mxu0 0
  %137 = vmatpush1.bf16.xpose.msra.mxu0 %v127
  %138 = vmatprep.subr.bf16.mxu0 0
  %139 = vmatpush1.bf16.xpose.msra.mxu0 %v126
  %140 = vmatprep.subr.bf16.mxu0 0
  %141 = vmatpush1.bf16.xpose.msra.mxu0 %v125
  %142 = vmatprep.subr.bf16.mxu0 0
  %143 = vmatpush1.bf16.xpose.msra.mxu0 %v124
  %144 = vmatprep.subr.bf16.mxu0 0
  %145 = vmatpush1.bf16.xpose.msra.mxu0 %v123
  %146 = vmatprep.subr.bf16.mxu0 0
  %147 = vmatpush1.bf16.xpose.msra.mxu0 %v122
  %148 = vmatprep.subr.bf16.mxu0 0
  %149 = vmatpush1.bf16.xpose.msra.mxu0 %v121
  %150 = vmatprep.subr.bf16.mxu0 0
  %151 = vmatpush1.bf16.xpose.msra.mxu0 %v120
  %152 = vmatprep.subr.bf16.mxu0 0
  %153 = vmatpush2.bf16.xpose.msra.mxu0 0
  %154 = vmatprep.subr.bf16.mxu0 0
  %155 = vmatpush2.bf16.xpose.msra.mxu0 0
  %156 = vmatprep.subr.bf16.mxu0 0
  %157 = vmatpush2.bf16.xpose.msra.mxu0 0
  %158 = vmatprep.subr.bf16.mxu0 0
  %159 = vmatpush2.bf16.xpose.msra.mxu0 0
  %160 = vmatprep.subr.bf16.mxu0 0
  %161 = vmatpush2.bf16.xpose.msra.mxu0 0
  %162 = vmatprep.subr.bf16.mxu0 0
  %163 = vmatpush2.bf16.xpose.msra.mxu0 0
  %164 = vmatprep.subr.bf16.mxu0 0
  %165 = vmatpush2.bf16.xpose.msra.mxu0 0
  %166 = vmatprep.subr.bf16.mxu0 0
  %167 = vmatpush2.bf16.xpose.msra.mxu0 0
  %168 = vmatprep.mubr.bf16.mxu0 0
  %169 = vmatmul.mubr.bf16.gmra.mxu0 %v64
  %v170 = vpop.f32.mrf.mxu0
  %v171 = vadd.f32 %v86, %v170
  %v172 = vpop.f32.mrf.mxu0
  %v173 = vpop.f32.mrf.mxu0
  %v174 = vadd.f32 %v86, %v173
  %v175 = vpop.f32.mrf.mxu0
  %176 = vdwg.mxu0
  %v177 = vpack.c.bf16 %v174, %v171
  %v179 = vunpack.c.l.b16 %v177
  %v180 = vunpack.c.h.b16 %v177
  %v181 = vpack.c.b16 %v179, %v179
  %v182 = vpack.c.b16 %v180, %v180
  %185 = vst [vmem:[%s5] sm:$0xf] %v181
  %186 = vst [vmem:[%s5 + $0x4] sm:$0xf] %v182
  // Predicated region
  $region22: #{summarizer_forward.32} parent=0 // pred_check
    _
  $region23: #{summarizer_forward.32} parent=0 // pred_check_branch
    %188 = sbr.rel (0) target = $region25
  $region24: #{summarizer_forward.32} parent=0 // pred_region
    _
  $region25: #{summarizer_forward.32} parent=0 // pred_fallthru
    _
  // Predicated region
  $region26: #{summarizer_forward.32} parent=0 // pred_check
    _
  $region27: #{summarizer_forward.32} parent=0 // pred_check_branch
    %190 = sbr.rel (0) target = $region29
  $region28: #{summarizer_forward.32} parent=0 // pred_region
    _
  $region29: #{summarizer_forward.32} parent=0 // pred_fallthru
    _

// kernel: summarizer_forward.31
$region0: #{summarizer_forward.31}
  #allocation0 [shape = 'u32[]', space=smem, size = 0x4, offset = 0x4, fixed_abs, tag = 'smem constant byte address 0x4 - core index']
  #allocation1 [shape = 'u32[144,128]{1,0:T(1,128)}', space=vmem, size = 0x12000, scoped, tag = 'internal scratch']
  %s0 = inlined_call_operand.vmem [shape: bf16[2,4,8,32], index: 0, kind: input, shape index: {}]
  %s1 = inlined_call_operand.vmem [shape: bf16[2,4,128,32], index: 1, kind: input, shape index: {}]
  %s2 = inlined_call_operand.vmem [shape: bf16[2,4,128,32], index: 2, kind: input, shape index: {}]
  %s3 = inlined_call_operand.vmem [shape: f32[2,1,128], index: 3, kind: input, shape index: {}]
  %s4 = inlined_call_operand.vmem [shape: f32[2,8,128], index: 4, kind: input, shape index: {}]
  %s5 = inlined_call_operand.vmem [shape: bf16[4,128,32], index: 5, kind: input, shape index: {}]
  %s6 = inlined_call_operand.vmem [shape: f32[1,128], index: 6, kind: input, shape index: {}]
  %s7 = inlined_call_operand.vmem [shape: f32[2,8,128], index: 7, kind: output, shape index: {}]
  %s8 = sld [smem:[#allocation0]]
  $region61: #{summarizer_forward.31} parent=0
    _
  %s10 = ssub.s32 1, %s8
  %s11 = scalar_select 0, %s10, %s8
  loop: start=0, step=1, limit=4
  $region2: #{summarizer_forward.31} parent=0 // loop_pre_header
    _
  $region3: #{summarizer_forward.31} parent=0 // loop_header
    %s13 = sphi 0, %s17
    %p14 = scmp.ge.s32.totalorder %s13, 4
    %s23 = sphi 0, %s25
    %s26 = sphi 0, %s23
    %s27 = sphi 0, %s26
    %s43 = sphi 0, %s27
    %s49 = sphi 0, %s51
    %s52 = sphi 0, %s49
    %s53 = sphi 0, %s52
    %s69 = sphi 0, %s53
    %s75 = sphi 0, %s77
    %s78 = sphi 0, %s75
    %s79 = sphi 0, %s78
    %s95 = sphi 0, %s79
    %s101 = sphi 0, %s103
    %s104 = sphi 0, %s101
    %s105 = sphi 0, %s104
    %s121 = sphi 0, %s105
    %s127 = sphi 0, %s129
    %s130 = sphi 0, %s127
    %s131 = sphi 0, %s130
    %s147 = sphi 0, %s131
    %s151 = sphi 0, %s151
    %s153 = sphi 0, %s151
    %s154 = sphi 0, %s153
    %s168 = sphi 0, %s154
    %s172 = sphi 0, %s172
    %s174 = sphi 0, %s172
    %s175 = sphi 0, %s174
    %s189 = sphi 0, %s175
    %s195 = sphi 0, %s197
    %s198 = sphi 0, %s195
    %s199 = sphi 0, %s198
    %s215 = sphi 0, %s199
  $region4: #{summarizer_forward.31} parent=0 // loop_header_branch
    %16 = sbr.rel (%p14) target = $region8
  $region5: #{summarizer_forward.31} parent=0 // loop_body
    %s18 = ssub.s32 %s13, 1
    %s19 = ssub.s32 %s13, 2
    %s20 = sadd.s32 %s13, 1
    %s21 = ssub.s32 %s13, %s20
    %p22 = scmp.eq.s32.totalorder %s21, 0
    %s24 = sadd.s32 %s23, 1
    %s25 = scalar_select %p22, %s23, %s24
    %p28 = pneg %p22
    %p29 = scmp.eq.s32.totalorder %s13, 1
    %p30 = por %p28, %p29
    %p31 = scmp.ne.s32.totalorder %s23, %s26
    %p32 = scmp.eq.s32.totalorder %s13, 0
    %p33 = por %p31, %p32
    %p34 = scmp.ne.s32.totalorder %s23, %s26
    %p35 = scmp.eq.s32.totalorder %s18, 1
    %p36 = por %p34, %p35
    %p37 = scmp.ne.s32.totalorder %s26, %s27
    %p38 = scmp.eq.s32.totalorder %s18, 0
    %p39 = por %p37, %p38
    %p40 = scmp.ne.s32.totalorder %s26, %s27
    %p41 = scmp.eq.s32.totalorder %s19, 1
    %p42 = por %p40, %p41
    %p44 = scmp.ne.s32.totalorder %s27, %s43
    %p45 = scmp.eq.s32.totalorder %s19, 0
    %p46 = por %p44, %p45
    %s47 = ssub.s32 %s13, %s20
    %p48 = scmp.eq.s32.totalorder %s47, 0
    %s50 = sadd.s32 %s49, 1
    %s51 = scalar_select %p48, %s49, %s50
    %p54 = pneg %p48
    %p55 = scmp.eq.s32.totalorder %s13, 1
    %p56 = por %p54, %p55
    %p57 = scmp.ne.s32.totalorder %s49, %s52
    %p58 = scmp.eq.s32.totalorder %s13, 0
    %p59 = por %p57, %p58
    %p60 = scmp.ne.s32.totalorder %s49, %s52
    %p61 = scmp.eq.s32.totalorder %s18, 1
    %p62 = por %p60, %p61
    %p63 = scmp.ne.s32.totalorder %s52, %s53
    %p64 = scmp.eq.s32.totalorder %s18, 0
    %p65 = por %p63, %p64
    %p66 = scmp.ne.s32.totalorder %s52, %s53
    %p67 = scmp.eq.s32.totalorder %s19, 1
    %p68 = por %p66, %p67
    %p70 = scmp.ne.s32.totalorder %s53, %s69
    %p71 = scmp.eq.s32.totalorder %s19, 0
    %p72 = por %p70, %p71
    %s73 = ssub.s32 %s13, %s20
    %p74 = scmp.eq.s32.totalorder %s73, 0
    %s76 = sadd.s32 %s75, 1
    %s77 = scalar_select %p74, %s75, %s76
    %p80 = pneg %p74
    %p81 = scmp.eq.s32.totalorder %s13, 1
    %p82 = por %p80, %p81
    %p83 = scmp.ne.s32.totalorder %s75, %s78
    %p84 = scmp.eq.s32.totalorder %s13, 0
    %p85 = por %p83, %p84
    %p86 = scmp.ne.s32.totalorder %s75, %s78
    %p87 = scmp.eq.s32.totalorder %s18, 1
    %p88 = por %p86, %p87
    %p89 = scmp.ne.s32.totalorder %s78, %s79
    %p90 = scmp.eq.s32.totalorder %s18, 0
    %p91 = por %p89, %p90
    %p92 = scmp.ne.s32.totalorder %s78, %s79
    %p93 = scmp.eq.s32.totalorder %s19, 1
    %p94 = por %p92, %p93
    %p96 = scmp.ne.s32.totalorder %s79, %s95
    %p97 = scmp.eq.s32.totalorder %s19, 0
    %p98 = por %p96, %p97
    %s99 = ssub.s32 %s13, %s20
    %p100 = scmp.eq.s32.totalorder %s99, 0
    %s102 = sadd.s32 %s101, 1
    %s103 = scalar_select %p100, %s101, %s102
    %p106 = pneg %p100
    %p107 = scmp.eq.s32.totalorder %s13, 1
    %p108 = por %p106, %p107
    %p109 = scmp.ne.s32.totalorder %s101, %s104
    %p110 = scmp.eq.s32.totalorder %s13, 0
    %p111 = por %p109, %p110
    %p112 = scmp.ne.s32.totalorder %s101, %s104
    %p113 = scmp.eq.s32.totalorder %s18, 1
    %p114 = por %p112, %p113
    %p115 = scmp.ne.s32.totalorder %s104, %s105
    %p116 = scmp.eq.s32.totalorder %s18, 0
    %p117 = por %p115, %p116
    %p118 = scmp.ne.s32.totalorder %s104, %s105
    %p119 = scmp.eq.s32.totalorder %s19, 1
    %p120 = por %p118, %p119
    %p122 = scmp.ne.s32.totalorder %s105, %s121
    %p123 = scmp.eq.s32.totalorder %s19, 0
    %p124 = por %p122, %p123
    %s125 = ssub.s32 %s13, %s20
    %p126 = scmp.eq.s32.totalorder %s125, 0
    %s128 = sadd.s32 %s127, 1
    %s129 = scalar_select %p126, %s127, %s128
    %p132 = pneg %p126
    %p133 = scmp.eq.s32.totalorder %s13, 1
    %p134 = por %p132, %p133
    %p135 = scmp.ne.s32.totalorder %s127, %s130
    %p136 = scmp.eq.s32.totalorder %s13, 0
    %p137 = por %p135, %p136
    %p138 = scmp.ne.s32.totalorder %s127, %s130
    %p139 = scmp.eq.s32.totalorder %s18, 1
    %p140 = por %p138, %p139
    %p141 = scmp.ne.s32.totalorder %s130, %s131
    %p142 = scmp.eq.s32.totalorder %s18, 0
    %p143 = por %p141, %p142
    %p144 = scmp.ne.s32.totalorder %s130, %s131
    %p145 = scmp.eq.s32.totalorder %s19, 1
    %p146 = por %p144, %p145
    %p148 = scmp.ne.s32.totalorder %s131, %s147
    %p149 = scmp.eq.s32.totalorder %s19, 0
    %p150 = por %p148, %p149
    %s152 = sadd.s32 %s151, 1
    %p155 = scmp.eq.s32.totalorder %s13, 1
    %p156 = scmp.ne.s32.totalorder %s151, %s153
    %p157 = scmp.eq.s32.totalorder %s13, 0
    %p158 = por %p156, %p157
    %p159 = scmp.ne.s32.totalorder %s151, %s153
    %p160 = scmp.eq.s32.totalorder %s18, 1
    %p161 = por %p159, %p160
    %p162 = scmp.ne.s32.totalorder %s153, %s154
    %p163 = scmp.eq.s32.totalorder %s18, 0
    %p164 = por %p162, %p163
    %p165 = scmp.ne.s32.totalorder %s153, %s154
    %p166 = scmp.eq.s32.totalorder %s19, 1
    %p167 = por %p165, %p166
    %p169 = scmp.ne.s32.totalorder %s154, %s168
    %p170 = scmp.eq.s32.totalorder %s19, 0
    %p171 = por %p169, %p170
    %s173 = sadd.s32 %s172, 1
    %p176 = scmp.eq.s32.totalorder %s13, 1
    %p177 = scmp.ne.s32.totalorder %s172, %s174
    %p178 = scmp.eq.s32.totalorder %s13, 0
    %p179 = por %p177, %p178
    %p180 = scmp.ne.s32.totalorder %s172, %s174
    %p181 = scmp.eq.s32.totalorder %s18, 1
    %p182 = por %p180, %p181
    %p183 = scmp.ne.s32.totalorder %s174, %s175
    %p184 = scmp.eq.s32.totalorder %s18, 0
    %p185 = por %p183, %p184
    %p186 = scmp.ne.s32.totalorder %s174, %s175
    %p187 = scmp.eq.s32.totalorder %s19, 1
    %p188 = por %p186, %p187
    %p190 = scmp.ne.s32.totalorder %s175, %s189
    %p191 = scmp.eq.s32.totalorder %s19, 0
    %p192 = por %p190, %p191
    %s193 = ssub.s32 %s13, %s20
    %p194 = scmp.eq.s32.totalorder %s193, 0
    %s196 = sadd.s32 %s195, 1
    %s197 = scalar_select %p194, %s195, %s196
    %p200 = pneg %p194
    %p201 = scmp.eq.s32.totalorder %s13, 1
    %p202 = por %p200, %p201
    %p203 = scmp.ne.s32.totalorder %s195, %s198
    %p204 = scmp.eq.s32.totalorder %s13, 0
    %p205 = por %p203, %p204
    %p206 = scmp.ne.s32.totalorder %s195, %s198
    %p207 = scmp.eq.s32.totalorder %s18, 1
    %p208 = por %p206, %p207
    %p209 = scmp.ne.s32.totalorder %s198, %s199
    %p210 = scmp.eq.s32.totalorder %s18, 0
    %p211 = por %p209, %p210
    %p212 = scmp.ne.s32.totalorder %s198, %s199
    %p213 = scmp.eq.s32.totalorder %s19, 1
    %p214 = por %p212, %p213
    %p216 = scmp.ne.s32.totalorder %s199, %s215
    %p217 = scmp.eq.s32.totalorder %s19, 0
    %p218 = por %p216, %p217
    %p219 = scmp.le.s32.totalorder 1, %s13
    %p220 = scmp.lt.s32.totalorder %s13, 3
    %p221 = pnand %p219, %p220
    %p222 = pneg %p221
    // Predicated region
    $region9: #{summarizer_forward.31} parent=5 // pred_check
      _
    $region10: #{summarizer_forward.31} parent=5 // pred_check_branch
      %224 = sbr.rel (%p221) target = $region12
    $region11: #{summarizer_forward.31} parent=5 // pred_region
      %s225 = ssub.s32 %s13, 1
      // Predicated region
      $region13: #{summarizer_forward.31} parent=11 // pred_check
        %p226 = pneg %p164
      $region14: #{summarizer_forward.31} parent=11 // pred_check_branch
        %228 = sbr.rel (%p226) target = $region16
      $region15: #{summarizer_forward.31} parent=11 // pred_region
        _
      $region16: #{summarizer_forward.31} parent=11 // pred_fallthru
        _
      // Predicated region
      $region17: #{summarizer_forward.31} parent=11 // pred_check
        %p229 = pneg %p185
      $region18: #{summarizer_forward.31} parent=11 // pred_check_branch
        %231 = sbr.rel (%p229) target = $region20
      $region19: #{summarizer_forward.31} parent=11 // pred_region
        _
      $region20: #{summarizer_forward.31} parent=11 // pred_fallthru
        _
    $region12: #{summarizer_forward.31} parent=5 // pred_fallthru
      _
    %p232 = scmp.lt.s32.totalorder %s13, 2
    // Predicated region
    $region21: #{summarizer_forward.31} parent=5 // pred_check
      %p233 = pneg %p232
    $region22: #{summarizer_forward.31} parent=5 // pred_check_branch
      %235 = sbr.rel (%p233) target = $region24
    $region23: #{summarizer_forward.31} parent=5 // pred_region
      // Predicated region
      $region25: #{summarizer_forward.31} parent=23 // pred_check
        %p236 = pneg %p33
      $region26: #{summarizer_forward.31} parent=23 // pred_check_branch
        %238 = sbr.rel (%p236) target = $region28
      $region27: #{summarizer_forward.31} parent=23 // pred_region
        %p239 = scmp.lt.s32.totalorder %s13, 1
        %s240 = scalar_select %p239, %s13, 1
        %s241 = smul.addr %s240, 4
        %s242 = smul.addr %s241, 4
        %s243 = scalar_lea.vmem %s0, %s242
      $region28: #{summarizer_forward.31} parent=23 // pred_fallthru
        _
      // Predicated region
      $region29: #{summarizer_forward.31} parent=23 // pred_check
        %p244 = pneg %p59
      $region30: #{summarizer_forward.31} parent=23 // pred_check_branch
        %246 = sbr.rel (%p244) target = $region32
      $region31: #{summarizer_forward.31} parent=23 // pred_region
        %p247 = scmp.lt.s32.totalorder %s13, 1
        %s248 = scalar_select %p247, %s13, 1
        %s249 = smul.addr %s248, 64
        %s250 = smul.addr %s249, 4
        %s251 = scalar_lea.vmem %s1, %s250
      $region32: #{summarizer_forward.31} parent=23 // pred_fallthru
        _
      // Predicated region
      $region33: #{summarizer_forward.31} parent=23 // pred_check
        %p252 = pneg %p85
      $region34: #{summarizer_forward.31} parent=23 // pred_check_branch
        %254 = sbr.rel (%p252) target = $region36
      $region35: #{summarizer_forward.31} parent=23 // pred_region
        %p255 = scmp.lt.s32.totalorder %s13, 1
        %s256 = scalar_select %p255, %s13, 1
        %s257 = smul.addr %s256, 64
        %s258 = smul.addr %s257, 4
        %s259 = scalar_lea.vmem %s2, %s258
      $region36: #{summarizer_forward.31} parent=23 // pred_fallthru
        _
      // Predicated region
      $region37: #{summarizer_forward.31} parent=23 // pred_check
        %p260 = pneg %p111
      $region38: #{summarizer_forward.31} parent=23 // pred_check_branch
        %262 = sbr.rel (%p260) target = $region40
      $region39: #{summarizer_forward.31} parent=23 // pred_region
        %p263 = scmp.lt.s32.totalorder %s13, 1
        %s264 = scalar_select %p263, %s13, 1
        %s265 = scalar_lea.vmem %s3, %s264
      $region40: #{summarizer_forward.31} parent=23 // pred_fallthru
        _
      // Predicated region
      $region41: #{summarizer_forward.31} parent=23 // pred_check
        %p266 = pneg %p137
      $region42: #{summarizer_forward.31} parent=23 // pred_check_branch
        %268 = sbr.rel (%p266) target = $region44
      $region43: #{summarizer_forward.31} parent=23 // pred_region
        %p269 = scmp.lt.s32.totalorder %s13, 1
        %s270 = scalar_select %p269, %s13, 1
        %s271 = smul.addr %s270, 8
        %s272 = scalar_lea.vmem %s4, %s271
      $region44: #{summarizer_forward.31} parent=23 // pred_fallthru
        _
    $region24: #{summarizer_forward.31} parent=5 // pred_fallthru
      _
    %p273 = scmp.le.s32.totalorder 1, %s13
    %p274 = scmp.lt.s32.totalorder %s13, 3
    %p275 = pnand %p273, %p274
    %p276 = pneg %p275
    // Predicated region
    $region45: #{summarizer_forward.31} parent=5 // pred_check
      _
    $region46: #{summarizer_forward.31} parent=5 // pred_check_branch
      %278 = sbr.rel (%p275) target = $region48
    $region47: #{summarizer_forward.31} parent=5 // pred_region
      %s279 = ssub.s32 %s13, 1
      %p280 = scmp.lt.s32.totalorder %s18, 1
      %s281 = scalar_select %p280, %s18, 1
      %s282 = smul.addr %s281, 4
      %s283 = smul.addr %s282, 4
      %s284 = scalar_lea.vmem %s0, %s283
      %p285 = pneg %p39
      %p286 = pneg %p36
      %p287 = scmp.lt.s32.totalorder %s18, 1
      %s288 = scalar_select %p287, %s18, 1
      %s289 = smul.addr %s288, 64
      %s290 = smul.addr %s289, 4
      %s291 = scalar_lea.vmem %s1, %s290
      %p292 = pneg %p65
      %p293 = pneg %p62
      %p294 = scmp.lt.s32.totalorder %s18, 1
      %s295 = scalar_select %p294, %s18, 1
      %s296 = smul.addr %s295, 64
      %s297 = smul.addr %s296, 4
      %s298 = scalar_lea.vmem %s2, %s297
      %p299 = pneg %p91
      %p300 = pneg %p88
      %p301 = scmp.lt.s32.totalorder %s18, 1
      %s302 = scalar_select %p301, %s18, 1
      %s303 = scalar_lea.vmem %s3, %s302
      %p304 = pneg %p117
      %p305 = pneg %p114
      %p306 = scmp.lt.s32.totalorder %s18, 1
      %s307 = scalar_select %p306, %s18, 1
      %s308 = smul.addr %s307, 8
      %s309 = scalar_lea.vmem %s4, %s308
      %p310 = pneg %p143
      %p311 = pneg %p140
      %p312 = pneg %p164
      %p313 = pneg %p161
      %p314 = pneg %p185
      %p315 = pneg %p182
      %p316 = pneg %p211
      %p317 = pneg %p208
      %p318 = scmp.lt.s32.totalorder %s18, 1
      %s319 = scalar_select %p318, %s18, 1
      %s320 = smul.addr %s319, 8
      %s321 = scalar_lea.vmem %s7, %s320
      %p322 = scmp.lt.s32.totalorder %s18, 1
      %s323 = scalar_select %p322, %s18, 1
      %s324 = smul.addr %s323, 4
      %s325 = smul.addr %s324, 4
      %s326 = scalar_lea.vmem %s0, %s325
      %p327 = scmp.lt.s32.totalorder %s18, 1
      %s328 = scalar_select %p327, %s18, 1
      %s329 = smul.addr %s328, 64
      %s330 = smul.addr %s329, 4
      %s331 = scalar_lea.vmem %s1, %s330
      %p332 = scmp.lt.s32.totalorder %s18, 1
      %s333 = scalar_select %p332, %s18, 1
      %s334 = smul.addr %s333, 64
      %s335 = smul.addr %s334, 4
      %s336 = scalar_lea.vmem %s2, %s335
      %p337 = scmp.lt.s32.totalorder %s18, 1
      %s338 = scalar_select %p337, %s18, 1
      %s339 = scalar_lea.vmem %s3, %s338
      %p340 = scmp.lt.s32.totalorder %s18, 1
      %s341 = scalar_select %p340, %s18, 1
      %s342 = smul.addr %s341, 8
      %s343 = scalar_lea.vmem %s4, %s342
      %p344 = scmp.lt.s32.totalorder %s18, 1
      %s345 = scalar_select %p344, %s18, 1
      %s346 = smul.addr %s345, 8
      %s347 = scalar_lea.vmem %s7, %s346
      %v349 = vld [vmem:[%s326] sm:$0xf]
      %v350 = vld [vmem:[%s326 + $0x4] sm:$0xf]
      %v351 = vld [vmem:[%s326 + $0x8] sm:$0xf]
      %v352 = vld [vmem:[%s326 + $0xc] sm:$0xf]
      %v353 = vld [vmem:[%s331] sm:$0xf]
      %v354 = vld [vmem:[%s331 + $0x4] sm:$0xf]
      %v355 = vld [vmem:[%s331 + $0x8] sm:$0xf]
      %v356 = vld [vmem:[%s331 + $0xc] sm:$0xf]
      %v357 = vld [vmem:[%s331 + $0x10] sm:$0xf]
      %v358 = vld [vmem:[%s331 + $0x14] sm:$0xf]
      %v359 = vld [vmem:[%s331 + $0x18] sm:$0xf]
      %v360 = vld [vmem:[%s331 + $0x1c] sm:$0xf]
      %v361 = vld [vmem:[%s331 + $0x20] sm:$0xf]
      %v362 = vld [vmem:[%s331 + $0x24] sm:$0xf]
      %v363 = vld [vmem:[%s331 + $0x28] sm:$0xf]
      %v364 = vld [vmem:[%s331 + $0x2c] sm:$0xf]
      %v365 = vld [vmem:[%s331 + $0x30] sm:$0xf]
      %v366 = vld [vmem:[%s331 + $0x34] sm:$0xf]
      %v367 = vld [vmem:[%s331 + $0x38] sm:$0xf]
      %v368 = vld [vmem:[%s331 + $0x3c] sm:$0xf]
      %v369 = vld [vmem:[%s331 + $0x40] sm:$0xf]
      %v370 = vld [vmem:[%s331 + $0x44] sm:$0xf]
      %v371 = vld [vmem:[%s331 + $0x48] sm:$0xf]
      %v372 = vld [vmem:[%s331 + $0x4c] sm:$0xf]
      %v373 = vld [vmem:[%s331 + $0x50] sm:$0xf]
      %v374 = vld [vmem:[%s331 + $0x54] sm:$0xf]
      %v375 = vld [vmem:[%s331 + $0x58] sm:$0xf]
      %v376 = vld [vmem:[%s331 + $0x5c] sm:$0xf]
      %v377 = vld [vmem:[%s331 + $0x60] sm:$0xf]
      %v378 = vld [vmem:[%s331 + $0x64] sm:$0xf]
      %v379 = vld [vmem:[%s331 + $0x68] sm:$0xf]
      %v380 = vld [vmem:[%s331 + $0x6c] sm:$0xf]
      %v381 = vld [vmem:[%s331 + $0x70] sm:$0xf]
      %v382 = vld [vmem:[%s331 + $0x74] sm:$0xf]
      %v383 = vld [vmem:[%s331 + $0x78] sm:$0xf]
      %v384 = vld [vmem:[%s331 + $0x7c] sm:$0xf]
      %v385 = vld [vmem:[%s331 + $0x80] sm:$0xf]
      %v386 = vld [vmem:[%s331 + $0x84] sm:$0xf]
      %v387 = vld [vmem:[%s331 + $0x88] sm:$0xf]
      %v388 = vld [vmem:[%s331 + $0x8c] sm:$0xf]
      %v389 = vld [vmem:[%s331 + $0x90] sm:$0xf]
      %v390 = vld [vmem:[%s331 + $0x94] sm:$0xf]
      %v391 = vld [vmem:[%s331 + $0x98] sm:$0xf]
      %v392 = vld [vmem:[%s331 + $0x9c] sm:$0xf]
      %v393 = vld [vmem:[%s331 + $0xa0] sm:$0xf]
      %v394 = vld [vmem:[%s331 + $0xa4] sm:$0xf]
      %v395 = vld [vmem:[%s331 + $0xa8] sm:$0xf]
      %v396 = vld [vmem:[%s331 + $0xac] sm:$0xf]
      %v397 = vld [vmem:[%s331 + $0xb0] sm:$0xf]
      %v398 = vld [vmem:[%s331 + $0xb4] sm:$0xf]
      %v399 = vld [vmem:[%s331 + $0xb8] sm:$0xf]
      %v400 = vld [vmem:[%s331 + $0xbc] sm:$0xf]
      %v401 = vld [vmem:[%s331 + $0xc0] sm:$0xf]
      %v402 = vld [vmem:[%s331 + $0xc4] sm:$0xf]
      %v403 = vld [vmem:[%s331 + $0xc8] sm:$0xf]
      %v404 = vld [vmem:[%s331 + $0xcc] sm:$0xf]
      %v405 = vld [vmem:[%s331 + $0xd0] sm:$0xf]
      %v406 = vld [vmem:[%s331 + $0xd4] sm:$0xf]
      %v407 = vld [vmem:[%s331 + $0xd8] sm:$0xf]
      %v408 = vld [vmem:[%s331 + $0xdc] sm:$0xf]
      %v409 = vld [vmem:[%s331 + $0xe0] sm:$0xf]
      %v410 = vld [vmem:[%s331 + $0xe4] sm:$0xf]
      %v411 = vld [vmem:[%s331 + $0xe8] sm:$0xf]
      %v412 = vld [vmem:[%s331 + $0xec] sm:$0xf]
      %v413 = vld [vmem:[%s331 + $0xf0] sm:$0xf]
      %v414 = vld [vmem:[%s331 + $0xf4] sm:$0xf]
      %v415 = vld [vmem:[%s331 + $0xf8] sm:$0xf]
      %v416 = vld [vmem:[%s331 + $0xfc] sm:$0xf]
      %v417 = vld [vmem:[%s336] sm:$0xf]
      %v418 = vld [vmem:[%s336 + $0x4] sm:$0xf]
      %v419 = vld [vmem:[%s336 + $0x8] sm:$0xf]
      %v420 = vld [vmem:[%s336 + $0xc] sm:$0xf]
      %v421 = vld [vmem:[%s336 + $0x10] sm:$0xf]
      %v422 = vld [vmem:[%s336 + $0x14] sm:$0xf]
      %v423 = vld [vmem:[%s336 + $0x18] sm:$0xf]
      %v424 = vld [vmem:[%s336 + $0x1c] sm:$0xf]
      %v425 = vld [vmem:[%s336 + $0x20] sm:$0xf]
      %v426 = vld [vmem:[%s336 + $0x24] sm:$0xf]
      %v427 = vld [vmem:[%s336 + $0x28] sm:$0xf]
      %v428 = vld [vmem:[%s336 + $0x2c] sm:$0xf]
      %v429 = vld [vmem:[%s336 + $0x30] sm:$0xf]
      %v430 = vld [vmem:[%s336 + $0x34] sm:$0xf]
      %v431 = vld [vmem:[%s336 + $0x38] sm:$0xf]
      %v432 = vld [vmem:[%s336 + $0x3c] sm:$0xf]
      %v433 = vld [vmem:[%s336 + $0x40] sm:$0xf]
      %v434 = vld [vmem:[%s336 + $0x44] sm:$0xf]
      %v435 = vld [vmem:[%s336 + $0x48] sm:$0xf]
      %v436 = vld [vmem:[%s336 + $0x4c] sm:$0xf]
      %v437 = vld [vmem:[%s336 + $0x50] sm:$0xf]
      %v438 = vld [vmem:[%s336 + $0x54] sm:$0xf]
      %v439 = vld [vmem:[%s336 + $0x58] sm:$0xf]
      %v440 = vld [vmem:[%s336 + $0x5c] sm:$0xf]
      %v441 = vld [vmem:[%s336 + $0x60] sm:$0xf]
      %v442 = vld [vmem:[%s336 + $0x64] sm:$0xf]
      %v443 = vld [vmem:[%s336 + $0x68] sm:$0xf]
      %v444 = vld [vmem:[%s336 + $0x6c] sm:$0xf]
      %v445 = vld [vmem:[%s336 + $0x70] sm:$0xf]
      %v446 = vld [vmem:[%s336 + $0x74] sm:$0xf]
      %v447 = vld [vmem:[%s336 + $0x78] sm:$0xf]
      %v448 = vld [vmem:[%s336 + $0x7c] sm:$0xf]
      %v449 = vld [vmem:[%s336 + $0x80] sm:$0xf]
      %v450 = vld [vmem:[%s336 + $0x84] sm:$0xf]
      %v451 = vld [vmem:[%s336 + $0x88] sm:$0xf]
      %v452 = vld [vmem:[%s336 + $0x8c] sm:$0xf]
      %v453 = vld [vmem:[%s336 + $0x90] sm:$0xf]
      %v454 = vld [vmem:[%s336 + $0x94] sm:$0xf]
      %v455 = vld [vmem:[%s336 + $0x98] sm:$0xf]
      %v456 = vld [vmem:[%s336 + $0x9c] sm:$0xf]
      %v457 = vld [vmem:[%s336 + $0xa0] sm:$0xf]
      %v458 = vld [vmem:[%s336 + $0xa4] sm:$0xf]
      %v459 = vld [vmem:[%s336 + $0xa8] sm:$0xf]
      %v460 = vld [vmem:[%s336 + $0xac] sm:$0xf]
      %v461 = vld [vmem:[%s336 + $0xb0] sm:$0xf]
      %v462 = vld [vmem:[%s336 + $0xb4] sm:$0xf]
      %v463 = vld [vmem:[%s336 + $0xb8] sm:$0xf]
      %v464 = vld [vmem:[%s336 + $0xbc] sm:$0xf]
      %v465 = vld [vmem:[%s336 + $0xc0] sm:$0xf]
      %v466 = vld [vmem:[%s336 + $0xc4] sm:$0xf]
      %v467 = vld [vmem:[%s336 + $0xc8] sm:$0xf]
      %v468 = vld [vmem:[%s336 + $0xcc] sm:$0xf]
      %v469 = vld [vmem:[%s336 + $0xd0] sm:$0xf]
      %v470 = vld [vmem:[%s336 + $0xd4] sm:$0xf]
      %v471 = vld [vmem:[%s336 + $0xd8] sm:$0xf]
      %v472 = vld [vmem:[%s336 + $0xdc] sm:$0xf]
      %v473 = vld [vmem:[%s336 + $0xe0] sm:$0xf]
      %v474 = vld [vmem:[%s336 + $0xe4] sm:$0xf]
      %v475 = vld [vmem:[%s336 + $0xe8] sm:$0xf]
      %v476 = vld [vmem:[%s336 + $0xec] sm:$0xf]
      %v477 = vld [vmem:[%s336 + $0xf0] sm:$0xf]
      %v478 = vld [vmem:[%s336 + $0xf4] sm:$0xf]
      %v479 = vld [vmem:[%s336 + $0xf8] sm:$0xf]
      %v480 = vld [vmem:[%s336 + $0xfc] sm:$0xf]
      %v497 = vunpack.c.l.b16 %v353
      %v498 = vunpack.c.l.b16 %v354
      %v499 = vunpack.c.l.b16 %v355
      %v500 = vunpack.c.l.b16 %v356
      %v501 = vunpack.c.l.b16 %v357
      %v502 = vunpack.c.l.b16 %v358
      %v503 = vunpack.c.l.b16 %v359
      %v504 = vunpack.c.l.b16 %v360
      %v505 = vunpack.c.l.b16 %v361
      %v506 = vunpack.c.l.b16 %v362
      %v507 = vunpack.c.l.b16 %v363
      %v508 = vunpack.c.l.b16 %v364
      %v509 = vunpack.c.l.b16 %v365
      %v510 = vunpack.c.l.b16 %v366
      %v511 = vunpack.c.l.b16 %v367
      %v512 = vunpack.c.l.b16 %v368
      %v513 = vpack.c.b16 %v498, %v497
      %v514 = vpack.c.b16 %v500, %v499
      %v515 = vpack.c.b16 %v502, %v501
      %v516 = vpack.c.b16 %v504, %v503
      %v517 = vpack.c.b16 %v506, %v505
      %v518 = vpack.c.b16 %v508, %v507
      %v519 = vpack.c.b16 %v510, %v509
      %v520 = vpack.c.b16 %v512, %v511
      %vm521 = vcmask 261120
      %v523 = vsel %vm521, %v349, 0
      %v526 = vsel %vm521, %v513, 0
      %v529 = vsel %vm521, %v514, 0
      %v532 = vsel %vm521, %v515, 0
      %v535 = vsel %vm521, %v516, 0
      %v538 = vsel %vm521, %v517, 0
      %v541 = vsel %vm521, %v518, 0
      %v544 = vsel %vm521, %v519, 0
      %v547 = vsel %vm521, %v520, 0
      %549 = vmatprep.subr.bf16.mxu0 0
      %550 = vmatpush1.bf16.xpose.msra.mxu0 %v547
      %551 = vmatprep.subr.bf16.mxu0 0
      %552 = vmatpush1.bf16.xpose.msra.mxu0 %v544
      %553 = vmatprep.subr.bf16.mxu0 0
      %554 = vmatpush1.bf16.xpose.msra.mxu0 %v541
      %555 = vmatprep.subr.bf16.mxu0 0
      %556 = vmatpush1.bf16.xpose.msra.mxu0 %v538
      %557 = vmatprep.subr.bf16.mxu0 0
      %558 = vmatpush1.bf16.xpose.msra.mxu0 %v535
      %559 = vmatprep.subr.bf16.mxu0 0
      %560 = vmatpush1.bf16.xpose.msra.mxu0 %v532
      %561 = vmatprep.subr.bf16.mxu0 0
      %562 = vmatpush1.bf16.xpose.msra.mxu0 %v529
      %563 = vmatprep.subr.bf16.mxu0 0
      %564 = vmatpush1.bf16.xpose.msra.mxu0 %v526
      %565 = vmatprep.subr.bf16.mxu0 0
      %566 = vmatpush2.bf16.xpose.msra.mxu0 0
      %567 = vmatprep.subr.bf16.mxu0 0
      %568 = vmatpush2.bf16.xpose.msra.mxu0 0
      %569 = vmatprep.subr.bf16.mxu0 0
      %570 = vmatpush2.bf16.xpose.msra.mxu0 0
      %571 = vmatprep.subr.bf16.mxu0 0
      %572 = vmatpush2.bf16.xpose.msra.mxu0 0
      %573 = vmatprep.subr.bf16.mxu0 0
      %574 = vmatpush2.bf16.xpose.msra.mxu0 0
      %575 = vmatprep.subr.bf16.mxu0 0
      %576 = vmatpush2.bf16.xpose.msra.mxu0 0
      %577 = vmatprep.subr.bf16.mxu0 0
      %578 = vmatpush2.bf16.xpose.msra.mxu0 0
      %579 = vmatprep.subr.bf16.mxu0 0
      %580 = vmatpush2.bf16.xpose.msra.mxu0 0
      %581 = vmatprep.mubr.bf16.mxu0 0
      %582 = vmatmul.mubr.bf16.gmra.mxu0 %v523
      %v583 = vpop.f32.mrf.mxu0
      %v584 = vadd.f32 0.0, %v583
      %v585 = vpop.f32.mrf.mxu0
      %v586 = vpop.f32.mrf.mxu0
      %v587 = vpop.f32.mrf.mxu0
      %588 = vdwg.mxu0
      %v605 = vunpack.c.l.b16 %v369
      %v606 = vunpack.c.l.b16 %v370
      %v607 = vunpack.c.l.b16 %v371
      %v608 = vunpack.c.l.b16 %v372
      %v609 = vunpack.c.l.b16 %v373
      %v610 = vunpack.c.l.b16 %v374
      %v611 = vunpack.c.l.b16 %v375
      %v612 = vunpack.c.l.b16 %v376
      %v613 = vunpack.c.l.b16 %v377
      %v614 = vunpack.c.l.b16 %v378
      %v615 = vunpack.c.l.b16 %v379
      %v616 = vunpack.c.l.b16 %v380
      %v617 = vunpack.c.l.b16 %v381
      %v618 = vunpack.c.l.b16 %v382
      %v619 = vunpack.c.l.b16 %v383
      %v620 = vunpack.c.l.b16 %v384
      %v621 = vpack.c.b16 %v606, %v605
      %v622 = vpack.c.b16 %v608, %v607
      %v623 = vpack.c.b16 %v610, %v609
      %v624 = vpack.c.b16 %v612, %v611
      %v625 = vpack.c.b16 %v614, %v613
      %v626 = vpack.c.b16 %v616, %v615
      %v627 = vpack.c.b16 %v618, %v617
      %v628 = vpack.c.b16 %v620, %v619
      %v630 = vsel %vm521, %v350, 0
      %v633 = vsel %vm521, %v621, 0
      %v636 = vsel %vm521, %v622, 0
      %v639 = vsel %vm521, %v623, 0
      %v642 = vsel %vm521, %v624, 0
      %v645 = vsel %vm521, %v625, 0
      %v648 = vsel %vm521, %v626, 0
      %v651 = vsel %vm521, %v627, 0
      %v654 = vsel %vm521, %v628, 0
      %656 = vmatprep.subr.bf16.mxu0 0
      %657 = vmatpush1.bf16.xpose.msra.mxu0 %v654
      %658 = vmatprep.subr.bf16.mxu0 0
      %659 = vmatpush1.bf16.xpose.msra.mxu0 %v651
      %660 = vmatprep.subr.bf16.mxu0 0
      %661 = vmatpush1.bf16.xpose.msra.mxu0 %v648
      %662 = vmatprep.subr.bf16.mxu0 0
      %663 = vmatpush1.bf16.xpose.msra.mxu0 %v645
      %664 = vmatprep.subr.bf16.mxu0 0
      %665 = vmatpush1.bf16.xpose.msra.mxu0 %v642
      %666 = vmatprep.subr.bf16.mxu0 0
      %667 = vmatpush1.bf16.xpose.msra.mxu0 %v639
      %668 = vmatprep.subr.bf16.mxu0 0
      %669 = vmatpush1.bf16.xpose.msra.mxu0 %v636
      %670 = vmatprep.subr.bf16.mxu0 0
      %671 = vmatpush1.bf16.xpose.msra.mxu0 %v633
      %672 = vmatprep.subr.bf16.mxu0 0
      %673 = vmatpush2.bf16.xpose.msra.mxu0 0
      %674 = vmatprep.subr.bf16.mxu0 0
      %675 = vmatpush2.bf16.xpose.msra.mxu0 0
      %676 = vmatprep.subr.bf16.mxu0 0
      %677 = vmatpush2.bf16.xpose.msra.mxu0 0
      %678 = vmatprep.subr.bf16.mxu0 0
      %679 = vmatpush2.bf16.xpose.msra.mxu0 0
      %680 = vmatprep.subr.bf16.mxu0 0
      %681 = vmatpush2.bf16.xpose.msra.mxu0 0
      %682 = vmatprep.subr.bf16.mxu0 0
      %683 = vmatpush2.bf16.xpose.msra.mxu0 0
      %684 = vmatprep.subr.bf16.mxu0 0
      %685 = vmatpush2.bf16.xpose.msra.mxu0 0
      %686 = vmatprep.subr.bf16.mxu0 0
      %687 = vmatpush2.bf16.xpose.msra.mxu0 0
      %688 = vmatprep.mubr.bf16.mxu0 0
      %689 = vmatmul.mubr.bf16.gmra.mxu0 %v630
      %v690 = vpop.f32.mrf.mxu0
      %v691 = vadd.f32 0.0, %v690
      %v692 = vpop.f32.mrf.mxu0
      %v693 = vpop.f32.mrf.mxu0
      %v694 = vpop.f32.mrf.mxu0
      %695 = vdwg.mxu0
      %v712 = vunpack.c.l.b16 %v385
      %v713 = vunpack.c.l.b16 %v386
      %v714 = vunpack.c.l.b16 %v387
      %v715 = vunpack.c.l.b16 %v388
      %v716 = vunpack.c.l.b16 %v389
      %v717 = vunpack.c.l.b16 %v390
      %v718 = vunpack.c.l.b16 %v391
      %v719 = vunpack.c.l.b16 %v392
      %v720 = vunpack.c.l.b16 %v393
      %v721 = vunpack.c.l.b16 %v394
      %v722 = vunpack.c.l.b16 %v395
      %v723 = vunpack.c.l.b16 %v396
      %v724 = vunpack.c.l.b16 %v397
      %v725 = vunpack.c.l.b16 %v398
      %v726 = vunpack.c.l.b16 %v399
      %v727 = vunpack.c.l.b16 %v400
      %v728 = vpack.c.b16 %v713, %v712
      %v729 = vpack.c.b16 %v715, %v714
      %v730 = vpack.c.b16 %v717, %v716
      %v731 = vpack.c.b16 %v719, %v718
      %v732 = vpack.c.b16 %v721, %v720
      %v733 = vpack.c.b16 %v723, %v722
      %v734 = vpack.c.b16 %v725, %v724
      %v735 = vpack.c.b16 %v727, %v726
      %v737 = vsel %vm521, %v351, 0
      %v740 = vsel %vm521, %v728, 0
      %v743 = vsel %vm521, %v729, 0
      %v746 = vsel %vm521, %v730, 0
      %v749 = vsel %vm521, %v731, 0
      %v752 = vsel %vm521, %v732, 0
      %v755 = vsel %vm521, %v733, 0
      %v758 = vsel %vm521, %v734, 0
      %v761 = vsel %vm521, %v735, 0
      %763 = vmatprep.subr.bf16.mxu0 0
      %764 = vmatpush1.bf16.xpose.msra.mxu0 %v761
      %765 = vmatprep.subr.bf16.mxu0 0
      %766 = vmatpush1.bf16.xpose.msra.mxu0 %v758
      %767 = vmatprep.subr.bf16.mxu0 0
      %768 = vmatpush1.bf16.xpose.msra.mxu0 %v755
      %769 = vmatprep.subr.bf16.mxu0 0
      %770 = vmatpush1.bf16.xpose.msra.mxu0 %v752
      %771 = vmatprep.subr.bf16.mxu0 0
      %772 = vmatpush1.bf16.xpose.msra.mxu0 %v749
      %773 = vmatprep.subr.bf16.mxu0 0
      %774 = vmatpush1.bf16.xpose.msra.mxu0 %v746
      %775 = vmatprep.subr.bf16.mxu0 0
      %776 = vmatpush1.bf16.xpose.msra.mxu0 %v743
      %777 = vmatprep.subr.bf16.mxu0 0
      %778 = vmatpush1.bf16.xpose.msra.mxu0 %v740
      %779 = vmatprep.subr.bf16.mxu0 0
      %780 = vmatpush2.bf16.xpose.msra.mxu0 0
      %781 = vmatprep.subr.bf16.mxu0 0
      %782 = vmatpush2.bf16.xpose.msra.mxu0 0
      %783 = vmatprep.subr.bf16.mxu0 0
      %784 = vmatpush2.bf16.xpose.msra.mxu0 0
      %785 = vmatprep.subr.bf16.mxu0 0
      %786 = vmatpush2.bf16.xpose.msra.mxu0 0
      %787 = vmatprep.subr.bf16.mxu0 0
      %788 = vmatpush2.bf16.xpose.msra.mxu0 0
      %789 = vmatprep.subr.bf16.mxu0 0
      %790 = vmatpush2.bf16.xpose.msra.mxu0 0
      %791 = vmatprep.subr.bf16.mxu0 0
      %792 = vmatpush2.bf16.xpose.msra.mxu0 0
      %793 = vmatprep.subr.bf16.mxu0 0
      %794 = vmatpush2.bf16.xpose.msra.mxu0 0
      %795 = vmatprep.mubr.bf16.mxu0 0
      %796 = vmatmul.mubr.bf16.gmra.mxu0 %v737
      %v797 = vpop.f32.mrf.mxu0
      %v798 = vadd.f32 0.0, %v797
      %v799 = vpop.f32.mrf.mxu0
      %v800 = vpop.f32.mrf.mxu0
      %v801 = vpop.f32.mrf.mxu0
      %802 = vdwg.mxu0
      %v819 = vunpack.c.l.b16 %v401
      %v820 = vunpack.c.l.b16 %v402
      %v821 = vunpack.c.l.b16 %v403
      %v822 = vunpack.c.l.b16 %v404
      %v823 = vunpack.c.l.b16 %v405
      %v824 = vunpack.c.l.b16 %v406
      %v825 = vunpack.c.l.b16 %v407
      %v826 = vunpack.c.l.b16 %v408
      %v827 = vunpack.c.l.b16 %v409
      %v828 = vunpack.c.l.b16 %v410
      %v829 = vunpack.c.l.b16 %v411
      %v830 = vunpack.c.l.b16 %v412
      %v831 = vunpack.c.l.b16 %v413
      %v832 = vunpack.c.l.b16 %v414
      %v833 = vunpack.c.l.b16 %v415
      %v834 = vunpack.c.l.b16 %v416
      %v835 = vpack.c.b16 %v820, %v819
      %v836 = vpack.c.b16 %v822, %v821
      %v837 = vpack.c.b16 %v824, %v823
      %v838 = vpack.c.b16 %v826, %v825
      %v839 = vpack.c.b16 %v828, %v827
      %v840 = vpack.c.b16 %v830, %v829
      %v841 = vpack.c.b16 %v832, %v831
      %v842 = vpack.c.b16 %v834, %v833
      %v844 = vsel %vm521, %v352, 0
      %v847 = vsel %vm521, %v835, 0
      %v850 = vsel %vm521, %v836, 0
      %v853 = vsel %vm521, %v837, 0
      %v856 = vsel %vm521, %v838, 0
      %v859 = vsel %vm521, %v839, 0
      %v862 = vsel %vm521, %v840, 0
      %v865 = vsel %vm521, %v841, 0
      %v868 = vsel %vm521, %v842, 0
      %870 = vmatprep.subr.bf16.mxu0 0
      %871 = vmatpush1.bf16.xpose.msra.mxu0 %v868
      %872 = vmatprep.subr.bf16.mxu0 0
      %873 = vmatpush1.bf16.xpose.msra.mxu0 %v865
      %874 = vmatprep.subr.bf16.mxu0 0
      %875 = vmatpush1.bf16.xpose.msra.mxu0 %v862
      %876 = vmatprep.subr.bf16.mxu0 0
      %877 = vmatpush1.bf16.xpose.msra.mxu0 %v859
      %878 = vmatprep.subr.bf16.mxu0 0
      %879 = vmatpush1.bf16.xpose.msra.mxu0 %v856
      %880 = vmatprep.subr.bf16.mxu0 0
      %881 = vmatpush1.bf16.xpose.msra.mxu0 %v853
      %882 = vmatprep.subr.bf16.mxu0 0
      %883 = vmatpush1.bf16.xpose.msra.mxu0 %v850
      %884 = vmatprep.subr.bf16.mxu0 0
      %885 = vmatpush1.bf16.xpose.msra.mxu0 %v847
      %886 = vmatprep.subr.bf16.mxu0 0
      %887 = vmatpush2.bf16.xpose.msra.mxu0 0
      %888 = vmatprep.subr.bf16.mxu0 0
      %889 = vmatpush2.bf16.xpose.msra.mxu0 0
      %890 = vmatprep.subr.bf16.mxu0 0
      %891 = vmatpush2.bf16.xpose.msra.mxu0 0
      %892 = vmatprep.subr.bf16.mxu0 0
      %893 = vmatpush2.bf16.xpose.msra.mxu0 0
      %894 = vmatprep.subr.bf16.mxu0 0
      %895 = vmatpush2.bf16.xpose.msra.mxu0 0
      %896 = vmatprep.subr.bf16.mxu0 0
      %897 = vmatpush2.bf16.xpose.msra.mxu0 0
      %898 = vmatprep.subr.bf16.mxu0 0
      %899 = vmatpush2.bf16.xpose.msra.mxu0 0
      %900 = vmatprep.subr.bf16.mxu0 0
      %901 = vmatpush2.bf16.xpose.msra.mxu0 0
      %902 = vmatprep.mubr.bf16.mxu0 0
      %903 = vmatmul.mubr.bf16.gmra.mxu0 %v844
      %v904 = vpop.f32.mrf.mxu0
      %v905 = vadd.f32 0.0, %v904
      %v906 = vpop.f32.mrf.mxu0
      %v907 = vpop.f32.mrf.mxu0
      %v908 = vpop.f32.mrf.mxu0
      %909 = vdwg.mxu0
      %v910 = vmul.f32 %v584, 0.17677669
      %v911 = vmul.f32 %v691, 0.17677669
      %v912 = vmul.f32 %v798, 0.17677669
      %v913 = vmul.f32 %v905, 0.17677669
      %v914 = vld [vmem:[%s339] sm:$0x1]
      %v916 = vlaneseq
      %v917 = vshrl.u32 %v916, 7
      %v918 = vsub.s32 0, %v917
      %v919 = vrot.slane %v914, %v918
      %v921 = vadd.f32 %v910, %v919
      %v922 = vadd.f32 %v911, %v919
      %v923 = vadd.f32 %v912, %v919
      %v924 = vadd.f32 %v913, %v919
      %v925 = vlaneseq
      %v926 = vshrl.u32 %v925, 7
      %v927 = vlaneseq
      %v928 = vand.u32 %v927, 127
      %vm929 = vcmp.gt.s32.totalorder %v928, %v926
      %v930 = vsel %vm929, -1e+09, 0.0
      %v931 = vadd.f32 %v921, %v930
      %v932 = vadd.f32 %v922, %v930
      %v933 = vadd.f32 %v923, %v930
      %v934 = vadd.f32 %v924, %v930
      %935 = vmax.xlane.f32.xlu0 %v931
      %v936 = vpop.xlane.xlu0 %935
      %937 = vmax.xlane.f32.xlu0 %v932
      %v938 = vpop.xlane.xlu0 %937
      %939 = vmax.xlane.f32.xlu0 %v933
      %v940 = vpop.xlane.xlu0 %939
      %941 = vmax.xlane.f32.xlu0 %v934
      %v942 = vpop.xlane.xlu0 %941
      %v943 = vsub.f32 %v931, %v936
      %v944 = vsub.f32 %v932, %v938
      %v945 = vsub.f32 %v933, %v940
      %v946 = vsub.f32 %v934, %v942
      %v947 = vmul.f32 %v943, 1.442695
      %v948 = vpow.pop %v947
      %v949 = vmul.f32 %v944, 1.442695
      %v950 = vpow.pop %v949
      %v951 = vmul.f32 %v945, 1.442695
      %v952 = vpow.pop %v951
      %v953 = vmul.f32 %v946, 1.442695
      %v954 = vpow.pop %v953
      %955 = vadd.xlane.f32.xlu0 %v948
      %v956 = vpop.xlane.xlu0 %955
      %957 = vadd.xlane.f32.xlu0 %v950
      %v958 = vpop.xlane.xlu0 %957
      %959 = vadd.xlane.f32.xlu0 %v952
      %v960 = vpop.xlane.xlu0 %959
      %961 = vadd.xlane.f32.xlu0 %v954
      %v962 = vpop.xlane.xlu0 %961
      %v963 = vpack.c.bf16 %v948, %v948
      %v964 = vpack.c.bf16 %v950, %v950
      %v965 = vpack.c.bf16 %v952, %v952
      %v966 = vpack.c.bf16 %v954, %v954
      %v983 = vunpack.c.l.b16 %v417
      %v984 = vunpack.c.l.b16 %v418
      %v985 = vunpack.c.l.b16 %v419
      %v986 = vunpack.c.l.b16 %v420
      %v987 = vunpack.c.l.b16 %v421
      %v988 = vunpack.c.l.b16 %v422
      %v989 = vunpack.c.l.b16 %v423
      %v990 = vunpack.c.l.b16 %v424
      %v991 = vunpack.c.l.b16 %v425
      %v992 = vunpack.c.l.b16 %v426
      %v993 = vunpack.c.l.b16 %v427
      %v994 = vunpack.c.l.b16 %v428
      %v995 = vunpack.c.l.b16 %v429
      %v996 = vunpack.c.l.b16 %v430
      %v997 = vunpack.c.l.b16 %v431
      %v998 = vunpack.c.l.b16 %v432
      %v999 = vpack.c.b16 %v984, %v983
      %v1000 = vpack.c.b16 %v986, %v985
      %v1001 = vpack.c.b16 %v988, %v987
      %v1002 = vpack.c.b16 %v990, %v989
      %v1003 = vpack.c.b16 %v992, %v991
      %v1004 = vpack.c.b16 %v994, %v993
      %v1005 = vpack.c.b16 %v996, %v995
      %v1006 = vpack.c.b16 %v998, %v997
      %1015 = vmatprep.subr.bf16.mxu0 0
      %1016 = vmatpush1.bf16.msra.mxu0 %v1006
      %1017 = vmatprep.subr.bf16.mxu0 0
      %1018 = vmatpush1.bf16.msra.mxu0 %v1005
      %1019 = vmatprep.subr.bf16.mxu0 0
      %1020 = vmatpush1.bf16.msra.mxu0 %v1004
      %1021 = vmatprep.subr.bf16.mxu0 0
      %1022 = vmatpush1.bf16.msra.mxu0 %v1003
      %1023 = vmatprep.subr.bf16.mxu0 0
      %1024 = vmatpush1.bf16.msra.mxu0 %v1002
      %1025 = vmatprep.subr.bf16.mxu0 0
      %1026 = vmatpush1.bf16.msra.mxu0 %v1001
      %1027 = vmatprep.subr.bf16.mxu0 0
      %1028 = vmatpush1.bf16.msra.mxu0 %v1000
      %1029 = vmatprep.subr.bf16.mxu0 0
      %1030 = vmatpush1.bf16.msra.mxu0 %v999
      %1031 = vmatprep.subr.bf16.mxu0 0
      %1032 = vmatpush2.bf16.msra.mxu0 0
      %1033 = vmatprep.subr.bf16.mxu0 0
      %1034 = vmatpush2.bf16.msra.mxu0 0
      %1035 = vmatprep.subr.bf16.mxu0 0
      %1036 = vmatpush2.bf16.msra.mxu0 0
      %1037 = vmatprep.subr.bf16.mxu0 0
      %1038 = vmatpush2.bf16.msra.mxu0 0
      %1039 = vmatprep.subr.bf16.mxu0 0
      %1040 = vmatpush2.bf16.msra.mxu0 0
      %1041 = vmatprep.subr.bf16.mxu0 0
      %1042 = vmatpush2.bf16.msra.mxu0 0
      %1043 = vmatprep.subr.bf16.mxu0 0
      %1044 = vmatpush2.bf16.msra.mxu0 0
      %1045 = vmatprep.subr.bf16.mxu0 0
      %1046 = vmatpush2.bf16.msra.mxu0 0
      %1047 = vmatprep.mubr.bf16.mxu0 0
      %1048 = vmatmul.mubr.bf16.gmra.mxu0 %v963
      %v1049 = vpop.f32.mrf.mxu0
      %v1050 = vadd.f32 0.0, %v1049
      %v1051 = vpop.f32.mrf.mxu0
      %v1052 = vpop.f32.mrf.mxu0
      %v1053 = vpop.f32.mrf.mxu0
      %1054 = vdwg.mxu0
      %v1071 = vunpack.c.l.b16 %v433
      %v1072 = vunpack.c.l.b16 %v434
      %v1073 = vunpack.c.l.b16 %v435
      %v1074 = vunpack.c.l.b16 %v436
      %v1075 = vunpack.c.l.b16 %v437
      %v1076 = vunpack.c.l.b16 %v438
      %v1077 = vunpack.c.l.b16 %v439
      %v1078 = vunpack.c.l.b16 %v440
      %v1079 = vunpack.c.l.b16 %v441
      %v1080 = vunpack.c.l.b16 %v442
      %v1081 = vunpack.c.l.b16 %v443
      %v1082 = vunpack.c.l.b16 %v444
      %v1083 = vunpack.c.l.b16 %v445
      %v1084 = vunpack.c.l.b16 %v446
      %v1085 = vunpack.c.l.b16 %v447
      %v1086 = vunpack.c.l.b16 %v448
      %v1087 = vpack.c.b16 %v1072, %v1071
      %v1088 = vpack.c.b16 %v1074, %v1073
      %v1089 = vpack.c.b16 %v1076, %v1075
      %v1090 = vpack.c.b16 %v1078, %v1077
      %v1091 = vpack.c.b16 %v1080, %v1079
      %v1092 = vpack.c.b16 %v1082, %v1081
      %v1093 = vpack.c.b16 %v1084, %v1083
      %v1094 = vpack.c.b16 %v1086, %v1085
      %1103 = vmatprep.subr.bf16.mxu0 0
      %1104 = vmatpush1.bf16.msra.mxu0 %v1094
      %1105 = vmatprep.subr.bf16.mxu0 0
      %1106 = vmatpush1.bf16.msra.mxu0 %v1093
      %1107 = vmatprep.subr.bf16.mxu0 0
      %1108 = vmatpush1.bf16.msra.mxu0 %v1092
      %1109 = vmatprep.subr.bf16.mxu0 0
      %1110 = vmatpush1.bf16.msra.mxu0 %v1091
      %1111 = vmatprep.subr.bf16.mxu0 0
      %1112 = vmatpush1.bf16.msra.mxu0 %v1090
      %1113 = vmatprep.subr.bf16.mxu0 0
      %1114 = vmatpush1.bf16.msra.mxu0 %v1089
      %1115 = vmatprep.subr.bf16.mxu0 0
      %1116 = vmatpush1.bf16.msra.mxu0 %v1088
      %1117 = vmatprep.subr.bf16.mxu0 0
      %1118 = vmatpush1.bf16.msra.mxu0 %v1087
      %1119 = vmatprep.subr.bf16.mxu0 0
      %1120 = vmatpush2.bf16.msra.mxu0 0
      %1121 = vmatprep.subr.bf16.mxu0 0
      %1122 = vmatpush2.bf16.msra.mxu0 0
      %1123 = vmatprep.subr.bf16.mxu0 0
      %1124 = vmatpush2.bf16.msra.mxu0 0
      %1125 = vmatprep.subr.bf16.mxu0 0
      %1126 = vmatpush2.bf16.msra.mxu0 0
      %1127 = vmatprep.subr.bf16.mxu0 0
      %1128 = vmatpush2.bf16.msra.mxu0 0
      %1129 = vmatprep.subr.bf16.mxu0 0
      %1130 = vmatpush2.bf16.msra.mxu0 0
      %1131 = vmatprep.subr.bf16.mxu0 0
      %1132 = vmatpush2.bf16.msra.mxu0 0
      %1133 = vmatprep.subr.bf16.mxu0 0
      %1134 = vmatpush2.bf16.msra.mxu0 0
      %1135 = vmatprep.mubr.bf16.mxu0 0
      %1136 = vmatmul.mubr.bf16.gmra.mxu0 %v964
      %v1137 = vpop.f32.mrf.mxu0
      %v1138 = vadd.f32 0.0, %v1137
      %v1139 = vpop.f32.mrf.mxu0
      %v1140 = vpop.f32.mrf.mxu0
      %v1141 = vpop.f32.mrf.mxu0
      %1142 = vdwg.mxu0
      %v1159 = vunpack.c.l.b16 %v449
      %v1160 = vunpack.c.l.b16 %v450
      %v1161 = vunpack.c.l.b16 %v451
      %v1162 = vunpack.c.l.b16 %v452
      %v1163 = vunpack.c.l.b16 %v453
      %v1164 = vunpack.c.l.b16 %v454
      %v1165 = vunpack.c.l.b16 %v455
      %v1166 = vunpack.c.l.b16 %v456
      %v1167 = vunpack.c.l.b16 %v457
      %v1168 = vunpack.c.l.b16 %v458
      %v1169 = vunpack.c.l.b16 %v459
      %v1170 = vunpack.c.l.b16 %v460
      %v1171 = vunpack.c.l.b16 %v461
      %v1172 = vunpack.c.l.b16 %v462
      %v1173 = vunpack.c.l.b16 %v463
      %v1174 = vunpack.c.l.b16 %v464
      %v1175 = vpack.c.b16 %v1160, %v1159
      %v1176 = vpack.c.b16 %v1162, %v1161
      %v1177 = vpack.c.b16 %v1164, %v1163
      %v1178 = vpack.c.b16 %v1166, %v1165
      %v1179 = vpack.c.b16 %v1168, %v1167
      %v1180 = vpack.c.b16 %v1170, %v1169
      %v1181 = vpack.c.b16 %v1172, %v1171
      %v1182 = vpack.c.b16 %v1174, %v1173
      %1191 = vmatprep.subr.bf16.mxu0 0
      %1192 = vmatpush1.bf16.msra.mxu0 %v1182
      %1193 = vmatprep.subr.bf16.mxu0 0
      %1194 = vmatpush1.bf16.msra.mxu0 %v1181
      %1195 = vmatprep.subr.bf16.mxu0 0
      %1196 = vmatpush1.bf16.msra.mxu0 %v1180
      %1197 = vmatprep.subr.bf16.mxu0 0
      %1198 = vmatpush1.bf16.msra.mxu0 %v1179
      %1199 = vmatprep.subr.bf16.mxu0 0
      %1200 = vmatpush1.bf16.msra.mxu0 %v1178
      %1201 = vmatprep.subr.bf16.mxu0 0
      %1202 = vmatpush1.bf16.msra.mxu0 %v1177
      %1203 = vmatprep.subr.bf16.mxu0 0
      %1204 = vmatpush1.bf16.msra.mxu0 %v1176
      %1205 = vmatprep.subr.bf16.mxu0 0
      %1206 = vmatpush1.bf16.msra.mxu0 %v1175
      %1207 = vmatprep.subr.bf16.mxu0 0
      %1208 = vmatpush2.bf16.msra.mxu0 0
      %1209 = vmatprep.subr.bf16.mxu0 0
      %1210 = vmatpush2.bf16.msra.mxu0 0
      %1211 = vmatprep.subr.bf16.mxu0 0
      %1212 = vmatpush2.bf16.msra.mxu0 0
      %1213 = vmatprep.subr.bf16.mxu0 0
      %1214 = vmatpush2.bf16.msra.mxu0 0
      %1215 = vmatprep.subr.bf16.mxu0 0
      %1216 = vmatpush2.bf16.msra.mxu0 0
      %1217 = vmatprep.subr.bf16.mxu0 0
      %1218 = vmatpush2.bf16.msra.mxu0 0
      %1219 = vmatprep.subr.bf16.mxu0 0
      %1220 = vmatpush2.bf16.msra.mxu0 0
      %1221 = vmatprep.subr.bf16.mxu0 0
      %1222 = vmatpush2.bf16.msra.mxu0 0
      %1223 = vmatprep.mubr.bf16.mxu0 0
      %1224 = vmatmul.mubr.bf16.gmra.mxu0 %v965
      %v1225 = vpop.f32.mrf.mxu0
      %v1226 = vadd.f32 0.0, %v1225
      %v1227 = vpop.f32.mrf.mxu0
      %v1228 = vpop.f32.mrf.mxu0
      %v1229 = vpop.f32.mrf.mxu0
      %1230 = vdwg.mxu0
      %v1247 = vunpack.c.l.b16 %v465
      %v1248 = vunpack.c.l.b16 %v466
      %v1249 = vunpack.c.l.b16 %v467
      %v1250 = vunpack.c.l.b16 %v468
      %v1251 = vunpack.c.l.b16 %v469
      %v1252 = vunpack.c.l.b16 %v470
      %v1253 = vunpack.c.l.b16 %v471
      %v1254 = vunpack.c.l.b16 %v472
      %v1255 = vunpack.c.l.b16 %v473
      %v1256 = vunpack.c.l.b16 %v474
      %v1257 = vunpack.c.l.b16 %v475
      %v1258 = vunpack.c.l.b16 %v476
      %v1259 = vunpack.c.l.b16 %v477
      %v1260 = vunpack.c.l.b16 %v478
      %v1261 = vunpack.c.l.b16 %v479
      %v1262 = vunpack.c.l.b16 %v480
      %v1263 = vpack.c.b16 %v1248, %v1247
      %v1264 = vpack.c.b16 %v1250, %v1249
      %v1265 = vpack.c.b16 %v1252, %v1251
      %v1266 = vpack.c.b16 %v1254, %v1253
      %v1267 = vpack.c.b16 %v1256, %v1255
      %v1268 = vpack.c.b16 %v1258, %v1257
      %v1269 = vpack.c.b16 %v1260, %v1259
      %v1270 = vpack.c.b16 %v1262, %v1261
      %1279 = vmatprep.subr.bf16.mxu0 0
      %1280 = vmatpush1.bf16.msra.mxu0 %v1270
      %1281 = vmatprep.subr.bf16.mxu0 0
      %1282 = vmatpush1.bf16.msra.mxu0 %v1269
      %1283 = vmatprep.subr.bf16.mxu0 0
      %1284 = vmatpush1.bf16.msra.mxu0 %v1268
      %1285 = vmatprep.subr.bf16.mxu0 0
      %1286 = vmatpush1.bf16.msra.mxu0 %v1267
      %1287 = vmatprep.subr.bf16.mxu0 0
      %1288 = vmatpush1.bf16.msra.mxu0 %v1266
      %1289 = vmatprep.subr.bf16.mxu0 0
      %1290 = vmatpush1.bf16.msra.mxu0 %v1265
      %1291 = vmatprep.subr.bf16.mxu0 0
      %1292 = vmatpush1.bf16.msra.mxu0 %v1264
      %1293 = vmatprep.subr.bf16.mxu0 0
      %1294 = vmatpush1.bf16.msra.mxu0 %v1263
      %1295 = vmatprep.subr.bf16.mxu0 0
      %1296 = vmatpush2.bf16.msra.mxu0 0
      %1297 = vmatprep.subr.bf16.mxu0 0
      %1298 = vmatpush2.bf16.msra.mxu0 0
      %1299 = vmatprep.subr.bf16.mxu0 0
      %1300 = vmatpush2.bf16.msra.mxu0 0
      %1301 = vmatprep.subr.bf16.mxu0 0
      %1302 = vmatpush2.bf16.msra.mxu0 0
      %1303 = vmatprep.subr.bf16.mxu0 0
      %1304 = vmatpush2.bf16.msra.mxu0 0
      %1305 = vmatprep.subr.bf16.mxu0 0
      %1306 = vmatpush2.bf16.msra.mxu0 0
      %1307 = vmatprep.subr.bf16.mxu0 0
      %1308 = vmatpush2.bf16.msra.mxu0 0
      %1309 = vmatprep.subr.bf16.mxu0 0
      %1310 = vmatpush2.bf16.msra.mxu0 0
      %1311 = vmatprep.mubr.bf16.mxu0 0
      %1312 = vmatmul.mubr.bf16.gmra.mxu0 %v966
      %v1313 = vpop.f32.mrf.mxu0
      %v1314 = vadd.f32 0.0, %v1313
      %v1315 = vpop.f32.mrf.mxu0
      %v1316 = vpop.f32.mrf.mxu0
      %v1317 = vpop.f32.mrf.mxu0
      %1318 = vdwg.mxu0
      %v1319 = vrcp.pop %v956
      %v1320 = vrcp.pop %v958
      %v1321 = vrcp.pop %v960
      %v1322 = vrcp.pop %v962
      %v1323 = vmul.f32 %v1050, %v1319
      %v1324 = vmul.f32 %v1138, %v1320
      %v1325 = vmul.f32 %v1226, %v1321
      %v1326 = vmul.f32 %v1314, %v1322
      %v1327 = vld [vmem:[%s5] sm:$0xf]
      %v1328 = vld [vmem:[%s5 + $0x4] sm:$0xf]
      %v1329 = vld [vmem:[%s5 + $0x8] sm:$0xf]
      %v1330 = vld [vmem:[%s5 + $0xc] sm:$0xf]
      %v1331 = vld [vmem:[%s5 + $0x10] sm:$0xf]
      %v1332 = vld [vmem:[%s5 + $0x14] sm:$0xf]
      %v1333 = vld [vmem:[%s5 + $0x18] sm:$0xf]
      %v1334 = vld [vmem:[%s5 + $0x1c] sm:$0xf]
      %v1335 = vld [vmem:[%s5 + $0x20] sm:$0xf]
      %v1336 = vld [vmem:[%s5 + $0x24] sm:$0xf]
      %v1337 = vld [vmem:[%s5 + $0x28] sm:$0xf]
      %v1338 = vld [vmem:[%s5 + $0x2c] sm:$0xf]
      %v1339 = vld [vmem:[%s5 + $0x30] sm:$0xf]
      %v1340 = vld [vmem:[%s5 + $0x34] sm:$0xf]
      %v1341 = vld [vmem:[%s5 + $0x38] sm:$0xf]
      %v1342 = vld [vmem:[%s5 + $0x3c] sm:$0xf]
      %v1343 = vld [vmem:[%s5 + $0x40] sm:$0xf]
      %v1344 = vld [vmem:[%s5 + $0x44] sm:$0xf]
      %v1345 = vld [vmem:[%s5 + $0x48] sm:$0xf]
      %v1346 = vld [vmem:[%s5 + $0x4c] sm:$0xf]
      %v1347 = vld [vmem:[%s5 + $0x50] sm:$0xf]
      %v1348 = vld [vmem:[%s5 + $0x54] sm:$0xf]
      %v1349 = vld [vmem:[%s5 + $0x58] sm:$0xf]
      %v1350 = vld [vmem:[%s5 + $0x5c] sm:$0xf]
      %v1351 = vld [vmem:[%s5 + $0x60] sm:$0xf]
      %v1352 = vld [vmem:[%s5 + $0x64] sm:$0xf]
      %v1353 = vld [vmem:[%s5 + $0x68] sm:$0xf]
      %v1354 = vld [vmem:[%s5 + $0x6c] sm:$0xf]
      %v1355 = vld [vmem:[%s5 + $0x70] sm:$0xf]
      %v1356 = vld [vmem:[%s5 + $0x74] sm:$0xf]
      %v1357 = vld [vmem:[%s5 + $0x78] sm:$0xf]
      %v1358 = vld [vmem:[%s5 + $0x7c] sm:$0xf]
      %v1359 = vld [vmem:[%s5 + $0x80] sm:$0xf]
      %v1360 = vld [vmem:[%s5 + $0x84] sm:$0xf]
      %v1361 = vld [vmem:[%s5 + $0x88] sm:$0xf]
      %v1362 = vld [vmem:[%s5 + $0x8c] sm:$0xf]
      %v1363 = vld [vmem:[%s5 + $0x90] sm:$0xf]
      %v1364 = vld [vmem:[%s5 + $0x94] sm:$0xf]
      %v1365 = vld [vmem:[%s5 + $0x98] sm:$0xf]
      %v1366 = vld [vmem:[%s5 + $0x9c] sm:$0xf]
      %v1367 = vld [vmem:[%s5 + $0xa0] sm:$0xf]
      %v1368 = vld [vmem:[%s5 + $0xa4] sm:$0xf]
      %v1369 = vld [vmem:[%s5 + $0xa8] sm:$0xf]
      %v1370 = vld [vmem:[%s5 + $0xac] sm:$0xf]
      %v1371 = vld [vmem:[%s5 + $0xb0] sm:$0xf]
      %v1372 = vld [vmem:[%s5 + $0xb4] sm:$0xf]
      %v1373 = vld [vmem:[%s5 + $0xb8] sm:$0xf]
      %v1374 = vld [vmem:[%s5 + $0xbc] sm:$0xf]
      %v1375 = vld [vmem:[%s5 + $0xc0] sm:$0xf]
      %v1376 = vld [vmem:[%s5 + $0xc4] sm:$0xf]
      %v1377 = vld [vmem:[%s5 + $0xc8] sm:$0xf]
      %v1378 = vld [vmem:[%s5 + $0xcc] sm:$0xf]
      %v1379 = vld [vmem:[%s5 + $0xd0] sm:$0xf]
      %v1380 = vld [vmem:[%s5 + $0xd4] sm:$0xf]
      %v1381 = vld [vmem:[%s5 + $0xd8] sm:$0xf]
      %v1382 = vld [vmem:[%s5 + $0xdc] sm:$0xf]
      %v1383 = vld [vmem:[%s5 + $0xe0] sm:$0xf]
      %v1384 = vld [vmem:[%s5 + $0xe4] sm:$0xf]
      %v1385 = vld [vmem:[%s5 + $0xe8] sm:$0xf]
      %v1386 = vld [vmem:[%s5 + $0xec] sm:$0xf]
      %v1387 = vld [vmem:[%s5 + $0xf0] sm:$0xf]
      %v1388 = vld [vmem:[%s5 + $0xf4] sm:$0xf]
      %v1389 = vld [vmem:[%s5 + $0xf8] sm:$0xf]
      %v1390 = vld [vmem:[%s5 + $0xfc] sm:$0xf]
      %v1391 = vld [vmem:[%s343] sm:$0xff]
      %v1392 = vld [vmem:[%s6] sm:$0x1]
      %v1394 = vlaneseq
      %v1395 = vshrl.u32 %v1394, 7
      %v1396 = vsub.s32 0, %v1395
      %v1397 = vrot.slane %v1392, %v1396
      %v1399 = vadd.f32 %v1391, %v1397
      %v1400 = vpack.c.bf16 %v1323, %v1323
      %v1417 = vunpack.c.l.b16 %v1327
      %v1418 = vunpack.c.l.b16 %v1328
      %v1419 = vunpack.c.l.b16 %v1329
      %v1420 = vunpack.c.l.b16 %v1330
      %v1421 = vunpack.c.l.b16 %v1331
      %v1422 = vunpack.c.l.b16 %v1332
      %v1423 = vunpack.c.l.b16 %v1333
      %v1424 = vunpack.c.l.b16 %v1334
      %v1425 = vunpack.c.l.b16 %v1335
      %v1426 = vunpack.c.l.b16 %v1336
      %v1427 = vunpack.c.l.b16 %v1337
      %v1428 = vunpack.c.l.b16 %v1338
      %v1429 = vunpack.c.l.b16 %v1339
      %v1430 = vunpack.c.l.b16 %v1340
      %v1431 = vunpack.c.l.b16 %v1341
      %v1432 = vunpack.c.l.b16 %v1342
      %v1433 = vpack.c.b16 %v1418, %v1417
      %v1434 = vpack.c.b16 %v1420, %v1419
      %v1435 = vpack.c.b16 %v1422, %v1421
      %v1436 = vpack.c.b16 %v1424, %v1423
      %v1437 = vpack.c.b16 %v1426, %v1425
      %v1438 = vpack.c.b16 %v1428, %v1427
      %v1439 = vpack.c.b16 %v1430, %v1429
      %v1440 = vpack.c.b16 %v1432, %v1431
      %v1442 = vsel %vm521, %v1400, 0
      %v1445 = vsel %vm521, %v1433, 0
      %v1448 = vsel %vm521, %v1434, 0
      %v1451 = vsel %vm521, %v1435, 0
      %v1454 = vsel %vm521, %v1436, 0
      %v1457 = vsel %vm521, %v1437, 0
      %v1460 = vsel %vm521, %v1438, 0
      %v1463 = vsel %vm521, %v1439, 0
      %v1466 = vsel %vm521, %v1440, 0
      %1468 = vmatprep.subr.bf16.mxu0 0
      %1469 = vmatpush1.bf16.xpose.msra.mxu0 %v1466
      %1470 = vmatprep.subr.bf16.mxu0 0
      %1471 = vmatpush1.bf16.xpose.msra.mxu0 %v1463
      %1472 = vmatprep.subr.bf16.mxu0 0
      %1473 = vmatpush1.bf16.xpose.msra.mxu0 %v1460
      %1474 = vmatprep.subr.bf16.mxu0 0
      %1475 = vmatpush1.bf16.xpose.msra.mxu0 %v1457
      %1476 = vmatprep.subr.bf16.mxu0 0
      %1477 = vmatpush1.bf16.xpose.msra.mxu0 %v1454
      %1478 = vmatprep.subr.bf16.mxu0 0
      %1479 = vmatpush1.bf16.xpose.msra.mxu0 %v1451
      %1480 = vmatprep.subr.bf16.mxu0 0
      %1481 = vmatpush1.bf16.xpose.msra.mxu0 %v1448
      %1482 = vmatprep.subr.bf16.mxu0 0
      %1483 = vmatpush1.bf16.xpose.msra.mxu0 %v1445
      %1484 = vmatprep.subr.bf16.mxu0 0
      %1485 = vmatpush2.bf16.xpose.msra.mxu0 0
      %1486 = vmatprep.subr.bf16.mxu0 0
      %1487 = vmatpush2.bf16.xpose.msra.mxu0 0
      %1488 = vmatprep.subr.bf16.mxu0 0
      %1489 = vmatpush2.bf16.xpose.msra.mxu0 0
      %1490 = vmatprep.subr.bf16.mxu0 0
      %1491 = vmatpush2.bf16.xpose.msra.mxu0 0
      %1492 = vmatprep.subr.bf16.mxu0 0
      %1493 = vmatpush2.bf16.xpose.msra.mxu0 0
      %1494 = vmatprep.subr.bf16.mxu0 0
      %1495 = vmatpush2.bf16.xpose.msra.mxu0 0
      %1496 = vmatprep.subr.bf16.mxu0 0
      %1497 = vmatpush2.bf16.xpose.msra.mxu0 0
      %1498 = vmatprep.subr.bf16.mxu0 0
      %1499 = vmatpush2.bf16.xpose.msra.mxu0 0
      %1500 = vmatprep.mubr.bf16.mxu0 0
      %1501 = vmatmul.mubr.bf16.gmra.mxu0 %v1442
      %v1502 = vpop.f32.mrf.mxu0
      %v1503 = vadd.f32 0.0, %v1502
      %v1504 = vpop.f32.mrf.mxu0
      %v1505 = vpop.f32.mrf.mxu0
      %v1506 = vpop.f32.mrf.mxu0
      %1507 = vdwg.mxu0
      %v1508 = vadd.f32 %v1399, %v1503
      %v1509 = vpack.c.bf16 %v1324, %v1324
      %v1526 = vunpack.c.l.b16 %v1343
      %v1527 = vunpack.c.l.b16 %v1344
      %v1528 = vunpack.c.l.b16 %v1345
      %v1529 = vunpack.c.l.b16 %v1346
      %v1530 = vunpack.c.l.b16 %v1347
      %v1531 = vunpack.c.l.b16 %v1348
      %v1532 = vunpack.c.l.b16 %v1349
      %v1533 = vunpack.c.l.b16 %v1350
      %v1534 = vunpack.c.l.b16 %v1351
      %v1535 = vunpack.c.l.b16 %v1352
      %v1536 = vunpack.c.l.b16 %v1353
      %v1537 = vunpack.c.l.b16 %v1354
      %v1538 = vunpack.c.l.b16 %v1355
      %v1539 = vunpack.c.l.b16 %v1356
      %v1540 = vunpack.c.l.b16 %v1357
      %v1541 = vunpack.c.l.b16 %v1358
      %v1542 = vpack.c.b16 %v1527, %v1526
      %v1543 = vpack.c.b16 %v1529, %v1528
      %v1544 = vpack.c.b16 %v1531, %v1530
      %v1545 = vpack.c.b16 %v1533, %v1532
      %v1546 = vpack.c.b16 %v1535, %v1534
      %v1547 = vpack.c.b16 %v1537, %v1536
      %v1548 = vpack.c.b16 %v1539, %v1538
      %v1549 = vpack.c.b16 %v1541, %v1540
      %v1551 = vsel %vm521, %v1509, 0
      %v1554 = vsel %vm521, %v1542, 0
      %v1557 = vsel %vm521, %v1543, 0
      %v1560 = vsel %vm521, %v1544, 0
      %v1563 = vsel %vm521, %v1545, 0
      %v1566 = vsel %vm521, %v1546, 0
      %v1569 = vsel %vm521, %v1547, 0
      %v1572 = vsel %vm521, %v1548, 0
      %v1575 = vsel %vm521, %v1549, 0
      %1577 = vmatprep.subr.bf16.mxu0 0
      %1578 = vmatpush1.bf16.xpose.msra.mxu0 %v1575
      %1579 = vmatprep.subr.bf16.mxu0 0
      %1580 = vmatpush1.bf16.xpose.msra.mxu0 %v1572
      %1581 = vmatprep.subr.bf16.mxu0 0
      %1582 = vmatpush1.bf16.xpose.msra.mxu0 %v1569
      %1583 = vmatprep.subr.bf16.mxu0 0
      %1584 = vmatpush1.bf16.xpose.msra.mxu0 %v1566
      %1585 = vmatprep.subr.bf16.mxu0 0
      %1586 = vmatpush1.bf16.xpose.msra.mxu0 %v1563
      %1587 = vmatprep.subr.bf16.mxu0 0
      %1588 = vmatpush1.bf16.xpose.msra.mxu0 %v1560
      %1589 = vmatprep.subr.bf16.mxu0 0
      %1590 = vmatpush1.bf16.xpose.msra.mxu0 %v1557
      %1591 = vmatprep.subr.bf16.mxu0 0
      %1592 = vmatpush1.bf16.xpose.msra.mxu0 %v1554
      %1593 = vmatprep.subr.bf16.mxu0 0
      %1594 = vmatpush2.bf16.xpose.msra.mxu0 0
      %1595 = vmatprep.subr.bf16.mxu0 0
      %1596 = vmatpush2.bf16.xpose.msra.mxu0 0
      %1597 = vmatprep.subr.bf16.mxu0 0
      %1598 = vmatpush2.bf16.xpose.msra.mxu0 0
      %1599 = vmatprep.subr.bf16.mxu0 0
      %1600 = vmatpush2.bf16.xpose.msra.mxu0 0
      %1601 = vmatprep.subr.bf16.mxu0 0
      %1602 = vmatpush2.bf16.xpose.msra.mxu0 0
      %1603 = vmatprep.subr.bf16.mxu0 0
      %1604 = vmatpush2.bf16.xpose.msra.mxu0 0
      %1605 = vmatprep.subr.bf16.mxu0 0
      %1606 = vmatpush2.bf16.xpose.msra.mxu0 0
      %1607 = vmatprep.subr.bf16.mxu0 0
      %1608 = vmatpush2.bf16.xpose.msra.mxu0 0
      %1609 = vmatprep.mubr.bf16.mxu0 0
      %1610 = vmatmul.mubr.bf16.gmra.mxu0 %v1551
      %v1611 = vpop.f32.mrf.mxu0
      %v1612 = vadd.f32 0.0, %v1611
      %v1613 = vpop.f32.mrf.mxu0
      %v1614 = vpop.f32.mrf.mxu0
      %v1615 = vpop.f32.mrf.mxu0
      %1616 = vdwg.mxu0
      %v1617 = vadd.f32 %v1508, %v1612
      %v1618 = vpack.c.bf16 %v1325, %v1325
      %v1635 = vunpack.c.l.b16 %v1359
      %v1636 = vunpack.c.l.b16 %v1360
      %v1637 = vunpack.c.l.b16 %v1361
      %v1638 = vunpack.c.l.b16 %v1362
      %v1639 = vunpack.c.l.b16 %v1363
      %v1640 = vunpack.c.l.b16 %v1364
      %v1641 = vunpack.c.l.b16 %v1365
      %v1642 = vunpack.c.l.b16 %v1366
      %v1643 = vunpack.c.l.b16 %v1367
      %v1644 = vunpack.c.l.b16 %v1368
      %v1645 = vunpack.c.l.b16 %v1369
      %v1646 = vunpack.c.l.b16 %v1370
      %v1647 = vunpack.c.l.b16 %v1371
      %v1648 = vunpack.c.l.b16 %v1372
      %v1649 = vunpack.c.l.b16 %v1373
      %v1650 = vunpack.c.l.b16 %v1374
      %v1651 = vpack.c.b16 %v1636, %v1635
      %v1652 = vpack.c.b16 %v1638, %v1637
      %v1653 = vpack.c.b16 %v1640, %v1639
      %v1654 = vpack.c.b16 %v1642, %v1641
      %v1655 = vpack.c.b16 %v1644, %v1643
      %v1656 = vpack.c.b16 %v1646, %v1645
      %v1657 = vpack.c.b16 %v1648, %v1647
      %v1658 = vpack.c.b16 %v1650, %v1649
      %v1660 = vsel %vm521, %v1618, 0
      %v1663 = vsel %vm521, %v1651, 0
      %v1666 = vsel %vm521, %v1652, 0
      %v1669 = vsel %vm521, %v1653, 0
      %v1672 = vsel %vm521, %v1654, 0
      %v1675 = vsel %vm521, %v1655, 0
      %v1678 = vsel %vm521, %v1656, 0
      %v1681 = vsel %vm521, %v1657, 0
      %v1684 = vsel %vm521, %v1658, 0
      %1686 = vmatprep.subr.bf16.mxu0 0
      %1687 = vmatpush1.bf16.xpose.msra.mxu0 %v1684
      %1688 = vmatprep.subr.bf16.mxu0 0
      %1689 = vmatpush1.bf16.xpose.msra.mxu0 %v1681
      %1690 = vmatprep.subr.bf16.mxu0 0
      %1691 = vmatpush1.bf16.xpose.msra.mxu0 %v1678
      %1692 = vmatprep.subr.bf16.mxu0 0
      %1693 = vmatpush1.bf16.xpose.msra.mxu0 %v1675
      %1694 = vmatprep.subr.bf16.mxu0 0
      %1695 = vmatpush1.bf16.xpose.msra.mxu0 %v1672
      %1696 = vmatprep.subr.bf16.mxu0 0
      %1697 = vmatpush1.bf16.xpose.msra.mxu0 %v1669
      %1698 = vmatprep.subr.bf16.mxu0 0
      %1699 = vmatpush1.bf16.xpose.msra.mxu0 %v1666
      %1700 = vmatprep.subr.bf16.mxu0 0
      %1701 = vmatpush1.bf16.xpose.msra.mxu0 %v1663
      %1702 = vmatprep.subr.bf16.mxu0 0
      %1703 = vmatpush2.bf16.xpose.msra.mxu0 0
      %1704 = vmatprep.subr.bf16.mxu0 0
      %1705 = vmatpush2.bf16.xpose.msra.mxu0 0
      %1706 = vmatprep.subr.bf16.mxu0 0
      %1707 = vmatpush2.bf16.xpose.msra.mxu0 0
      %1708 = vmatprep.subr.bf16.mxu0 0
      %1709 = vmatpush2.bf16.xpose.msra.mxu0 0
      %1710 = vmatprep.subr.bf16.mxu0 0
      %1711 = vmatpush2.bf16.xpose.msra.mxu0 0
      %1712 = vmatprep.subr.bf16.mxu0 0
      %1713 = vmatpush2.bf16.xpose.msra.mxu0 0
      %1714 = vmatprep.subr.bf16.mxu0 0
      %1715 = vmatpush2.bf16.xpose.msra.mxu0 0
      %1716 = vmatprep.subr.bf16.mxu0 0
      %1717 = vmatpush2.bf16.xpose.msra.mxu0 0
      %1718 = vmatprep.mubr.bf16.mxu0 0
      %1719 = vmatmul.mubr.bf16.gmra.mxu0 %v1660
      %v1720 = vpop.f32.mrf.mxu0
      %v1721 = vadd.f32 0.0, %v1720
      %v1722 = vpop.f32.mrf.mxu0
      %v1723 = vpop.f32.mrf.mxu0
      %v1724 = vpop.f32.mrf.mxu0
      %1725 = vdwg.mxu0
      %v1726 = vadd.f32 %v1617, %v1721
      %v1727 = vpack.c.bf16 %v1326, %v1326
      %v1744 = vunpack.c.l.b16 %v1375
      %v1745 = vunpack.c.l.b16 %v1376
      %v1746 = vunpack.c.l.b16 %v1377
      %v1747 = vunpack.c.l.b16 %v1378
      %v1748 = vunpack.c.l.b16 %v1379
      %v1749 = vunpack.c.l.b16 %v1380
      %v1750 = vunpack.c.l.b16 %v1381
      %v1751 = vunpack.c.l.b16 %v1382
      %v1752 = vunpack.c.l.b16 %v1383
      %v1753 = vunpack.c.l.b16 %v1384
      %v1754 = vunpack.c.l.b16 %v1385
      %v1755 = vunpack.c.l.b16 %v1386
      %v1756 = vunpack.c.l.b16 %v1387
      %v1757 = vunpack.c.l.b16 %v1388
      %v1758 = vunpack.c.l.b16 %v1389
      %v1759 = vunpack.c.l.b16 %v1390
      %v1760 = vpack.c.b16 %v1745, %v1744
      %v1761 = vpack.c.b16 %v1747, %v1746
      %v1762 = vpack.c.b16 %v1749, %v1748
      %v1763 = vpack.c.b16 %v1751, %v1750
      %v1764 = vpack.c.b16 %v1753, %v1752
      %v1765 = vpack.c.b16 %v1755, %v1754
      %v1766 = vpack.c.b16 %v1757, %v1756
      %v1767 = vpack.c.b16 %v1759, %v1758
      %v1769 = vsel %vm521, %v1727, 0
      %v1772 = vsel %vm521, %v1760, 0
      %v1775 = vsel %vm521, %v1761, 0
      %v1778 = vsel %vm521, %v1762, 0
      %v1781 = vsel %vm521, %v1763, 0
      %v1784 = vsel %vm521, %v1764, 0
      %v1787 = vsel %vm521, %v1765, 0
      %v1790 = vsel %vm521, %v1766, 0
      %v1793 = vsel %vm521, %v1767, 0
      %1795 = vmatprep.subr.bf16.mxu0 0
      %1796 = vmatpush1.bf16.xpose.msra.mxu0 %v1793
      %1797 = vmatprep.subr.bf16.mxu0 0
      %1798 = vmatpush1.bf16.xpose.msra.mxu0 %v1790
      %1799 = vmatprep.subr.bf16.mxu0 0
      %1800 = vmatpush1.bf16.xpose.msra.mxu0 %v1787
      %1801 = vmatprep.subr.bf16.mxu0 0
      %1802 = vmatpush1.bf16.xpose.msra.mxu0 %v1784
      %1803 = vmatprep.subr.bf16.mxu0 0
      %1804 = vmatpush1.bf16.xpose.msra.mxu0 %v1781
      %1805 = vmatprep.subr.bf16.mxu0 0
      %1806 = vmatpush1.bf16.xpose.msra.mxu0 %v1778
      %1807 = vmatprep.subr.bf16.mxu0 0
      %1808 = vmatpush1.bf16.xpose.msra.mxu0 %v1775
      %1809 = vmatprep.subr.bf16.mxu0 0
      %1810 = vmatpush1.bf16.xpose.msra.mxu0 %v1772
      %1811 = vmatprep.subr.bf16.mxu0 0
      %1812 = vmatpush2.bf16.xpose.msra.mxu0 0
      %1813 = vmatprep.subr.bf16.mxu0 0
      %1814 = vmatpush2.bf16.xpose.msra.mxu0 0
      %1815 = vmatprep.subr.bf16.mxu0 0
      %1816 = vmatpush2.bf16.xpose.msra.mxu0 0
      %1817 = vmatprep.subr.bf16.mxu0 0
      %1818 = vmatpush2.bf16.xpose.msra.mxu0 0
      %1819 = vmatprep.subr.bf16.mxu0 0
      %1820 = vmatpush2.bf16.xpose.msra.mxu0 0
      %1821 = vmatprep.subr.bf16.mxu0 0
      %1822 = vmatpush2.bf16.xpose.msra.mxu0 0
      %1823 = vmatprep.subr.bf16.mxu0 0
      %1824 = vmatpush2.bf16.xpose.msra.mxu0 0
      %1825 = vmatprep.subr.bf16.mxu0 0
      %1826 = vmatpush2.bf16.xpose.msra.mxu0 0
      %1827 = vmatprep.mubr.bf16.mxu0 0
      %1828 = vmatmul.mubr.bf16.gmra.mxu0 %v1769
      %v1829 = vpop.f32.mrf.mxu0
      %v1830 = vadd.f32 0.0, %v1829
      %v1831 = vpop.f32.mrf.mxu0
      %v1832 = vpop.f32.mrf.mxu0
      %v1833 = vpop.f32.mrf.mxu0
      %1834 = vdwg.mxu0
      %v1835 = vadd.f32 %v1726, %v1830
      %1836 = vst [vmem:[%s347] sm:$0xff] %v1835
      %p1837 = scmp.lt.s32.totalorder %s18, 1
      %s1838 = scalar_select %p1837, %s18, 1
      %s1839 = smul.addr %s1838, 8
      %s1840 = scalar_lea.vmem %s7, %s1839
      // Predicated region
      $region49: #{summarizer_forward.31} parent=47 // pred_check
        %p1841 = pneg %p208
      $region50: #{summarizer_forward.31} parent=47 // pred_check_branch
        %1843 = sbr.rel (%p1841) target = $region52
      $region51: #{summarizer_forward.31} parent=47 // pred_region
        _
      $region52: #{summarizer_forward.31} parent=47 // pred_fallthru
        _
    $region48: #{summarizer_forward.31} parent=5 // pred_fallthru
      _
    %p1844 = scmp.le.s32.totalorder 2, %s13
    // Predicated region
    $region53: #{summarizer_forward.31} parent=5 // pred_check
      %p1845 = pneg %p1844
    $region54: #{summarizer_forward.31} parent=5 // pred_check_branch
      %1847 = sbr.rel (%p1845) target = $region56
    $region55: #{summarizer_forward.31} parent=5 // pred_region
      %s1848 = ssub.s32 %s13, 2
      // Predicated region
      $region57: #{summarizer_forward.31} parent=55 // pred_check
        %p1849 = pneg %p214
      $region58: #{summarizer_forward.31} parent=55 // pred_check_branch
        %1851 = sbr.rel (%p1849) target = $region60
      $region59: #{summarizer_forward.31} parent=55 // pred_region
        %p1852 = scmp.lt.s32.totalorder %s19, 1
        %s1853 = scalar_select %p1852, %s19, 1
        %s1854 = smul.addr %s1853, 8
        %s1855 = scalar_lea.vmem %s7, %s1854
      $region60: #{summarizer_forward.31} parent=55 // pred_fallthru
        _
    $region56: #{summarizer_forward.31} parent=5 // pred_fallthru
      _
  $region6: #{summarizer_forward.31} parent=0 // loop_footer
    %s17 = sadd.s32 1, %s13
  $region7: #{summarizer_forward.31} parent=0 // loop_footer_branch
    %12 = sbr.rel target = $region3
  $region8: #{summarizer_forward.31} parent=0 // loop_exit
    _

// kernel: summarizer_forward.22
$region0: #{summarizer_forward.22}
  #allocation0 [shape = 'u32[]', space=smem, size = 0x4, offset = 0x4, fixed_abs, tag = 'smem constant byte address 0x4 - core index']
  #allocation1 [shape = 'u32[144,128]{1,0:T(1,128)}', space=vmem, size = 0x12000, scoped, tag = 'internal scratch']
  %s0 = inlined_call_operand.vmem [shape: f32[32,128], index: 0, kind: input, shape index: {}]
  %s1 = inlined_call_operand.vmem [shape: bf16[384,128], index: 1, kind: input, shape index: {}]
  %s2 = inlined_call_operand.vmem [shape: f32[1,384], index: 2, kind: input, shape index: {}]
  %s3 = inlined_call_operand.vmem [shape: bf16[32,384], index: 3, kind: output, shape index: {}]
  %s4 = sld [smem:[#allocation0]]
  $region45: #{summarizer_forward.22} parent=0
    _
  %s6 = ssub.s32 1, %s4
  %s7 = scalar_select 0, %s6, %s4
  loop: start=0, step=1, limit=4
  $region2: #{summarizer_forward.22} parent=0 // loop_pre_header
    _
  $region3: #{summarizer_forward.22} parent=0 // loop_header
    %s9 = sphi 0, %s13
    %p10 = scmp.ge.s32.totalorder %s9, 4
    %s19 = sphi 0, %s21
    %s22 = sphi 0, %s19
    %s23 = sphi 0, %s22
    %s39 = sphi 0, %s23
    %s43 = sphi 0, %s43
    %s45 = sphi 0, %s43
    %s46 = sphi 0, %s45
    %s60 = sphi 0, %s46
    %s64 = sphi 0, %s64
    %s66 = sphi 0, %s64
    %s67 = sphi 0, %s66
    %s81 = sphi 0, %s67
    %s87 = sphi 0, %s89
    %s90 = sphi 0, %s87
    %s91 = sphi 0, %s90
    %s107 = sphi 0, %s91
  $region4: #{summarizer_forward.22} parent=0 // loop_header_branch
    %12 = sbr.rel (%p10) target = $region8
  $region5: #{summarizer_forward.22} parent=0 // loop_body
    %s14 = ssub.s32 %s9, 1
    %s15 = ssub.s32 %s9, 2
    %s16 = sadd.s32 %s9, 1
    %s17 = ssub.s32 %s9, %s16
    %p18 = scmp.eq.s32.totalorder %s17, 0
    %s20 = sadd.s32 %s19, 1
    %s21 = scalar_select %p18, %s19, %s20
    %p24 = pneg %p18
    %p25 = scmp.eq.s32.totalorder %s9, 1
    %p26 = por %p24, %p25
    %p27 = scmp.ne.s32.totalorder %s19, %s22
    %p28 = scmp.eq.s32.totalorder %s9, 0
    %p29 = por %p27, %p28
    %p30 = scmp.ne.s32.totalorder %s19, %s22
    %p31 = scmp.eq.s32.totalorder %s14, 1
    %p32 = por %p30, %p31
    %p33 = scmp.ne.s32.totalorder %s22, %s23
    %p34 = scmp.eq.s32.totalorder %s14, 0
    %p35 = por %p33, %p34
    %p36 = scmp.ne.s32.totalorder %s22, %s23
    %p37 = scmp.eq.s32.totalorder %s15, 1
    %p38 = por %p36, %p37
    %p40 = scmp.ne.s32.totalorder %s23, %s39
    %p41 = scmp.eq.s32.totalorder %s15, 0
    %p42 = por %p40, %p41
    %s44 = sadd.s32 %s43, 1
    %p47 = scmp.eq.s32.totalorder %s9, 1
    %p48 = scmp.ne.s32.totalorder %s43, %s45
    %p49 = scmp.eq.s32.totalorder %s9, 0
    %p50 = por %p48, %p49
    %p51 = scmp.ne.s32.totalorder %s43, %s45
    %p52 = scmp.eq.s32.totalorder %s14, 1
    %p53 = por %p51, %p52
    %p54 = scmp.ne.s32.totalorder %s45, %s46
    %p55 = scmp.eq.s32.totalorder %s14, 0
    %p56 = por %p54, %p55
    %p57 = scmp.ne.s32.totalorder %s45, %s46
    %p58 = scmp.eq.s32.totalorder %s15, 1
    %p59 = por %p57, %p58
    %p61 = scmp.ne.s32.totalorder %s46, %s60
    %p62 = scmp.eq.s32.totalorder %s15, 0
    %p63 = por %p61, %p62
    %s65 = sadd.s32 %s64, 1
    %p68 = scmp.eq.s32.totalorder %s9, 1
    %p69 = scmp.ne.s32.totalorder %s64, %s66
    %p70 = scmp.eq.s32.totalorder %s9, 0
    %p71 = por %p69, %p70
    %p72 = scmp.ne.s32.totalorder %s64, %s66
    %p73 = scmp.eq.s32.totalorder %s14, 1
    %p74 = por %p72, %p73
    %p75 = scmp.ne.s32.totalorder %s66, %s67
    %p76 = scmp.eq.s32.totalorder %s14, 0
    %p77 = por %p75, %p76
    %p78 = scmp.ne.s32.totalorder %s66, %s67
    %p79 = scmp.eq.s32.totalorder %s15, 1
    %p80 = por %p78, %p79
    %p82 = scmp.ne.s32.totalorder %s67, %s81
    %p83 = scmp.eq.s32.totalorder %s15, 0
    %p84 = por %p82, %p83
    %s85 = ssub.s32 %s9, %s16
    %p86 = scmp.eq.s32.totalorder %s85, 0
    %s88 = sadd.s32 %s87, 1
    %s89 = scalar_select %p86, %s87, %s88
    %p92 = pneg %p86
    %p93 = scmp.eq.s32.totalorder %s9, 1
    %p94 = por %p92, %p93
    %p95 = scmp.ne.s32.totalorder %s87, %s90
    %p96 = scmp.eq.s32.totalorder %s9, 0
    %p97 = por %p95, %p96
    %p98 = scmp.ne.s32.totalorder %s87, %s90
    %p99 = scmp.eq.s32.totalorder %s14, 1
    %p100 = por %p98, %p99
    %p101 = scmp.ne.s32.totalorder %s90, %s91
    %p102 = scmp.eq.s32.totalorder %s14, 0
    %p103 = por %p101, %p102
    %p104 = scmp.ne.s32.totalorder %s90, %s91
    %p105 = scmp.eq.s32.totalorder %s15, 1
    %p106 = por %p104, %p105
    %p108 = scmp.ne.s32.totalorder %s91, %s107
    %p109 = scmp.eq.s32.totalorder %s15, 0
    %p110 = por %p108, %p109
    %p111 = scmp.le.s32.totalorder 1, %s9
    %p112 = scmp.lt.s32.totalorder %s9, 3
    %p113 = pnand %p111, %p112
    %p114 = pneg %p113
    // Predicated region
    $region9: #{summarizer_forward.22} parent=5 // pred_check
      _
    $region10: #{summarizer_forward.22} parent=5 // pred_check_branch
      %116 = sbr.rel (%p113) target = $region12
    $region11: #{summarizer_forward.22} parent=5 // pred_region
      %s117 = ssub.s32 %s9, 1
      // Predicated region
      $region13: #{summarizer_forward.22} parent=11 // pred_check
        %p118 = pneg %p56
      $region14: #{summarizer_forward.22} parent=11 // pred_check_branch
        %120 = sbr.rel (%p118) target = $region16
      $region15: #{summarizer_forward.22} parent=11 // pred_region
        _
      $region16: #{summarizer_forward.22} parent=11 // pred_fallthru
        _
      // Predicated region
      $region17: #{summarizer_forward.22} parent=11 // pred_check
        %p121 = pneg %p77
      $region18: #{summarizer_forward.22} parent=11 // pred_check_branch
        %123 = sbr.rel (%p121) target = $region20
      $region19: #{summarizer_forward.22} parent=11 // pred_region
        _
      $region20: #{summarizer_forward.22} parent=11 // pred_fallthru
        _
    $region12: #{summarizer_forward.22} parent=5 // pred_fallthru
      _
    %p124 = scmp.lt.s32.totalorder %s9, 2
    // Predicated region
    $region21: #{summarizer_forward.22} parent=5 // pred_check
      %p125 = pneg %p124
    $region22: #{summarizer_forward.22} parent=5 // pred_check_branch
      %127 = sbr.rel (%p125) target = $region24
    $region23: #{summarizer_forward.22} parent=5 // pred_region
      // Predicated region
      $region25: #{summarizer_forward.22} parent=23 // pred_check
        %p128 = pneg %p29
      $region26: #{summarizer_forward.22} parent=23 // pred_check_branch
        %130 = sbr.rel (%p128) target = $region28
      $region27: #{summarizer_forward.22} parent=23 // pred_region
        %s131 = smul.u32 2, %s9
        %p132 = scmp.lt.s32.totalorder %s131, 3
        %s133 = scalar_select %p132, %s131, 3
        %s134 = smul.addr %s133, 8
        %s135 = scalar_lea.vmem %s0, %s134
        %s136 = smul.u32 2, %s9
      $region28: #{summarizer_forward.22} parent=23 // pred_fallthru
        _
    $region24: #{summarizer_forward.22} parent=5 // pred_fallthru
      _
    %p137 = scmp.le.s32.totalorder 1, %s9
    %p138 = scmp.lt.s32.totalorder %s9, 3
    %p139 = pnand %p137, %p138
    %p140 = pneg %p139
    // Predicated region
    $region29: #{summarizer_forward.22} parent=5 // pred_check
      _
    $region30: #{summarizer_forward.22} parent=5 // pred_check_branch
      %142 = sbr.rel (%p139) target = $region32
    $region31: #{summarizer_forward.22} parent=5 // pred_region
      %s143 = ssub.s32 %s9, 1
      %s144 = smul.u32 2, %s14
      %p145 = scmp.lt.s32.totalorder %s144, 3
      %s146 = scalar_select %p145, %s144, 3
      %s147 = smul.addr %s146, 8
      %s148 = scalar_lea.vmem %s0, %s147
      %p149 = pneg %p35
      %p150 = pneg %p32
      %p151 = pneg %p56
      %p152 = pneg %p53
      %p153 = pneg %p77
      %p154 = pneg %p74
      %p155 = pneg %p103
      %p156 = pneg %p100
      %s157 = smul.u32 2, %s14
      %p158 = scmp.lt.s32.totalorder %s157, 3
      %s159 = scalar_select %p158, %s157, 3
      %s160 = smul.addr %s159, 3
      %s161 = smul.addr %s160, 4
      %s162 = scalar_lea.vmem %s3, %s161
      %s163 = smul.u32 2, %s14
      %p164 = scmp.lt.s32.totalorder %s163, 3
      %s165 = scalar_select %p164, %s163, 3
      %s166 = smul.addr %s165, 8
      %s167 = scalar_lea.vmem %s0, %s166
      %s168 = smul.u32 2, %s14
      %s169 = smul.u32 2, %s14
      %p170 = scmp.lt.s32.totalorder %s169, 3
      %s171 = scalar_select %p170, %s169, 3
      %s172 = smul.addr %s171, 3
      %s173 = smul.addr %s172, 4
      %s174 = scalar_lea.vmem %s3, %s173
      %s175 = smul.u32 2, %s14
      %v177 = vld [vmem:[%s167] sm:$0xff]
      %v178 = vld [vmem:[%s167 + $0x8] sm:$0xff]
      %v179 = vpack.c.bf16 %v178, %v177
      %v180 = vld [vmem:[%s1] sm:$0xf]
      %v181 = vld [vmem:[%s1 + $0x4] sm:$0xf]
      %v182 = vld [vmem:[%s1 + $0x8] sm:$0xf]
      %v183 = vld [vmem:[%s1 + $0xc] sm:$0xf]
      %v184 = vld [vmem:[%s1 + $0x10] sm:$0xf]
      %v185 = vld [vmem:[%s1 + $0x14] sm:$0xf]
      %v186 = vld [vmem:[%s1 + $0x18] sm:$0xf]
      %v187 = vld [vmem:[%s1 + $0x1c] sm:$0xf]
      %v188 = vld [vmem:[%s1 + $0x20] sm:$0xf]
      %v189 = vld [vmem:[%s1 + $0x24] sm:$0xf]
      %v190 = vld [vmem:[%s1 + $0x28] sm:$0xf]
      %v191 = vld [vmem:[%s1 + $0x2c] sm:$0xf]
      %v192 = vld [vmem:[%s1 + $0x30] sm:$0xf]
      %v193 = vld [vmem:[%s1 + $0x34] sm:$0xf]
      %v194 = vld [vmem:[%s1 + $0x38] sm:$0xf]
      %v195 = vld [vmem:[%s1 + $0x3c] sm:$0xf]
      %v196 = vld [vmem:[%s1 + $0x40] sm:$0xf]
      %v197 = vld [vmem:[%s1 + $0x44] sm:$0xf]
      %v198 = vld [vmem:[%s1 + $0x48] sm:$0xf]
      %v199 = vld [vmem:[%s1 + $0x4c] sm:$0xf]
      %v200 = vld [vmem:[%s1 + $0x50] sm:$0xf]
      %v201 = vld [vmem:[%s1 + $0x54] sm:$0xf]
      %v202 = vld [vmem:[%s1 + $0x58] sm:$0xf]
      %v203 = vld [vmem:[%s1 + $0x5c] sm:$0xf]
      %v204 = vld [vmem:[%s1 + $0x60] sm:$0xf]
      %v205 = vld [vmem:[%s1 + $0x64] sm:$0xf]
      %v206 = vld [vmem:[%s1 + $0x68] sm:$0xf]
      %v207 = vld [vmem:[%s1 + $0x6c] sm:$0xf]
      %v208 = vld [vmem:[%s1 + $0x70] sm:$0xf]
      %v209 = vld [vmem:[%s1 + $0x74] sm:$0xf]
      %v210 = vld [vmem:[%s1 + $0x78] sm:$0xf]
      %v211 = vld [vmem:[%s1 + $0x7c] sm:$0xf]
      %v212 = vld [vmem:[%s1 + $0x80] sm:$0xf]
      %v213 = vld [vmem:[%s1 + $0x84] sm:$0xf]
      %v214 = vld [vmem:[%s1 + $0x88] sm:$0xf]
      %v215 = vld [vmem:[%s1 + $0x8c] sm:$0xf]
      %v216 = vld [vmem:[%s1 + $0x90] sm:$0xf]
      %v217 = vld [vmem:[%s1 + $0x94] sm:$0xf]
      %v218 = vld [vmem:[%s1 + $0x98] sm:$0xf]
      %v219 = vld [vmem:[%s1 + $0x9c] sm:$0xf]
      %v220 = vld [vmem:[%s1 + $0xa0] sm:$0xf]
      %v221 = vld [vmem:[%s1 + $0xa4] sm:$0xf]
      %v222 = vld [vmem:[%s1 + $0xa8] sm:$0xf]
      %v223 = vld [vmem:[%s1 + $0xac] sm:$0xf]
      %v224 = vld [vmem:[%s1 + $0xb0] sm:$0xf]
      %v225 = vld [vmem:[%s1 + $0xb4] sm:$0xf]
      %v226 = vld [vmem:[%s1 + $0xb8] sm:$0xf]
      %v227 = vld [vmem:[%s1 + $0xbc] sm:$0xf]
      %v228 = vld [vmem:[%s2] sm:$0x7]
      %v230 = vlaneseq
      %v231 = vshrl.u32 %v230, 7
      %v232 = vsub.s32 0, %v231
      %v233 = vrot.slane %v228, %v232
      %v234 = vlaneseq
      %v235 = vshrl.u32 %v234, 7
      %v236 = vsub.s32 1, %v235
      %v237 = vrot.slane %v228, %v236
      %v238 = vlaneseq
      %v239 = vshrl.u32 %v238, 7
      %v240 = vsub.s32 2, %v239
      %v241 = vrot.slane %v228, %v240
      %v293 = vunpack.c.l.b16 %v180
      %v294 = vunpack.c.l.b16 %v181
      %v295 = vunpack.c.l.b16 %v182
      %v296 = vunpack.c.l.b16 %v183
      %v297 = vunpack.c.l.b16 %v184
      %v298 = vunpack.c.l.b16 %v185
      %v299 = vunpack.c.l.b16 %v186
      %v300 = vunpack.c.l.b16 %v187
      %v301 = vunpack.c.l.b16 %v188
      %v302 = vunpack.c.l.b16 %v189
      %v303 = vunpack.c.l.b16 %v190
      %v304 = vunpack.c.l.b16 %v191
      %v305 = vunpack.c.l.b16 %v192
      %v306 = vunpack.c.l.b16 %v193
      %v307 = vunpack.c.l.b16 %v194
      %v308 = vunpack.c.l.b16 %v195
      %v309 = vunpack.c.l.b16 %v196
      %v310 = vunpack.c.l.b16 %v197
      %v311 = vunpack.c.l.b16 %v198
      %v312 = vunpack.c.l.b16 %v199
      %v313 = vunpack.c.l.b16 %v200
      %v314 = vunpack.c.l.b16 %v201
      %v315 = vunpack.c.l.b16 %v202
      %v316 = vunpack.c.l.b16 %v203
      %v317 = vunpack.c.l.b16 %v204
      %v318 = vunpack.c.l.b16 %v205
      %v319 = vunpack.c.l.b16 %v206
      %v320 = vunpack.c.l.b16 %v207
      %v321 = vunpack.c.l.b16 %v208
      %v322 = vunpack.c.l.b16 %v209
      %v323 = vunpack.c.l.b16 %v210
      %v324 = vunpack.c.l.b16 %v211
      %v325 = vunpack.c.l.b16 %v212
      %v326 = vunpack.c.l.b16 %v213
      %v327 = vunpack.c.l.b16 %v214
      %v328 = vunpack.c.l.b16 %v215
      %v329 = vunpack.c.l.b16 %v216
      %v330 = vunpack.c.l.b16 %v217
      %v331 = vunpack.c.l.b16 %v218
      %v332 = vunpack.c.l.b16 %v219
      %v333 = vunpack.c.l.b16 %v220
      %v334 = vunpack.c.l.b16 %v221
      %v335 = vunpack.c.l.b16 %v222
      %v336 = vunpack.c.l.b16 %v223
      %v337 = vunpack.c.l.b16 %v224
      %v338 = vunpack.c.l.b16 %v225
      %v339 = vunpack.c.l.b16 %v226
      %v340 = vunpack.c.l.b16 %v227
      %v341 = vpack.c.b16 %v294, %v293
      %v342 = vpack.c.b16 %v296, %v295
      %v343 = vpack.c.b16 %v298, %v297
      %v344 = vpack.c.b16 %v300, %v299
      %v345 = vpack.c.b16 %v302, %v301
      %v346 = vpack.c.b16 %v304, %v303
      %v347 = vpack.c.b16 %v306, %v305
      %v348 = vpack.c.b16 %v308, %v307
      %v349 = vpack.c.b16 %v310, %v309
      %v350 = vpack.c.b16 %v312, %v311
      %v351 = vpack.c.b16 %v314, %v313
      %v352 = vpack.c.b16 %v316, %v315
      %v353 = vpack.c.b16 %v318, %v317
      %v354 = vpack.c.b16 %v320, %v319
      %v355 = vpack.c.b16 %v322, %v321
      %v356 = vpack.c.b16 %v324, %v323
      %v357 = vpack.c.b16 %v326, %v325
      %v358 = vpack.c.b16 %v328, %v327
      %v359 = vpack.c.b16 %v330, %v329
      %v360 = vpack.c.b16 %v332, %v331
      %v361 = vpack.c.b16 %v334, %v333
      %v362 = vpack.c.b16 %v336, %v335
      %v363 = vpack.c.b16 %v338, %v337
      %v364 = vpack.c.b16 %v340, %v339
      %389 = vmatprep.subr.bf16.mxu0 0
      %390 = vmatpush1.bf16.xpose.msra.mxu0 %v348
      %391 = vmatprep.subr.bf16.mxu0 0
      %392 = vmatpush1.bf16.xpose.msra.mxu0 %v347
      %393 = vmatprep.subr.bf16.mxu0 0
      %394 = vmatpush1.bf16.xpose.msra.mxu0 %v346
      %395 = vmatprep.subr.bf16.mxu0 0
      %396 = vmatpush1.bf16.xpose.msra.mxu0 %v345
      %397 = vmatprep.subr.bf16.mxu0 0
      %398 = vmatpush1.bf16.xpose.msra.mxu0 %v344
      %399 = vmatprep.subr.bf16.mxu0 0
      %400 = vmatpush1.bf16.xpose.msra.mxu0 %v343
      %401 = vmatprep.subr.bf16.mxu0 0
      %402 = vmatpush1.bf16.xpose.msra.mxu0 %v342
      %403 = vmatprep.subr.bf16.mxu0 0
      %404 = vmatpush1.bf16.xpose.msra.mxu0 %v341
      %405 = vmatprep.subr.bf16.mxu0 0
      %406 = vmatpush2.bf16.xpose.msra.mxu0 %v356
      %407 = vmatprep.subr.bf16.mxu0 0
      %408 = vmatpush2.bf16.xpose.msra.mxu0 %v355
      %409 = vmatprep.subr.bf16.mxu0 0
      %410 = vmatpush2.bf16.xpose.msra.mxu0 %v354
      %411 = vmatprep.subr.bf16.mxu0 0
      %412 = vmatpush2.bf16.xpose.msra.mxu0 %v353
      %413 = vmatprep.subr.bf16.mxu0 0
      %414 = vmatpush2.bf16.xpose.msra.mxu0 %v352
      %415 = vmatprep.subr.bf16.mxu0 0
      %416 = vmatpush2.bf16.xpose.msra.mxu0 %v351
      %417 = vmatprep.subr.bf16.mxu0 0
      %418 = vmatpush2.bf16.xpose.msra.mxu0 %v350
      %419 = vmatprep.subr.bf16.mxu0 0
      %420 = vmatpush2.bf16.xpose.msra.mxu0 %v349
      %421 = vmatprep.mubr.bf16.mxu0 0
      %422 = vmatmul.mubr.bf16.gmra.mxu0 %v179
      %v423 = vpop.f32.mrf.mxu0
      %v424 = vadd.f32 %v233, %v423
      %v425 = vpop.f32.mrf.mxu0
      %v426 = vadd.f32 %v237, %v425
      %v427 = vpop.f32.mrf.mxu0
      %v428 = vadd.f32 %v233, %v427
      %v429 = vpop.f32.mrf.mxu0
      %v430 = vadd.f32 %v237, %v429
      %431 = vdwg.mxu0
      %432 = vmatprep.subr.bf16.mxu0 0
      %433 = vmatpush1.bf16.xpose.msra.mxu0 %v364
      %434 = vmatprep.subr.bf16.mxu0 0
      %435 = vmatpush1.bf16.xpose.msra.mxu0 %v363
      %436 = vmatprep.subr.bf16.mxu0 0
      %437 = vmatpush1.bf16.xpose.msra.mxu0 %v362
      %438 = vmatprep.subr.bf16.mxu0 0
      %439 = vmatpush1.bf16.xpose.msra.mxu0 %v361
      %440 = vmatprep.subr.bf16.mxu0 0
      %441 = vmatpush1.bf16.xpose.msra.mxu0 %v360
      %442 = vmatprep.subr.bf16.mxu0 0
      %443 = vmatpush1.bf16.xpose.msra.mxu0 %v359
      %444 = vmatprep.subr.bf16.mxu0 0
      %445 = vmatpush1.bf16.xpose.msra.mxu0 %v358
      %446 = vmatprep.subr.bf16.mxu0 0
      %447 = vmatpush1.bf16.xpose.msra.mxu0 %v357
      %448 = vmatprep.subr.bf16.mxu0 0
      %449 = vmatpush2.bf16.xpose.msra.mxu0 0
      %450 = vmatprep.subr.bf16.mxu0 0
      %451 = vmatpush2.bf16.xpose.msra.mxu0 0
      %452 = vmatprep.subr.bf16.mxu0 0
      %453 = vmatpush2.bf16.xpose.msra.mxu0 0
      %454 = vmatprep.subr.bf16.mxu0 0
      %455 = vmatpush2.bf16.xpose.msra.mxu0 0
      %456 = vmatprep.subr.bf16.mxu0 0
      %457 = vmatpush2.bf16.xpose.msra.mxu0 0
      %458 = vmatprep.subr.bf16.mxu0 0
      %459 = vmatpush2.bf16.xpose.msra.mxu0 0
      %460 = vmatprep.subr.bf16.mxu0 0
      %461 = vmatpush2.bf16.xpose.msra.mxu0 0
      %462 = vmatprep.subr.bf16.mxu0 0
      %463 = vmatpush2.bf16.xpose.msra.mxu0 0
      %464 = vmatprep.mubr.bf16.mxu0 0
      %465 = vmatmul.mubr.bf16.gmra.mxu0 %v179
      %v466 = vpop.f32.mrf.mxu0
      %v467 = vadd.f32 %v241, %v466
      %v468 = vpop.f32.mrf.mxu0
      %v469 = vpop.f32.mrf.mxu0
      %v470 = vadd.f32 %v241, %v469
      %v471 = vpop.f32.mrf.mxu0
      %472 = vdwg.mxu0
      %v473 = vpack.c.bf16 %v428, %v424
      %v474 = vpack.c.bf16 %v430, %v426
      %v475 = vpack.c.bf16 %v470, %v467
      %v479 = vunpack.c.l.b16 %v473
      %v480 = vunpack.c.l.b16 %v474
      %v481 = vunpack.c.l.b16 %v475
      %v482 = vunpack.c.h.b16 %v473
      %v483 = vunpack.c.h.b16 %v474
      %v484 = vunpack.c.h.b16 %v475
      %v485 = vpack.c.b16 %v480, %v479
      %v486 = vpack.c.b16 %v481, %v481
      %v487 = vpack.c.b16 %v483, %v482
      %v488 = vpack.c.b16 %v484, %v484
      %493 = vst [vmem:[%s174] sm:$0xff] %v485
      %494 = vst [vmem:[%s174 + $0x8] sm:$0xf] %v486
      %495 = vst [vmem:[%s174 + $0xc] sm:$0xff] %v487
      %496 = vst [vmem:[%s174 + $0x14] sm:$0xf] %v488
      %s497 = smul.u32 2, %s14
      %p498 = scmp.lt.s32.totalorder %s497, 3
      %s499 = scalar_select %p498, %s497, 3
      %s500 = smul.addr %s499, 3
      %s501 = smul.addr %s500, 4
      %s502 = scalar_lea.vmem %s3, %s501
      // Predicated region
      $region33: #{summarizer_forward.22} parent=31 // pred_check
        %p503 = pneg %p100
      $region34: #{summarizer_forward.22} parent=31 // pred_check_branch
        %505 = sbr.rel (%p503) target = $region36
      $region35: #{summarizer_forward.22} parent=31 // pred_region
        %s506 = smul.u32 2, %s14
      $region36: #{summarizer_forward.22} parent=31 // pred_fallthru
        _
    $region32: #{summarizer_forward.22} parent=5 // pred_fallthru
      _
    %p507 = scmp.le.s32.totalorder 2, %s9
    // Predicated region
    $region37: #{summarizer_forward.22} parent=5 // pred_check
      %p508 = pneg %p507
    $region38: #{summarizer_forward.22} parent=5 // pred_check_branch
      %510 = sbr.rel (%p508) target = $region40
    $region39: #{summarizer_forward.22} parent=5 // pred_region
      %s511 = ssub.s32 %s9, 2
      // Predicated region
      $region41: #{summarizer_forward.22} parent=39 // pred_check
        %p512 = pneg %p106
      $region42: #{summarizer_forward.22} parent=39 // pred_check_branch
        %514 = sbr.rel (%p512) target = $region44
      $region43: #{summarizer_forward.22} parent=39 // pred_region
        %s515 = smul.u32 2, %s15
        %p516 = scmp.lt.s32.totalorder %s515, 3
        %s517 = scalar_select %p516, %s515, 3
        %s518 = smul.addr %s517, 3
        %s519 = smul.addr %s518, 4
        %s520 = scalar_lea.vmem %s3, %s519
      $region44: #{summarizer_forward.22} parent=39 // pred_fallthru
        _
    $region40: #{summarizer_forward.22} parent=5 // pred_fallthru
      _
  $region6: #{summarizer_forward.22} parent=0 // loop_footer
    %s13 = sadd.s32 1, %s9
  $region7: #{summarizer_forward.22} parent=0 // loop_footer_branch
    %8 = sbr.rel target = $region3
  $region8: #{summarizer_forward.22} parent=0 // loop_exit
    _

// kernel: summarizer_forward.24
$region0: #{summarizer_forward.24}
  #allocation0 [shape = 'u32[]', space=smem, size = 0x4, offset = 0x4, fixed_abs, tag = 'smem constant byte address 0x4 - core index']
  #allocation1 [shape = 'u32[144,128]{1,0:T(1,128)}', space=vmem, size = 0x12000, scoped, tag = 'internal scratch']
  %s0 = inlined_call_operand.vmem [shape: f32[32,128], index: 0, kind: input, shape index: {}]
  %s1 = inlined_call_operand.vmem [shape: bf16[256,128], index: 1, kind: input, shape index: {}]
  %s2 = inlined_call_operand.vmem [shape: f32[1,256], index: 2, kind: input, shape index: {}]
  %s3 = inlined_call_operand.vmem [shape: f32[1,128], index: 3, kind: input, shape index: {}]
  %s4 = inlined_call_operand.vmem [shape: f32[1,128], index: 4, kind: input, shape index: {}]
  %s5 = inlined_call_operand.vmem [shape: bf16[32,256], index: 5, kind: output, shape index: {}]
  %s6 = sld [smem:[#allocation0]]
  $region53: #{summarizer_forward.24} parent=0
    _
  %s8 = ssub.s32 1, %s6
  %s9 = scalar_select 0, %s8, %s6
  loop: start=0, step=1, limit=4
  $region2: #{summarizer_forward.24} parent=0 // loop_pre_header
    _
  $region3: #{summarizer_forward.24} parent=0 // loop_header
    %s11 = sphi 0, %s15
    %p12 = scmp.ge.s32.totalorder %s11, 4
    %s21 = sphi 0, %s23
    %s24 = sphi 0, %s21
    %s25 = sphi 0, %s24
    %s41 = sphi 0, %s25
    %s45 = sphi 0, %s45
    %s47 = sphi 0, %s45
    %s48 = sphi 0, %s47
    %s62 = sphi 0, %s48
    %s66 = sphi 0, %s66
    %s68 = sphi 0, %s66
    %s69 = sphi 0, %s68
    %s83 = sphi 0, %s69
    %s87 = sphi 0, %s87
    %s89 = sphi 0, %s87
    %s90 = sphi 0, %s89
    %s104 = sphi 0, %s90
    %s108 = sphi 0, %s108
    %s110 = sphi 0, %s108
    %s111 = sphi 0, %s110
    %s125 = sphi 0, %s111
    %s131 = sphi 0, %s133
    %s134 = sphi 0, %s131
    %s135 = sphi 0, %s134
    %s151 = sphi 0, %s135
  $region4: #{summarizer_forward.24} parent=0 // loop_header_branch
    %14 = sbr.rel (%p12) target = $region8
  $region5: #{summarizer_forward.24} parent=0 // loop_body
    %s16 = ssub.s32 %s11, 1
    %s17 = ssub.s32 %s11, 2
    %s18 = sadd.s32 %s11, 1
    %s19 = ssub.s32 %s11, %s18
    %p20 = scmp.eq.s32.totalorder %s19, 0
    %s22 = sadd.s32 %s21, 1
    %s23 = scalar_select %p20, %s21, %s22
    %p26 = pneg %p20
    %p27 = scmp.eq.s32.totalorder %s11, 1
    %p28 = por %p26, %p27
    %p29 = scmp.ne.s32.totalorder %s21, %s24
    %p30 = scmp.eq.s32.totalorder %s11, 0
    %p31 = por %p29, %p30
    %p32 = scmp.ne.s32.totalorder %s21, %s24
    %p33 = scmp.eq.s32.totalorder %s16, 1
    %p34 = por %p32, %p33
    %p35 = scmp.ne.s32.totalorder %s24, %s25
    %p36 = scmp.eq.s32.totalorder %s16, 0
    %p37 = por %p35, %p36
    %p38 = scmp.ne.s32.totalorder %s24, %s25
    %p39 = scmp.eq.s32.totalorder %s17, 1
    %p40 = por %p38, %p39
    %p42 = scmp.ne.s32.totalorder %s25, %s41
    %p43 = scmp.eq.s32.totalorder %s17, 0
    %p44 = por %p42, %p43
    %s46 = sadd.s32 %s45, 1
    %p49 = scmp.eq.s32.totalorder %s11, 1
    %p50 = scmp.ne.s32.totalorder %s45, %s47
    %p51 = scmp.eq.s32.totalorder %s11, 0
    %p52 = por %p50, %p51
    %p53 = scmp.ne.s32.totalorder %s45, %s47
    %p54 = scmp.eq.s32.totalorder %s16, 1
    %p55 = por %p53, %p54
    %p56 = scmp.ne.s32.totalorder %s47, %s48
    %p57 = scmp.eq.s32.totalorder %s16, 0
    %p58 = por %p56, %p57
    %p59 = scmp.ne.s32.totalorder %s47, %s48
    %p60 = scmp.eq.s32.totalorder %s17, 1
    %p61 = por %p59, %p60
    %p63 = scmp.ne.s32.totalorder %s48, %s62
    %p64 = scmp.eq.s32.totalorder %s17, 0
    %p65 = por %p63, %p64
    %s67 = sadd.s32 %s66, 1
    %p70 = scmp.eq.s32.totalorder %s11, 1
    %p71 = scmp.ne.s32.totalorder %s66, %s68
    %p72 = scmp.eq.s32.totalorder %s11, 0
    %p73 = por %p71, %p72
    %p74 = scmp.ne.s32.totalorder %s66, %s68
    %p75 = scmp.eq.s32.totalorder %s16, 1
    %p76 = por %p74, %p75
    %p77 = scmp.ne.s32.totalorder %s68, %s69
    %p78 = scmp.eq.s32.totalorder %s16, 0
    %p79 = por %p77, %p78
    %p80 = scmp.ne.s32.totalorder %s68, %s69
    %p81 = scmp.eq.s32.totalorder %s17, 1
    %p82 = por %p80, %p81
    %p84 = scmp.ne.s32.totalorder %s69, %s83
    %p85 = scmp.eq.s32.totalorder %s17, 0
    %p86 = por %p84, %p85
    %s88 = sadd.s32 %s87, 1
    %p91 = scmp.eq.s32.totalorder %s11, 1
    %p92 = scmp.ne.s32.totalorder %s87, %s89
    %p93 = scmp.eq.s32.totalorder %s11, 0
    %p94 = por %p92, %p93
    %p95 = scmp.ne.s32.totalorder %s87, %s89
    %p96 = scmp.eq.s32.totalorder %s16, 1
    %p97 = por %p95, %p96
    %p98 = scmp.ne.s32.totalorder %s89, %s90
    %p99 = scmp.eq.s32.totalorder %s16, 0
    %p100 = por %p98, %p99
    %p101 = scmp.ne.s32.totalorder %s89, %s90
    %p102 = scmp.eq.s32.totalorder %s17, 1
    %p103 = por %p101, %p102
    %p105 = scmp.ne.s32.totalorder %s90, %s104
    %p106 = scmp.eq.s32.totalorder %s17, 0
    %p107 = por %p105, %p106
    %s109 = sadd.s32 %s108, 1
    %p112 = scmp.eq.s32.totalorder %s11, 1
    %p113 = scmp.ne.s32.totalorder %s108, %s110
    %p114 = scmp.eq.s32.totalorder %s11, 0
    %p115 = por %p113, %p114
    %p116 = scmp.ne.s32.totalorder %s108, %s110
    %p117 = scmp.eq.s32.totalorder %s16, 1
    %p118 = por %p116, %p117
    %p119 = scmp.ne.s32.totalorder %s110, %s111
    %p120 = scmp.eq.s32.totalorder %s16, 0
    %p121 = por %p119, %p120
    %p122 = scmp.ne.s32.totalorder %s110, %s111
    %p123 = scmp.eq.s32.totalorder %s17, 1
    %p124 = por %p122, %p123
    %p126 = scmp.ne.s32.totalorder %s111, %s125
    %p127 = scmp.eq.s32.totalorder %s17, 0
    %p128 = por %p126, %p127
    %s129 = ssub.s32 %s11, %s18
    %p130 = scmp.eq.s32.totalorder %s129, 0
    %s132 = sadd.s32 %s131, 1
    %s133 = scalar_select %p130, %s131, %s132
    %p136 = pneg %p130
    %p137 = scmp.eq.s32.totalorder %s11, 1
    %p138 = por %p136, %p137
    %p139 = scmp.ne.s32.totalorder %s131, %s134
    %p140 = scmp.eq.s32.totalorder %s11, 0
    %p141 = por %p139, %p140
    %p142 = scmp.ne.s32.totalorder %s131, %s134
    %p143 = scmp.eq.s32.totalorder %s16, 1
    %p144 = por %p142, %p143
    %p145 = scmp.ne.s32.totalorder %s134, %s135
    %p146 = scmp.eq.s32.totalorder %s16, 0
    %p147 = por %p145, %p146
    %p148 = scmp.ne.s32.totalorder %s134, %s135
    %p149 = scmp.eq.s32.totalorder %s17, 1
    %p150 = por %p148, %p149
    %p152 = scmp.ne.s32.totalorder %s135, %s151
    %p153 = scmp.eq.s32.totalorder %s17, 0
    %p154 = por %p152, %p153
    %p155 = scmp.le.s32.totalorder 1, %s11
    %p156 = scmp.lt.s32.totalorder %s11, 3
    %p157 = pnand %p155, %p156
    %p158 = pneg %p157
    // Predicated region
    $region9: #{summarizer_forward.24} parent=5 // pred_check
      _
    $region10: #{summarizer_forward.24} parent=5 // pred_check_branch
      %160 = sbr.rel (%p157) target = $region12
    $region11: #{summarizer_forward.24} parent=5 // pred_region
      %s161 = ssub.s32 %s11, 1
      // Predicated region
      $region13: #{summarizer_forward.24} parent=11 // pred_check
        %p162 = pneg %p58
      $region14: #{summarizer_forward.24} parent=11 // pred_check_branch
        %164 = sbr.rel (%p162) target = $region16
      $region15: #{summarizer_forward.24} parent=11 // pred_region
        _
      $region16: #{summarizer_forward.24} parent=11 // pred_fallthru
        _
      // Predicated region
      $region17: #{summarizer_forward.24} parent=11 // pred_check
        %p165 = pneg %p79
      $region18: #{summarizer_forward.24} parent=11 // pred_check_branch
        %167 = sbr.rel (%p165) target = $region20
      $region19: #{summarizer_forward.24} parent=11 // pred_region
        _
      $region20: #{summarizer_forward.24} parent=11 // pred_fallthru
        _
      // Predicated region
      $region21: #{summarizer_forward.24} parent=11 // pred_check
        %p168 = pneg %p100
      $region22: #{summarizer_forward.24} parent=11 // pred_check_branch
        %170 = sbr.rel (%p168) target = $region24
      $region23: #{summarizer_forward.24} parent=11 // pred_region
        _
      $region24: #{summarizer_forward.24} parent=11 // pred_fallthru
        _
      // Predicated region
      $region25: #{summarizer_forward.24} parent=11 // pred_check
        %p171 = pneg %p121
      $region26: #{summarizer_forward.24} parent=11 // pred_check_branch
        %173 = sbr.rel (%p171) target = $region28
      $region27: #{summarizer_forward.24} parent=11 // pred_region
        _
      $region28: #{summarizer_forward.24} parent=11 // pred_fallthru
        _
    $region12: #{summarizer_forward.24} parent=5 // pred_fallthru
      _
    %p174 = scmp.lt.s32.totalorder %s11, 2
    // Predicated region
    $region29: #{summarizer_forward.24} parent=5 // pred_check
      %p175 = pneg %p174
    $region30: #{summarizer_forward.24} parent=5 // pred_check_branch
      %177 = sbr.rel (%p175) target = $region32
    $region31: #{summarizer_forward.24} parent=5 // pred_region
      // Predicated region
      $region33: #{summarizer_forward.24} parent=31 // pred_check
        %p178 = pneg %p31
      $region34: #{summarizer_forward.24} parent=31 // pred_check_branch
        %180 = sbr.rel (%p178) target = $region36
      $region35: #{summarizer_forward.24} parent=31 // pred_region
        %s181 = smul.u32 2, %s11
        %p182 = scmp.lt.s32.totalorder %s181, 3
        %s183 = scalar_select %p182, %s181, 3
        %s184 = smul.addr %s183, 8
        %s185 = scalar_lea.vmem %s0, %s184
        %s186 = smul.u32 2, %s11
      $region36: #{summarizer_forward.24} parent=31 // pred_fallthru
        _
    $region32: #{summarizer_forward.24} parent=5 // pred_fallthru
      _
    %p187 = scmp.le.s32.totalorder 1, %s11
    %p188 = scmp.lt.s32.totalorder %s11, 3
    %p189 = pnand %p187, %p188
    %p190 = pneg %p189
    // Predicated region
    $region37: #{summarizer_forward.24} parent=5 // pred_check
      _
    $region38: #{summarizer_forward.24} parent=5 // pred_check_branch
      %192 = sbr.rel (%p189) target = $region40
    $region39: #{summarizer_forward.24} parent=5 // pred_region
      %s193 = ssub.s32 %s11, 1
      %s194 = smul.u32 2, %s16
      %p195 = scmp.lt.s32.totalorder %s194, 3
      %s196 = scalar_select %p195, %s194, 3
      %s197 = smul.addr %s196, 8
      %s198 = scalar_lea.vmem %s0, %s197
      %p199 = pneg %p37
      %p200 = pneg %p34
      %p201 = pneg %p58
      %p202 = pneg %p55
      %p203 = pneg %p79
      %p204 = pneg %p76
      %p205 = pneg %p100
      %p206 = pneg %p97
      %p207 = pneg %p121
      %p208 = pneg %p118
      %p209 = pneg %p147
      %p210 = pneg %p144
      %s211 = smul.u32 2, %s16
      %p212 = scmp.lt.s32.totalorder %s211, 3
      %s213 = scalar_select %p212, %s211, 3
      %s214 = smul.addr %s213, 2
      %s215 = smul.addr %s214, 4
      %s216 = scalar_lea.vmem %s5, %s215
      %s217 = smul.u32 2, %s16
      %p218 = scmp.lt.s32.totalorder %s217, 3
      %s219 = scalar_select %p218, %s217, 3
      %s220 = smul.addr %s219, 8
      %s221 = scalar_lea.vmem %s0, %s220
      %s222 = smul.u32 2, %s16
      %s223 = smul.u32 2, %s16
      %p224 = scmp.lt.s32.totalorder %s223, 3
      %s225 = scalar_select %p224, %s223, 3
      %s226 = smul.addr %s225, 2
      %s227 = smul.addr %s226, 4
      %s228 = scalar_lea.vmem %s5, %s227
      %s229 = smul.u32 2, %s16
      %v231 = vld [vmem:[%s221] sm:$0xff]
      %v232 = vld [vmem:[%s221 + $0x8] sm:$0xff]
      %233 = vadd.xlane.f32.xlu0 %v231
      %v234 = vpop.xlane.xlu0 %233
      %235 = vadd.xlane.f32.xlu0 %v232
      %v236 = vpop.xlane.xlu0 %235
      %v237 = vrcp.pop 128.0
      %v238 = vmul.f32 %v234, %v237
      %v239 = vmul.f32 %v236, %v237
      %v240 = vsub.f32 %v231, %v238
      %v241 = vsub.f32 %v232, %v239
      %v242 = vmul.f32 %v240, %v240
      %v243 = vmul.f32 %v241, %v241
      %244 = vadd.xlane.f32.xlu0 %v242
      %v245 = vpop.xlane.xlu0 %244
      %246 = vadd.xlane.f32.xlu0 %v243
      %v247 = vpop.xlane.xlu0 %246
      %v248 = vmul.f32 %v245, %v237
      %v249 = vmul.f32 %v247, %v237
      %v250 = vadd.f32 %v248, 1e-06
      %v251 = vadd.f32 %v249, 1e-06
      %v252 = vrsqrt.pop %v250
      %v253 = vrsqrt.pop %v251
      %v254 = vmul.f32 %v240, %v252
      %v255 = vmul.f32 %v241, %v253
      %v256 = vld [vmem:[%s3] sm:$0x1]
      %v258 = vlaneseq
      %v259 = vshrl.u32 %v258, 7
      %v260 = vsub.s32 0, %v259
      %v261 = vrot.slane %v256, %v260
      %v263 = vmul.f32 %v254, %v261
      %v264 = vmul.f32 %v255, %v261
      %v265 = vld [vmem:[%s4] sm:$0x1]
      %v267 = vlaneseq
      %v268 = vshrl.u32 %v267, 7
      %v269 = vsub.s32 0, %v268
      %v270 = vrot.slane %v265, %v269
      %v272 = vadd.f32 %v263, %v270
      %v273 = vadd.f32 %v264, %v270
      %v274 = vpack.c.bf16 %v273, %v272
      %v275 = vld [vmem:[%s1] sm:$0xf]
      %v276 = vld [vmem:[%s1 + $0x4] sm:$0xf]
      %v277 = vld [vmem:[%s1 + $0x8] sm:$0xf]
      %v278 = vld [vmem:[%s1 + $0xc] sm:$0xf]
      %v279 = vld [vmem:[%s1 + $0x10] sm:$0xf]
      %v280 = vld [vmem:[%s1 + $0x14] sm:$0xf]
      %v281 = vld [vmem:[%s1 + $0x18] sm:$0xf]
      %v282 = vld [vmem:[%s1 + $0x1c] sm:$0xf]
      %v283 = vld [vmem:[%s1 + $0x20] sm:$0xf]
      %v284 = vld [vmem:[%s1 + $0x24] sm:$0xf]
      %v285 = vld [vmem:[%s1 + $0x28] sm:$0xf]
      %v286 = vld [vmem:[%s1 + $0x2c] sm:$0xf]
      %v287 = vld [vmem:[%s1 + $0x30] sm:$0xf]
      %v288 = vld [vmem:[%s1 + $0x34] sm:$0xf]
      %v289 = vld [vmem:[%s1 + $0x38] sm:$0xf]
      %v290 = vld [vmem:[%s1 + $0x3c] sm:$0xf]
      %v291 = vld [vmem:[%s1 + $0x40] sm:$0xf]
      %v292 = vld [vmem:[%s1 + $0x44] sm:$0xf]
      %v293 = vld [vmem:[%s1 + $0x48] sm:$0xf]
      %v294 = vld [vmem:[%s1 + $0x4c] sm:$0xf]
      %v295 = vld [vmem:[%s1 + $0x50] sm:$0xf]
      %v296 = vld [vmem:[%s1 + $0x54] sm:$0xf]
      %v297 = vld [vmem:[%s1 + $0x58] sm:$0xf]
      %v298 = vld [vmem:[%s1 + $0x5c] sm:$0xf]
      %v299 = vld [vmem:[%s1 + $0x60] sm:$0xf]
      %v300 = vld [vmem:[%s1 + $0x64] sm:$0xf]
      %v301 = vld [vmem:[%s1 + $0x68] sm:$0xf]
      %v302 = vld [vmem:[%s1 + $0x6c] sm:$0xf]
      %v303 = vld [vmem:[%s1 + $0x70] sm:$0xf]
      %v304 = vld [vmem:[%s1 + $0x74] sm:$0xf]
      %v305 = vld [vmem:[%s1 + $0x78] sm:$0xf]
      %v306 = vld [vmem:[%s1 + $0x7c] sm:$0xf]
      %v307 = vld [vmem:[%s2] sm:$0x3]
      %v309 = vlaneseq
      %v310 = vshrl.u32 %v309, 7
      %v311 = vsub.s32 0, %v310
      %v312 = vrot.slane %v307, %v311
      %v313 = vlaneseq
      %v314 = vshrl.u32 %v313, 7
      %v315 = vsub.s32 1, %v314
      %v316 = vrot.slane %v307, %v315
      %v351 = vunpack.c.l.b16 %v275
      %v352 = vunpack.c.l.b16 %v276
      %v353 = vunpack.c.l.b16 %v277
      %v354 = vunpack.c.l.b16 %v278
      %v355 = vunpack.c.l.b16 %v279
      %v356 = vunpack.c.l.b16 %v280
      %v357 = vunpack.c.l.b16 %v281
      %v358 = vunpack.c.l.b16 %v282
      %v359 = vunpack.c.l.b16 %v283
      %v360 = vunpack.c.l.b16 %v284
      %v361 = vunpack.c.l.b16 %v285
      %v362 = vunpack.c.l.b16 %v286
      %v363 = vunpack.c.l.b16 %v287
      %v364 = vunpack.c.l.b16 %v288
      %v365 = vunpack.c.l.b16 %v289
      %v366 = vunpack.c.l.b16 %v290
      %v367 = vunpack.c.l.b16 %v291
      %v368 = vunpack.c.l.b16 %v292
      %v369 = vunpack.c.l.b16 %v293
      %v370 = vunpack.c.l.b16 %v294
      %v371 = vunpack.c.l.b16 %v295
      %v372 = vunpack.c.l.b16 %v296
      %v373 = vunpack.c.l.b16 %v297
      %v374 = vunpack.c.l.b16 %v298
      %v375 = vunpack.c.l.b16 %v299
      %v376 = vunpack.c.l.b16 %v300
      %v377 = vunpack.c.l.b16 %v301
      %v378 = vunpack.c.l.b16 %v302
      %v379 = vunpack.c.l.b16 %v303
      %v380 = vunpack.c.l.b16 %v304
      %v381 = vunpack.c.l.b16 %v305
      %v382 = vunpack.c.l.b16 %v306
      %v383 = vpack.c.b16 %v352, %v351
      %v384 = vpack.c.b16 %v354, %v353
      %v385 = vpack.c.b16 %v356, %v355
      %v386 = vpack.c.b16 %v358, %v357
      %v387 = vpack.c.b16 %v360, %v359
      %v388 = vpack.c.b16 %v362, %v361
      %v389 = vpack.c.b16 %v364, %v363
      %v390 = vpack.c.b16 %v366, %v365
      %v391 = vpack.c.b16 %v368, %v367
      %v392 = vpack.c.b16 %v370, %v369
      %v393 = vpack.c.b16 %v372, %v371
      %v394 = vpack.c.b16 %v374, %v373
      %v395 = vpack.c.b16 %v376, %v375
      %v396 = vpack.c.b16 %v378, %v377
      %v397 = vpack.c.b16 %v380, %v379
      %v398 = vpack.c.b16 %v382, %v381
      %415 = vmatprep.subr.bf16.mxu0 0
      %416 = vmatpush1.bf16.xpose.msra.mxu0 %v390
      %417 = vmatprep.subr.bf16.mxu0 0
      %418 = vmatpush1.bf16.xpose.msra.mxu0 %v389
      %419 = vmatprep.subr.bf16.mxu0 0
      %420 = vmatpush1.bf16.xpose.msra.mxu0 %v388
      %421 = vmatprep.subr.bf16.mxu0 0
      %422 = vmatpush1.bf16.xpose.msra.mxu0 %v387
      %423 = vmatprep.subr.bf16.mxu0 0
      %424 = vmatpush1.bf16.xpose.msra.mxu0 %v386
      %425 = vmatprep.subr.bf16.mxu0 0
      %426 = vmatpush1.bf16.xpose.msra.mxu0 %v385
      %427 = vmatprep.subr.bf16.mxu0 0
      %428 = vmatpush1.bf16.xpose.msra.mxu0 %v384
      %429 = vmatprep.subr.bf16.mxu0 0
      %430 = vmatpush1.bf16.xpose.msra.mxu0 %v383
      %431 = vmatprep.subr.bf16.mxu0 0
      %432 = vmatpush2.bf16.xpose.msra.mxu0 %v398
      %433 = vmatprep.subr.bf16.mxu0 0
      %434 = vmatpush2.bf16.xpose.msra.mxu0 %v397
      %435 = vmatprep.subr.bf16.mxu0 0
      %436 = vmatpush2.bf16.xpose.msra.mxu0 %v396
      %437 = vmatprep.subr.bf16.mxu0 0
      %438 = vmatpush2.bf16.xpose.msra.mxu0 %v395
      %439 = vmatprep.subr.bf16.mxu0 0
      %440 = vmatpush2.bf16.xpose.msra.mxu0 %v394
      %441 = vmatprep.subr.bf16.mxu0 0
      %442 = vmatpush2.bf16.xpose.msra.mxu0 %v393
      %443 = vmatprep.subr.bf16.mxu0 0
      %444 = vmatpush2.bf16.xpose.msra.mxu0 %v392
      %445 = vmatprep.subr.bf16.mxu0 0
      %446 = vmatpush2.bf16.xpose.msra.mxu0 %v391
      %447 = vmatprep.mubr.bf16.mxu0 0
      %448 = vmatmul.mubr.bf16.gmra.mxu0 %v274
      %v449 = vpop.f32.mrf.mxu0
      %v450 = vadd.f32 %v312, %v449
      %v451 = vpop.f32.mrf.mxu0
      %v452 = vadd.f32 %v316, %v451
      %v453 = vpop.f32.mrf.mxu0
      %v454 = vadd.f32 %v312, %v453
      %v455 = vpop.f32.mrf.mxu0
      %v456 = vadd.f32 %v316, %v455
      %457 = vdwg.mxu0
      %v458 = vmax.f32 %v450, 0.0
      %v459 = vmax.f32 %v452, 0.0
      %v460 = vmax.f32 %v454, 0.0
      %v461 = vmax.f32 %v456, 0.0
      %v462 = vpack.c.bf16 %v460, %v458
      %v463 = vpack.c.bf16 %v461, %v459
      %v466 = vunpack.c.l.b16 %v462
      %v467 = vunpack.c.l.b16 %v463
      %v468 = vunpack.c.h.b16 %v462
      %v469 = vunpack.c.h.b16 %v463
      %v470 = vpack.c.b16 %v467, %v466
      %v471 = vpack.c.b16 %v469, %v468
      %474 = vst [vmem:[%s228] sm:$0xff] %v470
      %475 = vst [vmem:[%s228 + $0x8] sm:$0xff] %v471
      %s476 = smul.u32 2, %s16
      %p477 = scmp.lt.s32.totalorder %s476, 3
      %s478 = scalar_select %p477, %s476, 3
      %s479 = smul.addr %s478, 2
      %s480 = smul.addr %s479, 4
      %s481 = scalar_lea.vmem %s5, %s480
      // Predicated region
      $region41: #{summarizer_forward.24} parent=39 // pred_check
        %p482 = pneg %p144
      $region42: #{summarizer_forward.24} parent=39 // pred_check_branch
        %484 = sbr.rel (%p482) target = $region44
      $region43: #{summarizer_forward.24} parent=39 // pred_region
        %s485 = smul.u32 2, %s16
      $region44: #{summarizer_forward.24} parent=39 // pred_fallthru
        _
    $region40: #{summarizer_forward.24} parent=5 // pred_fallthru
      _
    %p486 = scmp.le.s32.totalorder 2, %s11
    // Predicated region
    $region45: #{summarizer_forward.24} parent=5 // pred_check
      %p487 = pneg %p486
    $region46: #{summarizer_forward.24} parent=5 // pred_check_branch
      %489 = sbr.rel (%p487) target = $region48
    $region47: #{summarizer_forward.24} parent=5 // pred_region
      %s490 = ssub.s32 %s11, 2
      // Predicated region
      $region49: #{summarizer_forward.24} parent=47 // pred_check
        %p491 = pneg %p150
      $region50: #{summarizer_forward.24} parent=47 // pred_check_branch
        %493 = sbr.rel (%p491) target = $region52
      $region51: #{summarizer_forward.24} parent=47 // pred_region
        %s494 = smul.u32 2, %s17
        %p495 = scmp.lt.s32.totalorder %s494, 3
        %s496 = scalar_select %p495, %s494, 3
        %s497 = smul.addr %s496, 2
        %s498 = smul.addr %s497, 4
        %s499 = scalar_lea.vmem %s5, %s498
      $region52: #{summarizer_forward.24} parent=47 // pred_fallthru
        _
    $region48: #{summarizer_forward.24} parent=5 // pred_fallthru
      _
  $region6: #{summarizer_forward.24} parent=0 // loop_footer
    %s15 = sadd.s32 1, %s11
  $region7: #{summarizer_forward.24} parent=0 // loop_footer_branch
    %10 = sbr.rel target = $region3
  $region8: #{summarizer_forward.24} parent=0 // loop_exit
    _

// kernel: summarizer_forward.26
$region0: #{summarizer_forward.26}
  #allocation0 [shape = 'u32[]', space=smem, size = 0x4, offset = 0x4, fixed_abs, tag = 'smem constant byte address 0x4 - core index']
  #allocation1 [shape = 'u32[144,128]{1,0:T(1,128)}', space=vmem, size = 0x12000, scoped, tag = 'internal scratch']
  %s0 = inlined_call_operand.vmem [shape: f32[32,128], index: 0, kind: input, shape index: {}]
  %s1 = inlined_call_operand.vmem [shape: bf16[384,128], index: 1, kind: input, shape index: {}]
  %s2 = inlined_call_operand.vmem [shape: f32[1,384], index: 2, kind: input, shape index: {}]
  %s3 = inlined_call_operand.vmem [shape: f32[1,128], index: 3, kind: input, shape index: {}]
  %s4 = inlined_call_operand.vmem [shape: f32[1,128], index: 4, kind: input, shape index: {}]
  %s5 = inlined_call_operand.vmem [shape: bf16[32,384], index: 5, kind: output, shape index: {}]
  %s6 = sld [smem:[#allocation0]]
  $region53: #{summarizer_forward.26} parent=0
    _
  %s8 = ssub.s32 1, %s6
  %s9 = scalar_select 0, %s8, %s6
  loop: start=0, step=1, limit=4
  $region2: #{summarizer_forward.26} parent=0 // loop_pre_header
    _
  $region3: #{summarizer_forward.26} parent=0 // loop_header
    %s11 = sphi 0, %s15
    %p12 = scmp.ge.s32.totalorder %s11, 4
    %s21 = sphi 0, %s23
    %s24 = sphi 0, %s21
    %s25 = sphi 0, %s24
    %s41 = sphi 0, %s25
    %s45 = sphi 0, %s45
    %s47 = sphi 0, %s45
    %s48 = sphi 0, %s47
    %s62 = sphi 0, %s48
    %s66 = sphi 0, %s66
    %s68 = sphi 0, %s66
    %s69 = sphi 0, %s68
    %s83 = sphi 0, %s69
    %s87 = sphi 0, %s87
    %s89 = sphi 0, %s87
    %s90 = sphi 0, %s89
    %s104 = sphi 0, %s90
    %s108 = sphi 0, %s108
    %s110 = sphi 0, %s108
    %s111 = sphi 0, %s110
    %s125 = sphi 0, %s111
    %s131 = sphi 0, %s133
    %s134 = sphi 0, %s131
    %s135 = sphi 0, %s134
    %s151 = sphi 0, %s135
  $region4: #{summarizer_forward.26} parent=0 // loop_header_branch
    %14 = sbr.rel (%p12) target = $region8
  $region5: #{summarizer_forward.26} parent=0 // loop_body
    %s16 = ssub.s32 %s11, 1
    %s17 = ssub.s32 %s11, 2
    %s18 = sadd.s32 %s11, 1
    %s19 = ssub.s32 %s11, %s18
    %p20 = scmp.eq.s32.totalorder %s19, 0
    %s22 = sadd.s32 %s21, 1
    %s23 = scalar_select %p20, %s21, %s22
    %p26 = pneg %p20
    %p27 = scmp.eq.s32.totalorder %s11, 1
    %p28 = por %p26, %p27
    %p29 = scmp.ne.s32.totalorder %s21, %s24
    %p30 = scmp.eq.s32.totalorder %s11, 0
    %p31 = por %p29, %p30
    %p32 = scmp.ne.s32.totalorder %s21, %s24
    %p33 = scmp.eq.s32.totalorder %s16, 1
    %p34 = por %p32, %p33
    %p35 = scmp.ne.s32.totalorder %s24, %s25
    %p36 = scmp.eq.s32.totalorder %s16, 0
    %p37 = por %p35, %p36
    %p38 = scmp.ne.s32.totalorder %s24, %s25
    %p39 = scmp.eq.s32.totalorder %s17, 1
    %p40 = por %p38, %p39
    %p42 = scmp.ne.s32.totalorder %s25, %s41
    %p43 = scmp.eq.s32.totalorder %s17, 0
    %p44 = por %p42, %p43
    %s46 = sadd.s32 %s45, 1
    %p49 = scmp.eq.s32.totalorder %s11, 1
    %p50 = scmp.ne.s32.totalorder %s45, %s47
    %p51 = scmp.eq.s32.totalorder %s11, 0
    %p52 = por %p50, %p51
    %p53 = scmp.ne.s32.totalorder %s45, %s47
    %p54 = scmp.eq.s32.totalorder %s16, 1
    %p55 = por %p53, %p54
    %p56 = scmp.ne.s32.totalorder %s47, %s48
    %p57 = scmp.eq.s32.totalorder %s16, 0
    %p58 = por %p56, %p57
    %p59 = scmp.ne.s32.totalorder %s47, %s48
    %p60 = scmp.eq.s32.totalorder %s17, 1
    %p61 = por %p59, %p60
    %p63 = scmp.ne.s32.totalorder %s48, %s62
    %p64 = scmp.eq.s32.totalorder %s17, 0
    %p65 = por %p63, %p64
    %s67 = sadd.s32 %s66, 1
    %p70 = scmp.eq.s32.totalorder %s11, 1
    %p71 = scmp.ne.s32.totalorder %s66, %s68
    %p72 = scmp.eq.s32.totalorder %s11, 0
    %p73 = por %p71, %p72
    %p74 = scmp.ne.s32.totalorder %s66, %s68
    %p75 = scmp.eq.s32.totalorder %s16, 1
    %p76 = por %p74, %p75
    %p77 = scmp.ne.s32.totalorder %s68, %s69
    %p78 = scmp.eq.s32.totalorder %s16, 0
    %p79 = por %p77, %p78
    %p80 = scmp.ne.s32.totalorder %s68, %s69
    %p81 = scmp.eq.s32.totalorder %s17, 1
    %p82 = por %p80, %p81
    %p84 = scmp.ne.s32.totalorder %s69, %s83
    %p85 = scmp.eq.s32.totalorder %s17, 0
    %p86 = por %p84, %p85
    %s88 = sadd.s32 %s87, 1
    %p91 = scmp.eq.s32.totalorder %s11, 1
    %p92 = scmp.ne.s32.totalorder %s87, %s89
    %p93 = scmp.eq.s32.totalorder %s11, 0
    %p94 = por %p92, %p93
    %p95 = scmp.ne.s32.totalorder %s87, %s89
    %p96 = scmp.eq.s32.totalorder %s16, 1
    %p97 = por %p95, %p96
    %p98 = scmp.ne.s32.totalorder %s89, %s90
    %p99 = scmp.eq.s32.totalorder %s16, 0
    %p100 = por %p98, %p99
    %p101 = scmp.ne.s32.totalorder %s89, %s90
    %p102 = scmp.eq.s32.totalorder %s17, 1
    %p103 = por %p101, %p102
    %p105 = scmp.ne.s32.totalorder %s90, %s104
    %p106 = scmp.eq.s32.totalorder %s17, 0
    %p107 = por %p105, %p106
    %s109 = sadd.s32 %s108, 1
    %p112 = scmp.eq.s32.totalorder %s11, 1
    %p113 = scmp.ne.s32.totalorder %s108, %s110
    %p114 = scmp.eq.s32.totalorder %s11, 0
    %p115 = por %p113, %p114
    %p116 = scmp.ne.s32.totalorder %s108, %s110
    %p117 = scmp.eq.s32.totalorder %s16, 1
    %p118 = por %p116, %p117
    %p119 = scmp.ne.s32.totalorder %s110, %s111
    %p120 = scmp.eq.s32.totalorder %s16, 0
    %p121 = por %p119, %p120
    %p122 = scmp.ne.s32.totalorder %s110, %s111
    %p123 = scmp.eq.s32.totalorder %s17, 1
    %p124 = por %p122, %p123
    %p126 = scmp.ne.s32.totalorder %s111, %s125
    %p127 = scmp.eq.s32.totalorder %s17, 0
    %p128 = por %p126, %p127
    %s129 = ssub.s32 %s11, %s18
    %p130 = scmp.eq.s32.totalorder %s129, 0
    %s132 = sadd.s32 %s131, 1
    %s133 = scalar_select %p130, %s131, %s132
    %p136 = pneg %p130
    %p137 = scmp.eq.s32.totalorder %s11, 1
    %p138 = por %p136, %p137
    %p139 = scmp.ne.s32.totalorder %s131, %s134
    %p140 = scmp.eq.s32.totalorder %s11, 0
    %p141 = por %p139, %p140
    %p142 = scmp.ne.s32.totalorder %s131, %s134
    %p143 = scmp.eq.s32.totalorder %s16, 1
    %p144 = por %p142, %p143
    %p145 = scmp.ne.s32.totalorder %s134, %s135
    %p146 = scmp.eq.s32.totalorder %s16, 0
    %p147 = por %p145, %p146
    %p148 = scmp.ne.s32.totalorder %s134, %s135
    %p149 = scmp.eq.s32.totalorder %s17, 1
    %p150 = por %p148, %p149
    %p152 = scmp.ne.s32.totalorder %s135, %s151
    %p153 = scmp.eq.s32.totalorder %s17, 0
    %p154 = por %p152, %p153
    %p155 = scmp.le.s32.totalorder 1, %s11
    %p156 = scmp.lt.s32.totalorder %s11, 3
    %p157 = pnand %p155, %p156
    %p158 = pneg %p157
    // Predicated region
    $region9: #{summarizer_forward.26} parent=5 // pred_check
      _
    $region10: #{summarizer_forward.26} parent=5 // pred_check_branch
      %160 = sbr.rel (%p157) target = $region12
    $region11: #{summarizer_forward.26} parent=5 // pred_region
      %s161 = ssub.s32 %s11, 1
      // Predicated region
      $region13: #{summarizer_forward.26} parent=11 // pred_check
        %p162 = pneg %p58
      $region14: #{summarizer_forward.26} parent=11 // pred_check_branch
        %164 = sbr.rel (%p162) target = $region16
      $region15: #{summarizer_forward.26} parent=11 // pred_region
        _
      $region16: #{summarizer_forward.26} parent=11 // pred_fallthru
        _
      // Predicated region
      $region17: #{summarizer_forward.26} parent=11 // pred_check
        %p165 = pneg %p79
      $region18: #{summarizer_forward.26} parent=11 // pred_check_branch
        %167 = sbr.rel (%p165) target = $region20
      $region19: #{summarizer_forward.26} parent=11 // pred_region
        _
      $region20: #{summarizer_forward.26} parent=11 // pred_fallthru
        _
      // Predicated region
      $region21: #{summarizer_forward.26} parent=11 // pred_check
        %p168 = pneg %p100
      $region22: #{summarizer_forward.26} parent=11 // pred_check_branch
        %170 = sbr.rel (%p168) target = $region24
      $region23: #{summarizer_forward.26} parent=11 // pred_region
        _
      $region24: #{summarizer_forward.26} parent=11 // pred_fallthru
        _
      // Predicated region
      $region25: #{summarizer_forward.26} parent=11 // pred_check
        %p171 = pneg %p121
      $region26: #{summarizer_forward.26} parent=11 // pred_check_branch
        %173 = sbr.rel (%p171) target = $region28
      $region27: #{summarizer_forward.26} parent=11 // pred_region
        _
      $region28: #{summarizer_forward.26} parent=11 // pred_fallthru
        _
    $region12: #{summarizer_forward.26} parent=5 // pred_fallthru
      _
    %p174 = scmp.lt.s32.totalorder %s11, 2
    // Predicated region
    $region29: #{summarizer_forward.26} parent=5 // pred_check
      %p175 = pneg %p174
    $region30: #{summarizer_forward.26} parent=5 // pred_check_branch
      %177 = sbr.rel (%p175) target = $region32
    $region31: #{summarizer_forward.26} parent=5 // pred_region
      // Predicated region
      $region33: #{summarizer_forward.26} parent=31 // pred_check
        %p178 = pneg %p31
      $region34: #{summarizer_forward.26} parent=31 // pred_check_branch
        %180 = sbr.rel (%p178) target = $region36
      $region35: #{summarizer_forward.26} parent=31 // pred_region
        %s181 = smul.u32 2, %s11
        %p182 = scmp.lt.s32.totalorder %s181, 3
        %s183 = scalar_select %p182, %s181, 3
        %s184 = smul.addr %s183, 8
        %s185 = scalar_lea.vmem %s0, %s184
        %s186 = smul.u32 2, %s11
      $region36: #{summarizer_forward.26} parent=31 // pred_fallthru
        _
    $region32: #{summarizer_forward.26} parent=5 // pred_fallthru
      _
    %p187 = scmp.le.s32.totalorder 1, %s11
    %p188 = scmp.lt.s32.totalorder %s11, 3
    %p189 = pnand %p187, %p188
    %p190 = pneg %p189
    // Predicated region
    $region37: #{summarizer_forward.26} parent=5 // pred_check
      _
    $region38: #{summarizer_forward.26} parent=5 // pred_check_branch
      %192 = sbr.rel (%p189) target = $region40
    $region39: #{summarizer_forward.26} parent=5 // pred_region
      %s193 = ssub.s32 %s11, 1
      %s194 = smul.u32 2, %s16
      %p195 = scmp.lt.s32.totalorder %s194, 3
      %s196 = scalar_select %p195, %s194, 3
      %s197 = smul.addr %s196, 8
      %s198 = scalar_lea.vmem %s0, %s197
      %p199 = pneg %p37
      %p200 = pneg %p34
      %p201 = pneg %p58
      %p202 = pneg %p55
      %p203 = pneg %p79
      %p204 = pneg %p76
      %p205 = pneg %p100
      %p206 = pneg %p97
      %p207 = pneg %p121
      %p208 = pneg %p118
      %p209 = pneg %p147
      %p210 = pneg %p144
      %s211 = smul.u32 2, %s16
      %p212 = scmp.lt.s32.totalorder %s211, 3
      %s213 = scalar_select %p212, %s211, 3
      %s214 = smul.addr %s213, 3
      %s215 = smul.addr %s214, 4
      %s216 = scalar_lea.vmem %s5, %s215
      %s217 = smul.u32 2, %s16
      %p218 = scmp.lt.s32.totalorder %s217, 3
      %s219 = scalar_select %p218, %s217, 3
      %s220 = smul.addr %s219, 8
      %s221 = scalar_lea.vmem %s0, %s220
      %s222 = smul.u32 2, %s16
      %s223 = smul.u32 2, %s16
      %p224 = scmp.lt.s32.totalorder %s223, 3
      %s225 = scalar_select %p224, %s223, 3
      %s226 = smul.addr %s225, 3
      %s227 = smul.addr %s226, 4
      %s228 = scalar_lea.vmem %s5, %s227
      %s229 = smul.u32 2, %s16
      %v231 = vld [vmem:[%s221] sm:$0xff]
      %v232 = vld [vmem:[%s221 + $0x8] sm:$0xff]
      %233 = vadd.xlane.f32.xlu0 %v231
      %v234 = vpop.xlane.xlu0 %233
      %235 = vadd.xlane.f32.xlu0 %v232
      %v236 = vpop.xlane.xlu0 %235
      %v237 = vrcp.pop 128.0
      %v238 = vmul.f32 %v234, %v237
      %v239 = vmul.f32 %v236, %v237
      %v240 = vsub.f32 %v231, %v238
      %v241 = vsub.f32 %v232, %v239
      %v242 = vmul.f32 %v240, %v240
      %v243 = vmul.f32 %v241, %v241
      %244 = vadd.xlane.f32.xlu0 %v242
      %v245 = vpop.xlane.xlu0 %244
      %246 = vadd.xlane.f32.xlu0 %v243
      %v247 = vpop.xlane.xlu0 %246
      %v248 = vmul.f32 %v245, %v237
      %v249 = vmul.f32 %v247, %v237
      %v250 = vadd.f32 %v248, 1e-06
      %v251 = vadd.f32 %v249, 1e-06
      %v252 = vrsqrt.pop %v250
      %v253 = vrsqrt.pop %v251
      %v254 = vmul.f32 %v240, %v252
      %v255 = vmul.f32 %v241, %v253
      %v256 = vld [vmem:[%s3] sm:$0x1]
      %v258 = vlaneseq
      %v259 = vshrl.u32 %v258, 7
      %v260 = vsub.s32 0, %v259
      %v261 = vrot.slane %v256, %v260
      %v263 = vmul.f32 %v254, %v261
      %v264 = vmul.f32 %v255, %v261
      %v265 = vld [vmem:[%s4] sm:$0x1]
      %v267 = vlaneseq
      %v268 = vshrl.u32 %v267, 7
      %v269 = vsub.s32 0, %v268
      %v270 = vrot.slane %v265, %v269
      %v272 = vadd.f32 %v263, %v270
      %v273 = vadd.f32 %v264, %v270
      %v274 = vpack.c.bf16 %v273, %v272
      %v275 = vld [vmem:[%s1] sm:$0xf]
      %v276 = vld [vmem:[%s1 + $0x4] sm:$0xf]
      %v277 = vld [vmem:[%s1 + $0x8] sm:$0xf]
      %v278 = vld [vmem:[%s1 + $0xc] sm:$0xf]
      %v279 = vld [vmem:[%s1 + $0x10] sm:$0xf]
      %v280 = vld [vmem:[%s1 + $0x14] sm:$0xf]
      %v281 = vld [vmem:[%s1 + $0x18] sm:$0xf]
      %v282 = vld [vmem:[%s1 + $0x1c] sm:$0xf]
      %v283 = vld [vmem:[%s1 + $0x20] sm:$0xf]
      %v284 = vld [vmem:[%s1 + $0x24] sm:$0xf]
      %v285 = vld [vmem:[%s1 + $0x28] sm:$0xf]
      %v286 = vld [vmem:[%s1 + $0x2c] sm:$0xf]
      %v287 = vld [vmem:[%s1 + $0x30] sm:$0xf]
      %v288 = vld [vmem:[%s1 + $0x34] sm:$0xf]
      %v289 = vld [vmem:[%s1 + $0x38] sm:$0xf]
      %v290 = vld [vmem:[%s1 + $0x3c] sm:$0xf]
      %v291 = vld [vmem:[%s1 + $0x40] sm:$0xf]
      %v292 = vld [vmem:[%s1 + $0x44] sm:$0xf]
      %v293 = vld [vmem:[%s1 + $0x48] sm:$0xf]
      %v294 = vld [vmem:[%s1 + $0x4c] sm:$0xf]
      %v295 = vld [vmem:[%s1 + $0x50] sm:$0xf]
      %v296 = vld [vmem:[%s1 + $0x54] sm:$0xf]
      %v297 = vld [vmem:[%s1 + $0x58] sm:$0xf]
      %v298 = vld [vmem:[%s1 + $0x5c] sm:$0xf]
      %v299 = vld [vmem:[%s1 + $0x60] sm:$0xf]
      %v300 = vld [vmem:[%s1 + $0x64] sm:$0xf]
      %v301 = vld [vmem:[%s1 + $0x68] sm:$0xf]
      %v302 = vld [vmem:[%s1 + $0x6c] sm:$0xf]
      %v303 = vld [vmem:[%s1 + $0x70] sm:$0xf]
      %v304 = vld [vmem:[%s1 + $0x74] sm:$0xf]
      %v305 = vld [vmem:[%s1 + $0x78] sm:$0xf]
      %v306 = vld [vmem:[%s1 + $0x7c] sm:$0xf]
      %v307 = vld [vmem:[%s1 + $0x80] sm:$0xf]
      %v308 = vld [vmem:[%s1 + $0x84] sm:$0xf]
      %v309 = vld [vmem:[%s1 + $0x88] sm:$0xf]
      %v310 = vld [vmem:[%s1 + $0x8c] sm:$0xf]
      %v311 = vld [vmem:[%s1 + $0x90] sm:$0xf]
      %v312 = vld [vmem:[%s1 + $0x94] sm:$0xf]
      %v313 = vld [vmem:[%s1 + $0x98] sm:$0xf]
      %v314 = vld [vmem:[%s1 + $0x9c] sm:$0xf]
      %v315 = vld [vmem:[%s1 + $0xa0] sm:$0xf]
      %v316 = vld [vmem:[%s1 + $0xa4] sm:$0xf]
      %v317 = vld [vmem:[%s1 + $0xa8] sm:$0xf]
      %v318 = vld [vmem:[%s1 + $0xac] sm:$0xf]
      %v319 = vld [vmem:[%s1 + $0xb0] sm:$0xf]
      %v320 = vld [vmem:[%s1 + $0xb4] sm:$0xf]
      %v321 = vld [vmem:[%s1 + $0xb8] sm:$0xf]
      %v322 = vld [vmem:[%s1 + $0xbc] sm:$0xf]
      %v323 = vld [vmem:[%s2] sm:$0x7]
      %v325 = vlaneseq
      %v326 = vshrl.u32 %v325, 7
      %v327 = vsub.s32 0, %v326
      %v328 = vrot.slane %v323, %v327
      %v329 = vlaneseq
      %v330 = vshrl.u32 %v329, 7
      %v331 = vsub.s32 1, %v330
      %v332 = vrot.slane %v323, %v331
      %v333 = vlaneseq
      %v334 = vshrl.u32 %v333, 7
      %v335 = vsub.s32 2, %v334
      %v336 = vrot.slane %v323, %v335
      %v388 = vunpack.c.l.b16 %v275
      %v389 = vunpack.c.l.b16 %v276
      %v390 = vunpack.c.l.b16 %v277
      %v391 = vunpack.c.l.b16 %v278
      %v392 = vunpack.c.l.b16 %v279
      %v393 = vunpack.c.l.b16 %v280
      %v394 = vunpack.c.l.b16 %v281
      %v395 = vunpack.c.l.b16 %v282
      %v396 = vunpack.c.l.b16 %v283
      %v397 = vunpack.c.l.b16 %v284
      %v398 = vunpack.c.l.b16 %v285
      %v399 = vunpack.c.l.b16 %v286
      %v400 = vunpack.c.l.b16 %v287
      %v401 = vunpack.c.l.b16 %v288
      %v402 = vunpack.c.l.b16 %v289
      %v403 = vunpack.c.l.b16 %v290
      %v404 = vunpack.c.l.b16 %v291
      %v405 = vunpack.c.l.b16 %v292
      %v406 = vunpack.c.l.b16 %v293
      %v407 = vunpack.c.l.b16 %v294
      %v408 = vunpack.c.l.b16 %v295
      %v409 = vunpack.c.l.b16 %v296
      %v410 = vunpack.c.l.b16 %v297
      %v411 = vunpack.c.l.b16 %v298
      %v412 = vunpack.c.l.b16 %v299
      %v413 = vunpack.c.l.b16 %v300
      %v414 = vunpack.c.l.b16 %v301
      %v415 = vunpack.c.l.b16 %v302
      %v416 = vunpack.c.l.b16 %v303
      %v417 = vunpack.c.l.b16 %v304
      %v418 = vunpack.c.l.b16 %v305
      %v419 = vunpack.c.l.b16 %v306
      %v420 = vunpack.c.l.b16 %v307
      %v421 = vunpack.c.l.b16 %v308
      %v422 = vunpack.c.l.b16 %v309
      %v423 = vunpack.c.l.b16 %v310
      %v424 = vunpack.c.l.b16 %v311
      %v425 = vunpack.c.l.b16 %v312
      %v426 = vunpack.c.l.b16 %v313
      %v427 = vunpack.c.l.b16 %v314
      %v428 = vunpack.c.l.b16 %v315
      %v429 = vunpack.c.l.b16 %v316
      %v430 = vunpack.c.l.b16 %v317
      %v431 = vunpack.c.l.b16 %v318
      %v432 = vunpack.c.l.b16 %v319
      %v433 = vunpack.c.l.b16 %v320
      %v434 = vunpack.c.l.b16 %v321
      %v435 = vunpack.c.l.b16 %v322
      %v436 = vpack.c.b16 %v389, %v388
      %v437 = vpack.c.b16 %v391, %v390
      %v438 = vpack.c.b16 %v393, %v392
      %v439 = vpack.c.b16 %v395, %v394
      %v440 = vpack.c.b16 %v397, %v396
      %v441 = vpack.c.b16 %v399, %v398
      %v442 = vpack.c.b16 %v401, %v400
      %v443 = vpack.c.b16 %v403, %v402
      %v444 = vpack.c.b16 %v405, %v404
      %v445 = vpack.c.b16 %v407, %v406
      %v446 = vpack.c.b16 %v409, %v408
      %v447 = vpack.c.b16 %v411, %v410
      %v448 = vpack.c.b16 %v413, %v412
      %v449 = vpack.c.b16 %v415, %v414
      %v450 = vpack.c.b16 %v417, %v416
      %v451 = vpack.c.b16 %v419, %v418
      %v452 = vpack.c.b16 %v421, %v420
      %v453 = vpack.c.b16 %v423, %v422
      %v454 = vpack.c.b16 %v425, %v424
      %v455 = vpack.c.b16 %v427, %v426
      %v456 = vpack.c.b16 %v429, %v428
      %v457 = vpack.c.b16 %v431, %v430
      %v458 = vpack.c.b16 %v433, %v432
      %v459 = vpack.c.b16 %v435, %v434
      %484 = vmatprep.subr.bf16.mxu0 0
      %485 = vmatpush1.bf16.xpose.msra.mxu0 %v443
      %486 = vmatprep.subr.bf16.mxu0 0
      %487 = vmatpush1.bf16.xpose.msra.mxu0 %v442
      %488 = vmatprep.subr.bf16.mxu0 0
      %489 = vmatpush1.bf16.xpose.msra.mxu0 %v441
      %490 = vmatprep.subr.bf16.mxu0 0
      %491 = vmatpush1.bf16.xpose.msra.mxu0 %v440
      %492 = vmatprep.subr.bf16.mxu0 0
      %493 = vmatpush1.bf16.xpose.msra.mxu0 %v439
      %494 = vmatprep.subr.bf16.mxu0 0
      %495 = vmatpush1.bf16.xpose.msra.mxu0 %v438
      %496 = vmatprep.subr.bf16.mxu0 0
      %497 = vmatpush1.bf16.xpose.msra.mxu0 %v437
      %498 = vmatprep.subr.bf16.mxu0 0
      %499 = vmatpush1.bf16.xpose.msra.mxu0 %v436
      %500 = vmatprep.subr.bf16.mxu0 0
      %501 = vmatpush2.bf16.xpose.msra.mxu0 %v451
      %502 = vmatprep.subr.bf16.mxu0 0
      %503 = vmatpush2.bf16.xpose.msra.mxu0 %v450
      %504 = vmatprep.subr.bf16.mxu0 0
      %505 = vmatpush2.bf16.xpose.msra.mxu0 %v449
      %506 = vmatprep.subr.bf16.mxu0 0
      %507 = vmatpush2.bf16.xpose.msra.mxu0 %v448
      %508 = vmatprep.subr.bf16.mxu0 0
      %509 = vmatpush2.bf16.xpose.msra.mxu0 %v447
      %510 = vmatprep.subr.bf16.mxu0 0
      %511 = vmatpush2.bf16.xpose.msra.mxu0 %v446
      %512 = vmatprep.subr.bf16.mxu0 0
      %513 = vmatpush2.bf16.xpose.msra.mxu0 %v445
      %514 = vmatprep.subr.bf16.mxu0 0
      %515 = vmatpush2.bf16.xpose.msra.mxu0 %v444
      %516 = vmatprep.mubr.bf16.mxu0 0
      %517 = vmatmul.mubr.bf16.gmra.mxu0 %v274
      %v518 = vpop.f32.mrf.mxu0
      %v519 = vadd.f32 %v328, %v518
      %v520 = vpop.f32.mrf.mxu0
      %v521 = vadd.f32 %v332, %v520
      %v522 = vpop.f32.mrf.mxu0
      %v523 = vadd.f32 %v328, %v522
      %v524 = vpop.f32.mrf.mxu0
      %v525 = vadd.f32 %v332, %v524
      %526 = vdwg.mxu0
      %527 = vmatprep.subr.bf16.mxu0 0
      %528 = vmatpush1.bf16.xpose.msra.mxu0 %v459
      %529 = vmatprep.subr.bf16.mxu0 0
      %530 = vmatpush1.bf16.xpose.msra.mxu0 %v458
      %531 = vmatprep.subr.bf16.mxu0 0
      %532 = vmatpush1.bf16.xpose.msra.mxu0 %v457
      %533 = vmatprep.subr.bf16.mxu0 0
      %534 = vmatpush1.bf16.xpose.msra.mxu0 %v456
      %535 = vmatprep.subr.bf16.mxu0 0
      %536 = vmatpush1.bf16.xpose.msra.mxu0 %v455
      %537 = vmatprep.subr.bf16.mxu0 0
      %538 = vmatpush1.bf16.xpose.msra.mxu0 %v454
      %539 = vmatprep.subr.bf16.mxu0 0
      %540 = vmatpush1.bf16.xpose.msra.mxu0 %v453
      %541 = vmatprep.subr.bf16.mxu0 0
      %542 = vmatpush1.bf16.xpose.msra.mxu0 %v452
      %543 = vmatprep.subr.bf16.mxu0 0
      %544 = vmatpush2.bf16.xpose.msra.mxu0 0
      %545 = vmatprep.subr.bf16.mxu0 0
      %546 = vmatpush2.bf16.xpose.msra.mxu0 0
      %547 = vmatprep.subr.bf16.mxu0 0
      %548 = vmatpush2.bf16.xpose.msra.mxu0 0
      %549 = vmatprep.subr.bf16.mxu0 0
      %550 = vmatpush2.bf16.xpose.msra.mxu0 0
      %551 = vmatprep.subr.bf16.mxu0 0
      %552 = vmatpush2.bf16.xpose.msra.mxu0 0
      %553 = vmatprep.subr.bf16.mxu0 0
      %554 = vmatpush2.bf16.xpose.msra.mxu0 0
      %555 = vmatprep.subr.bf16.mxu0 0
      %556 = vmatpush2.bf16.xpose.msra.mxu0 0
      %557 = vmatprep.subr.bf16.mxu0 0
      %558 = vmatpush2.bf16.xpose.msra.mxu0 0
      %559 = vmatprep.mubr.bf16.mxu0 0
      %560 = vmatmul.mubr.bf16.gmra.mxu0 %v274
      %v561 = vpop.f32.mrf.mxu0
      %v562 = vadd.f32 %v336, %v561
      %v563 = vpop.f32.mrf.mxu0
      %v564 = vpop.f32.mrf.mxu0
      %v565 = vadd.f32 %v336, %v564
      %v566 = vpop.f32.mrf.mxu0
      %567 = vdwg.mxu0
      %v568 = vpack.c.bf16 %v523, %v519
      %v569 = vpack.c.bf16 %v525, %v521
      %v570 = vpack.c.bf16 %v565, %v562
      %v574 = vunpack.c.l.b16 %v568
      %v575 = vunpack.c.l.b16 %v569
      %v576 = vunpack.c.l.b16 %v570
      %v577 = vunpack.c.h.b16 %v568
      %v578 = vunpack.c.h.b16 %v569
      %v579 = vunpack.c.h.b16 %v570
      %v580 = vpack.c.b16 %v575, %v574
      %v581 = vpack.c.b16 %v576, %v576
      %v582 = vpack.c.b16 %v578, %v577
      %v583 = vpack.c.b16 %v579, %v579
      %588 = vst [vmem:[%s228] sm:$0xff] %v580
      %589 = vst [vmem:[%s228 + $0x8] sm:$0xf] %v581
      %590 = vst [vmem:[%s228 + $0xc] sm:$0xff] %v582
      %591 = vst [vmem:[%s228 + $0x14] sm:$0xf] %v583
      %s592 = smul.u32 2, %s16
      %p593 = scmp.lt.s32.totalorder %s592, 3
      %s594 = scalar_select %p593, %s592, 3
      %s595 = smul.addr %s594, 3
      %s596 = smul.addr %s595, 4
      %s597 = scalar_lea.vmem %s5, %s596
      // Predicated region
      $region41: #{summarizer_forward.26} parent=39 // pred_check
        %p598 = pneg %p144
      $region42: #{summarizer_forward.26} parent=39 // pred_check_branch
        %600 = sbr.rel (%p598) target = $region44
      $region43: #{summarizer_forward.26} parent=39 // pred_region
        %s601 = smul.u32 2, %s16
      $region44: #{summarizer_forward.26} parent=39 // pred_fallthru
        _
    $region40: #{summarizer_forward.26} parent=5 // pred_fallthru
      _
    %p602 = scmp.le.s32.totalorder 2, %s11
    // Predicated region
    $region45: #{summarizer_forward.26} parent=5 // pred_check
      %p603 = pneg %p602
    $region46: #{summarizer_forward.26} parent=5 // pred_check_branch
      %605 = sbr.rel (%p603) target = $region48
    $region47: #{summarizer_forward.26} parent=5 // pred_region
      %s606 = ssub.s32 %s11, 2
      // Predicated region
      $region49: #{summarizer_forward.26} parent=47 // pred_check
        %p607 = pneg %p150
      $region50: #{summarizer_forward.26} parent=47 // pred_check_branch
        %609 = sbr.rel (%p607) target = $region52
      $region51: #{summarizer_forward.26} parent=47 // pred_region
        %s610 = smul.u32 2, %s17
        %p611 = scmp.lt.s32.totalorder %s610, 3
        %s612 = scalar_select %p611, %s610, 3
        %s613 = smul.addr %s612, 3
        %s614 = smul.addr %s613, 4
        %s615 = scalar_lea.vmem %s5, %s614
      $region52: #{summarizer_forward.26} parent=47 // pred_fallthru
        _
    $region48: #{summarizer_forward.26} parent=5 // pred_fallthru
      _
  $region6: #{summarizer_forward.26} parent=0 // loop_footer
    %s15 = sadd.s32 1, %s11
  $region7: #{summarizer_forward.26} parent=0 // loop_footer_branch
    %10 = sbr.rel target = $region3
  $region8: #{summarizer_forward.26} parent=0 // loop_exit
    _

// kernel: summarizer_forward.25
$region0: #{summarizer_forward.25}
  #allocation0 [shape = 'u32[]', space=smem, size = 0x4, offset = 0x4, fixed_abs, tag = 'smem constant byte address 0x4 - core index']
  #allocation1 [shape = 'u32[144,128]{1,0:T(1,128)}', space=vmem, size = 0x12000, scoped, tag = 'internal scratch']
  %s0 = inlined_call_operand.vmem [shape: bf16[32,256], index: 0, kind: input, shape index: {}]
  %s1 = inlined_call_operand.vmem [shape: bf16[128,256], index: 1, kind: input, shape index: {}]
  %s2 = inlined_call_operand.vmem [shape: f32[1,128], index: 2, kind: input, shape index: {}]
  %s3 = inlined_call_operand.vmem [shape: f32[32,128], index: 3, kind: input, shape index: {}]
  %s4 = inlined_call_operand.vmem [shape: f32[32,128], index: 4, kind: output, shape index: {}]
  %s5 = sld [smem:[#allocation0]]
  $region49: #{summarizer_forward.25} parent=0
    _
  %s7 = ssub.s32 1, %s5
  %s8 = scalar_select 0, %s7, %s5
  loop: start=0, step=1, limit=4
  $region2: #{summarizer_forward.25} parent=0 // loop_pre_header
    _
  $region3: #{summarizer_forward.25} parent=0 // loop_header
    %s10 = sphi 0, %s14
    %p11 = scmp.ge.s32.totalorder %s10, 4
    %s20 = sphi 0, %s22
    %s23 = sphi 0, %s20
    %s24 = sphi 0, %s23
    %s40 = sphi 0, %s24
    %s44 = sphi 0, %s44
    %s46 = sphi 0, %s44
    %s47 = sphi 0, %s46
    %s61 = sphi 0, %s47
    %s65 = sphi 0, %s65
    %s67 = sphi 0, %s65
    %s68 = sphi 0, %s67
    %s82 = sphi 0, %s68
    %s88 = sphi 0, %s90
    %s91 = sphi 0, %s88
    %s92 = sphi 0, %s91
    %s108 = sphi 0, %s92
    %s114 = sphi 0, %s116
    %s117 = sphi 0, %s114
    %s118 = sphi 0, %s117
    %s134 = sphi 0, %s118
  $region4: #{summarizer_forward.25} parent=0 // loop_header_branch
    %13 = sbr.rel (%p11) target = $region8
  $region5: #{summarizer_forward.25} parent=0 // loop_body
    %s15 = ssub.s32 %s10, 1
    %s16 = ssub.s32 %s10, 2
    %s17 = sadd.s32 %s10, 1
    %s18 = ssub.s32 %s10, %s17
    %p19 = scmp.eq.s32.totalorder %s18, 0
    %s21 = sadd.s32 %s20, 1
    %s22 = scalar_select %p19, %s20, %s21
    %p25 = pneg %p19
    %p26 = scmp.eq.s32.totalorder %s10, 1
    %p27 = por %p25, %p26
    %p28 = scmp.ne.s32.totalorder %s20, %s23
    %p29 = scmp.eq.s32.totalorder %s10, 0
    %p30 = por %p28, %p29
    %p31 = scmp.ne.s32.totalorder %s20, %s23
    %p32 = scmp.eq.s32.totalorder %s15, 1
    %p33 = por %p31, %p32
    %p34 = scmp.ne.s32.totalorder %s23, %s24
    %p35 = scmp.eq.s32.totalorder %s15, 0
    %p36 = por %p34, %p35
    %p37 = scmp.ne.s32.totalorder %s23, %s24
    %p38 = scmp.eq.s32.totalorder %s16, 1
    %p39 = por %p37, %p38
    %p41 = scmp.ne.s32.totalorder %s24, %s40
    %p42 = scmp.eq.s32.totalorder %s16, 0
    %p43 = por %p41, %p42
    %s45 = sadd.s32 %s44, 1
    %p48 = scmp.eq.s32.totalorder %s10, 1
    %p49 = scmp.ne.s32.totalorder %s44, %s46
    %p50 = scmp.eq.s32.totalorder %s10, 0
    %p51 = por %p49, %p50
    %p52 = scmp.ne.s32.totalorder %s44, %s46
    %p53 = scmp.eq.s32.totalorder %s15, 1
    %p54 = por %p52, %p53
    %p55 = scmp.ne.s32.totalorder %s46, %s47
    %p56 = scmp.eq.s32.totalorder %s15, 0
    %p57 = por %p55, %p56
    %p58 = scmp.ne.s32.totalorder %s46, %s47
    %p59 = scmp.eq.s32.totalorder %s16, 1
    %p60 = por %p58, %p59
    %p62 = scmp.ne.s32.totalorder %s47, %s61
    %p63 = scmp.eq.s32.totalorder %s16, 0
    %p64 = por %p62, %p63
    %s66 = sadd.s32 %s65, 1
    %p69 = scmp.eq.s32.totalorder %s10, 1
    %p70 = scmp.ne.s32.totalorder %s65, %s67
    %p71 = scmp.eq.s32.totalorder %s10, 0
    %p72 = por %p70, %p71
    %p73 = scmp.ne.s32.totalorder %s65, %s67
    %p74 = scmp.eq.s32.totalorder %s15, 1
    %p75 = por %p73, %p74
    %p76 = scmp.ne.s32.totalorder %s67, %s68
    %p77 = scmp.eq.s32.totalorder %s15, 0
    %p78 = por %p76, %p77
    %p79 = scmp.ne.s32.totalorder %s67, %s68
    %p80 = scmp.eq.s32.totalorder %s16, 1
    %p81 = por %p79, %p80
    %p83 = scmp.ne.s32.totalorder %s68, %s82
    %p84 = scmp.eq.s32.totalorder %s16, 0
    %p85 = por %p83, %p84
    %s86 = ssub.s32 %s10, %s17
    %p87 = scmp.eq.s32.totalorder %s86, 0
    %s89 = sadd.s32 %s88, 1
    %s90 = scalar_select %p87, %s88, %s89
    %p93 = pneg %p87
    %p94 = scmp.eq.s32.totalorder %s10, 1
    %p95 = por %p93, %p94
    %p96 = scmp.ne.s32.totalorder %s88, %s91
    %p97 = scmp.eq.s32.totalorder %s10, 0
    %p98 = por %p96, %p97
    %p99 = scmp.ne.s32.totalorder %s88, %s91
    %p100 = scmp.eq.s32.totalorder %s15, 1
    %p101 = por %p99, %p100
    %p102 = scmp.ne.s32.totalorder %s91, %s92
    %p103 = scmp.eq.s32.totalorder %s15, 0
    %p104 = por %p102, %p103
    %p105 = scmp.ne.s32.totalorder %s91, %s92
    %p106 = scmp.eq.s32.totalorder %s16, 1
    %p107 = por %p105, %p106
    %p109 = scmp.ne.s32.totalorder %s92, %s108
    %p110 = scmp.eq.s32.totalorder %s16, 0
    %p111 = por %p109, %p110
    %s112 = ssub.s32 %s10, %s17
    %p113 = scmp.eq.s32.totalorder %s112, 0
    %s115 = sadd.s32 %s114, 1
    %s116 = scalar_select %p113, %s114, %s115
    %p119 = pneg %p113
    %p120 = scmp.eq.s32.totalorder %s10, 1
    %p121 = por %p119, %p120
    %p122 = scmp.ne.s32.totalorder %s114, %s117
    %p123 = scmp.eq.s32.totalorder %s10, 0
    %p124 = por %p122, %p123
    %p125 = scmp.ne.s32.totalorder %s114, %s117
    %p126 = scmp.eq.s32.totalorder %s15, 1
    %p127 = por %p125, %p126
    %p128 = scmp.ne.s32.totalorder %s117, %s118
    %p129 = scmp.eq.s32.totalorder %s15, 0
    %p130 = por %p128, %p129
    %p131 = scmp.ne.s32.totalorder %s117, %s118
    %p132 = scmp.eq.s32.totalorder %s16, 1
    %p133 = por %p131, %p132
    %p135 = scmp.ne.s32.totalorder %s118, %s134
    %p136 = scmp.eq.s32.totalorder %s16, 0
    %p137 = por %p135, %p136
    %p138 = scmp.le.s32.totalorder 1, %s10
    %p139 = scmp.lt.s32.totalorder %s10, 3
    %p140 = pnand %p138, %p139
    %p141 = pneg %p140
    // Predicated region
    $region9: #{summarizer_forward.25} parent=5 // pred_check
      _
    $region10: #{summarizer_forward.25} parent=5 // pred_check_branch
      %143 = sbr.rel (%p140) target = $region12
    $region11: #{summarizer_forward.25} parent=5 // pred_region
      %s144 = ssub.s32 %s10, 1
      // Predicated region
      $region13: #{summarizer_forward.25} parent=11 // pred_check
        %p145 = pneg %p57
      $region14: #{summarizer_forward.25} parent=11 // pred_check_branch
        %147 = sbr.rel (%p145) target = $region16
      $region15: #{summarizer_forward.25} parent=11 // pred_region
        _
      $region16: #{summarizer_forward.25} parent=11 // pred_fallthru
        _
      // Predicated region
      $region17: #{summarizer_forward.25} parent=11 // pred_check
        %p148 = pneg %p78
      $region18: #{summarizer_forward.25} parent=11 // pred_check_branch
        %150 = sbr.rel (%p148) target = $region20
      $region19: #{summarizer_forward.25} parent=11 // pred_region
        _
      $region20: #{summarizer_forward.25} parent=11 // pred_fallthru
        _
    $region12: #{summarizer_forward.25} parent=5 // pred_fallthru
      _
    %p151 = scmp.lt.s32.totalorder %s10, 2
    // Predicated region
    $region21: #{summarizer_forward.25} parent=5 // pred_check
      %p152 = pneg %p151
    $region22: #{summarizer_forward.25} parent=5 // pred_check_branch
      %154 = sbr.rel (%p152) target = $region24
    $region23: #{summarizer_forward.25} parent=5 // pred_region
      // Predicated region
      $region25: #{summarizer_forward.25} parent=23 // pred_check
        %p155 = pneg %p30
      $region26: #{summarizer_forward.25} parent=23 // pred_check_branch
        %157 = sbr.rel (%p155) target = $region28
      $region27: #{summarizer_forward.25} parent=23 // pred_region
        %s158 = smul.u32 2, %s10
        %p159 = scmp.lt.s32.totalorder %s158, 3
        %s160 = scalar_select %p159, %s158, 3
        %s161 = smul.addr %s160, 2
        %s162 = smul.addr %s161, 4
        %s163 = scalar_lea.vmem %s0, %s162
        %s164 = smul.u32 2, %s10
      $region28: #{summarizer_forward.25} parent=23 // pred_fallthru
        _
      // Predicated region
      $region29: #{summarizer_forward.25} parent=23 // pred_check
        %p165 = pneg %p98
      $region30: #{summarizer_forward.25} parent=23 // pred_check_branch
        %167 = sbr.rel (%p165) target = $region32
      $region31: #{summarizer_forward.25} parent=23 // pred_region
        %s168 = smul.u32 2, %s10
        %p169 = scmp.lt.s32.totalorder %s168, 3
        %s170 = scalar_select %p169, %s168, 3
        %s171 = smul.addr %s170, 8
        %s172 = scalar_lea.vmem %s3, %s171
        %s173 = smul.u32 2, %s10
      $region32: #{summarizer_forward.25} parent=23 // pred_fallthru
        _
    $region24: #{summarizer_forward.25} parent=5 // pred_fallthru
      _
    %p174 = scmp.le.s32.totalorder 1, %s10
    %p175 = scmp.lt.s32.totalorder %s10, 3
    %p176 = pnand %p174, %p175
    %p177 = pneg %p176
    // Predicated region
    $region33: #{summarizer_forward.25} parent=5 // pred_check
      _
    $region34: #{summarizer_forward.25} parent=5 // pred_check_branch
      %179 = sbr.rel (%p176) target = $region36
    $region35: #{summarizer_forward.25} parent=5 // pred_region
      %s180 = ssub.s32 %s10, 1
      %s181 = smul.u32 2, %s15
      %p182 = scmp.lt.s32.totalorder %s181, 3
      %s183 = scalar_select %p182, %s181, 3
      %s184 = smul.addr %s183, 2
      %s185 = smul.addr %s184, 4
      %s186 = scalar_lea.vmem %s0, %s185
      %p187 = pneg %p36
      %p188 = pneg %p33
      %p189 = pneg %p57
      %p190 = pneg %p54
      %p191 = pneg %p78
      %p192 = pneg %p75
      %s193 = smul.u32 2, %s15
      %p194 = scmp.lt.s32.totalorder %s193, 3
      %s195 = scalar_select %p194, %s193, 3
      %s196 = smul.addr %s195, 8
      %s197 = scalar_lea.vmem %s3, %s196
      %p198 = pneg %p104
      %p199 = pneg %p101
      %p200 = pneg %p130
      %p201 = pneg %p127
      %s202 = smul.u32 2, %s15
      %p203 = scmp.lt.s32.totalorder %s202, 3
      %s204 = scalar_select %p203, %s202, 3
      %s205 = smul.addr %s204, 8
      %s206 = scalar_lea.vmem %s4, %s205
      %s207 = smul.u32 2, %s15
      %p208 = scmp.lt.s32.totalorder %s207, 3
      %s209 = scalar_select %p208, %s207, 3
      %s210 = smul.addr %s209, 2
      %s211 = smul.addr %s210, 4
      %s212 = scalar_lea.vmem %s0, %s211
      %s213 = smul.u32 2, %s15
      %s214 = smul.u32 2, %s15
      %p215 = scmp.lt.s32.totalorder %s214, 3
      %s216 = scalar_select %p215, %s214, 3
      %s217 = smul.addr %s216, 8
      %s218 = scalar_lea.vmem %s3, %s217
      %s219 = smul.u32 2, %s15
      %s220 = smul.u32 2, %s15
      %p221 = scmp.lt.s32.totalorder %s220, 3
      %s222 = scalar_select %p221, %s220, 3
      %s223 = smul.addr %s222, 8
      %s224 = scalar_lea.vmem %s4, %s223
      %s225 = smul.u32 2, %s15
      %v227 = vld [vmem:[%s212] sm:$0xff]
      %v228 = vld [vmem:[%s212 + $0x8] sm:$0xff]
      %v229 = vld [vmem:[%s1] sm:$0xff]
      %v230 = vld [vmem:[%s1 + $0x8] sm:$0xff]
      %v231 = vld [vmem:[%s1 + $0x10] sm:$0xff]
      %v232 = vld [vmem:[%s1 + $0x18] sm:$0xff]
      %v233 = vld [vmem:[%s1 + $0x20] sm:$0xff]
      %v234 = vld [vmem:[%s1 + $0x28] sm:$0xff]
      %v235 = vld [vmem:[%s1 + $0x30] sm:$0xff]
      %v236 = vld [vmem:[%s1 + $0x38] sm:$0xff]
      %v237 = vld [vmem:[%s1 + $0x40] sm:$0xff]
      %v238 = vld [vmem:[%s1 + $0x48] sm:$0xff]
      %v239 = vld [vmem:[%s1 + $0x50] sm:$0xff]
      %v240 = vld [vmem:[%s1 + $0x58] sm:$0xff]
      %v241 = vld [vmem:[%s1 + $0x60] sm:$0xff]
      %v242 = vld [vmem:[%s1 + $0x68] sm:$0xff]
      %v243 = vld [vmem:[%s1 + $0x70] sm:$0xff]
      %v244 = vld [vmem:[%s1 + $0x78] sm:$0xff]
      %v245 = vld [vmem:[%s2] sm:$0x1]
      %v247 = vlaneseq
      %v248 = vshrl.u32 %v247, 7
      %v249 = vsub.s32 0, %v248
      %v250 = vrot.slane %v245, %v249
      %v254 = vunpack.c.l.b16 %v227
      %v255 = vunpack.c.h.b16 %v227
      %v256 = vunpack.c.l.b16 %v228
      %v257 = vunpack.c.h.b16 %v228
      %v258 = vpack.c.b16 %v256, %v254
      %v259 = vpack.c.b16 %v257, %v255
      %v278 = vunpack.c.l.b16 %v229
      %v279 = vunpack.c.h.b16 %v229
      %v280 = vunpack.c.l.b16 %v230
      %v281 = vunpack.c.h.b16 %v230
      %v282 = vunpack.c.l.b16 %v231
      %v283 = vunpack.c.h.b16 %v231
      %v284 = vunpack.c.l.b16 %v232
      %v285 = vunpack.c.h.b16 %v232
      %v286 = vunpack.c.l.b16 %v233
      %v287 = vunpack.c.h.b16 %v233
      %v288 = vunpack.c.l.b16 %v234
      %v289 = vunpack.c.h.b16 %v234
      %v290 = vunpack.c.l.b16 %v235
      %v291 = vunpack.c.h.b16 %v235
      %v292 = vunpack.c.l.b16 %v236
      %v293 = vunpack.c.h.b16 %v236
      %v294 = vunpack.c.l.b16 %v237
      %v295 = vunpack.c.h.b16 %v237
      %v296 = vunpack.c.l.b16 %v238
      %v297 = vunpack.c.h.b16 %v238
      %v298 = vunpack.c.l.b16 %v239
      %v299 = vunpack.c.h.b16 %v239
      %v300 = vunpack.c.l.b16 %v240
      %v301 = vunpack.c.h.b16 %v240
      %v302 = vunpack.c.l.b16 %v241
      %v303 = vunpack.c.h.b16 %v241
      %v304 = vunpack.c.l.b16 %v242
      %v305 = vunpack.c.h.b16 %v242
      %v306 = vunpack.c.l.b16 %v243
      %v307 = vunpack.c.h.b16 %v243
      %v308 = vunpack.c.l.b16 %v244
      %v309 = vunpack.c.h.b16 %v244
      %v310 = vpack.c.b16 %v280, %v278
      %v311 = vpack.c.b16 %v281, %v279
      %v312 = vpack.c.b16 %v284, %v282
      %v313 = vpack.c.b16 %v285, %v283
      %v314 = vpack.c.b16 %v288, %v286
      %v315 = vpack.c.b16 %v289, %v287
      %v316 = vpack.c.b16 %v292, %v290
      %v317 = vpack.c.b16 %v293, %v291
      %v318 = vpack.c.b16 %v296, %v294
      %v319 = vpack.c.b16 %v297, %v295
      %v320 = vpack.c.b16 %v300, %v298
      %v321 = vpack.c.b16 %v301, %v299
      %v322 = vpack.c.b16 %v304, %v302
      %v323 = vpack.c.b16 %v305, %v303
      %v324 = vpack.c.b16 %v308, %v306
      %v325 = vpack.c.b16 %v309, %v307
      %342 = vmatprep.subr.bf16.mxu0 %v325
      %343 = vmatpush1.bf16.xpose.msra.mxu0 %v324
      %344 = vmatprep.subr.bf16.mxu0 %v323
      %345 = vmatpush1.bf16.xpose.msra.mxu0 %v322
      %346 = vmatprep.subr.bf16.mxu0 %v321
      %347 = vmatpush1.bf16.xpose.msra.mxu0 %v320
      %348 = vmatprep.subr.bf16.mxu0 %v319
      %349 = vmatpush1.bf16.xpose.msra.mxu0 %v318
      %350 = vmatprep.subr.bf16.mxu0 %v317
      %351 = vmatpush1.bf16.xpose.msra.mxu0 %v316
      %352 = vmatprep.subr.bf16.mxu0 %v315
      %353 = vmatpush1.bf16.xpose.msra.mxu0 %v314
      %354 = vmatprep.subr.bf16.mxu0 %v313
      %355 = vmatpush1.bf16.xpose.msra.mxu0 %v312
      %356 = vmatprep.subr.bf16.mxu0 %v311
      %357 = vmatpush1.bf16.xpose.msra.mxu0 %v310
      %358 = vmatprep.subr.bf16.mxu0 0
      %359 = vmatpush2.bf16.xpose.msra.mxu0 0
      %360 = vmatprep.subr.bf16.mxu0 0
      %361 = vmatpush2.bf16.xpose.msra.mxu0 0
      %362 = vmatprep.subr.bf16.mxu0 0
      %363 = vmatpush2.bf16.xpose.msra.mxu0 0
      %364 = vmatprep.subr.bf16.mxu0 0
      %365 = vmatpush2.bf16.xpose.msra.mxu0 0
      %366 = vmatprep.subr.bf16.mxu0 0
      %367 = vmatpush2.bf16.xpose.msra.mxu0 0
      %368 = vmatprep.subr.bf16.mxu0 0
      %369 = vmatpush2.bf16.xpose.msra.mxu0 0
      %370 = vmatprep.subr.bf16.mxu0 0
      %371 = vmatpush2.bf16.xpose.msra.mxu0 0
      %372 = vmatprep.subr.bf16.mxu0 0
      %373 = vmatpush2.bf16.xpose.msra.mxu0 0
      %374 = vmatprep.mubr.bf16.mxu0 %v259
      %375 = vmatmul.mubr.bf16.gmra.mxu0 %v258
      %v376 = vpop.f32.mrf.mxu0
      %v377 = vadd.f32 %v250, %v376
      %v378 = vpop.f32.mrf.mxu0
      %v379 = vpop.f32.mrf.mxu0
      %v380 = vadd.f32 %v250, %v379
      %v381 = vpop.f32.mrf.mxu0
      %382 = vdwg.mxu0
      %v383 = vld [vmem:[%s218] sm:$0xff]
      %v384 = vld [vmem:[%s218 + $0x8] sm:$0xff]
      %v385 = vadd.f32 %v377, %v383
      %v386 = vadd.f32 %v380, %v384
      %387 = vst [vmem:[%s224] sm:$0xff] %v385
      %388 = vst [vmem:[%s224 + $0x8] sm:$0xff] %v386
      %s389 = smul.u32 2, %s15
      %p390 = scmp.lt.s32.totalorder %s389, 3
      %s391 = scalar_select %p390, %s389, 3
      %s392 = smul.addr %s391, 8
      %s393 = scalar_lea.vmem %s4, %s392
      // Predicated region
      $region37: #{summarizer_forward.25} parent=35 // pred_check
        %p394 = pneg %p127
      $region38: #{summarizer_forward.25} parent=35 // pred_check_branch
        %396 = sbr.rel (%p394) target = $region40
      $region39: #{summarizer_forward.25} parent=35 // pred_region
        %s397 = smul.u32 2, %s15
      $region40: #{summarizer_forward.25} parent=35 // pred_fallthru
        _
    $region36: #{summarizer_forward.25} parent=5 // pred_fallthru
      _
    %p398 = scmp.le.s32.totalorder 2, %s10
    // Predicated region
    $region41: #{summarizer_forward.25} parent=5 // pred_check
      %p399 = pneg %p398
    $region42: #{summarizer_forward.25} parent=5 // pred_check_branch
      %401 = sbr.rel (%p399) target = $region44
    $region43: #{summarizer_forward.25} parent=5 // pred_region
      %s402 = ssub.s32 %s10, 2
      // Predicated region
      $region45: #{summarizer_forward.25} parent=43 // pred_check
        %p403 = pneg %p133
      $region46: #{summarizer_forward.25} parent=43 // pred_check_branch
        %405 = sbr.rel (%p403) target = $region48
      $region47: #{summarizer_forward.25} parent=43 // pred_region
        %s406 = smul.u32 2, %s16
        %p407 = scmp.lt.s32.totalorder %s406, 3
        %s408 = scalar_select %p407, %s406, 3
        %s409 = smul.addr %s408, 8
        %s410 = scalar_lea.vmem %s4, %s409
      $region48: #{summarizer_forward.25} parent=43 // pred_fallthru
        _
    $region44: #{summarizer_forward.25} parent=5 // pred_fallthru
      _
  $region6: #{summarizer_forward.25} parent=0 // loop_footer
    %s14 = sadd.s32 1, %s10
  $region7: #{summarizer_forward.25} parent=0 // loop_footer_branch
    %9 = sbr.rel target = $region3
  $region8: #{summarizer_forward.25} parent=0 // loop_exit
    _

// kernel: summarizer_forward.23
$region0: #{summarizer_forward.23}
  #allocation0 [shape = 'u32[]', space=smem, size = 0x4, offset = 0x4, fixed_abs, tag = 'smem constant byte address 0x4 - core index']
  #allocation1 [shape = 'u32[144,128]{1,0:T(1,128)}', space=vmem, size = 0x12000, scoped, tag = 'internal scratch']
  %s0 = inlined_call_operand.vmem [shape: bf16[2,4,16,32], index: 0, kind: input, shape index: {}]
  %s1 = inlined_call_operand.vmem [shape: bf16[2,4,128,32], index: 1, kind: input, shape index: {}]
  %s2 = inlined_call_operand.vmem [shape: bf16[2,4,128,32], index: 2, kind: input, shape index: {}]
  %s3 = inlined_call_operand.vmem [shape: f32[2,1,128], index: 3, kind: input, shape index: {}]
  %s4 = inlined_call_operand.vmem [shape: f32[2,16,128], index: 4, kind: input, shape index: {}]
  %s5 = inlined_call_operand.vmem [shape: bf16[4,128,32], index: 5, kind: input, shape index: {}]
  %s6 = inlined_call_operand.vmem [shape: f32[1,128], index: 6, kind: input, shape index: {}]
  %s7 = inlined_call_operand.vmem [shape: f32[2,16,128], index: 7, kind: output, shape index: {}]
  %s8 = sld [smem:[#allocation0]]
  $region61: #{summarizer_forward.23} parent=0
    _
  %s10 = ssub.s32 1, %s8
  %s11 = scalar_select 0, %s10, %s8
  loop: start=0, step=1, limit=4
  $region2: #{summarizer_forward.23} parent=0 // loop_pre_header
    _
  $region3: #{summarizer_forward.23} parent=0 // loop_header
    %s13 = sphi 0, %s17
    %p14 = scmp.ge.s32.totalorder %s13, 4
    %s23 = sphi 0, %s25
    %s26 = sphi 0, %s23
    %s27 = sphi 0, %s26
    %s43 = sphi 0, %s27
    %s49 = sphi 0, %s51
    %s52 = sphi 0, %s49
    %s53 = sphi 0, %s52
    %s69 = sphi 0, %s53
    %s75 = sphi 0, %s77
    %s78 = sphi 0, %s75
    %s79 = sphi 0, %s78
    %s95 = sphi 0, %s79
    %s101 = sphi 0, %s103
    %s104 = sphi 0, %s101
    %s105 = sphi 0, %s104
    %s121 = sphi 0, %s105
    %s127 = sphi 0, %s129
    %s130 = sphi 0, %s127
    %s131 = sphi 0, %s130
    %s147 = sphi 0, %s131
    %s151 = sphi 0, %s151
    %s153 = sphi 0, %s151
    %s154 = sphi 0, %s153
    %s168 = sphi 0, %s154
    %s172 = sphi 0, %s172
    %s174 = sphi 0, %s172
    %s175 = sphi 0, %s174
    %s189 = sphi 0, %s175
    %s195 = sphi 0, %s197
    %s198 = sphi 0, %s195
    %s199 = sphi 0, %s198
    %s215 = sphi 0, %s199
  $region4: #{summarizer_forward.23} parent=0 // loop_header_branch
    %16 = sbr.rel (%p14) target = $region8
  $region5: #{summarizer_forward.23} parent=0 // loop_body
    %s18 = ssub.s32 %s13, 1
    %s19 = ssub.s32 %s13, 2
    %s20 = sadd.s32 %s13, 1
    %s21 = ssub.s32 %s13, %s20
    %p22 = scmp.eq.s32.totalorder %s21, 0
    %s24 = sadd.s32 %s23, 1
    %s25 = scalar_select %p22, %s23, %s24
    %p28 = pneg %p22
    %p29 = scmp.eq.s32.totalorder %s13, 1
    %p30 = por %p28, %p29
    %p31 = scmp.ne.s32.totalorder %s23, %s26
    %p32 = scmp.eq.s32.totalorder %s13, 0
    %p33 = por %p31, %p32
    %p34 = scmp.ne.s32.totalorder %s23, %s26
    %p35 = scmp.eq.s32.totalorder %s18, 1
    %p36 = por %p34, %p35
    %p37 = scmp.ne.s32.totalorder %s26, %s27
    %p38 = scmp.eq.s32.totalorder %s18, 0
    %p39 = por %p37, %p38
    %p40 = scmp.ne.s32.totalorder %s26, %s27
    %p41 = scmp.eq.s32.totalorder %s19, 1
    %p42 = por %p40, %p41
    %p44 = scmp.ne.s32.totalorder %s27, %s43
    %p45 = scmp.eq.s32.totalorder %s19, 0
    %p46 = por %p44, %p45
    %s47 = ssub.s32 %s13, %s20
    %p48 = scmp.eq.s32.totalorder %s47, 0
    %s50 = sadd.s32 %s49, 1
    %s51 = scalar_select %p48, %s49, %s50
    %p54 = pneg %p48
    %p55 = scmp.eq.s32.totalorder %s13, 1
    %p56 = por %p54, %p55
    %p57 = scmp.ne.s32.totalorder %s49, %s52
    %p58 = scmp.eq.s32.totalorder %s13, 0
    %p59 = por %p57, %p58
    %p60 = scmp.ne.s32.totalorder %s49, %s52
    %p61 = scmp.eq.s32.totalorder %s18, 1
    %p62 = por %p60, %p61
    %p63 = scmp.ne.s32.totalorder %s52, %s53
    %p64 = scmp.eq.s32.totalorder %s18, 0
    %p65 = por %p63, %p64
    %p66 = scmp.ne.s32.totalorder %s52, %s53
    %p67 = scmp.eq.s32.totalorder %s19, 1
    %p68 = por %p66, %p67
    %p70 = scmp.ne.s32.totalorder %s53, %s69
    %p71 = scmp.eq.s32.totalorder %s19, 0
    %p72 = por %p70, %p71
    %s73 = ssub.s32 %s13, %s20
    %p74 = scmp.eq.s32.totalorder %s73, 0
    %s76 = sadd.s32 %s75, 1
    %s77 = scalar_select %p74, %s75, %s76
    %p80 = pneg %p74
    %p81 = scmp.eq.s32.totalorder %s13, 1
    %p82 = por %p80, %p81
    %p83 = scmp.ne.s32.totalorder %s75, %s78
    %p84 = scmp.eq.s32.totalorder %s13, 0
    %p85 = por %p83, %p84
    %p86 = scmp.ne.s32.totalorder %s75, %s78
    %p87 = scmp.eq.s32.totalorder %s18, 1
    %p88 = por %p86, %p87
    %p89 = scmp.ne.s32.totalorder %s78, %s79
    %p90 = scmp.eq.s32.totalorder %s18, 0
    %p91 = por %p89, %p90
    %p92 = scmp.ne.s32.totalorder %s78, %s79
    %p93 = scmp.eq.s32.totalorder %s19, 1
    %p94 = por %p92, %p93
    %p96 = scmp.ne.s32.totalorder %s79, %s95
    %p97 = scmp.eq.s32.totalorder %s19, 0
    %p98 = por %p96, %p97
    %s99 = ssub.s32 %s13, %s20
    %p100 = scmp.eq.s32.totalorder %s99, 0
    %s102 = sadd.s32 %s101, 1
    %s103 = scalar_select %p100, %s101, %s102
    %p106 = pneg %p100
    %p107 = scmp.eq.s32.totalorder %s13, 1
    %p108 = por %p106, %p107
    %p109 = scmp.ne.s32.totalorder %s101, %s104
    %p110 = scmp.eq.s32.totalorder %s13, 0
    %p111 = por %p109, %p110
    %p112 = scmp.ne.s32.totalorder %s101, %s104
    %p113 = scmp.eq.s32.totalorder %s18, 1
    %p114 = por %p112, %p113
    %p115 = scmp.ne.s32.totalorder %s104, %s105
    %p116 = scmp.eq.s32.totalorder %s18, 0
    %p117 = por %p115, %p116
    %p118 = scmp.ne.s32.totalorder %s104, %s105
    %p119 = scmp.eq.s32.totalorder %s19, 1
    %p120 = por %p118, %p119
    %p122 = scmp.ne.s32.totalorder %s105, %s121
    %p123 = scmp.eq.s32.totalorder %s19, 0
    %p124 = por %p122, %p123
    %s125 = ssub.s32 %s13, %s20
    %p126 = scmp.eq.s32.totalorder %s125, 0
    %s128 = sadd.s32 %s127, 1
    %s129 = scalar_select %p126, %s127, %s128
    %p132 = pneg %p126
    %p133 = scmp.eq.s32.totalorder %s13, 1
    %p134 = por %p132, %p133
    %p135 = scmp.ne.s32.totalorder %s127, %s130
    %p136 = scmp.eq.s32.totalorder %s13, 0
    %p137 = por %p135, %p136
    %p138 = scmp.ne.s32.totalorder %s127, %s130
    %p139 = scmp.eq.s32.totalorder %s18, 1
    %p140 = por %p138, %p139
    %p141 = scmp.ne.s32.totalorder %s130, %s131
    %p142 = scmp.eq.s32.totalorder %s18, 0
    %p143 = por %p141, %p142
    %p144 = scmp.ne.s32.totalorder %s130, %s131
    %p145 = scmp.eq.s32.totalorder %s19, 1
    %p146 = por %p144, %p145
    %p148 = scmp.ne.s32.totalorder %s131, %s147
    %p149 = scmp.eq.s32.totalorder %s19, 0
    %p150 = por %p148, %p149
    %s152 = sadd.s32 %s151, 1
    %p155 = scmp.eq.s32.totalorder %s13, 1
    %p156 = scmp.ne.s32.totalorder %s151, %s153
    %p157 = scmp.eq.s32.totalorder %s13, 0
    %p158 = por %p156, %p157
    %p159 = scmp.ne.s32.totalorder %s151, %s153
    %p160 = scmp.eq.s32.totalorder %s18, 1
    %p161 = por %p159, %p160
    %p162 = scmp.ne.s32.totalorder %s153, %s154
    %p163 = scmp.eq.s32.totalorder %s18, 0
    %p164 = por %p162, %p163
    %p165 = scmp.ne.s32.totalorder %s153, %s154
    %p166 = scmp.eq.s32.totalorder %s19, 1
    %p167 = por %p165, %p166
    %p169 = scmp.ne.s32.totalorder %s154, %s168
    %p170 = scmp.eq.s32.totalorder %s19, 0
    %p171 = por %p169, %p170
    %s173 = sadd.s32 %s172, 1
    %p176 = scmp.eq.s32.totalorder %s13, 1
    %p177 = scmp.ne.s32.totalorder %s172, %s174
    %p178 = scmp.eq.s32.totalorder %s13, 0
    %p179 = por %p177, %p178
    %p180 = scmp.ne.s32.totalorder %s172, %s174
    %p181 = scmp.eq.s32.totalorder %s18, 1
    %p182 = por %p180, %p181
    %p183 = scmp.ne.s32.totalorder %s174, %s175
    %p184 = scmp.eq.s32.totalorder %s18, 0
    %p185 = por %p183, %p184
    %p186 = scmp.ne.s32.totalorder %s174, %s175
    %p187 = scmp.eq.s32.totalorder %s19, 1
    %p188 = por %p186, %p187
    %p190 = scmp.ne.s32.totalorder %s175, %s189
    %p191 = scmp.eq.s32.totalorder %s19, 0
    %p192 = por %p190, %p191
    %s193 = ssub.s32 %s13, %s20
    %p194 = scmp.eq.s32.totalorder %s193, 0
    %s196 = sadd.s32 %s195, 1
    %s197 = scalar_select %p194, %s195, %s196
    %p200 = pneg %p194
    %p201 = scmp.eq.s32.totalorder %s13, 1
    %p202 = por %p200, %p201
    %p203 = scmp.ne.s32.totalorder %s195, %s198
    %p204 = scmp.eq.s32.totalorder %s13, 0
    %p205 = por %p203, %p204
    %p206 = scmp.ne.s32.totalorder %s195, %s198
    %p207 = scmp.eq.s32.totalorder %s18, 1
    %p208 = por %p206, %p207
    %p209 = scmp.ne.s32.totalorder %s198, %s199
    %p210 = scmp.eq.s32.totalorder %s18, 0
    %p211 = por %p209, %p210
    %p212 = scmp.ne.s32.totalorder %s198, %s199
    %p213 = scmp.eq.s32.totalorder %s19, 1
    %p214 = por %p212, %p213
    %p216 = scmp.ne.s32.totalorder %s199, %s215
    %p217 = scmp.eq.s32.totalorder %s19, 0
    %p218 = por %p216, %p217
    %p219 = scmp.le.s32.totalorder 1, %s13
    %p220 = scmp.lt.s32.totalorder %s13, 3
    %p221 = pnand %p219, %p220
    %p222 = pneg %p221
    // Predicated region
    $region9: #{summarizer_forward.23} parent=5 // pred_check
      _
    $region10: #{summarizer_forward.23} parent=5 // pred_check_branch
      %224 = sbr.rel (%p221) target = $region12
    $region11: #{summarizer_forward.23} parent=5 // pred_region
      %s225 = ssub.s32 %s13, 1
      // Predicated region
      $region13: #{summarizer_forward.23} parent=11 // pred_check
        %p226 = pneg %p164
      $region14: #{summarizer_forward.23} parent=11 // pred_check_branch
        %228 = sbr.rel (%p226) target = $region16
      $region15: #{summarizer_forward.23} parent=11 // pred_region
        _
      $region16: #{summarizer_forward.23} parent=11 // pred_fallthru
        _
      // Predicated region
      $region17: #{summarizer_forward.23} parent=11 // pred_check
        %p229 = pneg %p185
      $region18: #{summarizer_forward.23} parent=11 // pred_check_branch
        %231 = sbr.rel (%p229) target = $region20
      $region19: #{summarizer_forward.23} parent=11 // pred_region
        _
      $region20: #{summarizer_forward.23} parent=11 // pred_fallthru
        _
    $region12: #{summarizer_forward.23} parent=5 // pred_fallthru
      _
    %p232 = scmp.lt.s32.totalorder %s13, 2
    // Predicated region
    $region21: #{summarizer_forward.23} parent=5 // pred_check
      %p233 = pneg %p232
    $region22: #{summarizer_forward.23} parent=5 // pred_check_branch
      %235 = sbr.rel (%p233) target = $region24
    $region23: #{summarizer_forward.23} parent=5 // pred_region
      // Predicated region
      $region25: #{summarizer_forward.23} parent=23 // pred_check
        %p236 = pneg %p33
      $region26: #{summarizer_forward.23} parent=23 // pred_check_branch
        %238 = sbr.rel (%p236) target = $region28
      $region27: #{summarizer_forward.23} parent=23 // pred_region
        %p239 = scmp.lt.s32.totalorder %s13, 1
        %s240 = scalar_select %p239, %s13, 1
        %s241 = smul.addr %s240, 8
        %s242 = smul.addr %s241, 4
        %s243 = scalar_lea.vmem %s0, %s242
      $region28: #{summarizer_forward.23} parent=23 // pred_fallthru
        _
      // Predicated region
      $region29: #{summarizer_forward.23} parent=23 // pred_check
        %p244 = pneg %p59
      $region30: #{summarizer_forward.23} parent=23 // pred_check_branch
        %246 = sbr.rel (%p244) target = $region32
      $region31: #{summarizer_forward.23} parent=23 // pred_region
        %p247 = scmp.lt.s32.totalorder %s13, 1
        %s248 = scalar_select %p247, %s13, 1
        %s249 = smul.addr %s248, 64
        %s250 = smul.addr %s249, 4
        %s251 = scalar_lea.vmem %s1, %s250
      $region32: #{summarizer_forward.23} parent=23 // pred_fallthru
        _
      // Predicated region
      $region33: #{summarizer_forward.23} parent=23 // pred_check
        %p252 = pneg %p85
      $region34: #{summarizer_forward.23} parent=23 // pred_check_branch
        %254 = sbr.rel (%p252) target = $region36
      $region35: #{summarizer_forward.23} parent=23 // pred_region
        %p255 = scmp.lt.s32.totalorder %s13, 1
        %s256 = scalar_select %p255, %s13, 1
        %s257 = smul.addr %s256, 64
        %s258 = smul.addr %s257, 4
        %s259 = scalar_lea.vmem %s2, %s258
      $region36: #{summarizer_forward.23} parent=23 // pred_fallthru
        _
      // Predicated region
      $region37: #{summarizer_forward.23} parent=23 // pred_check
        %p260 = pneg %p111
      $region38: #{summarizer_forward.23} parent=23 // pred_check_branch
        %262 = sbr.rel (%p260) target = $region40
      $region39: #{summarizer_forward.23} parent=23 // pred_region
        %p263 = scmp.lt.s32.totalorder %s13, 1
        %s264 = scalar_select %p263, %s13, 1
        %s265 = scalar_lea.vmem %s3, %s264
      $region40: #{summarizer_forward.23} parent=23 // pred_fallthru
        _
      // Predicated region
      $region41: #{summarizer_forward.23} parent=23 // pred_check
        %p266 = pneg %p137
      $region42: #{summarizer_forward.23} parent=23 // pred_check_branch
        %268 = sbr.rel (%p266) target = $region44
      $region43: #{summarizer_forward.23} parent=23 // pred_region
        %p269 = scmp.lt.s32.totalorder %s13, 1
        %s270 = scalar_select %p269, %s13, 1
        %s271 = smul.addr %s270, 2
        %s272 = smul.addr %s271, 8
        %s273 = scalar_lea.vmem %s4, %s272
      $region44: #{summarizer_forward.23} parent=23 // pred_fallthru
        _
    $region24: #{summarizer_forward.23} parent=5 // pred_fallthru
      _
    %p274 = scmp.le.s32.totalorder 1, %s13
    %p275 = scmp.lt.s32.totalorder %s13, 3
    %p276 = pnand %p274, %p275
    %p277 = pneg %p276
    // Predicated region
    $region45: #{summarizer_forward.23} parent=5 // pred_check
      _
    $region46: #{summarizer_forward.23} parent=5 // pred_check_branch
      %279 = sbr.rel (%p276) target = $region48
    $region47: #{summarizer_forward.23} parent=5 // pred_region
      %s280 = ssub.s32 %s13, 1
      %p281 = scmp.lt.s32.totalorder %s18, 1
      %s282 = scalar_select %p281, %s18, 1
      %s283 = smul.addr %s282, 8
      %s284 = smul.addr %s283, 4
      %s285 = scalar_lea.vmem %s0, %s284
      %p286 = pneg %p39
      %p287 = pneg %p36
      %p288 = scmp.lt.s32.totalorder %s18, 1
      %s289 = scalar_select %p288, %s18, 1
      %s290 = smul.addr %s289, 64
      %s291 = smul.addr %s290, 4
      %s292 = scalar_lea.vmem %s1, %s291
      %p293 = pneg %p65
      %p294 = pneg %p62
      %p295 = scmp.lt.s32.totalorder %s18, 1
      %s296 = scalar_select %p295, %s18, 1
      %s297 = smul.addr %s296, 64
      %s298 = smul.addr %s297, 4
      %s299 = scalar_lea.vmem %s2, %s298
      %p300 = pneg %p91
      %p301 = pneg %p88
      %p302 = scmp.lt.s32.totalorder %s18, 1
      %s303 = scalar_select %p302, %s18, 1
      %s304 = scalar_lea.vmem %s3, %s303
      %p305 = pneg %p117
      %p306 = pneg %p114
      %p307 = scmp.lt.s32.totalorder %s18, 1
      %s308 = scalar_select %p307, %s18, 1
      %s309 = smul.addr %s308, 2
      %s310 = smul.addr %s309, 8
      %s311 = scalar_lea.vmem %s4, %s310
      %p312 = pneg %p143
      %p313 = pneg %p140
      %p314 = pneg %p164
      %p315 = pneg %p161
      %p316 = pneg %p185
      %p317 = pneg %p182
      %p318 = pneg %p211
      %p319 = pneg %p208
      %p320 = scmp.lt.s32.totalorder %s18, 1
      %s321 = scalar_select %p320, %s18, 1
      %s322 = smul.addr %s321, 2
      %s323 = smul.addr %s322, 8
      %s324 = scalar_lea.vmem %s7, %s323
      %p325 = scmp.lt.s32.totalorder %s18, 1
      %s326 = scalar_select %p325, %s18, 1
      %s327 = smul.addr %s326, 8
      %s328 = smul.addr %s327, 4
      %s329 = scalar_lea.vmem %s0, %s328
      %p330 = scmp.lt.s32.totalorder %s18, 1
      %s331 = scalar_select %p330, %s18, 1
      %s332 = smul.addr %s331, 64
      %s333 = smul.addr %s332, 4
      %s334 = scalar_lea.vmem %s1, %s333
      %p335 = scmp.lt.s32.totalorder %s18, 1
      %s336 = scalar_select %p335, %s18, 1
      %s337 = smul.addr %s336, 64
      %s338 = smul.addr %s337, 4
      %s339 = scalar_lea.vmem %s2, %s338
      %p340 = scmp.lt.s32.totalorder %s18, 1
      %s341 = scalar_select %p340, %s18, 1
      %s342 = scalar_lea.vmem %s3, %s341
      %p343 = scmp.lt.s32.totalorder %s18, 1
      %s344 = scalar_select %p343, %s18, 1
      %s345 = smul.addr %s344, 2
      %s346 = smul.addr %s345, 8
      %s347 = scalar_lea.vmem %s4, %s346
      %p348 = scmp.lt.s32.totalorder %s18, 1
      %s349 = scalar_select %p348, %s18, 1
      %s350 = smul.addr %s349, 2
      %s351 = smul.addr %s350, 8
      %s352 = scalar_lea.vmem %s7, %s351
      %v354 = vld [vmem:[%s329] sm:$0xf]
      %v355 = vld [vmem:[%s329 + $0x4] sm:$0xf]
      %v356 = vld [vmem:[%s329 + $0x8] sm:$0xf]
      %v357 = vld [vmem:[%s329 + $0xc] sm:$0xf]
      %v358 = vld [vmem:[%s329 + $0x10] sm:$0xf]
      %v359 = vld [vmem:[%s329 + $0x14] sm:$0xf]
      %v360 = vld [vmem:[%s329 + $0x18] sm:$0xf]
      %v361 = vld [vmem:[%s329 + $0x1c] sm:$0xf]
      %v362 = vld [vmem:[%s334] sm:$0xf]
      %v363 = vld [vmem:[%s334 + $0x4] sm:$0xf]
      %v364 = vld [vmem:[%s334 + $0x8] sm:$0xf]
      %v365 = vld [vmem:[%s334 + $0xc] sm:$0xf]
      %v366 = vld [vmem:[%s334 + $0x10] sm:$0xf]
      %v367 = vld [vmem:[%s334 + $0x14] sm:$0xf]
      %v368 = vld [vmem:[%s334 + $0x18] sm:$0xf]
      %v369 = vld [vmem:[%s334 + $0x1c] sm:$0xf]
      %v370 = vld [vmem:[%s334 + $0x20] sm:$0xf]
      %v371 = vld [vmem:[%s334 + $0x24] sm:$0xf]
      %v372 = vld [vmem:[%s334 + $0x28] sm:$0xf]
      %v373 = vld [vmem:[%s334 + $0x2c] sm:$0xf]
      %v374 = vld [vmem:[%s334 + $0x30] sm:$0xf]
      %v375 = vld [vmem:[%s334 + $0x34] sm:$0xf]
      %v376 = vld [vmem:[%s334 + $0x38] sm:$0xf]
      %v377 = vld [vmem:[%s334 + $0x3c] sm:$0xf]
      %v378 = vld [vmem:[%s334 + $0x40] sm:$0xf]
      %v379 = vld [vmem:[%s334 + $0x44] sm:$0xf]
      %v380 = vld [vmem:[%s334 + $0x48] sm:$0xf]
      %v381 = vld [vmem:[%s334 + $0x4c] sm:$0xf]
      %v382 = vld [vmem:[%s334 + $0x50] sm:$0xf]
      %v383 = vld [vmem:[%s334 + $0x54] sm:$0xf]
      %v384 = vld [vmem:[%s334 + $0x58] sm:$0xf]
      %v385 = vld [vmem:[%s334 + $0x5c] sm:$0xf]
      %v386 = vld [vmem:[%s334 + $0x60] sm:$0xf]
      %v387 = vld [vmem:[%s334 + $0x64] sm:$0xf]
      %v388 = vld [vmem:[%s334 + $0x68] sm:$0xf]
      %v389 = vld [vmem:[%s334 + $0x6c] sm:$0xf]
      %v390 = vld [vmem:[%s334 + $0x70] sm:$0xf]
      %v391 = vld [vmem:[%s334 + $0x74] sm:$0xf]
      %v392 = vld [vmem:[%s334 + $0x78] sm:$0xf]
      %v393 = vld [vmem:[%s334 + $0x7c] sm:$0xf]
      %v394 = vld [vmem:[%s334 + $0x80] sm:$0xf]
      %v395 = vld [vmem:[%s334 + $0x84] sm:$0xf]
      %v396 = vld [vmem:[%s334 + $0x88] sm:$0xf]
      %v397 = vld [vmem:[%s334 + $0x8c] sm:$0xf]
      %v398 = vld [vmem:[%s334 + $0x90] sm:$0xf]
      %v399 = vld [vmem:[%s334 + $0x94] sm:$0xf]
      %v400 = vld [vmem:[%s334 + $0x98] sm:$0xf]
      %v401 = vld [vmem:[%s334 + $0x9c] sm:$0xf]
      %v402 = vld [vmem:[%s334 + $0xa0] sm:$0xf]
      %v403 = vld [vmem:[%s334 + $0xa4] sm:$0xf]
      %v404 = vld [vmem:[%s334 + $0xa8] sm:$0xf]
      %v405 = vld [vmem:[%s334 + $0xac] sm:$0xf]
      %v406 = vld [vmem:[%s334 + $0xb0] sm:$0xf]
      %v407 = vld [vmem:[%s334 + $0xb4] sm:$0xf]
      %v408 = vld [vmem:[%s334 + $0xb8] sm:$0xf]
      %v409 = vld [vmem:[%s334 + $0xbc] sm:$0xf]
      %v410 = vld [vmem:[%s334 + $0xc0] sm:$0xf]
      %v411 = vld [vmem:[%s334 + $0xc4] sm:$0xf]
      %v412 = vld [vmem:[%s334 + $0xc8] sm:$0xf]
      %v413 = vld [vmem:[%s334 + $0xcc] sm:$0xf]
      %v414 = vld [vmem:[%s334 + $0xd0] sm:$0xf]
      %v415 = vld [vmem:[%s334 + $0xd4] sm:$0xf]
      %v416 = vld [vmem:[%s334 + $0xd8] sm:$0xf]
      %v417 = vld [vmem:[%s334 + $0xdc] sm:$0xf]
      %v418 = vld [vmem:[%s334 + $0xe0] sm:$0xf]
      %v419 = vld [vmem:[%s334 + $0xe4] sm:$0xf]
      %v420 = vld [vmem:[%s334 + $0xe8] sm:$0xf]
      %v421 = vld [vmem:[%s334 + $0xec] sm:$0xf]
      %v422 = vld [vmem:[%s334 + $0xf0] sm:$0xf]
      %v423 = vld [vmem:[%s334 + $0xf4] sm:$0xf]
      %v424 = vld [vmem:[%s334 + $0xf8] sm:$0xf]
      %v425 = vld [vmem:[%s334 + $0xfc] sm:$0xf]
      %v426 = vld [vmem:[%s339] sm:$0xf]
      %v427 = vld [vmem:[%s339 + $0x4] sm:$0xf]
      %v428 = vld [vmem:[%s339 + $0x8] sm:$0xf]
      %v429 = vld [vmem:[%s339 + $0xc] sm:$0xf]
      %v430 = vld [vmem:[%s339 + $0x10] sm:$0xf]
      %v431 = vld [vmem:[%s339 + $0x14] sm:$0xf]
      %v432 = vld [vmem:[%s339 + $0x18] sm:$0xf]
      %v433 = vld [vmem:[%s339 + $0x1c] sm:$0xf]
      %v434 = vld [vmem:[%s339 + $0x20] sm:$0xf]
      %v435 = vld [vmem:[%s339 + $0x24] sm:$0xf]
      %v436 = vld [vmem:[%s339 + $0x28] sm:$0xf]
      %v437 = vld [vmem:[%s339 + $0x2c] sm:$0xf]
      %v438 = vld [vmem:[%s339 + $0x30] sm:$0xf]
      %v439 = vld [vmem:[%s339 + $0x34] sm:$0xf]
      %v440 = vld [vmem:[%s339 + $0x38] sm:$0xf]
      %v441 = vld [vmem:[%s339 + $0x3c] sm:$0xf]
      %v442 = vld [vmem:[%s339 + $0x40] sm:$0xf]
      %v443 = vld [vmem:[%s339 + $0x44] sm:$0xf]
      %v444 = vld [vmem:[%s339 + $0x48] sm:$0xf]
      %v445 = vld [vmem:[%s339 + $0x4c] sm:$0xf]
      %v446 = vld [vmem:[%s339 + $0x50] sm:$0xf]
      %v447 = vld [vmem:[%s339 + $0x54] sm:$0xf]
      %v448 = vld [vmem:[%s339 + $0x58] sm:$0xf]
      %v449 = vld [vmem:[%s339 + $0x5c] sm:$0xf]
      %v450 = vld [vmem:[%s339 + $0x60] sm:$0xf]
      %v451 = vld [vmem:[%s339 + $0x64] sm:$0xf]
      %v452 = vld [vmem:[%s339 + $0x68] sm:$0xf]
      %v453 = vld [vmem:[%s339 + $0x6c] sm:$0xf]
      %v454 = vld [vmem:[%s339 + $0x70] sm:$0xf]
      %v455 = vld [vmem:[%s339 + $0x74] sm:$0xf]
      %v456 = vld [vmem:[%s339 + $0x78] sm:$0xf]
      %v457 = vld [vmem:[%s339 + $0x7c] sm:$0xf]
      %v458 = vld [vmem:[%s339 + $0x80] sm:$0xf]
      %v459 = vld [vmem:[%s339 + $0x84] sm:$0xf]
      %v460 = vld [vmem:[%s339 + $0x88] sm:$0xf]
      %v461 = vld [vmem:[%s339 + $0x8c] sm:$0xf]
      %v462 = vld [vmem:[%s339 + $0x90] sm:$0xf]
      %v463 = vld [vmem:[%s339 + $0x94] sm:$0xf]
      %v464 = vld [vmem:[%s339 + $0x98] sm:$0xf]
      %v465 = vld [vmem:[%s339 + $0x9c] sm:$0xf]
      %v466 = vld [vmem:[%s339 + $0xa0] sm:$0xf]
      %v467 = vld [vmem:[%s339 + $0xa4] sm:$0xf]
      %v468 = vld [vmem:[%s339 + $0xa8] sm:$0xf]
      %v469 = vld [vmem:[%s339 + $0xac] sm:$0xf]
      %v470 = vld [vmem:[%s339 + $0xb0] sm:$0xf]
      %v471 = vld [vmem:[%s339 + $0xb4] sm:$0xf]
      %v472 = vld [vmem:[%s339 + $0xb8] sm:$0xf]
      %v473 = vld [vmem:[%s339 + $0xbc] sm:$0xf]
      %v474 = vld [vmem:[%s339 + $0xc0] sm:$0xf]
      %v475 = vld [vmem:[%s339 + $0xc4] sm:$0xf]
      %v476 = vld [vmem:[%s339 + $0xc8] sm:$0xf]
      %v477 = vld [vmem:[%s339 + $0xcc] sm:$0xf]
      %v478 = vld [vmem:[%s339 + $0xd0] sm:$0xf]
      %v479 = vld [vmem:[%s339 + $0xd4] sm:$0xf]
      %v480 = vld [vmem:[%s339 + $0xd8] sm:$0xf]
      %v481 = vld [vmem:[%s339 + $0xdc] sm:$0xf]
      %v482 = vld [vmem:[%s339 + $0xe0] sm:$0xf]
      %v483 = vld [vmem:[%s339 + $0xe4] sm:$0xf]
      %v484 = vld [vmem:[%s339 + $0xe8] sm:$0xf]
      %v485 = vld [vmem:[%s339 + $0xec] sm:$0xf]
      %v486 = vld [vmem:[%s339 + $0xf0] sm:$0xf]
      %v487 = vld [vmem:[%s339 + $0xf4] sm:$0xf]
      %v488 = vld [vmem:[%s339 + $0xf8] sm:$0xf]
      %v489 = vld [vmem:[%s339 + $0xfc] sm:$0xf]
      %v492 = vunpack.c.l.b16 %v354
      %v493 = vunpack.c.l.b16 %v355
      %v494 = vpack.c.b16 %v493, %v492
      %v511 = vunpack.c.l.b16 %v362
      %v512 = vunpack.c.l.b16 %v363
      %v513 = vunpack.c.l.b16 %v364
      %v514 = vunpack.c.l.b16 %v365
      %v515 = vunpack.c.l.b16 %v366
      %v516 = vunpack.c.l.b16 %v367
      %v517 = vunpack.c.l.b16 %v368
      %v518 = vunpack.c.l.b16 %v369
      %v519 = vunpack.c.l.b16 %v370
      %v520 = vunpack.c.l.b16 %v371
      %v521 = vunpack.c.l.b16 %v372
      %v522 = vunpack.c.l.b16 %v373
      %v523 = vunpack.c.l.b16 %v374
      %v524 = vunpack.c.l.b16 %v375
      %v525 = vunpack.c.l.b16 %v376
      %v526 = vunpack.c.l.b16 %v377
      %v527 = vpack.c.b16 %v512, %v511
      %v528 = vpack.c.b16 %v514, %v513
      %v529 = vpack.c.b16 %v516, %v515
      %v530 = vpack.c.b16 %v518, %v517
      %v531 = vpack.c.b16 %v520, %v519
      %v532 = vpack.c.b16 %v522, %v521
      %v533 = vpack.c.b16 %v524, %v523
      %v534 = vpack.c.b16 %v526, %v525
      %vm535 = vcmask 261120
      %v537 = vsel %vm535, %v494, 0
      %v540 = vsel %vm535, %v527, 0
      %v543 = vsel %vm535, %v528, 0
      %v546 = vsel %vm535, %v529, 0
      %v549 = vsel %vm535, %v530, 0
      %v552 = vsel %vm535, %v531, 0
      %v555 = vsel %vm535, %v532, 0
      %v558 = vsel %vm535, %v533, 0
      %v561 = vsel %vm535, %v534, 0
      %563 = vmatprep.subr.bf16.mxu0 0
      %564 = vmatpush1.bf16.xpose.msra.mxu0 %v561
      %565 = vmatprep.subr.bf16.mxu0 0
      %566 = vmatpush1.bf16.xpose.msra.mxu0 %v558
      %567 = vmatprep.subr.bf16.mxu0 0
      %568 = vmatpush1.bf16.xpose.msra.mxu0 %v555
      %569 = vmatprep.subr.bf16.mxu0 0
      %570 = vmatpush1.bf16.xpose.msra.mxu0 %v552
      %571 = vmatprep.subr.bf16.mxu0 0
      %572 = vmatpush1.bf16.xpose.msra.mxu0 %v549
      %573 = vmatprep.subr.bf16.mxu0 0
      %574 = vmatpush1.bf16.xpose.msra.mxu0 %v546
      %575 = vmatprep.subr.bf16.mxu0 0
      %576 = vmatpush1.bf16.xpose.msra.mxu0 %v543
      %577 = vmatprep.subr.bf16.mxu0 0
      %578 = vmatpush1.bf16.xpose.msra.mxu0 %v540
      %579 = vmatprep.subr.bf16.mxu0 0
      %580 = vmatpush2.bf16.xpose.msra.mxu0 0
      %581 = vmatprep.subr.bf16.mxu0 0
      %582 = vmatpush2.bf16.xpose.msra.mxu0 0
      %583 = vmatprep.subr.bf16.mxu0 0
      %584 = vmatpush2.bf16.xpose.msra.mxu0 0
      %585 = vmatprep.subr.bf16.mxu0 0
      %586 = vmatpush2.bf16.xpose.msra.mxu0 0
      %587 = vmatprep.subr.bf16.mxu0 0
      %588 = vmatpush2.bf16.xpose.msra.mxu0 0
      %589 = vmatprep.subr.bf16.mxu0 0
      %590 = vmatpush2.bf16.xpose.msra.mxu0 0
      %591 = vmatprep.subr.bf16.mxu0 0
      %592 = vmatpush2.bf16.xpose.msra.mxu0 0
      %593 = vmatprep.subr.bf16.mxu0 0
      %594 = vmatpush2.bf16.xpose.msra.mxu0 0
      %595 = vmatprep.mubr.bf16.mxu0 0
      %596 = vmatmul.mubr.bf16.gmra.mxu0 %v537
      %v597 = vpop.f32.mrf.mxu0
      %v598 = vadd.f32 0.0, %v597
      %v599 = vpop.f32.mrf.mxu0
      %v600 = vpop.f32.mrf.mxu0
      %v601 = vadd.f32 0.0, %v600
      %v602 = vpop.f32.mrf.mxu0
      %603 = vdwg.mxu0
      %v606 = vunpack.c.l.b16 %v356
      %v607 = vunpack.c.l.b16 %v357
      %v608 = vpack.c.b16 %v607, %v606
      %v625 = vunpack.c.l.b16 %v378
      %v626 = vunpack.c.l.b16 %v379
      %v627 = vunpack.c.l.b16 %v380
      %v628 = vunpack.c.l.b16 %v381
      %v629 = vunpack.c.l.b16 %v382
      %v630 = vunpack.c.l.b16 %v383
      %v631 = vunpack.c.l.b16 %v384
      %v632 = vunpack.c.l.b16 %v385
      %v633 = vunpack.c.l.b16 %v386
      %v634 = vunpack.c.l.b16 %v387
      %v635 = vunpack.c.l.b16 %v388
      %v636 = vunpack.c.l.b16 %v389
      %v637 = vunpack.c.l.b16 %v390
      %v638 = vunpack.c.l.b16 %v391
      %v639 = vunpack.c.l.b16 %v392
      %v640 = vunpack.c.l.b16 %v393
      %v641 = vpack.c.b16 %v626, %v625
      %v642 = vpack.c.b16 %v628, %v627
      %v643 = vpack.c.b16 %v630, %v629
      %v644 = vpack.c.b16 %v632, %v631
      %v645 = vpack.c.b16 %v634, %v633
      %v646 = vpack.c.b16 %v636, %v635
      %v647 = vpack.c.b16 %v638, %v637
      %v648 = vpack.c.b16 %v640, %v639
      %v650 = vsel %vm535, %v608, 0
      %v653 = vsel %vm535, %v641, 0
      %v656 = vsel %vm535, %v642, 0
      %v659 = vsel %vm535, %v643, 0
      %v662 = vsel %vm535, %v644, 0
      %v665 = vsel %vm535, %v645, 0
      %v668 = vsel %vm535, %v646, 0
      %v671 = vsel %vm535, %v647, 0
      %v674 = vsel %vm535, %v648, 0
      %676 = vmatprep.subr.bf16.mxu0 0
      %677 = vmatpush1.bf16.xpose.msra.mxu0 %v674
      %678 = vmatprep.subr.bf16.mxu0 0
      %679 = vmatpush1.bf16.xpose.msra.mxu0 %v671
      %680 = vmatprep.subr.bf16.mxu0 0
      %681 = vmatpush1.bf16.xpose.msra.mxu0 %v668
      %682 = vmatprep.subr.bf16.mxu0 0
      %683 = vmatpush1.bf16.xpose.msra.mxu0 %v665
      %684 = vmatprep.subr.bf16.mxu0 0
      %685 = vmatpush1.bf16.xpose.msra.mxu0 %v662
      %686 = vmatprep.subr.bf16.mxu0 0
      %687 = vmatpush1.bf16.xpose.msra.mxu0 %v659
      %688 = vmatprep.subr.bf16.mxu0 0
      %689 = vmatpush1.bf16.xpose.msra.mxu0 %v656
      %690 = vmatprep.subr.bf16.mxu0 0
      %691 = vmatpush1.bf16.xpose.msra.mxu0 %v653
      %692 = vmatprep.subr.bf16.mxu0 0
      %693 = vmatpush2.bf16.xpose.msra.mxu0 0
      %694 = vmatprep.subr.bf16.mxu0 0
      %695 = vmatpush2.bf16.xpose.msra.mxu0 0
      %696 = vmatprep.subr.bf16.mxu0 0
      %697 = vmatpush2.bf16.xpose.msra.mxu0 0
      %698 = vmatprep.subr.bf16.mxu0 0
      %699 = vmatpush2.bf16.xpose.msra.mxu0 0
      %700 = vmatprep.subr.bf16.mxu0 0
      %701 = vmatpush2.bf16.xpose.msra.mxu0 0
      %702 = vmatprep.subr.bf16.mxu0 0
      %703 = vmatpush2.bf16.xpose.msra.mxu0 0
      %704 = vmatprep.subr.bf16.mxu0 0
      %705 = vmatpush2.bf16.xpose.msra.mxu0 0
      %706 = vmatprep.subr.bf16.mxu0 0
      %707 = vmatpush2.bf16.xpose.msra.mxu0 0
      %708 = vmatprep.mubr.bf16.mxu0 0
      %709 = vmatmul.mubr.bf16.gmra.mxu0 %v650
      %v710 = vpop.f32.mrf.mxu0
      %v711 = vadd.f32 0.0, %v710
      %v712 = vpop.f32.mrf.mxu0
      %v713 = vpop.f32.mrf.mxu0
      %v714 = vadd.f32 0.0, %v713
      %v715 = vpop.f32.mrf.mxu0
      %716 = vdwg.mxu0
      %v719 = vunpack.c.l.b16 %v358
      %v720 = vunpack.c.l.b16 %v359
      %v721 = vpack.c.b16 %v720, %v719
      %v738 = vunpack.c.l.b16 %v394
      %v739 = vunpack.c.l.b16 %v395
      %v740 = vunpack.c.l.b16 %v396
      %v741 = vunpack.c.l.b16 %v397
      %v742 = vunpack.c.l.b16 %v398
      %v743 = vunpack.c.l.b16 %v399
      %v744 = vunpack.c.l.b16 %v400
      %v745 = vunpack.c.l.b16 %v401
      %v746 = vunpack.c.l.b16 %v402
      %v747 = vunpack.c.l.b16 %v403
      %v748 = vunpack.c.l.b16 %v404
      %v749 = vunpack.c.l.b16 %v405
      %v750 = vunpack.c.l.b16 %v406
      %v751 = vunpack.c.l.b16 %v407
      %v752 = vunpack.c.l.b16 %v408
      %v753 = vunpack.c.l.b16 %v409
      %v754 = vpack.c.b16 %v739, %v738
      %v755 = vpack.c.b16 %v741, %v740
      %v756 = vpack.c.b16 %v743, %v742
      %v757 = vpack.c.b16 %v745, %v744
      %v758 = vpack.c.b16 %v747, %v746
      %v759 = vpack.c.b16 %v749, %v748
      %v760 = vpack.c.b16 %v751, %v750
      %v761 = vpack.c.b16 %v753, %v752
      %v763 = vsel %vm535, %v721, 0
      %v766 = vsel %vm535, %v754, 0
      %v769 = vsel %vm535, %v755, 0
      %v772 = vsel %vm535, %v756, 0
      %v775 = vsel %vm535, %v757, 0
      %v778 = vsel %vm535, %v758, 0
      %v781 = vsel %vm535, %v759, 0
      %v784 = vsel %vm535, %v760, 0
      %v787 = vsel %vm535, %v761, 0
      %789 = vmatprep.subr.bf16.mxu0 0
      %790 = vmatpush1.bf16.xpose.msra.mxu0 %v787
      %791 = vmatprep.subr.bf16.mxu0 0
      %792 = vmatpush1.bf16.xpose.msra.mxu0 %v784
      %793 = vmatprep.subr.bf16.mxu0 0
      %794 = vmatpush1.bf16.xpose.msra.mxu0 %v781
      %795 = vmatprep.subr.bf16.mxu0 0
      %796 = vmatpush1.bf16.xpose.msra.mxu0 %v778
      %797 = vmatprep.subr.bf16.mxu0 0
      %798 = vmatpush1.bf16.xpose.msra.mxu0 %v775
      %799 = vmatprep.subr.bf16.mxu0 0
      %800 = vmatpush1.bf16.xpose.msra.mxu0 %v772
      %801 = vmatprep.subr.bf16.mxu0 0
      %802 = vmatpush1.bf16.xpose.msra.mxu0 %v769
      %803 = vmatprep.subr.bf16.mxu0 0
      %804 = vmatpush1.bf16.xpose.msra.mxu0 %v766
      %805 = vmatprep.subr.bf16.mxu0 0
      %806 = vmatpush2.bf16.xpose.msra.mxu0 0
      %807 = vmatprep.subr.bf16.mxu0 0
      %808 = vmatpush2.bf16.xpose.msra.mxu0 0
      %809 = vmatprep.subr.bf16.mxu0 0
      %810 = vmatpush2.bf16.xpose.msra.mxu0 0
      %811 = vmatprep.subr.bf16.mxu0 0
      %812 = vmatpush2.bf16.xpose.msra.mxu0 0
      %813 = vmatprep.subr.bf16.mxu0 0
      %814 = vmatpush2.bf16.xpose.msra.mxu0 0
      %815 = vmatprep.subr.bf16.mxu0 0
      %816 = vmatpush2.bf16.xpose.msra.mxu0 0
      %817 = vmatprep.subr.bf16.mxu0 0
      %818 = vmatpush2.bf16.xpose.msra.mxu0 0
      %819 = vmatprep.subr.bf16.mxu0 0
      %820 = vmatpush2.bf16.xpose.msra.mxu0 0
      %821 = vmatprep.mubr.bf16.mxu0 0
      %822 = vmatmul.mubr.bf16.gmra.mxu0 %v763
      %v823 = vpop.f32.mrf.mxu0
      %v824 = vadd.f32 0.0, %v823
      %v825 = vpop.f32.mrf.mxu0
      %v826 = vpop.f32.mrf.mxu0
      %v827 = vadd.f32 0.0, %v826
      %v828 = vpop.f32.mrf.mxu0
      %829 = vdwg.mxu0
      %v832 = vunpack.c.l.b16 %v360
      %v833 = vunpack.c.l.b16 %v361
      %v834 = vpack.c.b16 %v833, %v832
      %v851 = vunpack.c.l.b16 %v410
      %v852 = vunpack.c.l.b16 %v411
      %v853 = vunpack.c.l.b16 %v412
      %v854 = vunpack.c.l.b16 %v413
      %v855 = vunpack.c.l.b16 %v414
      %v856 = vunpack.c.l.b16 %v415
      %v857 = vunpack.c.l.b16 %v416
      %v858 = vunpack.c.l.b16 %v417
      %v859 = vunpack.c.l.b16 %v418
      %v860 = vunpack.c.l.b16 %v419
      %v861 = vunpack.c.l.b16 %v420
      %v862 = vunpack.c.l.b16 %v421
      %v863 = vunpack.c.l.b16 %v422
      %v864 = vunpack.c.l.b16 %v423
      %v865 = vunpack.c.l.b16 %v424
      %v866 = vunpack.c.l.b16 %v425
      %v867 = vpack.c.b16 %v852, %v851
      %v868 = vpack.c.b16 %v854, %v853
      %v869 = vpack.c.b16 %v856, %v855
      %v870 = vpack.c.b16 %v858, %v857
      %v871 = vpack.c.b16 %v860, %v859
      %v872 = vpack.c.b16 %v862, %v861
      %v873 = vpack.c.b16 %v864, %v863
      %v874 = vpack.c.b16 %v866, %v865
      %v876 = vsel %vm535, %v834, 0
      %v879 = vsel %vm535, %v867, 0
      %v882 = vsel %vm535, %v868, 0
      %v885 = vsel %vm535, %v869, 0
      %v888 = vsel %vm535, %v870, 0
      %v891 = vsel %vm535, %v871, 0
      %v894 = vsel %vm535, %v872, 0
      %v897 = vsel %vm535, %v873, 0
      %v900 = vsel %vm535, %v874, 0
      %902 = vmatprep.subr.bf16.mxu0 0
      %903 = vmatpush1.bf16.xpose.msra.mxu0 %v900
      %904 = vmatprep.subr.bf16.mxu0 0
      %905 = vmatpush1.bf16.xpose.msra.mxu0 %v897
      %906 = vmatprep.subr.bf16.mxu0 0
      %907 = vmatpush1.bf16.xpose.msra.mxu0 %v894
      %908 = vmatprep.subr.bf16.mxu0 0
      %909 = vmatpush1.bf16.xpose.msra.mxu0 %v891
      %910 = vmatprep.subr.bf16.mxu0 0
      %911 = vmatpush1.bf16.xpose.msra.mxu0 %v888
      %912 = vmatprep.subr.bf16.mxu0 0
      %913 = vmatpush1.bf16.xpose.msra.mxu0 %v885
      %914 = vmatprep.subr.bf16.mxu0 0
      %915 = vmatpush1.bf16.xpose.msra.mxu0 %v882
      %916 = vmatprep.subr.bf16.mxu0 0
      %917 = vmatpush1.bf16.xpose.msra.mxu0 %v879
      %918 = vmatprep.subr.bf16.mxu0 0
      %919 = vmatpush2.bf16.xpose.msra.mxu0 0
      %920 = vmatprep.subr.bf16.mxu0 0
      %921 = vmatpush2.bf16.xpose.msra.mxu0 0
      %922 = vmatprep.subr.bf16.mxu0 0
      %923 = vmatpush2.bf16.xpose.msra.mxu0 0
      %924 = vmatprep.subr.bf16.mxu0 0
      %925 = vmatpush2.bf16.xpose.msra.mxu0 0
      %926 = vmatprep.subr.bf16.mxu0 0
      %927 = vmatpush2.bf16.xpose.msra.mxu0 0
      %928 = vmatprep.subr.bf16.mxu0 0
      %929 = vmatpush2.bf16.xpose.msra.mxu0 0
      %930 = vmatprep.subr.bf16.mxu0 0
      %931 = vmatpush2.bf16.xpose.msra.mxu0 0
      %932 = vmatprep.subr.bf16.mxu0 0
      %933 = vmatpush2.bf16.xpose.msra.mxu0 0
      %934 = vmatprep.mubr.bf16.mxu0 0
      %935 = vmatmul.mubr.bf16.gmra.mxu0 %v876
      %v936 = vpop.f32.mrf.mxu0
      %v937 = vadd.f32 0.0, %v936
      %v938 = vpop.f32.mrf.mxu0
      %v939 = vpop.f32.mrf.mxu0
      %v940 = vadd.f32 0.0, %v939
      %v941 = vpop.f32.mrf.mxu0
      %942 = vdwg.mxu0
      %v943 = vmul.f32 %v598, 0.17677669
      %v944 = vmul.f32 %v601, 0.17677669
      %v945 = vmul.f32 %v711, 0.17677669
      %v946 = vmul.f32 %v714, 0.17677669
      %v947 = vmul.f32 %v824, 0.17677669
      %v948 = vmul.f32 %v827, 0.17677669
      %v949 = vmul.f32 %v937, 0.17677669
      %v950 = vmul.f32 %v940, 0.17677669
      %v951 = vld [vmem:[%s342] sm:$0x1]
      %v953 = vlaneseq
      %v954 = vshrl.u32 %v953, 7
      %v955 = vsub.s32 0, %v954
      %v956 = vrot.slane %v951, %v955
      %v958 = vadd.f32 %v943, %v956
      %v959 = vadd.f32 %v944, %v956
      %v960 = vadd.f32 %v945, %v956
      %v961 = vadd.f32 %v946, %v956
      %v962 = vadd.f32 %v947, %v956
      %v963 = vadd.f32 %v948, %v956
      %v964 = vadd.f32 %v949, %v956
      %v965 = vadd.f32 %v950, %v956
      %966 = vmax.xlane.f32.xlu0 %v958
      %v967 = vpop.xlane.xlu0 %966
      %968 = vmax.xlane.f32.xlu0 %v959
      %v969 = vpop.xlane.xlu0 %968
      %970 = vmax.xlane.f32.xlu0 %v960
      %v971 = vpop.xlane.xlu0 %970
      %972 = vmax.xlane.f32.xlu0 %v961
      %v973 = vpop.xlane.xlu0 %972
      %974 = vmax.xlane.f32.xlu0 %v962
      %v975 = vpop.xlane.xlu0 %974
      %976 = vmax.xlane.f32.xlu0 %v963
      %v977 = vpop.xlane.xlu0 %976
      %978 = vmax.xlane.f32.xlu0 %v964
      %v979 = vpop.xlane.xlu0 %978
      %980 = vmax.xlane.f32.xlu0 %v965
      %v981 = vpop.xlane.xlu0 %980
      %v982 = vsub.f32 %v958, %v967
      %v983 = vsub.f32 %v959, %v969
      %v984 = vsub.f32 %v960, %v971
      %v985 = vsub.f32 %v961, %v973
      %v986 = vsub.f32 %v962, %v975
      %v987 = vsub.f32 %v963, %v977
      %v988 = vsub.f32 %v964, %v979
      %v989 = vsub.f32 %v965, %v981
      %v990 = vmul.f32 %v982, 1.442695
      %v991 = vpow.pop %v990
      %v992 = vmul.f32 %v983, 1.442695
      %v993 = vpow.pop %v992
      %v994 = vmul.f32 %v984, 1.442695
      %v995 = vpow.pop %v994
      %v996 = vmul.f32 %v985, 1.442695
      %v997 = vpow.pop %v996
      %v998 = vmul.f32 %v986, 1.442695
      %v999 = vpow.pop %v998
      %v1000 = vmul.f32 %v987, 1.442695
      %v1001 = vpow.pop %v1000
      %v1002 = vmul.f32 %v988, 1.442695
      %v1003 = vpow.pop %v1002
      %v1004 = vmul.f32 %v989, 1.442695
      %v1005 = vpow.pop %v1004
      %1006 = vadd.xlane.f32.xlu0 %v991
      %v1007 = vpop.xlane.xlu0 %1006
      %1008 = vadd.xlane.f32.xlu0 %v993
      %v1009 = vpop.xlane.xlu0 %1008
      %1010 = vadd.xlane.f32.xlu0 %v995
      %v1011 = vpop.xlane.xlu0 %1010
      %1012 = vadd.xlane.f32.xlu0 %v997
      %v1013 = vpop.xlane.xlu0 %1012
      %1014 = vadd.xlane.f32.xlu0 %v999
      %v1015 = vpop.xlane.xlu0 %1014
      %1016 = vadd.xlane.f32.xlu0 %v1001
      %v1017 = vpop.xlane.xlu0 %1016
      %1018 = vadd.xlane.f32.xlu0 %v1003
      %v1019 = vpop.xlane.xlu0 %1018
      %1020 = vadd.xlane.f32.xlu0 %v1005
      %v1021 = vpop.xlane.xlu0 %1020
      %v1022 = vpack.c.bf16 %v993, %v991
      %v1023 = vpack.c.bf16 %v997, %v995
      %v1024 = vpack.c.bf16 %v1001, %v999
      %v1025 = vpack.c.bf16 %v1005, %v1003
      %v1042 = vunpack.c.l.b16 %v426
      %v1043 = vunpack.c.l.b16 %v427
      %v1044 = vunpack.c.l.b16 %v428
      %v1045 = vunpack.c.l.b16 %v429
      %v1046 = vunpack.c.l.b16 %v430
      %v1047 = vunpack.c.l.b16 %v431
      %v1048 = vunpack.c.l.b16 %v432
      %v1049 = vunpack.c.l.b16 %v433
      %v1050 = vunpack.c.l.b16 %v434
      %v1051 = vunpack.c.l.b16 %v435
      %v1052 = vunpack.c.l.b16 %v436
      %v1053 = vunpack.c.l.b16 %v437
      %v1054 = vunpack.c.l.b16 %v438
      %v1055 = vunpack.c.l.b16 %v439
      %v1056 = vunpack.c.l.b16 %v440
      %v1057 = vunpack.c.l.b16 %v441
      %v1058 = vpack.c.b16 %v1043, %v1042
      %v1059 = vpack.c.b16 %v1045, %v1044
      %v1060 = vpack.c.b16 %v1047, %v1046
      %v1061 = vpack.c.b16 %v1049, %v1048
      %v1062 = vpack.c.b16 %v1051, %v1050
      %v1063 = vpack.c.b16 %v1053, %v1052
      %v1064 = vpack.c.b16 %v1055, %v1054
      %v1065 = vpack.c.b16 %v1057, %v1056
      %1074 = vmatprep.subr.bf16.mxu0 0
      %1075 = vmatpush1.bf16.msra.mxu0 %v1065
      %1076 = vmatprep.subr.bf16.mxu0 0
      %1077 = vmatpush1.bf16.msra.mxu0 %v1064
      %1078 = vmatprep.subr.bf16.mxu0 0
      %1079 = vmatpush1.bf16.msra.mxu0 %v1063
      %1080 = vmatprep.subr.bf16.mxu0 0
      %1081 = vmatpush1.bf16.msra.mxu0 %v1062
      %1082 = vmatprep.subr.bf16.mxu0 0
      %1083 = vmatpush1.bf16.msra.mxu0 %v1061
      %1084 = vmatprep.subr.bf16.mxu0 0
      %1085 = vmatpush1.bf16.msra.mxu0 %v1060
      %1086 = vmatprep.subr.bf16.mxu0 0
      %1087 = vmatpush1.bf16.msra.mxu0 %v1059
      %1088 = vmatprep.subr.bf16.mxu0 0
      %1089 = vmatpush1.bf16.msra.mxu0 %v1058
      %1090 = vmatprep.subr.bf16.mxu0 0
      %1091 = vmatpush2.bf16.msra.mxu0 0
      %1092 = vmatprep.subr.bf16.mxu0 0
      %1093 = vmatpush2.bf16.msra.mxu0 0
      %1094 = vmatprep.subr.bf16.mxu0 0
      %1095 = vmatpush2.bf16.msra.mxu0 0
      %1096 = vmatprep.subr.bf16.mxu0 0
      %1097 = vmatpush2.bf16.msra.mxu0 0
      %1098 = vmatprep.subr.bf16.mxu0 0
      %1099 = vmatpush2.bf16.msra.mxu0 0
      %1100 = vmatprep.subr.bf16.mxu0 0
      %1101 = vmatpush2.bf16.msra.mxu0 0
      %1102 = vmatprep.subr.bf16.mxu0 0
      %1103 = vmatpush2.bf16.msra.mxu0 0
      %1104 = vmatprep.subr.bf16.mxu0 0
      %1105 = vmatpush2.bf16.msra.mxu0 0
      %1106 = vmatprep.mubr.bf16.mxu0 0
      %1107 = vmatmul.mubr.bf16.gmra.mxu0 %v1022
      %v1108 = vpop.f32.mrf.mxu0
      %v1109 = vadd.f32 0.0, %v1108
      %v1110 = vpop.f32.mrf.mxu0
      %v1111 = vpop.f32.mrf.mxu0
      %v1112 = vadd.f32 0.0, %v1111
      %v1113 = vpop.f32.mrf.mxu0
      %1114 = vdwg.mxu0
      %v1131 = vunpack.c.l.b16 %v442
      %v1132 = vunpack.c.l.b16 %v443
      %v1133 = vunpack.c.l.b16 %v444
      %v1134 = vunpack.c.l.b16 %v445
      %v1135 = vunpack.c.l.b16 %v446
      %v1136 = vunpack.c.l.b16 %v447
      %v1137 = vunpack.c.l.b16 %v448
      %v1138 = vunpack.c.l.b16 %v449
      %v1139 = vunpack.c.l.b16 %v450
      %v1140 = vunpack.c.l.b16 %v451
      %v1141 = vunpack.c.l.b16 %v452
      %v1142 = vunpack.c.l.b16 %v453
      %v1143 = vunpack.c.l.b16 %v454
      %v1144 = vunpack.c.l.b16 %v455
      %v1145 = vunpack.c.l.b16 %v456
      %v1146 = vunpack.c.l.b16 %v457
      %v1147 = vpack.c.b16 %v1132, %v1131
      %v1148 = vpack.c.b16 %v1134, %v1133
      %v1149 = vpack.c.b16 %v1136, %v1135
      %v1150 = vpack.c.b16 %v1138, %v1137
      %v1151 = vpack.c.b16 %v1140, %v1139
      %v1152 = vpack.c.b16 %v1142, %v1141
      %v1153 = vpack.c.b16 %v1144, %v1143
      %v1154 = vpack.c.b16 %v1146, %v1145
      %1163 = vmatprep.subr.bf16.mxu0 0
      %1164 = vmatpush1.bf16.msra.mxu0 %v1154
      %1165 = vmatprep.subr.bf16.mxu0 0
      %1166 = vmatpush1.bf16.msra.mxu0 %v1153
      %1167 = vmatprep.subr.bf16.mxu0 0
      %1168 = vmatpush1.bf16.msra.mxu0 %v1152
      %1169 = vmatprep.subr.bf16.mxu0 0
      %1170 = vmatpush1.bf16.msra.mxu0 %v1151
      %1171 = vmatprep.subr.bf16.mxu0 0
      %1172 = vmatpush1.bf16.msra.mxu0 %v1150
      %1173 = vmatprep.subr.bf16.mxu0 0
      %1174 = vmatpush1.bf16.msra.mxu0 %v1149
      %1175 = vmatprep.subr.bf16.mxu0 0
      %1176 = vmatpush1.bf16.msra.mxu0 %v1148
      %1177 = vmatprep.subr.bf16.mxu0 0
      %1178 = vmatpush1.bf16.msra.mxu0 %v1147
      %1179 = vmatprep.subr.bf16.mxu0 0
      %1180 = vmatpush2.bf16.msra.mxu0 0
      %1181 = vmatprep.subr.bf16.mxu0 0
      %1182 = vmatpush2.bf16.msra.mxu0 0
      %1183 = vmatprep.subr.bf16.mxu0 0
      %1184 = vmatpush2.bf16.msra.mxu0 0
      %1185 = vmatprep.subr.bf16.mxu0 0
      %1186 = vmatpush2.bf16.msra.mxu0 0
      %1187 = vmatprep.subr.bf16.mxu0 0
      %1188 = vmatpush2.bf16.msra.mxu0 0
      %1189 = vmatprep.subr.bf16.mxu0 0
      %1190 = vmatpush2.bf16.msra.mxu0 0
      %1191 = vmatprep.subr.bf16.mxu0 0
      %1192 = vmatpush2.bf16.msra.mxu0 0
      %1193 = vmatprep.subr.bf16.mxu0 0
      %1194 = vmatpush2.bf16.msra.mxu0 0
      %1195 = vmatprep.mubr.bf16.mxu0 0
      %1196 = vmatmul.mubr.bf16.gmra.mxu0 %v1023
      %v1197 = vpop.f32.mrf.mxu0
      %v1198 = vadd.f32 0.0, %v1197
      %v1199 = vpop.f32.mrf.mxu0
      %v1200 = vpop.f32.mrf.mxu0
      %v1201 = vadd.f32 0.0, %v1200
      %v1202 = vpop.f32.mrf.mxu0
      %1203 = vdwg.mxu0
      %v1220 = vunpack.c.l.b16 %v458
      %v1221 = vunpack.c.l.b16 %v459
      %v1222 = vunpack.c.l.b16 %v460
      %v1223 = vunpack.c.l.b16 %v461
      %v1224 = vunpack.c.l.b16 %v462
      %v1225 = vunpack.c.l.b16 %v463
      %v1226 = vunpack.c.l.b16 %v464
      %v1227 = vunpack.c.l.b16 %v465
      %v1228 = vunpack.c.l.b16 %v466
      %v1229 = vunpack.c.l.b16 %v467
      %v1230 = vunpack.c.l.b16 %v468
      %v1231 = vunpack.c.l.b16 %v469
      %v1232 = vunpack.c.l.b16 %v470
      %v1233 = vunpack.c.l.b16 %v471
      %v1234 = vunpack.c.l.b16 %v472
      %v1235 = vunpack.c.l.b16 %v473
      %v1236 = vpack.c.b16 %v1221, %v1220
      %v1237 = vpack.c.b16 %v1223, %v1222
      %v1238 = vpack.c.b16 %v1225, %v1224
      %v1239 = vpack.c.b16 %v1227, %v1226
      %v1240 = vpack.c.b16 %v1229, %v1228
      %v1241 = vpack.c.b16 %v1231, %v1230
      %v1242 = vpack.c.b16 %v1233, %v1232
      %v1243 = vpack.c.b16 %v1235, %v1234
      %1252 = vmatprep.subr.bf16.mxu0 0
      %1253 = vmatpush1.bf16.msra.mxu0 %v1243
      %1254 = vmatprep.subr.bf16.mxu0 0
      %1255 = vmatpush1.bf16.msra.mxu0 %v1242
      %1256 = vmatprep.subr.bf16.mxu0 0
      %1257 = vmatpush1.bf16.msra.mxu0 %v1241
      %1258 = vmatprep.subr.bf16.mxu0 0
      %1259 = vmatpush1.bf16.msra.mxu0 %v1240
      %1260 = vmatprep.subr.bf16.mxu0 0
      %1261 = vmatpush1.bf16.msra.mxu0 %v1239
      %1262 = vmatprep.subr.bf16.mxu0 0
      %1263 = vmatpush1.bf16.msra.mxu0 %v1238
      %1264 = vmatprep.subr.bf16.mxu0 0
      %1265 = vmatpush1.bf16.msra.mxu0 %v1237
      %1266 = vmatprep.subr.bf16.mxu0 0
      %1267 = vmatpush1.bf16.msra.mxu0 %v1236
      %1268 = vmatprep.subr.bf16.mxu0 0
      %1269 = vmatpush2.bf16.msra.mxu0 0
      %1270 = vmatprep.subr.bf16.mxu0 0
      %1271 = vmatpush2.bf16.msra.mxu0 0
      %1272 = vmatprep.subr.bf16.mxu0 0
      %1273 = vmatpush2.bf16.msra.mxu0 0
      %1274 = vmatprep.subr.bf16.mxu0 0
      %1275 = vmatpush2.bf16.msra.mxu0 0
      %1276 = vmatprep.subr.bf16.mxu0 0
      %1277 = vmatpush2.bf16.msra.mxu0 0
      %1278 = vmatprep.subr.bf16.mxu0 0
      %1279 = vmatpush2.bf16.msra.mxu0 0
      %1280 = vmatprep.subr.bf16.mxu0 0
      %1281 = vmatpush2.bf16.msra.mxu0 0
      %1282 = vmatprep.subr.bf16.mxu0 0
      %1283 = vmatpush2.bf16.msra.mxu0 0
      %1284 = vmatprep.mubr.bf16.mxu0 0
      %1285 = vmatmul.mubr.bf16.gmra.mxu0 %v1024
      %v1286 = vpop.f32.mrf.mxu0
      %v1287 = vadd.f32 0.0, %v1286
      %v1288 = vpop.f32.mrf.mxu0
      %v1289 = vpop.f32.mrf.mxu0
      %v1290 = vadd.f32 0.0, %v1289
      %v1291 = vpop.f32.mrf.mxu0
      %1292 = vdwg.mxu0
      %v1309 = vunpack.c.l.b16 %v474
      %v1310 = vunpack.c.l.b16 %v475
      %v1311 = vunpack.c.l.b16 %v476
      %v1312 = vunpack.c.l.b16 %v477
      %v1313 = vunpack.c.l.b16 %v478
      %v1314 = vunpack.c.l.b16 %v479
      %v1315 = vunpack.c.l.b16 %v480
      %v1316 = vunpack.c.l.b16 %v481
      %v1317 = vunpack.c.l.b16 %v482
      %v1318 = vunpack.c.l.b16 %v483
      %v1319 = vunpack.c.l.b16 %v484
      %v1320 = vunpack.c.l.b16 %v485
      %v1321 = vunpack.c.l.b16 %v486
      %v1322 = vunpack.c.l.b16 %v487
      %v1323 = vunpack.c.l.b16 %v488
      %v1324 = vunpack.c.l.b16 %v489
      %v1325 = vpack.c.b16 %v1310, %v1309
      %v1326 = vpack.c.b16 %v1312, %v1311
      %v1327 = vpack.c.b16 %v1314, %v1313
      %v1328 = vpack.c.b16 %v1316, %v1315
      %v1329 = vpack.c.b16 %v1318, %v1317
      %v1330 = vpack.c.b16 %v1320, %v1319
      %v1331 = vpack.c.b16 %v1322, %v1321
      %v1332 = vpack.c.b16 %v1324, %v1323
      %1341 = vmatprep.subr.bf16.mxu0 0
      %1342 = vmatpush1.bf16.msra.mxu0 %v1332
      %1343 = vmatprep.subr.bf16.mxu0 0
      %1344 = vmatpush1.bf16.msra.mxu0 %v1331
      %1345 = vmatprep.subr.bf16.mxu0 0
      %1346 = vmatpush1.bf16.msra.mxu0 %v1330
      %1347 = vmatprep.subr.bf16.mxu0 0
      %1348 = vmatpush1.bf16.msra.mxu0 %v1329
      %1349 = vmatprep.subr.bf16.mxu0 0
      %1350 = vmatpush1.bf16.msra.mxu0 %v1328
      %1351 = vmatprep.subr.bf16.mxu0 0
      %1352 = vmatpush1.bf16.msra.mxu0 %v1327
      %1353 = vmatprep.subr.bf16.mxu0 0
      %1354 = vmatpush1.bf16.msra.mxu0 %v1326
      %1355 = vmatprep.subr.bf16.mxu0 0
      %1356 = vmatpush1.bf16.msra.mxu0 %v1325
      %1357 = vmatprep.subr.bf16.mxu0 0
      %1358 = vmatpush2.bf16.msra.mxu0 0
      %1359 = vmatprep.subr.bf16.mxu0 0
      %1360 = vmatpush2.bf16.msra.mxu0 0
      %1361 = vmatprep.subr.bf16.mxu0 0
      %1362 = vmatpush2.bf16.msra.mxu0 0
      %1363 = vmatprep.subr.bf16.mxu0 0
      %1364 = vmatpush2.bf16.msra.mxu0 0
      %1365 = vmatprep.subr.bf16.mxu0 0
      %1366 = vmatpush2.bf16.msra.mxu0 0
      %1367 = vmatprep.subr.bf16.mxu0 0
      %1368 = vmatpush2.bf16.msra.mxu0 0
      %1369 = vmatprep.subr.bf16.mxu0 0
      %1370 = vmatpush2.bf16.msra.mxu0 0
      %1371 = vmatprep.subr.bf16.mxu0 0
      %1372 = vmatpush2.bf16.msra.mxu0 0
      %1373 = vmatprep.mubr.bf16.mxu0 0
      %1374 = vmatmul.mubr.bf16.gmra.mxu0 %v1025
      %v1375 = vpop.f32.mrf.mxu0
      %v1376 = vadd.f32 0.0, %v1375
      %v1377 = vpop.f32.mrf.mxu0
      %v1378 = vpop.f32.mrf.mxu0
      %v1379 = vadd.f32 0.0, %v1378
      %v1380 = vpop.f32.mrf.mxu0
      %1381 = vdwg.mxu0
      %v1382 = vrcp.pop %v1007
      %v1383 = vrcp.pop %v1009
      %v1384 = vrcp.pop %v1011
      %v1385 = vrcp.pop %v1013
      %v1386 = vrcp.pop %v1015
      %v1387 = vrcp.pop %v1017
      %v1388 = vrcp.pop %v1019
      %v1389 = vrcp.pop %v1021
      %v1390 = vmul.f32 %v1109, %v1382
      %v1391 = vmul.f32 %v1112, %v1383
      %v1392 = vmul.f32 %v1198, %v1384
      %v1393 = vmul.f32 %v1201, %v1385
      %v1394 = vmul.f32 %v1287, %v1386
      %v1395 = vmul.f32 %v1290, %v1387
      %v1396 = vmul.f32 %v1376, %v1388
      %v1397 = vmul.f32 %v1379, %v1389
      %v1398 = vld [vmem:[%s5] sm:$0xf]
      %v1399 = vld [vmem:[%s5 + $0x4] sm:$0xf]
      %v1400 = vld [vmem:[%s5 + $0x8] sm:$0xf]
      %v1401 = vld [vmem:[%s5 + $0xc] sm:$0xf]
      %v1402 = vld [vmem:[%s5 + $0x10] sm:$0xf]
      %v1403 = vld [vmem:[%s5 + $0x14] sm:$0xf]
      %v1404 = vld [vmem:[%s5 + $0x18] sm:$0xf]
      %v1405 = vld [vmem:[%s5 + $0x1c] sm:$0xf]
      %v1406 = vld [vmem:[%s5 + $0x20] sm:$0xf]
      %v1407 = vld [vmem:[%s5 + $0x24] sm:$0xf]
      %v1408 = vld [vmem:[%s5 + $0x28] sm:$0xf]
      %v1409 = vld [vmem:[%s5 + $0x2c] sm:$0xf]
      %v1410 = vld [vmem:[%s5 + $0x30] sm:$0xf]
      %v1411 = vld [vmem:[%s5 + $0x34] sm:$0xf]
      %v1412 = vld [vmem:[%s5 + $0x38] sm:$0xf]
      %v1413 = vld [vmem:[%s5 + $0x3c] sm:$0xf]
      %v1414 = vld [vmem:[%s5 + $0x40] sm:$0xf]
      %v1415 = vld [vmem:[%s5 + $0x44] sm:$0xf]
      %v1416 = vld [vmem:[%s5 + $0x48] sm:$0xf]
      %v1417 = vld [vmem:[%s5 + $0x4c] sm:$0xf]
      %v1418 = vld [vmem:[%s5 + $0x50] sm:$0xf]
      %v1419 = vld [vmem:[%s5 + $0x54] sm:$0xf]
      %v1420 = vld [vmem:[%s5 + $0x58] sm:$0xf]
      %v1421 = vld [vmem:[%s5 + $0x5c] sm:$0xf]
      %v1422 = vld [vmem:[%s5 + $0x60] sm:$0xf]
      %v1423 = vld [vmem:[%s5 + $0x64] sm:$0xf]
      %v1424 = vld [vmem:[%s5 + $0x68] sm:$0xf]
      %v1425 = vld [vmem:[%s5 + $0x6c] sm:$0xf]
      %v1426 = vld [vmem:[%s5 + $0x70] sm:$0xf]
      %v1427 = vld [vmem:[%s5 + $0x74] sm:$0xf]
      %v1428 = vld [vmem:[%s5 + $0x78] sm:$0xf]
      %v1429 = vld [vmem:[%s5 + $0x7c] sm:$0xf]
      %v1430 = vld [vmem:[%s5 + $0x80] sm:$0xf]
      %v1431 = vld [vmem:[%s5 + $0x84] sm:$0xf]
      %v1432 = vld [vmem:[%s5 + $0x88] sm:$0xf]
      %v1433 = vld [vmem:[%s5 + $0x8c] sm:$0xf]
      %v1434 = vld [vmem:[%s5 + $0x90] sm:$0xf]
      %v1435 = vld [vmem:[%s5 + $0x94] sm:$0xf]
      %v1436 = vld [vmem:[%s5 + $0x98] sm:$0xf]
      %v1437 = vld [vmem:[%s5 + $0x9c] sm:$0xf]
      %v1438 = vld [vmem:[%s5 + $0xa0] sm:$0xf]
      %v1439 = vld [vmem:[%s5 + $0xa4] sm:$0xf]
      %v1440 = vld [vmem:[%s5 + $0xa8] sm:$0xf]
      %v1441 = vld [vmem:[%s5 + $0xac] sm:$0xf]
      %v1442 = vld [vmem:[%s5 + $0xb0] sm:$0xf]
      %v1443 = vld [vmem:[%s5 + $0xb4] sm:$0xf]
      %v1444 = vld [vmem:[%s5 + $0xb8] sm:$0xf]
      %v1445 = vld [vmem:[%s5 + $0xbc] sm:$0xf]
      %v1446 = vld [vmem:[%s5 + $0xc0] sm:$0xf]
      %v1447 = vld [vmem:[%s5 + $0xc4] sm:$0xf]
      %v1448 = vld [vmem:[%s5 + $0xc8] sm:$0xf]
      %v1449 = vld [vmem:[%s5 + $0xcc] sm:$0xf]
      %v1450 = vld [vmem:[%s5 + $0xd0] sm:$0xf]
      %v1451 = vld [vmem:[%s5 + $0xd4] sm:$0xf]
      %v1452 = vld [vmem:[%s5 + $0xd8] sm:$0xf]
      %v1453 = vld [vmem:[%s5 + $0xdc] sm:$0xf]
      %v1454 = vld [vmem:[%s5 + $0xe0] sm:$0xf]
      %v1455 = vld [vmem:[%s5 + $0xe4] sm:$0xf]
      %v1456 = vld [vmem:[%s5 + $0xe8] sm:$0xf]
      %v1457 = vld [vmem:[%s5 + $0xec] sm:$0xf]
      %v1458 = vld [vmem:[%s5 + $0xf0] sm:$0xf]
      %v1459 = vld [vmem:[%s5 + $0xf4] sm:$0xf]
      %v1460 = vld [vmem:[%s5 + $0xf8] sm:$0xf]
      %v1461 = vld [vmem:[%s5 + $0xfc] sm:$0xf]
      %v1462 = vld [vmem:[%s347] sm:$0xff]
      %v1463 = vld [vmem:[%s347 + $0x8] sm:$0xff]
      %v1464 = vld [vmem:[%s6] sm:$0x1]
      %v1466 = vlaneseq
      %v1467 = vshrl.u32 %v1466, 7
      %v1468 = vsub.s32 0, %v1467
      %v1469 = vrot.slane %v1464, %v1468
      %v1471 = vadd.f32 %v1462, %v1469
      %v1472 = vadd.f32 %v1463, %v1469
      %v1473 = vpack.c.bf16 %v1391, %v1390
      %v1490 = vunpack.c.l.b16 %v1398
      %v1491 = vunpack.c.l.b16 %v1399
      %v1492 = vunpack.c.l.b16 %v1400
      %v1493 = vunpack.c.l.b16 %v1401
      %v1494 = vunpack.c.l.b16 %v1402
      %v1495 = vunpack.c.l.b16 %v1403
      %v1496 = vunpack.c.l.b16 %v1404
      %v1497 = vunpack.c.l.b16 %v1405
      %v1498 = vunpack.c.l.b16 %v1406
      %v1499 = vunpack.c.l.b16 %v1407
      %v1500 = vunpack.c.l.b16 %v1408
      %v1501 = vunpack.c.l.b16 %v1409
      %v1502 = vunpack.c.l.b16 %v1410
      %v1503 = vunpack.c.l.b16 %v1411
      %v1504 = vunpack.c.l.b16 %v1412
      %v1505 = vunpack.c.l.b16 %v1413
      %v1506 = vpack.c.b16 %v1491, %v1490
      %v1507 = vpack.c.b16 %v1493, %v1492
      %v1508 = vpack.c.b16 %v1495, %v1494
      %v1509 = vpack.c.b16 %v1497, %v1496
      %v1510 = vpack.c.b16 %v1499, %v1498
      %v1511 = vpack.c.b16 %v1501, %v1500
      %v1512 = vpack.c.b16 %v1503, %v1502
      %v1513 = vpack.c.b16 %v1505, %v1504
      %v1515 = vsel %vm535, %v1473, 0
      %v1518 = vsel %vm535, %v1506, 0
      %v1521 = vsel %vm535, %v1507, 0
      %v1524 = vsel %vm535, %v1508, 0
      %v1527 = vsel %vm535, %v1509, 0
      %v1530 = vsel %vm535, %v1510, 0
      %v1533 = vsel %vm535, %v1511, 0
      %v1536 = vsel %vm535, %v1512, 0
      %v1539 = vsel %vm535, %v1513, 0
      %1541 = vmatprep.subr.bf16.mxu0 0
      %1542 = vmatpush1.bf16.xpose.msra.mxu0 %v1539
      %1543 = vmatprep.subr.bf16.mxu0 0
      %1544 = vmatpush1.bf16.xpose.msra.mxu0 %v1536
      %1545 = vmatprep.subr.bf16.mxu0 0
      %1546 = vmatpush1.bf16.xpose.msra.mxu0 %v1533
      %1547 = vmatprep.subr.bf16.mxu0 0
      %1548 = vmatpush1.bf16.xpose.msra.mxu0 %v1530
      %1549 = vmatprep.subr.bf16.mxu0 0
      %1550 = vmatpush1.bf16.xpose.msra.mxu0 %v1527
      %1551 = vmatprep.subr.bf16.mxu0 0
      %1552 = vmatpush1.bf16.xpose.msra.mxu0 %v1524
      %1553 = vmatprep.subr.bf16.mxu0 0
      %1554 = vmatpush1.bf16.xpose.msra.mxu0 %v1521
      %1555 = vmatprep.subr.bf16.mxu0 0
      %1556 = vmatpush1.bf16.xpose.msra.mxu0 %v1518
      %1557 = vmatprep.subr.bf16.mxu0 0
      %1558 = vmatpush2.bf16.xpose.msra.mxu0 0
      %1559 = vmatprep.subr.bf16.mxu0 0
      %1560 = vmatpush2.bf16.xpose.msra.mxu0 0
      %1561 = vmatprep.subr.bf16.mxu0 0
      %1562 = vmatpush2.bf16.xpose.msra.mxu0 0
      %1563 = vmatprep.subr.bf16.mxu0 0
      %1564 = vmatpush2.bf16.xpose.msra.mxu0 0
      %1565 = vmatprep.subr.bf16.mxu0 0
      %1566 = vmatpush2.bf16.xpose.msra.mxu0 0
      %1567 = vmatprep.subr.bf16.mxu0 0
      %1568 = vmatpush2.bf16.xpose.msra.mxu0 0
      %1569 = vmatprep.subr.bf16.mxu0 0
      %1570 = vmatpush2.bf16.xpose.msra.mxu0 0
      %1571 = vmatprep.subr.bf16.mxu0 0
      %1572 = vmatpush2.bf16.xpose.msra.mxu0 0
      %1573 = vmatprep.mubr.bf16.mxu0 0
      %1574 = vmatmul.mubr.bf16.gmra.mxu0 %v1515
      %v1575 = vpop.f32.mrf.mxu0
      %v1576 = vadd.f32 0.0, %v1575
      %v1577 = vpop.f32.mrf.mxu0
      %v1578 = vpop.f32.mrf.mxu0
      %v1579 = vadd.f32 0.0, %v1578
      %v1580 = vpop.f32.mrf.mxu0
      %1581 = vdwg.mxu0
      %v1582 = vadd.f32 %v1471, %v1576
      %v1583 = vadd.f32 %v1472, %v1579
      %v1584 = vpack.c.bf16 %v1393, %v1392
      %v1601 = vunpack.c.l.b16 %v1414
      %v1602 = vunpack.c.l.b16 %v1415
      %v1603 = vunpack.c.l.b16 %v1416
      %v1604 = vunpack.c.l.b16 %v1417
      %v1605 = vunpack.c.l.b16 %v1418
      %v1606 = vunpack.c.l.b16 %v1419
      %v1607 = vunpack.c.l.b16 %v1420
      %v1608 = vunpack.c.l.b16 %v1421
      %v1609 = vunpack.c.l.b16 %v1422
      %v1610 = vunpack.c.l.b16 %v1423
      %v1611 = vunpack.c.l.b16 %v1424
      %v1612 = vunpack.c.l.b16 %v1425
      %v1613 = vunpack.c.l.b16 %v1426
      %v1614 = vunpack.c.l.b16 %v1427
      %v1615 = vunpack.c.l.b16 %v1428
      %v1616 = vunpack.c.l.b16 %v1429
      %v1617 = vpack.c.b16 %v1602, %v1601
      %v1618 = vpack.c.b16 %v1604, %v1603
      %v1619 = vpack.c.b16 %v1606, %v1605
      %v1620 = vpack.c.b16 %v1608, %v1607
      %v1621 = vpack.c.b16 %v1610, %v1609
      %v1622 = vpack.c.b16 %v1612, %v1611
      %v1623 = vpack.c.b16 %v1614, %v1613
      %v1624 = vpack.c.b16 %v1616, %v1615
      %v1626 = vsel %vm535, %v1584, 0
      %v1629 = vsel %vm535, %v1617, 0
      %v1632 = vsel %vm535, %v1618, 0
      %v1635 = vsel %vm535, %v1619, 0
      %v1638 = vsel %vm535, %v1620, 0
      %v1641 = vsel %vm535, %v1621, 0
      %v1644 = vsel %vm535, %v1622, 0
      %v1647 = vsel %vm535, %v1623, 0
      %v1650 = vsel %vm535, %v1624, 0
      %1652 = vmatprep.subr.bf16.mxu0 0
      %1653 = vmatpush1.bf16.xpose.msra.mxu0 %v1650
      %1654 = vmatprep.subr.bf16.mxu0 0
      %1655 = vmatpush1.bf16.xpose.msra.mxu0 %v1647
      %1656 = vmatprep.subr.bf16.mxu0 0
      %1657 = vmatpush1.bf16.xpose.msra.mxu0 %v1644
      %1658 = vmatprep.subr.bf16.mxu0 0
      %1659 = vmatpush1.bf16.xpose.msra.mxu0 %v1641
      %1660 = vmatprep.subr.bf16.mxu0 0
      %1661 = vmatpush1.bf16.xpose.msra.mxu0 %v1638
      %1662 = vmatprep.subr.bf16.mxu0 0
      %1663 = vmatpush1.bf16.xpose.msra.mxu0 %v1635
      %1664 = vmatprep.subr.bf16.mxu0 0
      %1665 = vmatpush1.bf16.xpose.msra.mxu0 %v1632
      %1666 = vmatprep.subr.bf16.mxu0 0
      %1667 = vmatpush1.bf16.xpose.msra.mxu0 %v1629
      %1668 = vmatprep.subr.bf16.mxu0 0
      %1669 = vmatpush2.bf16.xpose.msra.mxu0 0
      %1670 = vmatprep.subr.bf16.mxu0 0
      %1671 = vmatpush2.bf16.xpose.msra.mxu0 0
      %1672 = vmatprep.subr.bf16.mxu0 0
      %1673 = vmatpush2.bf16.xpose.msra.mxu0 0
      %1674 = vmatprep.subr.bf16.mxu0 0
      %1675 = vmatpush2.bf16.xpose.msra.mxu0 0
      %1676 = vmatprep.subr.bf16.mxu0 0
      %1677 = vmatpush2.bf16.xpose.msra.mxu0 0
      %1678 = vmatprep.subr.bf16.mxu0 0
      %1679 = vmatpush2.bf16.xpose.msra.mxu0 0
      %1680 = vmatprep.subr.bf16.mxu0 0
      %1681 = vmatpush2.bf16.xpose.msra.mxu0 0
      %1682 = vmatprep.subr.bf16.mxu0 0
      %1683 = vmatpush2.bf16.xpose.msra.mxu0 0
      %1684 = vmatprep.mubr.bf16.mxu0 0
      %1685 = vmatmul.mubr.bf16.gmra.mxu0 %v1626
      %v1686 = vpop.f32.mrf.mxu0
      %v1687 = vadd.f32 0.0, %v1686
      %v1688 = vpop.f32.mrf.mxu0
      %v1689 = vpop.f32.mrf.mxu0
      %v1690 = vadd.f32 0.0, %v1689
      %v1691 = vpop.f32.mrf.mxu0
      %1692 = vdwg.mxu0
      %v1693 = vadd.f32 %v1582, %v1687
      %v1694 = vadd.f32 %v1583, %v1690
      %v1695 = vpack.c.bf16 %v1395, %v1394
      %v1712 = vunpack.c.l.b16 %v1430
      %v1713 = vunpack.c.l.b16 %v1431
      %v1714 = vunpack.c.l.b16 %v1432
      %v1715 = vunpack.c.l.b16 %v1433
      %v1716 = vunpack.c.l.b16 %v1434
      %v1717 = vunpack.c.l.b16 %v1435
      %v1718 = vunpack.c.l.b16 %v1436
      %v1719 = vunpack.c.l.b16 %v1437
      %v1720 = vunpack.c.l.b16 %v1438
      %v1721 = vunpack.c.l.b16 %v1439
      %v1722 = vunpack.c.l.b16 %v1440
      %v1723 = vunpack.c.l.b16 %v1441
      %v1724 = vunpack.c.l.b16 %v1442
      %v1725 = vunpack.c.l.b16 %v1443
      %v1726 = vunpack.c.l.b16 %v1444
      %v1727 = vunpack.c.l.b16 %v1445
      %v1728 = vpack.c.b16 %v1713, %v1712
      %v1729 = vpack.c.b16 %v1715, %v1714
      %v1730 = vpack.c.b16 %v1717, %v1716
      %v1731 = vpack.c.b16 %v1719, %v1718
      %v1732 = vpack.c.b16 %v1721, %v1720
      %v1733 = vpack.c.b16 %v1723, %v1722
      %v1734 = vpack.c.b16 %v1725, %v1724
      %v1735 = vpack.c.b16 %v1727, %v1726
      %v1737 = vsel %vm535, %v1695, 0
      %v1740 = vsel %vm535, %v1728, 0
      %v1743 = vsel %vm535, %v1729, 0
      %v1746 = vsel %vm535, %v1730, 0
      %v1749 = vsel %vm535, %v1731, 0
      %v1752 = vsel %vm535, %v1732, 0
      %v1755 = vsel %vm535, %v1733, 0
      %v1758 = vsel %vm535, %v1734, 0
      %v1761 = vsel %vm535, %v1735, 0
      %1763 = vmatprep.subr.bf16.mxu0 0
      %1764 = vmatpush1.bf16.xpose.msra.mxu0 %v1761
      %1765 = vmatprep.subr.bf16.mxu0 0
      %1766 = vmatpush1.bf16.xpose.msra.mxu0 %v1758
      %1767 = vmatprep.subr.bf16.mxu0 0
      %1768 = vmatpush1.bf16.xpose.msra.mxu0 %v1755
      %1769 = vmatprep.subr.bf16.mxu0 0
      %1770 = vmatpush1.bf16.xpose.msra.mxu0 %v1752
      %1771 = vmatprep.subr.bf16.mxu0 0
      %1772 = vmatpush1.bf16.xpose.msra.mxu0 %v1749
      %1773 = vmatprep.subr.bf16.mxu0 0
      %1774 = vmatpush1.bf16.xpose.msra.mxu0 %v1746
      %1775 = vmatprep.subr.bf16.mxu0 0
      %1776 = vmatpush1.bf16.xpose.msra.mxu0 %v1743
      %1777 = vmatprep.subr.bf16.mxu0 0
      %1778 = vmatpush1.bf16.xpose.msra.mxu0 %v1740
      %1779 = vmatprep.subr.bf16.mxu0 0
      %1780 = vmatpush2.bf16.xpose.msra.mxu0 0
      %1781 = vmatprep.subr.bf16.mxu0 0
      %1782 = vmatpush2.bf16.xpose.msra.mxu0 0
      %1783 = vmatprep.subr.bf16.mxu0 0
      %1784 = vmatpush2.bf16.xpose.msra.mxu0 0
      %1785 = vmatprep.subr.bf16.mxu0 0
      %1786 = vmatpush2.bf16.xpose.msra.mxu0 0
      %1787 = vmatprep.subr.bf16.mxu0 0
      %1788 = vmatpush2.bf16.xpose.msra.mxu0 0
      %1789 = vmatprep.subr.bf16.mxu0 0
      %1790 = vmatpush2.bf16.xpose.msra.mxu0 0
      %1791 = vmatprep.subr.bf16.mxu0 0
      %1792 = vmatpush2.bf16.xpose.msra.mxu0 0
      %1793 = vmatprep.subr.bf16.mxu0 0
      %1794 = vmatpush2.bf16.xpose.msra.mxu0 0
      %1795 = vmatprep.mubr.bf16.mxu0 0
      %1796 = vmatmul.mubr.bf16.gmra.mxu0 %v1737
      %v1797 = vpop.f32.mrf.mxu0
      %v1798 = vadd.f32 0.0, %v1797
      %v1799 = vpop.f32.mrf.mxu0
      %v1800 = vpop.f32.mrf.mxu0
      %v1801 = vadd.f32 0.0, %v1800
      %v1802 = vpop.f32.mrf.mxu0
      %1803 = vdwg.mxu0
      %v1804 = vadd.f32 %v1693, %v1798
      %v1805 = vadd.f32 %v1694, %v1801
      %v1806 = vpack.c.bf16 %v1397, %v1396
      %v1823 = vunpack.c.l.b16 %v1446
      %v1824 = vunpack.c.l.b16 %v1447
      %v1825 = vunpack.c.l.b16 %v1448
      %v1826 = vunpack.c.l.b16 %v1449
      %v1827 = vunpack.c.l.b16 %v1450
      %v1828 = vunpack.c.l.b16 %v1451
      %v1829 = vunpack.c.l.b16 %v1452
      %v1830 = vunpack.c.l.b16 %v1453
      %v1831 = vunpack.c.l.b16 %v1454
      %v1832 = vunpack.c.l.b16 %v1455
      %v1833 = vunpack.c.l.b16 %v1456
      %v1834 = vunpack.c.l.b16 %v1457
      %v1835 = vunpack.c.l.b16 %v1458
      %v1836 = vunpack.c.l.b16 %v1459
      %v1837 = vunpack.c.l.b16 %v1460
      %v1838 = vunpack.c.l.b16 %v1461
      %v1839 = vpack.c.b16 %v1824, %v1823
      %v1840 = vpack.c.b16 %v1826, %v1825
      %v1841 = vpack.c.b16 %v1828, %v1827
      %v1842 = vpack.c.b16 %v1830, %v1829
      %v1843 = vpack.c.b16 %v1832, %v1831
      %v1844 = vpack.c.b16 %v1834, %v1833
      %v1845 = vpack.c.b16 %v1836, %v1835
      %v1846 = vpack.c.b16 %v1838, %v1837
      %v1848 = vsel %vm535, %v1806, 0
      %v1851 = vsel %vm535, %v1839, 0
      %v1854 = vsel %vm535, %v1840, 0
      %v1857 = vsel %vm535, %v1841, 0
      %v1860 = vsel %vm535, %v1842, 0
      %v1863 = vsel %vm535, %v1843, 0
      %v1866 = vsel %vm535, %v1844, 0
      %v1869 = vsel %vm535, %v1845, 0
      %v1872 = vsel %vm535, %v1846, 0
      %1874 = vmatprep.subr.bf16.mxu0 0
      %1875 = vmatpush1.bf16.xpose.msra.mxu0 %v1872
      %1876 = vmatprep.subr.bf16.mxu0 0
      %1877 = vmatpush1.bf16.xpose.msra.mxu0 %v1869
      %1878 = vmatprep.subr.bf16.mxu0 0
      %1879 = vmatpush1.bf16.xpose.msra.mxu0 %v1866
      %1880 = vmatprep.subr.bf16.mxu0 0
      %1881 = vmatpush1.bf16.xpose.msra.mxu0 %v1863
      %1882 = vmatprep.subr.bf16.mxu0 0
      %1883 = vmatpush1.bf16.xpose.msra.mxu0 %v1860
      %1884 = vmatprep.subr.bf16.mxu0 0
      %1885 = vmatpush1.bf16.xpose.msra.mxu0 %v1857
      %1886 = vmatprep.subr.bf16.mxu0 0
      %1887 = vmatpush1.bf16.xpose.msra.mxu0 %v1854
      %1888 = vmatprep.subr.bf16.mxu0 0
      %1889 = vmatpush1.bf16.xpose.msra.mxu0 %v1851
      %1890 = vmatprep.subr.bf16.mxu0 0
      %1891 = vmatpush2.bf16.xpose.msra.mxu0 0
      %1892 = vmatprep.subr.bf16.mxu0 0
      %1893 = vmatpush2.bf16.xpose.msra.mxu0 0
      %1894 = vmatprep.subr.bf16.mxu0 0
      %1895 = vmatpush2.bf16.xpose.msra.mxu0 0
      %1896 = vmatprep.subr.bf16.mxu0 0
      %1897 = vmatpush2.bf16.xpose.msra.mxu0 0
      %1898 = vmatprep.subr.bf16.mxu0 0
      %1899 = vmatpush2.bf16.xpose.msra.mxu0 0
      %1900 = vmatprep.subr.bf16.mxu0 0
      %1901 = vmatpush2.bf16.xpose.msra.mxu0 0
      %1902 = vmatprep.subr.bf16.mxu0 0
      %1903 = vmatpush2.bf16.xpose.msra.mxu0 0
      %1904 = vmatprep.subr.bf16.mxu0 0
      %1905 = vmatpush2.bf16.xpose.msra.mxu0 0
      %1906 = vmatprep.mubr.bf16.mxu0 0
      %1907 = vmatmul.mubr.bf16.gmra.mxu0 %v1848
      %v1908 = vpop.f32.mrf.mxu0
      %v1909 = vadd.f32 0.0, %v1908
      %v1910 = vpop.f32.mrf.mxu0
      %v1911 = vpop.f32.mrf.mxu0
      %v1912 = vadd.f32 0.0, %v1911
      %v1913 = vpop.f32.mrf.mxu0
      %1914 = vdwg.mxu0
      %v1915 = vadd.f32 %v1804, %v1909
      %v1916 = vadd.f32 %v1805, %v1912
      %1917 = vst [vmem:[%s352] sm:$0xff] %v1915
      %1918 = vst [vmem:[%s352 + $0x8] sm:$0xff] %v1916
      %p1919 = scmp.lt.s32.totalorder %s18, 1
      %s1920 = scalar_select %p1919, %s18, 1
      %s1921 = smul.addr %s1920, 2
      %s1922 = smul.addr %s1921, 8
      %s1923 = scalar_lea.vmem %s7, %s1922
      // Predicated region
      $region49: #{summarizer_forward.23} parent=47 // pred_check
        %p1924 = pneg %p208
      $region50: #{summarizer_forward.23} parent=47 // pred_check_branch
        %1926 = sbr.rel (%p1924) target = $region52
      $region51: #{summarizer_forward.23} parent=47 // pred_region
        _
      $region52: #{summarizer_forward.23} parent=47 // pred_fallthru
        _
    $region48: #{summarizer_forward.23} parent=5 // pred_fallthru
      _
    %p1927 = scmp.le.s32.totalorder 2, %s13
    // Predicated region
    $region53: #{summarizer_forward.23} parent=5 // pred_check
      %p1928 = pneg %p1927
    $region54: #{summarizer_forward.23} parent=5 // pred_check_branch
      %1930 = sbr.rel (%p1928) target = $region56
    $region55: #{summarizer_forward.23} parent=5 // pred_region
      %s1931 = ssub.s32 %s13, 2
      // Predicated region
      $region57: #{summarizer_forward.23} parent=55 // pred_check
        %p1932 = pneg %p214
      $region58: #{summarizer_forward.23} parent=55 // pred_check_branch
        %1934 = sbr.rel (%p1932) target = $region60
      $region59: #{summarizer_forward.23} parent=55 // pred_region
        %p1935 = scmp.lt.s32.totalorder %s19, 1
        %s1936 = scalar_select %p1935, %s19, 1
        %s1937 = smul.addr %s1936, 2
        %s1938 = smul.addr %s1937, 8
        %s1939 = scalar_lea.vmem %s7, %s1938
      $region60: #{summarizer_forward.23} parent=55 // pred_fallthru
        _
    $region56: #{summarizer_forward.23} parent=5 // pred_fallthru
      _
  $region6: #{summarizer_forward.23} parent=0 // loop_footer
    %s17 = sadd.s32 1, %s13
  $region7: #{summarizer_forward.23} parent=0 // loop_footer_branch
    %12 = sbr.rel target = $region3
  $region8: #{summarizer_forward.23} parent=0 // loop_exit
    _

// kernel: summarizer_forward.29
$region0: #{summarizer_forward.29}
  #allocation0 [shape = 'u32[]', space=smem, size = 0x4, offset = 0x4, fixed_abs, tag = 'smem constant byte address 0x4 - core index']
  #allocation1 [shape = 'u32[144,128]{1,0:T(1,128)}', space=vmem, size = 0x12000, scoped, tag = 'internal scratch']
  %s0 = inlined_call_operand.vmem [shape: bf16[32,256], index: 0, kind: input, shape index: {}]
  %s1 = inlined_call_operand.vmem [shape: bf16[128,256], index: 1, kind: input, shape index: {}]
  %s2 = inlined_call_operand.vmem [shape: f32[1,128], index: 2, kind: input, shape index: {}]
  %s3 = inlined_call_operand.vmem [shape: f32[32,128], index: 3, kind: input, shape index: {}]
  %s4 = inlined_call_operand.vmem [shape: f32[1,128], index: 4, kind: input, shape index: {}]
  %s5 = inlined_call_operand.vmem [shape: f32[1,128], index: 5, kind: input, shape index: {}]
  %s6 = inlined_call_operand.vmem [shape: f32[32,128], index: 6, kind: output, shape index: {}]
  %s7 = sld [smem:[#allocation0]]
  $region57: #{summarizer_forward.29} parent=0
    _
  %s9 = ssub.s32 1, %s7
  %s10 = scalar_select 0, %s9, %s7
  loop: start=0, step=1, limit=4
  $region2: #{summarizer_forward.29} parent=0 // loop_pre_header
    _
  $region3: #{summarizer_forward.29} parent=0 // loop_header
    %s12 = sphi 0, %s16
    %p13 = scmp.ge.s32.totalorder %s12, 4
    %s22 = sphi 0, %s24
    %s25 = sphi 0, %s22
    %s26 = sphi 0, %s25
    %s42 = sphi 0, %s26
    %s46 = sphi 0, %s46
    %s48 = sphi 0, %s46
    %s49 = sphi 0, %s48
    %s63 = sphi 0, %s49
    %s67 = sphi 0, %s67
    %s69 = sphi 0, %s67
    %s70 = sphi 0, %s69
    %s84 = sphi 0, %s70
    %s90 = sphi 0, %s92
    %s93 = sphi 0, %s90
    %s94 = sphi 0, %s93
    %s110 = sphi 0, %s94
    %s114 = sphi 0, %s114
    %s116 = sphi 0, %s114
    %s117 = sphi 0, %s116
    %s131 = sphi 0, %s117
    %s135 = sphi 0, %s135
    %s137 = sphi 0, %s135
    %s138 = sphi 0, %s137
    %s152 = sphi 0, %s138
    %s158 = sphi 0, %s160
    %s161 = sphi 0, %s158
    %s162 = sphi 0, %s161
    %s178 = sphi 0, %s162
  $region4: #{summarizer_forward.29} parent=0 // loop_header_branch
    %15 = sbr.rel (%p13) target = $region8
  $region5: #{summarizer_forward.29} parent=0 // loop_body
    %s17 = ssub.s32 %s12, 1
    %s18 = ssub.s32 %s12, 2
    %s19 = sadd.s32 %s12, 1
    %s20 = ssub.s32 %s12, %s19
    %p21 = scmp.eq.s32.totalorder %s20, 0
    %s23 = sadd.s32 %s22, 1
    %s24 = scalar_select %p21, %s22, %s23
    %p27 = pneg %p21
    %p28 = scmp.eq.s32.totalorder %s12, 1
    %p29 = por %p27, %p28
    %p30 = scmp.ne.s32.totalorder %s22, %s25
    %p31 = scmp.eq.s32.totalorder %s12, 0
    %p32 = por %p30, %p31
    %p33 = scmp.ne.s32.totalorder %s22, %s25
    %p34 = scmp.eq.s32.totalorder %s17, 1
    %p35 = por %p33, %p34
    %p36 = scmp.ne.s32.totalorder %s25, %s26
    %p37 = scmp.eq.s32.totalorder %s17, 0
    %p38 = por %p36, %p37
    %p39 = scmp.ne.s32.totalorder %s25, %s26
    %p40 = scmp.eq.s32.totalorder %s18, 1
    %p41 = por %p39, %p40
    %p43 = scmp.ne.s32.totalorder %s26, %s42
    %p44 = scmp.eq.s32.totalorder %s18, 0
    %p45 = por %p43, %p44
    %s47 = sadd.s32 %s46, 1
    %p50 = scmp.eq.s32.totalorder %s12, 1
    %p51 = scmp.ne.s32.totalorder %s46, %s48
    %p52 = scmp.eq.s32.totalorder %s12, 0
    %p53 = por %p51, %p52
    %p54 = scmp.ne.s32.totalorder %s46, %s48
    %p55 = scmp.eq.s32.totalorder %s17, 1
    %p56 = por %p54, %p55
    %p57 = scmp.ne.s32.totalorder %s48, %s49
    %p58 = scmp.eq.s32.totalorder %s17, 0
    %p59 = por %p57, %p58
    %p60 = scmp.ne.s32.totalorder %s48, %s49
    %p61 = scmp.eq.s32.totalorder %s18, 1
    %p62 = por %p60, %p61
    %p64 = scmp.ne.s32.totalorder %s49, %s63
    %p65 = scmp.eq.s32.totalorder %s18, 0
    %p66 = por %p64, %p65
    %s68 = sadd.s32 %s67, 1
    %p71 = scmp.eq.s32.totalorder %s12, 1
    %p72 = scmp.ne.s32.totalorder %s67, %s69
    %p73 = scmp.eq.s32.totalorder %s12, 0
    %p74 = por %p72, %p73
    %p75 = scmp.ne.s32.totalorder %s67, %s69
    %p76 = scmp.eq.s32.totalorder %s17, 1
    %p77 = por %p75, %p76
    %p78 = scmp.ne.s32.totalorder %s69, %s70
    %p79 = scmp.eq.s32.totalorder %s17, 0
    %p80 = por %p78, %p79
    %p81 = scmp.ne.s32.totalorder %s69, %s70
    %p82 = scmp.eq.s32.totalorder %s18, 1
    %p83 = por %p81, %p82
    %p85 = scmp.ne.s32.totalorder %s70, %s84
    %p86 = scmp.eq.s32.totalorder %s18, 0
    %p87 = por %p85, %p86
    %s88 = ssub.s32 %s12, %s19
    %p89 = scmp.eq.s32.totalorder %s88, 0
    %s91 = sadd.s32 %s90, 1
    %s92 = scalar_select %p89, %s90, %s91
    %p95 = pneg %p89
    %p96 = scmp.eq.s32.totalorder %s12, 1
    %p97 = por %p95, %p96
    %p98 = scmp.ne.s32.totalorder %s90, %s93
    %p99 = scmp.eq.s32.totalorder %s12, 0
    %p100 = por %p98, %p99
    %p101 = scmp.ne.s32.totalorder %s90, %s93
    %p102 = scmp.eq.s32.totalorder %s17, 1
    %p103 = por %p101, %p102
    %p104 = scmp.ne.s32.totalorder %s93, %s94
    %p105 = scmp.eq.s32.totalorder %s17, 0
    %p106 = por %p104, %p105
    %p107 = scmp.ne.s32.totalorder %s93, %s94
    %p108 = scmp.eq.s32.totalorder %s18, 1
    %p109 = por %p107, %p108
    %p111 = scmp.ne.s32.totalorder %s94, %s110
    %p112 = scmp.eq.s32.totalorder %s18, 0
    %p113 = por %p111, %p112
    %s115 = sadd.s32 %s114, 1
    %p118 = scmp.eq.s32.totalorder %s12, 1
    %p119 = scmp.ne.s32.totalorder %s114, %s116
    %p120 = scmp.eq.s32.totalorder %s12, 0
    %p121 = por %p119, %p120
    %p122 = scmp.ne.s32.totalorder %s114, %s116
    %p123 = scmp.eq.s32.totalorder %s17, 1
    %p124 = por %p122, %p123
    %p125 = scmp.ne.s32.totalorder %s116, %s117
    %p126 = scmp.eq.s32.totalorder %s17, 0
    %p127 = por %p125, %p126
    %p128 = scmp.ne.s32.totalorder %s116, %s117
    %p129 = scmp.eq.s32.totalorder %s18, 1
    %p130 = por %p128, %p129
    %p132 = scmp.ne.s32.totalorder %s117, %s131
    %p133 = scmp.eq.s32.totalorder %s18, 0
    %p134 = por %p132, %p133
    %s136 = sadd.s32 %s135, 1
    %p139 = scmp.eq.s32.totalorder %s12, 1
    %p140 = scmp.ne.s32.totalorder %s135, %s137
    %p141 = scmp.eq.s32.totalorder %s12, 0
    %p142 = por %p140, %p141
    %p143 = scmp.ne.s32.totalorder %s135, %s137
    %p144 = scmp.eq.s32.totalorder %s17, 1
    %p145 = por %p143, %p144
    %p146 = scmp.ne.s32.totalorder %s137, %s138
    %p147 = scmp.eq.s32.totalorder %s17, 0
    %p148 = por %p146, %p147
    %p149 = scmp.ne.s32.totalorder %s137, %s138
    %p150 = scmp.eq.s32.totalorder %s18, 1
    %p151 = por %p149, %p150
    %p153 = scmp.ne.s32.totalorder %s138, %s152
    %p154 = scmp.eq.s32.totalorder %s18, 0
    %p155 = por %p153, %p154
    %s156 = ssub.s32 %s12, %s19
    %p157 = scmp.eq.s32.totalorder %s156, 0
    %s159 = sadd.s32 %s158, 1
    %s160 = scalar_select %p157, %s158, %s159
    %p163 = pneg %p157
    %p164 = scmp.eq.s32.totalorder %s12, 1
    %p165 = por %p163, %p164
    %p166 = scmp.ne.s32.totalorder %s158, %s161
    %p167 = scmp.eq.s32.totalorder %s12, 0
    %p168 = por %p166, %p167
    %p169 = scmp.ne.s32.totalorder %s158, %s161
    %p170 = scmp.eq.s32.totalorder %s17, 1
    %p171 = por %p169, %p170
    %p172 = scmp.ne.s32.totalorder %s161, %s162
    %p173 = scmp.eq.s32.totalorder %s17, 0
    %p174 = por %p172, %p173
    %p175 = scmp.ne.s32.totalorder %s161, %s162
    %p176 = scmp.eq.s32.totalorder %s18, 1
    %p177 = por %p175, %p176
    %p179 = scmp.ne.s32.totalorder %s162, %s178
    %p180 = scmp.eq.s32.totalorder %s18, 0
    %p181 = por %p179, %p180
    %p182 = scmp.le.s32.totalorder 1, %s12
    %p183 = scmp.lt.s32.totalorder %s12, 3
    %p184 = pnand %p182, %p183
    %p185 = pneg %p184
    // Predicated region
    $region9: #{summarizer_forward.29} parent=5 // pred_check
      _
    $region10: #{summarizer_forward.29} parent=5 // pred_check_branch
      %187 = sbr.rel (%p184) target = $region12
    $region11: #{summarizer_forward.29} parent=5 // pred_region
      %s188 = ssub.s32 %s12, 1
      // Predicated region
      $region13: #{summarizer_forward.29} parent=11 // pred_check
        %p189 = pneg %p59
      $region14: #{summarizer_forward.29} parent=11 // pred_check_branch
        %191 = sbr.rel (%p189) target = $region16
      $region15: #{summarizer_forward.29} parent=11 // pred_region
        _
      $region16: #{summarizer_forward.29} parent=11 // pred_fallthru
        _
      // Predicated region
      $region17: #{summarizer_forward.29} parent=11 // pred_check
        %p192 = pneg %p80
      $region18: #{summarizer_forward.29} parent=11 // pred_check_branch
        %194 = sbr.rel (%p192) target = $region20
      $region19: #{summarizer_forward.29} parent=11 // pred_region
        _
      $region20: #{summarizer_forward.29} parent=11 // pred_fallthru
        _
      // Predicated region
      $region21: #{summarizer_forward.29} parent=11 // pred_check
        %p195 = pneg %p127
      $region22: #{summarizer_forward.29} parent=11 // pred_check_branch
        %197 = sbr.rel (%p195) target = $region24
      $region23: #{summarizer_forward.29} parent=11 // pred_region
        _
      $region24: #{summarizer_forward.29} parent=11 // pred_fallthru
        _
      // Predicated region
      $region25: #{summarizer_forward.29} parent=11 // pred_check
        %p198 = pneg %p148
      $region26: #{summarizer_forward.29} parent=11 // pred_check_branch
        %200 = sbr.rel (%p198) target = $region28
      $region27: #{summarizer_forward.29} parent=11 // pred_region
        _
      $region28: #{summarizer_forward.29} parent=11 // pred_fallthru
        _
    $region12: #{summarizer_forward.29} parent=5 // pred_fallthru
      _
    %p201 = scmp.lt.s32.totalorder %s12, 2
    // Predicated region
    $region29: #{summarizer_forward.29} parent=5 // pred_check
      %p202 = pneg %p201
    $region30: #{summarizer_forward.29} parent=5 // pred_check_branch
      %204 = sbr.rel (%p202) target = $region32
    $region31: #{summarizer_forward.29} parent=5 // pred_region
      // Predicated region
      $region33: #{summarizer_forward.29} parent=31 // pred_check
        %p205 = pneg %p32
      $region34: #{summarizer_forward.29} parent=31 // pred_check_branch
        %207 = sbr.rel (%p205) target = $region36
      $region35: #{summarizer_forward.29} parent=31 // pred_region
        %s208 = smul.u32 2, %s12
        %p209 = scmp.lt.s32.totalorder %s208, 3
        %s210 = scalar_select %p209, %s208, 3
        %s211 = smul.addr %s210, 2
        %s212 = smul.addr %s211, 4
        %s213 = scalar_lea.vmem %s0, %s212
        %s214 = smul.u32 2, %s12
      $region36: #{summarizer_forward.29} parent=31 // pred_fallthru
        _
      // Predicated region
      $region37: #{summarizer_forward.29} parent=31 // pred_check
        %p215 = pneg %p100
      $region38: #{summarizer_forward.29} parent=31 // pred_check_branch
        %217 = sbr.rel (%p215) target = $region40
      $region39: #{summarizer_forward.29} parent=31 // pred_region
        %s218 = smul.u32 2, %s12
        %p219 = scmp.lt.s32.totalorder %s218, 3
        %s220 = scalar_select %p219, %s218, 3
        %s221 = smul.addr %s220, 8
        %s222 = scalar_lea.vmem %s3, %s221
        %s223 = smul.u32 2, %s12
      $region40: #{summarizer_forward.29} parent=31 // pred_fallthru
        _
    $region32: #{summarizer_forward.29} parent=5 // pred_fallthru
      _
    %p224 = scmp.le.s32.totalorder 1, %s12
    %p225 = scmp.lt.s32.totalorder %s12, 3
    %p226 = pnand %p224, %p225
    %p227 = pneg %p226
    // Predicated region
    $region41: #{summarizer_forward.29} parent=5 // pred_check
      _
    $region42: #{summarizer_forward.29} parent=5 // pred_check_branch
      %229 = sbr.rel (%p226) target = $region44
    $region43: #{summarizer_forward.29} parent=5 // pred_region
      %s230 = ssub.s32 %s12, 1
      %s231 = smul.u32 2, %s17
      %p232 = scmp.lt.s32.totalorder %s231, 3
      %s233 = scalar_select %p232, %s231, 3
      %s234 = smul.addr %s233, 2
      %s235 = smul.addr %s234, 4
      %s236 = scalar_lea.vmem %s0, %s235
      %p237 = pneg %p38
      %p238 = pneg %p35
      %p239 = pneg %p59
      %p240 = pneg %p56
      %p241 = pneg %p80
      %p242 = pneg %p77
      %s243 = smul.u32 2, %s17
      %p244 = scmp.lt.s32.totalorder %s243, 3
      %s245 = scalar_select %p244, %s243, 3
      %s246 = smul.addr %s245, 8
      %s247 = scalar_lea.vmem %s3, %s246
      %p248 = pneg %p106
      %p249 = pneg %p103
      %p250 = pneg %p127
      %p251 = pneg %p124
      %p252 = pneg %p148
      %p253 = pneg %p145
      %p254 = pneg %p174
      %p255 = pneg %p171
      %s256 = smul.u32 2, %s17
      %p257 = scmp.lt.s32.totalorder %s256, 3
      %s258 = scalar_select %p257, %s256, 3
      %s259 = smul.addr %s258, 8
      %s260 = scalar_lea.vmem %s6, %s259
      %s261 = smul.u32 2, %s17
      %p262 = scmp.lt.s32.totalorder %s261, 3
      %s263 = scalar_select %p262, %s261, 3
      %s264 = smul.addr %s263, 2
      %s265 = smul.addr %s264, 4
      %s266 = scalar_lea.vmem %s0, %s265
      %s267 = smul.u32 2, %s17
      %s268 = smul.u32 2, %s17
      %p269 = scmp.lt.s32.totalorder %s268, 3
      %s270 = scalar_select %p269, %s268, 3
      %s271 = smul.addr %s270, 8
      %s272 = scalar_lea.vmem %s3, %s271
      %s273 = smul.u32 2, %s17
      %s274 = smul.u32 2, %s17
      %p275 = scmp.lt.s32.totalorder %s274, 3
      %s276 = scalar_select %p275, %s274, 3
      %s277 = smul.addr %s276, 8
      %s278 = scalar_lea.vmem %s6, %s277
      %s279 = smul.u32 2, %s17
      %v281 = vld [vmem:[%s266] sm:$0xff]
      %v282 = vld [vmem:[%s266 + $0x8] sm:$0xff]
      %v283 = vld [vmem:[%s1] sm:$0xff]
      %v284 = vld [vmem:[%s1 + $0x8] sm:$0xff]
      %v285 = vld [vmem:[%s1 + $0x10] sm:$0xff]
      %v286 = vld [vmem:[%s1 + $0x18] sm:$0xff]
      %v287 = vld [vmem:[%s1 + $0x20] sm:$0xff]
      %v288 = vld [vmem:[%s1 + $0x28] sm:$0xff]
      %v289 = vld [vmem:[%s1 + $0x30] sm:$0xff]
      %v290 = vld [vmem:[%s1 + $0x38] sm:$0xff]
      %v291 = vld [vmem:[%s1 + $0x40] sm:$0xff]
      %v292 = vld [vmem:[%s1 + $0x48] sm:$0xff]
      %v293 = vld [vmem:[%s1 + $0x50] sm:$0xff]
      %v294 = vld [vmem:[%s1 + $0x58] sm:$0xff]
      %v295 = vld [vmem:[%s1 + $0x60] sm:$0xff]
      %v296 = vld [vmem:[%s1 + $0x68] sm:$0xff]
      %v297 = vld [vmem:[%s1 + $0x70] sm:$0xff]
      %v298 = vld [vmem:[%s1 + $0x78] sm:$0xff]
      %v299 = vld [vmem:[%s2] sm:$0x1]
      %v301 = vlaneseq
      %v302 = vshrl.u32 %v301, 7
      %v303 = vsub.s32 0, %v302
      %v304 = vrot.slane %v299, %v303
      %v308 = vunpack.c.l.b16 %v281
      %v309 = vunpack.c.h.b16 %v281
      %v310 = vunpack.c.l.b16 %v282
      %v311 = vunpack.c.h.b16 %v282
      %v312 = vpack.c.b16 %v310, %v308
      %v313 = vpack.c.b16 %v311, %v309
      %v332 = vunpack.c.l.b16 %v283
      %v333 = vunpack.c.h.b16 %v283
      %v334 = vunpack.c.l.b16 %v284
      %v335 = vunpack.c.h.b16 %v284
      %v336 = vunpack.c.l.b16 %v285
      %v337 = vunpack.c.h.b16 %v285
      %v338 = vunpack.c.l.b16 %v286
      %v339 = vunpack.c.h.b16 %v286
      %v340 = vunpack.c.l.b16 %v287
      %v341 = vunpack.c.h.b16 %v287
      %v342 = vunpack.c.l.b16 %v288
      %v343 = vunpack.c.h.b16 %v288
      %v344 = vunpack.c.l.b16 %v289
      %v345 = vunpack.c.h.b16 %v289
      %v346 = vunpack.c.l.b16 %v290
      %v347 = vunpack.c.h.b16 %v290
      %v348 = vunpack.c.l.b16 %v291
      %v349 = vunpack.c.h.b16 %v291
      %v350 = vunpack.c.l.b16 %v292
      %v351 = vunpack.c.h.b16 %v292
      %v352 = vunpack.c.l.b16 %v293
      %v353 = vunpack.c.h.b16 %v293
      %v354 = vunpack.c.l.b16 %v294
      %v355 = vunpack.c.h.b16 %v294
      %v356 = vunpack.c.l.b16 %v295
      %v357 = vunpack.c.h.b16 %v295
      %v358 = vunpack.c.l.b16 %v296
      %v359 = vunpack.c.h.b16 %v296
      %v360 = vunpack.c.l.b16 %v297
      %v361 = vunpack.c.h.b16 %v297
      %v362 = vunpack.c.l.b16 %v298
      %v363 = vunpack.c.h.b16 %v298
      %v364 = vpack.c.b16 %v334, %v332
      %v365 = vpack.c.b16 %v335, %v333
      %v366 = vpack.c.b16 %v338, %v336
      %v367 = vpack.c.b16 %v339, %v337
      %v368 = vpack.c.b16 %v342, %v340
      %v369 = vpack.c.b16 %v343, %v341
      %v370 = vpack.c.b16 %v346, %v344
      %v371 = vpack.c.b16 %v347, %v345
      %v372 = vpack.c.b16 %v350, %v348
      %v373 = vpack.c.b16 %v351, %v349
      %v374 = vpack.c.b16 %v354, %v352
      %v375 = vpack.c.b16 %v355, %v353
      %v376 = vpack.c.b16 %v358, %v356
      %v377 = vpack.c.b16 %v359, %v357
      %v378 = vpack.c.b16 %v362, %v360
      %v379 = vpack.c.b16 %v363, %v361
      %396 = vmatprep.subr.bf16.mxu0 %v379
      %397 = vmatpush1.bf16.xpose.msra.mxu0 %v378
      %398 = vmatprep.subr.bf16.mxu0 %v377
      %399 = vmatpush1.bf16.xpose.msra.mxu0 %v376
      %400 = vmatprep.subr.bf16.mxu0 %v375
      %401 = vmatpush1.bf16.xpose.msra.mxu0 %v374
      %402 = vmatprep.subr.bf16.mxu0 %v373
      %403 = vmatpush1.bf16.xpose.msra.mxu0 %v372
      %404 = vmatprep.subr.bf16.mxu0 %v371
      %405 = vmatpush1.bf16.xpose.msra.mxu0 %v370
      %406 = vmatprep.subr.bf16.mxu0 %v369
      %407 = vmatpush1.bf16.xpose.msra.mxu0 %v368
      %408 = vmatprep.subr.bf16.mxu0 %v367
      %409 = vmatpush1.bf16.xpose.msra.mxu0 %v366
      %410 = vmatprep.subr.bf16.mxu0 %v365
      %411 = vmatpush1.bf16.xpose.msra.mxu0 %v364
      %412 = vmatprep.subr.bf16.mxu0 0
      %413 = vmatpush2.bf16.xpose.msra.mxu0 0
      %414 = vmatprep.subr.bf16.mxu0 0
      %415 = vmatpush2.bf16.xpose.msra.mxu0 0
      %416 = vmatprep.subr.bf16.mxu0 0
      %417 = vmatpush2.bf16.xpose.msra.mxu0 0
      %418 = vmatprep.subr.bf16.mxu0 0
      %419 = vmatpush2.bf16.xpose.msra.mxu0 0
      %420 = vmatprep.subr.bf16.mxu0 0
      %421 = vmatpush2.bf16.xpose.msra.mxu0 0
      %422 = vmatprep.subr.bf16.mxu0 0
      %423 = vmatpush2.bf16.xpose.msra.mxu0 0
      %424 = vmatprep.subr.bf16.mxu0 0
      %425 = vmatpush2.bf16.xpose.msra.mxu0 0
      %426 = vmatprep.subr.bf16.mxu0 0
      %427 = vmatpush2.bf16.xpose.msra.mxu0 0
      %428 = vmatprep.mubr.bf16.mxu0 %v313
      %429 = vmatmul.mubr.bf16.gmra.mxu0 %v312
      %v430 = vpop.f32.mrf.mxu0
      %v431 = vadd.f32 %v304, %v430
      %v432 = vpop.f32.mrf.mxu0
      %v433 = vpop.f32.mrf.mxu0
      %v434 = vadd.f32 %v304, %v433
      %v435 = vpop.f32.mrf.mxu0
      %436 = vdwg.mxu0
      %v437 = vld [vmem:[%s272] sm:$0xff]
      %v438 = vld [vmem:[%s272 + $0x8] sm:$0xff]
      %v439 = vadd.f32 %v431, %v437
      %v440 = vadd.f32 %v434, %v438
      %441 = vadd.xlane.f32.xlu0 %v439
      %v442 = vpop.xlane.xlu0 %441
      %443 = vadd.xlane.f32.xlu0 %v440
      %v444 = vpop.xlane.xlu0 %443
      %v445 = vrcp.pop 128.0
      %v446 = vmul.f32 %v442, %v445
      %v447 = vmul.f32 %v444, %v445
      %v448 = vsub.f32 %v439, %v446
      %v449 = vsub.f32 %v440, %v447
      %v450 = vmul.f32 %v448, %v448
      %v451 = vmul.f32 %v449, %v449
      %452 = vadd.xlane.f32.xlu0 %v450
      %v453 = vpop.xlane.xlu0 %452
      %454 = vadd.xlane.f32.xlu0 %v451
      %v455 = vpop.xlane.xlu0 %454
      %v456 = vmul.f32 %v453, %v445
      %v457 = vmul.f32 %v455, %v445
      %v458 = vadd.f32 %v456, 1e-06
      %v459 = vadd.f32 %v457, 1e-06
      %v460 = vrsqrt.pop %v458
      %v461 = vrsqrt.pop %v459
      %v462 = vmul.f32 %v448, %v460
      %v463 = vmul.f32 %v449, %v461
      %v464 = vld [vmem:[%s4] sm:$0x1]
      %v466 = vlaneseq
      %v467 = vshrl.u32 %v466, 7
      %v468 = vsub.s32 0, %v467
      %v469 = vrot.slane %v464, %v468
      %v471 = vmul.f32 %v462, %v469
      %v472 = vmul.f32 %v463, %v469
      %v473 = vld [vmem:[%s5] sm:$0x1]
      %v475 = vlaneseq
      %v476 = vshrl.u32 %v475, 7
      %v477 = vsub.s32 0, %v476
      %v478 = vrot.slane %v473, %v477
      %v480 = vadd.f32 %v471, %v478
      %v481 = vadd.f32 %v472, %v478
      %482 = vst [vmem:[%s278] sm:$0xff] %v480
      %483 = vst [vmem:[%s278 + $0x8] sm:$0xff] %v481
      %s484 = smul.u32 2, %s17
      %p485 = scmp.lt.s32.totalorder %s484, 3
      %s486 = scalar_select %p485, %s484, 3
      %s487 = smul.addr %s486, 8
      %s488 = scalar_lea.vmem %s6, %s487
      // Predicated region
      $region45: #{summarizer_forward.29} parent=43 // pred_check
        %p489 = pneg %p171
      $region46: #{summarizer_forward.29} parent=43 // pred_check_branch
        %491 = sbr.rel (%p489) target = $region48
      $region47: #{summarizer_forward.29} parent=43 // pred_region
        %s492 = smul.u32 2, %s17
      $region48: #{summarizer_forward.29} parent=43 // pred_fallthru
        _
    $region44: #{summarizer_forward.29} parent=5 // pred_fallthru
      _
    %p493 = scmp.le.s32.totalorder 2, %s12
    // Predicated region
    $region49: #{summarizer_forward.29} parent=5 // pred_check
      %p494 = pneg %p493
    $region50: #{summarizer_forward.29} parent=5 // pred_check_branch
      %496 = sbr.rel (%p494) target = $region52
    $region51: #{summarizer_forward.29} parent=5 // pred_region
      %s497 = ssub.s32 %s12, 2
      // Predicated region
      $region53: #{summarizer_forward.29} parent=51 // pred_check
        %p498 = pneg %p177
      $region54: #{summarizer_forward.29} parent=51 // pred_check_branch
        %500 = sbr.rel (%p498) target = $region56
      $region55: #{summarizer_forward.29} parent=51 // pred_region
        %s501 = smul.u32 2, %s18
        %p502 = scmp.lt.s32.totalorder %s501, 3
        %s503 = scalar_select %p502, %s501, 3
        %s504 = smul.addr %s503, 8
        %s505 = scalar_lea.vmem %s6, %s504
      $region56: #{summarizer_forward.29} parent=51 // pred_fallthru
        _
    $region52: #{summarizer_forward.29} parent=5 // pred_fallthru
      _
  $region6: #{summarizer_forward.29} parent=0 // loop_footer
    %s16 = sadd.s32 1, %s12
  $region7: #{summarizer_forward.29} parent=0 // loop_footer_branch
    %11 = sbr.rel target = $region3
  $region8: #{summarizer_forward.29} parent=0 // loop_exit
    _

// kernel: summarizer_forward.33
$region0: #{summarizer_forward.33}
  #allocation0 [shape = 'u32[]', space=smem, size = 0x4, offset = 0x4, fixed_abs, tag = 'smem constant byte address 0x4 - core index']
  #allocation1 [shape = 'u32[144,128]{1,0:T(1,128)}', space=vmem, size = 0x12000, scoped, tag = 'internal scratch']
  %s0 = inlined_call_operand.vmem [shape: f32[32,128], index: 0, kind: input, shape index: {}]
  %s1 = inlined_call_operand.vmem [shape: bf16[256,128], index: 1, kind: input, shape index: {}]
  %s2 = inlined_call_operand.vmem [shape: f32[1,256], index: 2, kind: input, shape index: {}]
  %s3 = inlined_call_operand.vmem [shape: bf16[32,256], index: 3, kind: output, shape index: {}]
  %s4 = sld [smem:[#allocation0]]
  $region45: #{summarizer_forward.33} parent=0
    _
  %s6 = ssub.s32 1, %s4
  %s7 = scalar_select 0, %s6, %s4
  loop: start=0, step=1, limit=4
  $region2: #{summarizer_forward.33} parent=0 // loop_pre_header
    _
  $region3: #{summarizer_forward.33} parent=0 // loop_header
    %s9 = sphi 0, %s13
    %p10 = scmp.ge.s32.totalorder %s9, 4
    %s19 = sphi 0, %s21
    %s22 = sphi 0, %s19
    %s23 = sphi 0, %s22
    %s39 = sphi 0, %s23
    %s43 = sphi 0, %s43
    %s45 = sphi 0, %s43
    %s46 = sphi 0, %s45
    %s60 = sphi 0, %s46
    %s64 = sphi 0, %s64
    %s66 = sphi 0, %s64
    %s67 = sphi 0, %s66
    %s81 = sphi 0, %s67
    %s87 = sphi 0, %s89
    %s90 = sphi 0, %s87
    %s91 = sphi 0, %s90
    %s107 = sphi 0, %s91
  $region4: #{summarizer_forward.33} parent=0 // loop_header_branch
    %12 = sbr.rel (%p10) target = $region8
  $region5: #{summarizer_forward.33} parent=0 // loop_body
    %s14 = ssub.s32 %s9, 1
    %s15 = ssub.s32 %s9, 2
    %s16 = sadd.s32 %s9, 1
    %s17 = ssub.s32 %s9, %s16
    %p18 = scmp.eq.s32.totalorder %s17, 0
    %s20 = sadd.s32 %s19, 1
    %s21 = scalar_select %p18, %s19, %s20
    %p24 = pneg %p18
    %p25 = scmp.eq.s32.totalorder %s9, 1
    %p26 = por %p24, %p25
    %p27 = scmp.ne.s32.totalorder %s19, %s22
    %p28 = scmp.eq.s32.totalorder %s9, 0
    %p29 = por %p27, %p28
    %p30 = scmp.ne.s32.totalorder %s19, %s22
    %p31 = scmp.eq.s32.totalorder %s14, 1
    %p32 = por %p30, %p31
    %p33 = scmp.ne.s32.totalorder %s22, %s23
    %p34 = scmp.eq.s32.totalorder %s14, 0
    %p35 = por %p33, %p34
    %p36 = scmp.ne.s32.totalorder %s22, %s23
    %p37 = scmp.eq.s32.totalorder %s15, 1
    %p38 = por %p36, %p37
    %p40 = scmp.ne.s32.totalorder %s23, %s39
    %p41 = scmp.eq.s32.totalorder %s15, 0
    %p42 = por %p40, %p41
    %s44 = sadd.s32 %s43, 1
    %p47 = scmp.eq.s32.totalorder %s9, 1
    %p48 = scmp.ne.s32.totalorder %s43, %s45
    %p49 = scmp.eq.s32.totalorder %s9, 0
    %p50 = por %p48, %p49
    %p51 = scmp.ne.s32.totalorder %s43, %s45
    %p52 = scmp.eq.s32.totalorder %s14, 1
    %p53 = por %p51, %p52
    %p54 = scmp.ne.s32.totalorder %s45, %s46
    %p55 = scmp.eq.s32.totalorder %s14, 0
    %p56 = por %p54, %p55
    %p57 = scmp.ne.s32.totalorder %s45, %s46
    %p58 = scmp.eq.s32.totalorder %s15, 1
    %p59 = por %p57, %p58
    %p61 = scmp.ne.s32.totalorder %s46, %s60
    %p62 = scmp.eq.s32.totalorder %s15, 0
    %p63 = por %p61, %p62
    %s65 = sadd.s32 %s64, 1
    %p68 = scmp.eq.s32.totalorder %s9, 1
    %p69 = scmp.ne.s32.totalorder %s64, %s66
    %p70 = scmp.eq.s32.totalorder %s9, 0
    %p71 = por %p69, %p70
    %p72 = scmp.ne.s32.totalorder %s64, %s66
    %p73 = scmp.eq.s32.totalorder %s14, 1
    %p74 = por %p72, %p73
    %p75 = scmp.ne.s32.totalorder %s66, %s67
    %p76 = scmp.eq.s32.totalorder %s14, 0
    %p77 = por %p75, %p76
    %p78 = scmp.ne.s32.totalorder %s66, %s67
    %p79 = scmp.eq.s32.totalorder %s15, 1
    %p80 = por %p78, %p79
    %p82 = scmp.ne.s32.totalorder %s67, %s81
    %p83 = scmp.eq.s32.totalorder %s15, 0
    %p84 = por %p82, %p83
    %s85 = ssub.s32 %s9, %s16
    %p86 = scmp.eq.s32.totalorder %s85, 0
    %s88 = sadd.s32 %s87, 1
    %s89 = scalar_select %p86, %s87, %s88
    %p92 = pneg %p86
    %p93 = scmp.eq.s32.totalorder %s9, 1
    %p94 = por %p92, %p93
    %p95 = scmp.ne.s32.totalorder %s87, %s90
    %p96 = scmp.eq.s32.totalorder %s9, 0
    %p97 = por %p95, %p96
    %p98 = scmp.ne.s32.totalorder %s87, %s90
    %p99 = scmp.eq.s32.totalorder %s14, 1
    %p100 = por %p98, %p99
    %p101 = scmp.ne.s32.totalorder %s90, %s91
    %p102 = scmp.eq.s32.totalorder %s14, 0
    %p103 = por %p101, %p102
    %p104 = scmp.ne.s32.totalorder %s90, %s91
    %p105 = scmp.eq.s32.totalorder %s15, 1
    %p106 = por %p104, %p105
    %p108 = scmp.ne.s32.totalorder %s91, %s107
    %p109 = scmp.eq.s32.totalorder %s15, 0
    %p110 = por %p108, %p109
    %p111 = scmp.le.s32.totalorder 1, %s9
    %p112 = scmp.lt.s32.totalorder %s9, 3
    %p113 = pnand %p111, %p112
    %p114 = pneg %p113
    // Predicated region
    $region9: #{summarizer_forward.33} parent=5 // pred_check
      _
    $region10: #{summarizer_forward.33} parent=5 // pred_check_branch
      %116 = sbr.rel (%p113) target = $region12
    $region11: #{summarizer_forward.33} parent=5 // pred_region
      %s117 = ssub.s32 %s9, 1
      // Predicated region
      $region13: #{summarizer_forward.33} parent=11 // pred_check
        %p118 = pneg %p56
      $region14: #{summarizer_forward.33} parent=11 // pred_check_branch
        %120 = sbr.rel (%p118) target = $region16
      $region15: #{summarizer_forward.33} parent=11 // pred_region
        _
      $region16: #{summarizer_forward.33} parent=11 // pred_fallthru
        _
      // Predicated region
      $region17: #{summarizer_forward.33} parent=11 // pred_check
        %p121 = pneg %p77
      $region18: #{summarizer_forward.33} parent=11 // pred_check_branch
        %123 = sbr.rel (%p121) target = $region20
      $region19: #{summarizer_forward.33} parent=11 // pred_region
        _
      $region20: #{summarizer_forward.33} parent=11 // pred_fallthru
        _
    $region12: #{summarizer_forward.33} parent=5 // pred_fallthru
      _
    %p124 = scmp.lt.s32.totalorder %s9, 2
    // Predicated region
    $region21: #{summarizer_forward.33} parent=5 // pred_check
      %p125 = pneg %p124
    $region22: #{summarizer_forward.33} parent=5 // pred_check_branch
      %127 = sbr.rel (%p125) target = $region24
    $region23: #{summarizer_forward.33} parent=5 // pred_region
      // Predicated region
      $region25: #{summarizer_forward.33} parent=23 // pred_check
        %p128 = pneg %p29
      $region26: #{summarizer_forward.33} parent=23 // pred_check_branch
        %130 = sbr.rel (%p128) target = $region28
      $region27: #{summarizer_forward.33} parent=23 // pred_region
        %s131 = smul.u32 2, %s9
        %p132 = scmp.lt.s32.totalorder %s131, 3
        %s133 = scalar_select %p132, %s131, 3
        %s134 = smul.addr %s133, 8
        %s135 = scalar_lea.vmem %s0, %s134
        %s136 = smul.u32 2, %s9
      $region28: #{summarizer_forward.33} parent=23 // pred_fallthru
        _
    $region24: #{summarizer_forward.33} parent=5 // pred_fallthru
      _
    %p137 = scmp.le.s32.totalorder 1, %s9
    %p138 = scmp.lt.s32.totalorder %s9, 3
    %p139 = pnand %p137, %p138
    %p140 = pneg %p139
    // Predicated region
    $region29: #{summarizer_forward.33} parent=5 // pred_check
      _
    $region30: #{summarizer_forward.33} parent=5 // pred_check_branch
      %142 = sbr.rel (%p139) target = $region32
    $region31: #{summarizer_forward.33} parent=5 // pred_region
      %s143 = ssub.s32 %s9, 1
      %s144 = smul.u32 2, %s14
      %p145 = scmp.lt.s32.totalorder %s144, 3
      %s146 = scalar_select %p145, %s144, 3
      %s147 = smul.addr %s146, 8
      %s148 = scalar_lea.vmem %s0, %s147
      %p149 = pneg %p35
      %p150 = pneg %p32
      %p151 = pneg %p56
      %p152 = pneg %p53
      %p153 = pneg %p77
      %p154 = pneg %p74
      %p155 = pneg %p103
      %p156 = pneg %p100
      %s157 = smul.u32 2, %s14
      %p158 = scmp.lt.s32.totalorder %s157, 3
      %s159 = scalar_select %p158, %s157, 3
      %s160 = smul.addr %s159, 2
      %s161 = smul.addr %s160, 4
      %s162 = scalar_lea.vmem %s3, %s161
      %s163 = smul.u32 2, %s14
      %p164 = scmp.lt.s32.totalorder %s163, 3
      %s165 = scalar_select %p164, %s163, 3
      %s166 = smul.addr %s165, 8
      %s167 = scalar_lea.vmem %s0, %s166
      %s168 = smul.u32 2, %s14
      %s169 = smul.u32 2, %s14
      %p170 = scmp.lt.s32.totalorder %s169, 3
      %s171 = scalar_select %p170, %s169, 3
      %s172 = smul.addr %s171, 2
      %s173 = smul.addr %s172, 4
      %s174 = scalar_lea.vmem %s3, %s173
      %s175 = smul.u32 2, %s14
      %v177 = vld [vmem:[%s167] sm:$0xff]
      %v178 = vld [vmem:[%s167 + $0x8] sm:$0xff]
      %v179 = vpack.c.bf16 %v178, %v177
      %v180 = vld [vmem:[%s1] sm:$0xf]
      %v181 = vld [vmem:[%s1 + $0x4] sm:$0xf]
      %v182 = vld [vmem:[%s1 + $0x8] sm:$0xf]
      %v183 = vld [vmem:[%s1 + $0xc] sm:$0xf]
      %v184 = vld [vmem:[%s1 + $0x10] sm:$0xf]
      %v185 = vld [vmem:[%s1 + $0x14] sm:$0xf]
      %v186 = vld [vmem:[%s1 + $0x18] sm:$0xf]
      %v187 = vld [vmem:[%s1 + $0x1c] sm:$0xf]
      %v188 = vld [vmem:[%s1 + $0x20] sm:$0xf]
      %v189 = vld [vmem:[%s1 + $0x24] sm:$0xf]
      %v190 = vld [vmem:[%s1 + $0x28] sm:$0xf]
      %v191 = vld [vmem:[%s1 + $0x2c] sm:$0xf]
      %v192 = vld [vmem:[%s1 + $0x30] sm:$0xf]
      %v193 = vld [vmem:[%s1 + $0x34] sm:$0xf]
      %v194 = vld [vmem:[%s1 + $0x38] sm:$0xf]
      %v195 = vld [vmem:[%s1 + $0x3c] sm:$0xf]
      %v196 = vld [vmem:[%s1 + $0x40] sm:$0xf]
      %v197 = vld [vmem:[%s1 + $0x44] sm:$0xf]
      %v198 = vld [vmem:[%s1 + $0x48] sm:$0xf]
      %v199 = vld [vmem:[%s1 + $0x4c] sm:$0xf]
      %v200 = vld [vmem:[%s1 + $0x50] sm:$0xf]
      %v201 = vld [vmem:[%s1 + $0x54] sm:$0xf]
      %v202 = vld [vmem:[%s1 + $0x58] sm:$0xf]
      %v203 = vld [vmem:[%s1 + $0x5c] sm:$0xf]
      %v204 = vld [vmem:[%s1 + $0x60] sm:$0xf]
      %v205 = vld [vmem:[%s1 + $0x64] sm:$0xf]
      %v206 = vld [vmem:[%s1 + $0x68] sm:$0xf]
      %v207 = vld [vmem:[%s1 + $0x6c] sm:$0xf]
      %v208 = vld [vmem:[%s1 + $0x70] sm:$0xf]
      %v209 = vld [vmem:[%s1 + $0x74] sm:$0xf]
      %v210 = vld [vmem:[%s1 + $0x78] sm:$0xf]
      %v211 = vld [vmem:[%s1 + $0x7c] sm:$0xf]
      %v212 = vld [vmem:[%s2] sm:$0x3]
      %v214 = vlaneseq
      %v215 = vshrl.u32 %v214, 7
      %v216 = vsub.s32 0, %v215
      %v217 = vrot.slane %v212, %v216
      %v218 = vlaneseq
      %v219 = vshrl.u32 %v218, 7
      %v220 = vsub.s32 1, %v219
      %v221 = vrot.slane %v212, %v220
      %v256 = vunpack.c.l.b16 %v180
      %v257 = vunpack.c.l.b16 %v181
      %v258 = vunpack.c.l.b16 %v182
      %v259 = vunpack.c.l.b16 %v183
      %v260 = vunpack.c.l.b16 %v184
      %v261 = vunpack.c.l.b16 %v185
      %v262 = vunpack.c.l.b16 %v186
      %v263 = vunpack.c.l.b16 %v187
      %v264 = vunpack.c.l.b16 %v188
      %v265 = vunpack.c.l.b16 %v189
      %v266 = vunpack.c.l.b16 %v190
      %v267 = vunpack.c.l.b16 %v191
      %v268 = vunpack.c.l.b16 %v192
      %v269 = vunpack.c.l.b16 %v193
      %v270 = vunpack.c.l.b16 %v194
      %v271 = vunpack.c.l.b16 %v195
      %v272 = vunpack.c.l.b16 %v196
      %v273 = vunpack.c.l.b16 %v197
      %v274 = vunpack.c.l.b16 %v198
      %v275 = vunpack.c.l.b16 %v199
      %v276 = vunpack.c.l.b16 %v200
      %v277 = vunpack.c.l.b16 %v201
      %v278 = vunpack.c.l.b16 %v202
      %v279 = vunpack.c.l.b16 %v203
      %v280 = vunpack.c.l.b16 %v204
      %v281 = vunpack.c.l.b16 %v205
      %v282 = vunpack.c.l.b16 %v206
      %v283 = vunpack.c.l.b16 %v207
      %v284 = vunpack.c.l.b16 %v208
      %v285 = vunpack.c.l.b16 %v209
      %v286 = vunpack.c.l.b16 %v210
      %v287 = vunpack.c.l.b16 %v211
      %v288 = vpack.c.b16 %v257, %v256
      %v289 = vpack.c.b16 %v259, %v258
      %v290 = vpack.c.b16 %v261, %v260
      %v291 = vpack.c.b16 %v263, %v262
      %v292 = vpack.c.b16 %v265, %v264
      %v293 = vpack.c.b16 %v267, %v266
      %v294 = vpack.c.b16 %v269, %v268
      %v295 = vpack.c.b16 %v271, %v270
      %v296 = vpack.c.b16 %v273, %v272
      %v297 = vpack.c.b16 %v275, %v274
      %v298 = vpack.c.b16 %v277, %v276
      %v299 = vpack.c.b16 %v279, %v278
      %v300 = vpack.c.b16 %v281, %v280
      %v301 = vpack.c.b16 %v283, %v282
      %v302 = vpack.c.b16 %v285, %v284
      %v303 = vpack.c.b16 %v287, %v286
      %320 = vmatprep.subr.bf16.mxu0 0
      %321 = vmatpush1.bf16.xpose.msra.mxu0 %v295
      %322 = vmatprep.subr.bf16.mxu0 0
      %323 = vmatpush1.bf16.xpose.msra.mxu0 %v294
      %324 = vmatprep.subr.bf16.mxu0 0
      %325 = vmatpush1.bf16.xpose.msra.mxu0 %v293
      %326 = vmatprep.subr.bf16.mxu0 0
      %327 = vmatpush1.bf16.xpose.msra.mxu0 %v292
      %328 = vmatprep.subr.bf16.mxu0 0
      %329 = vmatpush1.bf16.xpose.msra.mxu0 %v291
      %330 = vmatprep.subr.bf16.mxu0 0
      %331 = vmatpush1.bf16.xpose.msra.mxu0 %v290
      %332 = vmatprep.subr.bf16.mxu0 0
      %333 = vmatpush1.bf16.xpose.msra.mxu0 %v289
      %334 = vmatprep.subr.bf16.mxu0 0
      %335 = vmatpush1.bf16.xpose.msra.mxu0 %v288
      %336 = vmatprep.subr.bf16.mxu0 0
      %337 = vmatpush2.bf16.xpose.msra.mxu0 %v303
      %338 = vmatprep.subr.bf16.mxu0 0
      %339 = vmatpush2.bf16.xpose.msra.mxu0 %v302
      %340 = vmatprep.subr.bf16.mxu0 0
      %341 = vmatpush2.bf16.xpose.msra.mxu0 %v301
      %342 = vmatprep.subr.bf16.mxu0 0
      %343 = vmatpush2.bf16.xpose.msra.mxu0 %v300
      %344 = vmatprep.subr.bf16.mxu0 0
      %345 = vmatpush2.bf16.xpose.msra.mxu0 %v299
      %346 = vmatprep.subr.bf16.mxu0 0
      %347 = vmatpush2.bf16.xpose.msra.mxu0 %v298
      %348 = vmatprep.subr.bf16.mxu0 0
      %349 = vmatpush2.bf16.xpose.msra.mxu0 %v297
      %350 = vmatprep.subr.bf16.mxu0 0
      %351 = vmatpush2.bf16.xpose.msra.mxu0 %v296
      %352 = vmatprep.mubr.bf16.mxu0 0
      %353 = vmatmul.mubr.bf16.gmra.mxu0 %v179
      %v354 = vpop.f32.mrf.mxu0
      %v355 = vadd.f32 %v217, %v354
      %v356 = vpop.f32.mrf.mxu0
      %v357 = vadd.f32 %v221, %v356
      %v358 = vpop.f32.mrf.mxu0
      %v359 = vadd.f32 %v217, %v358
      %v360 = vpop.f32.mrf.mxu0
      %v361 = vadd.f32 %v221, %v360
      %362 = vdwg.mxu0
      %v363 = vpack.c.bf16 %v359, %v355
      %v364 = vpack.c.bf16 %v361, %v357
      %v367 = vunpack.c.l.b16 %v363
      %v368 = vunpack.c.l.b16 %v364
      %v369 = vunpack.c.h.b16 %v363
      %v370 = vunpack.c.h.b16 %v364
      %v371 = vpack.c.b16 %v368, %v367
      %v372 = vpack.c.b16 %v370, %v369
      %375 = vst [vmem:[%s174] sm:$0xff] %v371
      %376 = vst [vmem:[%s174 + $0x8] sm:$0xff] %v372
      %s377 = smul.u32 2, %s14
      %p378 = scmp.lt.s32.totalorder %s377, 3
      %s379 = scalar_select %p378, %s377, 3
      %s380 = smul.addr %s379, 2
      %s381 = smul.addr %s380, 4
      %s382 = scalar_lea.vmem %s3, %s381
      // Predicated region
      $region33: #{summarizer_forward.33} parent=31 // pred_check
        %p383 = pneg %p100
      $region34: #{summarizer_forward.33} parent=31 // pred_check_branch
        %385 = sbr.rel (%p383) target = $region36
      $region35: #{summarizer_forward.33} parent=31 // pred_region
        %s386 = smul.u32 2, %s14
      $region36: #{summarizer_forward.33} parent=31 // pred_fallthru
        _
    $region32: #{summarizer_forward.33} parent=5 // pred_fallthru
      _
    %p387 = scmp.le.s32.totalorder 2, %s9
    // Predicated region
    $region37: #{summarizer_forward.33} parent=5 // pred_check
      %p388 = pneg %p387
    $region38: #{summarizer_forward.33} parent=5 // pred_check_branch
      %390 = sbr.rel (%p388) target = $region40
    $region39: #{summarizer_forward.33} parent=5 // pred_region
      %s391 = ssub.s32 %s9, 2
      // Predicated region
      $region41: #{summarizer_forward.33} parent=39 // pred_check
        %p392 = pneg %p106
      $region42: #{summarizer_forward.33} parent=39 // pred_check_branch
        %394 = sbr.rel (%p392) target = $region44
      $region43: #{summarizer_forward.33} parent=39 // pred_region
        %s395 = smul.u32 2, %s15
        %p396 = scmp.lt.s32.totalorder %s395, 3
        %s397 = scalar_select %p396, %s395, 3
        %s398 = smul.addr %s397, 2
        %s399 = smul.addr %s398, 4
        %s400 = scalar_lea.vmem %s3, %s399
      $region44: #{summarizer_forward.33} parent=39 // pred_fallthru
        _
    $region40: #{summarizer_forward.33} parent=5 // pred_fallthru
      _
  $region6: #{summarizer_forward.33} parent=0 // loop_footer
    %s13 = sadd.s32 1, %s9
  $region7: #{summarizer_forward.33} parent=0 // loop_footer_branch
    %8 = sbr.rel target = $region3
  $region8: #{summarizer_forward.33} parent=0 // loop_exit
    _

// kernel: summarizer_forward.35
$region0: #{summarizer_forward.35}
  #allocation0 [shape = 'u32[]', space=smem, size = 0x4, offset = 0x4, fixed_abs, tag = 'smem constant byte address 0x4 - core index']
  #allocation1 [shape = 'u32[144,128]{1,0:T(1,128)}', space=vmem, size = 0x12000, scoped, tag = 'internal scratch']
  %s0 = inlined_call_operand.vmem [shape: f32[16,128], index: 0, kind: input, shape index: {}]
  %s1 = inlined_call_operand.vmem [shape: bf16[256,128], index: 1, kind: input, shape index: {}]
  %s2 = inlined_call_operand.vmem [shape: f32[1,256], index: 2, kind: input, shape index: {}]
  %s3 = inlined_call_operand.vmem [shape: f32[1,128], index: 3, kind: input, shape index: {}]
  %s4 = inlined_call_operand.vmem [shape: f32[1,128], index: 4, kind: input, shape index: {}]
  %s5 = inlined_call_operand.vmem [shape: bf16[16,256], index: 5, kind: output, shape index: {}]
  %s6 = sld [smem:[#allocation0]]
  $region30: #{summarizer_forward.35} parent=0
    _
  %s8 = ssub.s32 1, %s6
  %s9 = scalar_select 0, %s8, %s6
  // Predicated region
  $region2: #{summarizer_forward.35} parent=0 // pred_check
    _
  $region3: #{summarizer_forward.35} parent=0 // pred_check_branch
    %11 = sbr.rel (0) target = $region5
  $region4: #{summarizer_forward.35} parent=0 // pred_region
    _
  $region5: #{summarizer_forward.35} parent=0 // pred_fallthru
    _
  // Predicated region
  $region6: #{summarizer_forward.35} parent=0 // pred_check
    _
  $region7: #{summarizer_forward.35} parent=0 // pred_check_branch
    %13 = sbr.rel (0) target = $region9
  $region8: #{summarizer_forward.35} parent=0 // pred_region
    _
  $region9: #{summarizer_forward.35} parent=0 // pred_fallthru
    _
  // Predicated region
  $region10: #{summarizer_forward.35} parent=0 // pred_check
    _
  $region11: #{summarizer_forward.35} parent=0 // pred_check_branch
    %15 = sbr.rel (0) target = $region13
  $region12: #{summarizer_forward.35} parent=0 // pred_region
    _
  $region13: #{summarizer_forward.35} parent=0 // pred_fallthru
    _
  // Predicated region
  $region14: #{summarizer_forward.35} parent=0 // pred_check
    _
  $region15: #{summarizer_forward.35} parent=0 // pred_check_branch
    %17 = sbr.rel (0) target = $region17
  $region16: #{summarizer_forward.35} parent=0 // pred_region
    _
  $region17: #{summarizer_forward.35} parent=0 // pred_fallthru
    _
  // Predicated region
  $region18: #{summarizer_forward.35} parent=0 // pred_check
    _
  $region19: #{summarizer_forward.35} parent=0 // pred_check_branch
    %19 = sbr.rel (0) target = $region21
  $region20: #{summarizer_forward.35} parent=0 // pred_region
    _
  $region21: #{summarizer_forward.35} parent=0 // pred_fallthru
    _
  %v21 = vld [vmem:[%s0] sm:$0xff]
  %v22 = vld [vmem:[%s0 + $0x8] sm:$0xff]
  %23 = vadd.xlane.f32.xlu0 %v21
  %v24 = vpop.xlane.xlu0 %23
  %25 = vadd.xlane.f32.xlu0 %v22
  %v26 = vpop.xlane.xlu0 %25
  %v27 = vrcp.pop 128.0
  %v28 = vmul.f32 %v24, %v27
  %v29 = vmul.f32 %v26, %v27
  %v30 = vsub.f32 %v21, %v28
  %v31 = vsub.f32 %v22, %v29
  %v32 = vmul.f32 %v30, %v30
  %v33 = vmul.f32 %v31, %v31
  %34 = vadd.xlane.f32.xlu0 %v32
  %v35 = vpop.xlane.xlu0 %34
  %36 = vadd.xlane.f32.xlu0 %v33
  %v37 = vpop.xlane.xlu0 %36
  %v38 = vmul.f32 %v35, %v27
  %v39 = vmul.f32 %v37, %v27
  %v40 = vadd.f32 %v38, 1e-06
  %v41 = vadd.f32 %v39, 1e-06
  %v42 = vrsqrt.pop %v40
  %v43 = vrsqrt.pop %v41
  %v44 = vmul.f32 %v30, %v42
  %v45 = vmul.f32 %v31, %v43
  %v46 = vld [vmem:[%s3] sm:$0x1]
  %v48 = vlaneseq
  %v49 = vshrl.u32 %v48, 7
  %v50 = vsub.s32 0, %v49
  %v51 = vrot.slane %v46, %v50
  %v53 = vmul.f32 %v44, %v51
  %v54 = vmul.f32 %v45, %v51
  %v55 = vld [vmem:[%s4] sm:$0x1]
  %v57 = vlaneseq
  %v58 = vshrl.u32 %v57, 7
  %v59 = vsub.s32 0, %v58
  %v60 = vrot.slane %v55, %v59
  %v62 = vadd.f32 %v53, %v60
  %v63 = vadd.f32 %v54, %v60
  %v64 = vpack.c.bf16 %v63, %v62
  %v65 = vld [vmem:[%s1] sm:$0xf]
  %v66 = vld [vmem:[%s1 + $0x4] sm:$0xf]
  %v67 = vld [vmem:[%s1 + $0x8] sm:$0xf]
  %v68 = vld [vmem:[%s1 + $0xc] sm:$0xf]
  %v69 = vld [vmem:[%s1 + $0x10] sm:$0xf]
  %v70 = vld [vmem:[%s1 + $0x14] sm:$0xf]
  %v71 = vld [vmem:[%s1 + $0x18] sm:$0xf]
  %v72 = vld [vmem:[%s1 + $0x1c] sm:$0xf]
  %v73 = vld [vmem:[%s1 + $0x20] sm:$0xf]
  %v74 = vld [vmem:[%s1 + $0x24] sm:$0xf]
  %v75 = vld [vmem:[%s1 + $0x28] sm:$0xf]
  %v76 = vld [vmem:[%s1 + $0x2c] sm:$0xf]
  %v77 = vld [vmem:[%s1 + $0x30] sm:$0xf]
  %v78 = vld [vmem:[%s1 + $0x34] sm:$0xf]
  %v79 = vld [vmem:[%s1 + $0x38] sm:$0xf]
  %v80 = vld [vmem:[%s1 + $0x3c] sm:$0xf]
  %v81 = vld [vmem:[%s1 + $0x40] sm:$0xf]
  %v82 = vld [vmem:[%s1 + $0x44] sm:$0xf]
  %v83 = vld [vmem:[%s1 + $0x48] sm:$0xf]
  %v84 = vld [vmem:[%s1 + $0x4c] sm:$0xf]
  %v85 = vld [vmem:[%s1 + $0x50] sm:$0xf]
  %v86 = vld [vmem:[%s1 + $0x54] sm:$0xf]
  %v87 = vld [vmem:[%s1 + $0x58] sm:$0xf]
  %v88 = vld [vmem:[%s1 + $0x5c] sm:$0xf]
  %v89 = vld [vmem:[%s1 + $0x60] sm:$0xf]
  %v90 = vld [vmem:[%s1 + $0x64] sm:$0xf]
  %v91 = vld [vmem:[%s1 + $0x68] sm:$0xf]
  %v92 = vld [vmem:[%s1 + $0x6c] sm:$0xf]
  %v93 = vld [vmem:[%s1 + $0x70] sm:$0xf]
  %v94 = vld [vmem:[%s1 + $0x74] sm:$0xf]
  %v95 = vld [vmem:[%s1 + $0x78] sm:$0xf]
  %v96 = vld [vmem:[%s1 + $0x7c] sm:$0xf]
  %v97 = vld [vmem:[%s2] sm:$0x3]
  %v99 = vlaneseq
  %v100 = vshrl.u32 %v99, 7
  %v101 = vsub.s32 0, %v100
  %v102 = vrot.slane %v97, %v101
  %v103 = vlaneseq
  %v104 = vshrl.u32 %v103, 7
  %v105 = vsub.s32 1, %v104
  %v106 = vrot.slane %v97, %v105
  %v141 = vunpack.c.l.b16 %v65
  %v142 = vunpack.c.l.b16 %v66
  %v143 = vunpack.c.l.b16 %v67
  %v144 = vunpack.c.l.b16 %v68
  %v145 = vunpack.c.l.b16 %v69
  %v146 = vunpack.c.l.b16 %v70
  %v147 = vunpack.c.l.b16 %v71
  %v148 = vunpack.c.l.b16 %v72
  %v149 = vunpack.c.l.b16 %v73
  %v150 = vunpack.c.l.b16 %v74
  %v151 = vunpack.c.l.b16 %v75
  %v152 = vunpack.c.l.b16 %v76
  %v153 = vunpack.c.l.b16 %v77
  %v154 = vunpack.c.l.b16 %v78
  %v155 = vunpack.c.l.b16 %v79
  %v156 = vunpack.c.l.b16 %v80
  %v157 = vunpack.c.l.b16 %v81
  %v158 = vunpack.c.l.b16 %v82
  %v159 = vunpack.c.l.b16 %v83
  %v160 = vunpack.c.l.b16 %v84
  %v161 = vunpack.c.l.b16 %v85
  %v162 = vunpack.c.l.b16 %v86
  %v163 = vunpack.c.l.b16 %v87
  %v164 = vunpack.c.l.b16 %v88
  %v165 = vunpack.c.l.b16 %v89
  %v166 = vunpack.c.l.b16 %v90
  %v167 = vunpack.c.l.b16 %v91
  %v168 = vunpack.c.l.b16 %v92
  %v169 = vunpack.c.l.b16 %v93
  %v170 = vunpack.c.l.b16 %v94
  %v171 = vunpack.c.l.b16 %v95
  %v172 = vunpack.c.l.b16 %v96
  %v173 = vpack.c.b16 %v142, %v141
  %v174 = vpack.c.b16 %v144, %v143
  %v175 = vpack.c.b16 %v146, %v145
  %v176 = vpack.c.b16 %v148, %v147
  %v177 = vpack.c.b16 %v150, %v149
  %v178 = vpack.c.b16 %v152, %v151
  %v179 = vpack.c.b16 %v154, %v153
  %v180 = vpack.c.b16 %v156, %v155
  %v181 = vpack.c.b16 %v158, %v157
  %v182 = vpack.c.b16 %v160, %v159
  %v183 = vpack.c.b16 %v162, %v161
  %v184 = vpack.c.b16 %v164, %v163
  %v185 = vpack.c.b16 %v166, %v165
  %v186 = vpack.c.b16 %v168, %v167
  %v187 = vpack.c.b16 %v170, %v169
  %v188 = vpack.c.b16 %v172, %v171
  %205 = vmatprep.subr.bf16.mxu0 0
  %206 = vmatpush1.bf16.xpose.msra.mxu0 %v180
  %207 = vmatprep.subr.bf16.mxu0 0
  %208 = vmatpush1.bf16.xpose.msra.mxu0 %v179
  %209 = vmatprep.subr.bf16.mxu0 0
  %210 = vmatpush1.bf16.xpose.msra.mxu0 %v178
  %211 = vmatprep.subr.bf16.mxu0 0
  %212 = vmatpush1.bf16.xpose.msra.mxu0 %v177
  %213 = vmatprep.subr.bf16.mxu0 0
  %214 = vmatpush1.bf16.xpose.msra.mxu0 %v176
  %215 = vmatprep.subr.bf16.mxu0 0
  %216 = vmatpush1.bf16.xpose.msra.mxu0 %v175
  %217 = vmatprep.subr.bf16.mxu0 0
  %218 = vmatpush1.bf16.xpose.msra.mxu0 %v174
  %219 = vmatprep.subr.bf16.mxu0 0
  %220 = vmatpush1.bf16.xpose.msra.mxu0 %v173
  %221 = vmatprep.subr.bf16.mxu0 0
  %222 = vmatpush2.bf16.xpose.msra.mxu0 %v188
  %223 = vmatprep.subr.bf16.mxu0 0
  %224 = vmatpush2.bf16.xpose.msra.mxu0 %v187
  %225 = vmatprep.subr.bf16.mxu0 0
  %226 = vmatpush2.bf16.xpose.msra.mxu0 %v186
  %227 = vmatprep.subr.bf16.mxu0 0
  %228 = vmatpush2.bf16.xpose.msra.mxu0 %v185
  %229 = vmatprep.subr.bf16.mxu0 0
  %230 = vmatpush2.bf16.xpose.msra.mxu0 %v184
  %231 = vmatprep.subr.bf16.mxu0 0
  %232 = vmatpush2.bf16.xpose.msra.mxu0 %v183
  %233 = vmatprep.subr.bf16.mxu0 0
  %234 = vmatpush2.bf16.xpose.msra.mxu0 %v182
  %235 = vmatprep.subr.bf16.mxu0 0
  %236 = vmatpush2.bf16.xpose.msra.mxu0 %v181
  %237 = vmatprep.mubr.bf16.mxu0 0
  %238 = vmatmul.mubr.bf16.gmra.mxu0 %v64
  %v239 = vpop.f32.mrf.mxu0
  %v240 = vadd.f32 %v102, %v239
  %v241 = vpop.f32.mrf.mxu0
  %v242 = vadd.f32 %v106, %v241
  %v243 = vpop.f32.mrf.mxu0
  %v244 = vadd.f32 %v102, %v243
  %v245 = vpop.f32.mrf.mxu0
  %v246 = vadd.f32 %v106, %v245
  %247 = vdwg.mxu0
  %v248 = vmax.f32 %v240, 0.0
  %v249 = vmax.f32 %v242, 0.0
  %v250 = vmax.f32 %v244, 0.0
  %v251 = vmax.f32 %v246, 0.0
  %v252 = vpack.c.bf16 %v250, %v248
  %v253 = vpack.c.bf16 %v251, %v249
  %v256 = vunpack.c.l.b16 %v252
  %v257 = vunpack.c.l.b16 %v253
  %v258 = vunpack.c.h.b16 %v252
  %v259 = vunpack.c.h.b16 %v253
  %v260 = vpack.c.b16 %v257, %v256
  %v261 = vpack.c.b16 %v259, %v258
  %264 = vst [vmem:[%s5] sm:$0xff] %v260
  %265 = vst [vmem:[%s5 + $0x8] sm:$0xff] %v261
  // Predicated region
  $region22: #{summarizer_forward.35} parent=0 // pred_check
    _
  $region23: #{summarizer_forward.35} parent=0 // pred_check_branch
    %267 = sbr.rel (0) target = $region25
  $region24: #{summarizer_forward.35} parent=0 // pred_region
    _
  $region25: #{summarizer_forward.35} parent=0 // pred_fallthru
    _
  // Predicated region
  $region26: #{summarizer_forward.35} parent=0 // pred_check
    _
  $region27: #{summarizer_forward.35} parent=0 // pred_check_branch
    %269 = sbr.rel (0) target = $region29
  $region28: #{summarizer_forward.35} parent=0 // pred_region
    _
  $region29: #{summarizer_forward.35} parent=0 // pred_fallthru
    _

// kernel: summarizer_forward.36
$region0: #{summarizer_forward.36}
  #allocation0 [shape = 'u32[]', space=smem, size = 0x4, offset = 0x4, fixed_abs, tag = 'smem constant byte address 0x4 - core index']
  #allocation1 [shape = 'u32[144,128]{1,0:T(1,128)}', space=vmem, size = 0x12000, scoped, tag = 'internal scratch']
  %s0 = inlined_call_operand.vmem [shape: bf16[16,256], index: 0, kind: input, shape index: {}]
  %s1 = inlined_call_operand.vmem [shape: bf16[128,256], index: 1, kind: input, shape index: {}]
  %s2 = inlined_call_operand.vmem [shape: f32[1,128], index: 2, kind: input, shape index: {}]
  %s3 = inlined_call_operand.vmem [shape: f32[16,128], index: 3, kind: input, shape index: {}]
  %s4 = inlined_call_operand.vmem [shape: f32[16,128], index: 4, kind: output, shape index: {}]
  %s5 = sld [smem:[#allocation0]]
  $region26: #{summarizer_forward.36} parent=0
    _
  %s7 = ssub.s32 1, %s5
  %s8 = scalar_select 0, %s7, %s5
  // Predicated region
  $region2: #{summarizer_forward.36} parent=0 // pred_check
    _
  $region3: #{summarizer_forward.36} parent=0 // pred_check_branch
    %10 = sbr.rel (0) target = $region5
  $region4: #{summarizer_forward.36} parent=0 // pred_region
    _
  $region5: #{summarizer_forward.36} parent=0 // pred_fallthru
    _
  // Predicated region
  $region6: #{summarizer_forward.36} parent=0 // pred_check
    _
  $region7: #{summarizer_forward.36} parent=0 // pred_check_branch
    %12 = sbr.rel (0) target = $region9
  $region8: #{summarizer_forward.36} parent=0 // pred_region
    _
  $region9: #{summarizer_forward.36} parent=0 // pred_fallthru
    _
  // Predicated region
  $region10: #{summarizer_forward.36} parent=0 // pred_check
    _
  $region11: #{summarizer_forward.36} parent=0 // pred_check_branch
    %14 = sbr.rel (0) target = $region13
  $region12: #{summarizer_forward.36} parent=0 // pred_region
    _
  $region13: #{summarizer_forward.36} parent=0 // pred_fallthru
    _
  // Predicated region
  $region14: #{summarizer_forward.36} parent=0 // pred_check
    _
  $region15: #{summarizer_forward.36} parent=0 // pred_check_branch
    %16 = sbr.rel (0) target = $region17
  $region16: #{summarizer_forward.36} parent=0 // pred_region
    _
  $region17: #{summarizer_forward.36} parent=0 // pred_fallthru
    _
  %v18 = vld [vmem:[%s0] sm:$0xff]
  %v19 = vld [vmem:[%s0 + $0x8] sm:$0xff]
  %v20 = vld [vmem:[%s1] sm:$0xff]
  %v21 = vld [vmem:[%s1 + $0x8] sm:$0xff]
  %v22 = vld [vmem:[%s1 + $0x10] sm:$0xff]
  %v23 = vld [vmem:[%s1 + $0x18] sm:$0xff]
  %v24 = vld [vmem:[%s1 + $0x20] sm:$0xff]
  %v25 = vld [vmem:[%s1 + $0x28] sm:$0xff]
  %v26 = vld [vmem:[%s1 + $0x30] sm:$0xff]
  %v27 = vld [vmem:[%s1 + $0x38] sm:$0xff]
  %v28 = vld [vmem:[%s1 + $0x40] sm:$0xff]
  %v29 = vld [vmem:[%s1 + $0x48] sm:$0xff]
  %v30 = vld [vmem:[%s1 + $0x50] sm:$0xff]
  %v31 = vld [vmem:[%s1 + $0x58] sm:$0xff]
  %v32 = vld [vmem:[%s1 + $0x60] sm:$0xff]
  %v33 = vld [vmem:[%s1 + $0x68] sm:$0xff]
  %v34 = vld [vmem:[%s1 + $0x70] sm:$0xff]
  %v35 = vld [vmem:[%s1 + $0x78] sm:$0xff]
  %v36 = vld [vmem:[%s2] sm:$0x1]
  %v38 = vlaneseq
  %v39 = vshrl.u32 %v38, 7
  %v40 = vsub.s32 0, %v39
  %v41 = vrot.slane %v36, %v40
  %v45 = vunpack.c.l.b16 %v18
  %v46 = vunpack.c.h.b16 %v18
  %v47 = vunpack.c.l.b16 %v19
  %v48 = vunpack.c.h.b16 %v19
  %v49 = vpack.c.b16 %v47, %v45
  %v50 = vpack.c.b16 %v48, %v46
  %v69 = vunpack.c.l.b16 %v20
  %v70 = vunpack.c.h.b16 %v20
  %v71 = vunpack.c.l.b16 %v21
  %v72 = vunpack.c.h.b16 %v21
  %v73 = vunpack.c.l.b16 %v22
  %v74 = vunpack.c.h.b16 %v22
  %v75 = vunpack.c.l.b16 %v23
  %v76 = vunpack.c.h.b16 %v23
  %v77 = vunpack.c.l.b16 %v24
  %v78 = vunpack.c.h.b16 %v24
  %v79 = vunpack.c.l.b16 %v25
  %v80 = vunpack.c.h.b16 %v25
  %v81 = vunpack.c.l.b16 %v26
  %v82 = vunpack.c.h.b16 %v26
  %v83 = vunpack.c.l.b16 %v27
  %v84 = vunpack.c.h.b16 %v27
  %v85 = vunpack.c.l.b16 %v28
  %v86 = vunpack.c.h.b16 %v28
  %v87 = vunpack.c.l.b16 %v29
  %v88 = vunpack.c.h.b16 %v29
  %v89 = vunpack.c.l.b16 %v30
  %v90 = vunpack.c.h.b16 %v30
  %v91 = vunpack.c.l.b16 %v31
  %v92 = vunpack.c.h.b16 %v31
  %v93 = vunpack.c.l.b16 %v32
  %v94 = vunpack.c.h.b16 %v32
  %v95 = vunpack.c.l.b16 %v33
  %v96 = vunpack.c.h.b16 %v33
  %v97 = vunpack.c.l.b16 %v34
  %v98 = vunpack.c.h.b16 %v34
  %v99 = vunpack.c.l.b16 %v35
  %v100 = vunpack.c.h.b16 %v35
  %v101 = vpack.c.b16 %v71, %v69
  %v102 = vpack.c.b16 %v72, %v70
  %v103 = vpack.c.b16 %v75, %v73
  %v104 = vpack.c.b16 %v76, %v74
  %v105 = vpack.c.b16 %v79, %v77
  %v106 = vpack.c.b16 %v80, %v78
  %v107 = vpack.c.b16 %v83, %v81
  %v108 = vpack.c.b16 %v84, %v82
  %v109 = vpack.c.b16 %v87, %v85
  %v110 = vpack.c.b16 %v88, %v86
  %v111 = vpack.c.b16 %v91, %v89
  %v112 = vpack.c.b16 %v92, %v90
  %v113 = vpack.c.b16 %v95, %v93
  %v114 = vpack.c.b16 %v96, %v94
  %v115 = vpack.c.b16 %v99, %v97
  %v116 = vpack.c.b16 %v100, %v98
  %133 = vmatprep.subr.bf16.mxu0 %v116
  %134 = vmatpush1.bf16.xpose.msra.mxu0 %v115
  %135 = vmatprep.subr.bf16.mxu0 %v114
  %136 = vmatpush1.bf16.xpose.msra.mxu0 %v113
  %137 = vmatprep.subr.bf16.mxu0 %v112
  %138 = vmatpush1.bf16.xpose.msra.mxu0 %v111
  %139 = vmatprep.subr.bf16.mxu0 %v110
  %140 = vmatpush1.bf16.xpose.msra.mxu0 %v109
  %141 = vmatprep.subr.bf16.mxu0 %v108
  %142 = vmatpush1.bf16.xpose.msra.mxu0 %v107
  %143 = vmatprep.subr.bf16.mxu0 %v106
  %144 = vmatpush1.bf16.xpose.msra.mxu0 %v105
  %145 = vmatprep.subr.bf16.mxu0 %v104
  %146 = vmatpush1.bf16.xpose.msra.mxu0 %v103
  %147 = vmatprep.subr.bf16.mxu0 %v102
  %148 = vmatpush1.bf16.xpose.msra.mxu0 %v101
  %149 = vmatprep.subr.bf16.mxu0 0
  %150 = vmatpush2.bf16.xpose.msra.mxu0 0
  %151 = vmatprep.subr.bf16.mxu0 0
  %152 = vmatpush2.bf16.xpose.msra.mxu0 0
  %153 = vmatprep.subr.bf16.mxu0 0
  %154 = vmatpush2.bf16.xpose.msra.mxu0 0
  %155 = vmatprep.subr.bf16.mxu0 0
  %156 = vmatpush2.bf16.xpose.msra.mxu0 0
  %157 = vmatprep.subr.bf16.mxu0 0
  %158 = vmatpush2.bf16.xpose.msra.mxu0 0
  %159 = vmatprep.subr.bf16.mxu0 0
  %160 = vmatpush2.bf16.xpose.msra.mxu0 0
  %161 = vmatprep.subr.bf16.mxu0 0
  %162 = vmatpush2.bf16.xpose.msra.mxu0 0
  %163 = vmatprep.subr.bf16.mxu0 0
  %164 = vmatpush2.bf16.xpose.msra.mxu0 0
  %165 = vmatprep.mubr.bf16.mxu0 %v50
  %166 = vmatmul.mubr.bf16.gmra.mxu0 %v49
  %v167 = vpop.f32.mrf.mxu0
  %v168 = vadd.f32 %v41, %v167
  %v169 = vpop.f32.mrf.mxu0
  %v170 = vpop.f32.mrf.mxu0
  %v171 = vadd.f32 %v41, %v170
  %v172 = vpop.f32.mrf.mxu0
  %173 = vdwg.mxu0
  %v174 = vld [vmem:[%s3] sm:$0xff]
  %v175 = vld [vmem:[%s3 + $0x8] sm:$0xff]
  %v176 = vadd.f32 %v168, %v174
  %v177 = vadd.f32 %v171, %v175
  %178 = vst [vmem:[%s4] sm:$0xff] %v176
  %179 = vst [vmem:[%s4 + $0x8] sm:$0xff] %v177
  // Predicated region
  $region18: #{summarizer_forward.36} parent=0 // pred_check
    _
  $region19: #{summarizer_forward.36} parent=0 // pred_check_branch
    %181 = sbr.rel (0) target = $region21
  $region20: #{summarizer_forward.36} parent=0 // pred_region
    _
  $region21: #{summarizer_forward.36} parent=0 // pred_fallthru
    _
  // Predicated region
  $region22: #{summarizer_forward.36} parent=0 // pred_check
    _
  $region23: #{summarizer_forward.36} parent=0 // pred_check_branch
    %183 = sbr.rel (0) target = $region25
  $region24: #{summarizer_forward.36} parent=0 // pred_region
    _
  $region25: #{summarizer_forward.36} parent=0 // pred_fallthru
    _

// kernel: summarizer_forward.43
$region0: #{summarizer_forward.43}
  #allocation0 [shape = 'u32[]', space=smem, size = 0x4, offset = 0x4, fixed_abs, tag = 'smem constant byte address 0x4 - core index']
  #allocation1 [shape = 'u32[144,128]{1,0:T(1,128)}', space=vmem, size = 0x12000, scoped, tag = 'internal scratch']
  %s0 = inlined_call_operand.vmem [shape: bf16[16,256], index: 0, kind: input, shape index: {}]
  %s1 = inlined_call_operand.vmem [shape: bf16[128,256], index: 1, kind: input, shape index: {}]
  %s2 = inlined_call_operand.vmem [shape: f32[1,128], index: 2, kind: input, shape index: {}]
  %s3 = inlined_call_operand.vmem [shape: f32[16,128], index: 3, kind: input, shape index: {}]
  %s4 = inlined_call_operand.vmem [shape: f32[1,128], index: 4, kind: input, shape index: {}]
  %s5 = inlined_call_operand.vmem [shape: f32[1,128], index: 5, kind: input, shape index: {}]
  %s6 = inlined_call_operand.vmem [shape: f32[16,128], index: 6, kind: output, shape index: {}]
  %s7 = sld [smem:[#allocation0]]
  $region34: #{summarizer_forward.43} parent=0
    _
  %s9 = ssub.s32 1, %s7
  %s10 = scalar_select 0, %s9, %s7
  // Predicated region
  $region2: #{summarizer_forward.43} parent=0 // pred_check
    _
  $region3: #{summarizer_forward.43} parent=0 // pred_check_branch
    %12 = sbr.rel (0) target = $region5
  $region4: #{summarizer_forward.43} parent=0 // pred_region
    _
  $region5: #{summarizer_forward.43} parent=0 // pred_fallthru
    _
  // Predicated region
  $region6: #{summarizer_forward.43} parent=0 // pred_check
    _
  $region7: #{summarizer_forward.43} parent=0 // pred_check_branch
    %14 = sbr.rel (0) target = $region9
  $region8: #{summarizer_forward.43} parent=0 // pred_region
    _
  $region9: #{summarizer_forward.43} parent=0 // pred_fallthru
    _
  // Predicated region
  $region10: #{summarizer_forward.43} parent=0 // pred_check
    _
  $region11: #{summarizer_forward.43} parent=0 // pred_check_branch
    %16 = sbr.rel (0) target = $region13
  $region12: #{summarizer_forward.43} parent=0 // pred_region
    _
  $region13: #{summarizer_forward.43} parent=0 // pred_fallthru
    _
  // Predicated region
  $region14: #{summarizer_forward.43} parent=0 // pred_check
    _
  $region15: #{summarizer_forward.43} parent=0 // pred_check_branch
    %18 = sbr.rel (0) target = $region17
  $region16: #{summarizer_forward.43} parent=0 // pred_region
    _
  $region17: #{summarizer_forward.43} parent=0 // pred_fallthru
    _
  // Predicated region
  $region18: #{summarizer_forward.43} parent=0 // pred_check
    _
  $region19: #{summarizer_forward.43} parent=0 // pred_check_branch
    %20 = sbr.rel (0) target = $region21
  $region20: #{summarizer_forward.43} parent=0 // pred_region
    _
  $region21: #{summarizer_forward.43} parent=0 // pred_fallthru
    _
  // Predicated region
  $region22: #{summarizer_forward.43} parent=0 // pred_check
    _
  $region23: #{summarizer_forward.43} parent=0 // pred_check_branch
    %22 = sbr.rel (0) target = $region25
  $region24: #{summarizer_forward.43} parent=0 // pred_region
    _
  $region25: #{summarizer_forward.43} parent=0 // pred_fallthru
    _
  %v24 = vld [vmem:[%s0] sm:$0xff]
  %v25 = vld [vmem:[%s0 + $0x8] sm:$0xff]
  %v26 = vld [vmem:[%s1] sm:$0xff]
  %v27 = vld [vmem:[%s1 + $0x8] sm:$0xff]
  %v28 = vld [vmem:[%s1 + $0x10] sm:$0xff]
  %v29 = vld [vmem:[%s1 + $0x18] sm:$0xff]
  %v30 = vld [vmem:[%s1 + $0x20] sm:$0xff]
  %v31 = vld [vmem:[%s1 + $0x28] sm:$0xff]
  %v32 = vld [vmem:[%s1 + $0x30] sm:$0xff]
  %v33 = vld [vmem:[%s1 + $0x38] sm:$0xff]
  %v34 = vld [vmem:[%s1 + $0x40] sm:$0xff]
  %v35 = vld [vmem:[%s1 + $0x48] sm:$0xff]
  %v36 = vld [vmem:[%s1 + $0x50] sm:$0xff]
  %v37 = vld [vmem:[%s1 + $0x58] sm:$0xff]
  %v38 = vld [vmem:[%s1 + $0x60] sm:$0xff]
  %v39 = vld [vmem:[%s1 + $0x68] sm:$0xff]
  %v40 = vld [vmem:[%s1 + $0x70] sm:$0xff]
  %v41 = vld [vmem:[%s1 + $0x78] sm:$0xff]
  %v42 = vld [vmem:[%s2] sm:$0x1]
  %v44 = vlaneseq
  %v45 = vshrl.u32 %v44, 7
  %v46 = vsub.s32 0, %v45
  %v47 = vrot.slane %v42, %v46
  %v51 = vunpack.c.l.b16 %v24
  %v52 = vunpack.c.h.b16 %v24
  %v53 = vunpack.c.l.b16 %v25
  %v54 = vunpack.c.h.b16 %v25
  %v55 = vpack.c.b16 %v53, %v51
  %v56 = vpack.c.b16 %v54, %v52
  %v75 = vunpack.c.l.b16 %v26
  %v76 = vunpack.c.h.b16 %v26
  %v77 = vunpack.c.l.b16 %v27
  %v78 = vunpack.c.h.b16 %v27
  %v79 = vunpack.c.l.b16 %v28
  %v80 = vunpack.c.h.b16 %v28
  %v81 = vunpack.c.l.b16 %v29
  %v82 = vunpack.c.h.b16 %v29
  %v83 = vunpack.c.l.b16 %v30
  %v84 = vunpack.c.h.b16 %v30
  %v85 = vunpack.c.l.b16 %v31
  %v86 = vunpack.c.h.b16 %v31
  %v87 = vunpack.c.l.b16 %v32
  %v88 = vunpack.c.h.b16 %v32
  %v89 = vunpack.c.l.b16 %v33
  %v90 = vunpack.c.h.b16 %v33
  %v91 = vunpack.c.l.b16 %v34
  %v92 = vunpack.c.h.b16 %v34
  %v93 = vunpack.c.l.b16 %v35
  %v94 = vunpack.c.h.b16 %v35
  %v95 = vunpack.c.l.b16 %v36
  %v96 = vunpack.c.h.b16 %v36
  %v97 = vunpack.c.l.b16 %v37
  %v98 = vunpack.c.h.b16 %v37
  %v99 = vunpack.c.l.b16 %v38
  %v100 = vunpack.c.h.b16 %v38
  %v101 = vunpack.c.l.b16 %v39
  %v102 = vunpack.c.h.b16 %v39
  %v103 = vunpack.c.l.b16 %v40
  %v104 = vunpack.c.h.b16 %v40
  %v105 = vunpack.c.l.b16 %v41
  %v106 = vunpack.c.h.b16 %v41
  %v107 = vpack.c.b16 %v77, %v75
  %v108 = vpack.c.b16 %v78, %v76
  %v109 = vpack.c.b16 %v81, %v79
  %v110 = vpack.c.b16 %v82, %v80
  %v111 = vpack.c.b16 %v85, %v83
  %v112 = vpack.c.b16 %v86, %v84
  %v113 = vpack.c.b16 %v89, %v87
  %v114 = vpack.c.b16 %v90, %v88
  %v115 = vpack.c.b16 %v93, %v91
  %v116 = vpack.c.b16 %v94, %v92
  %v117 = vpack.c.b16 %v97, %v95
  %v118 = vpack.c.b16 %v98, %v96
  %v119 = vpack.c.b16 %v101, %v99
  %v120 = vpack.c.b16 %v102, %v100
  %v121 = vpack.c.b16 %v105, %v103
  %v122 = vpack.c.b16 %v106, %v104
  %139 = vmatprep.subr.bf16.mxu0 %v122
  %140 = vmatpush1.bf16.xpose.msra.mxu0 %v121
  %141 = vmatprep.subr.bf16.mxu0 %v120
  %142 = vmatpush1.bf16.xpose.msra.mxu0 %v119
  %143 = vmatprep.subr.bf16.mxu0 %v118
  %144 = vmatpush1.bf16.xpose.msra.mxu0 %v117
  %145 = vmatprep.subr.bf16.mxu0 %v116
  %146 = vmatpush1.bf16.xpose.msra.mxu0 %v115
  %147 = vmatprep.subr.bf16.mxu0 %v114
  %148 = vmatpush1.bf16.xpose.msra.mxu0 %v113
  %149 = vmatprep.subr.bf16.mxu0 %v112
  %150 = vmatpush1.bf16.xpose.msra.mxu0 %v111
  %151 = vmatprep.subr.bf16.mxu0 %v110
  %152 = vmatpush1.bf16.xpose.msra.mxu0 %v109
  %153 = vmatprep.subr.bf16.mxu0 %v108
  %154 = vmatpush1.bf16.xpose.msra.mxu0 %v107
  %155 = vmatprep.subr.bf16.mxu0 0
  %156 = vmatpush2.bf16.xpose.msra.mxu0 0
  %157 = vmatprep.subr.bf16.mxu0 0
  %158 = vmatpush2.bf16.xpose.msra.mxu0 0
  %159 = vmatprep.subr.bf16.mxu0 0
  %160 = vmatpush2.bf16.xpose.msra.mxu0 0
  %161 = vmatprep.subr.bf16.mxu0 0
  %162 = vmatpush2.bf16.xpose.msra.mxu0 0
  %163 = vmatprep.subr.bf16.mxu0 0
  %164 = vmatpush2.bf16.xpose.msra.mxu0 0
  %165 = vmatprep.subr.bf16.mxu0 0
  %166 = vmatpush2.bf16.xpose.msra.mxu0 0
  %167 = vmatprep.subr.bf16.mxu0 0
  %168 = vmatpush2.bf16.xpose.msra.mxu0 0
  %169 = vmatprep.subr.bf16.mxu0 0
  %170 = vmatpush2.bf16.xpose.msra.mxu0 0
  %171 = vmatprep.mubr.bf16.mxu0 %v56
  %172 = vmatmul.mubr.bf16.gmra.mxu0 %v55
  %v173 = vpop.f32.mrf.mxu0
  %v174 = vadd.f32 %v47, %v173
  %v175 = vpop.f32.mrf.mxu0
  %v176 = vpop.f32.mrf.mxu0
  %v177 = vadd.f32 %v47, %v176
  %v178 = vpop.f32.mrf.mxu0
  %179 = vdwg.mxu0
  %v180 = vld [vmem:[%s3] sm:$0xff]
  %v181 = vld [vmem:[%s3 + $0x8] sm:$0xff]
  %v182 = vadd.f32 %v174, %v180
  %v183 = vadd.f32 %v177, %v181
  %184 = vadd.xlane.f32.xlu0 %v182
  %v185 = vpop.xlane.xlu0 %184
  %186 = vadd.xlane.f32.xlu0 %v183
  %v187 = vpop.xlane.xlu0 %186
  %v188 = vrcp.pop 128.0
  %v189 = vmul.f32 %v185, %v188
  %v190 = vmul.f32 %v187, %v188
  %v191 = vsub.f32 %v182, %v189
  %v192 = vsub.f32 %v183, %v190
  %v193 = vmul.f32 %v191, %v191
  %v194 = vmul.f32 %v192, %v192
  %195 = vadd.xlane.f32.xlu0 %v193
  %v196 = vpop.xlane.xlu0 %195
  %197 = vadd.xlane.f32.xlu0 %v194
  %v198 = vpop.xlane.xlu0 %197
  %v199 = vmul.f32 %v196, %v188
  %v200 = vmul.f32 %v198, %v188
  %v201 = vadd.f32 %v199, 1e-06
  %v202 = vadd.f32 %v200, 1e-06
  %v203 = vrsqrt.pop %v201
  %v204 = vrsqrt.pop %v202
  %v205 = vmul.f32 %v191, %v203
  %v206 = vmul.f32 %v192, %v204
  %v207 = vld [vmem:[%s4] sm:$0x1]
  %v209 = vlaneseq
  %v210 = vshrl.u32 %v209, 7
  %v211 = vsub.s32 0, %v210
  %v212 = vrot.slane %v207, %v211
  %v214 = vmul.f32 %v205, %v212
  %v215 = vmul.f32 %v206, %v212
  %v216 = vld [vmem:[%s5] sm:$0x1]
  %v218 = vlaneseq
  %v219 = vshrl.u32 %v218, 7
  %v220 = vsub.s32 0, %v219
  %v221 = vrot.slane %v216, %v220
  %v223 = vadd.f32 %v214, %v221
  %v224 = vadd.f32 %v215, %v221
  %225 = vst [vmem:[%s6] sm:$0xff] %v223
  %226 = vst [vmem:[%s6 + $0x8] sm:$0xff] %v224
  // Predicated region
  $region26: #{summarizer_forward.43} parent=0 // pred_check
    _
  $region27: #{summarizer_forward.43} parent=0 // pred_check_branch
    %228 = sbr.rel (0) target = $region29
  $region28: #{summarizer_forward.43} parent=0 // pred_region
    _
  $region29: #{summarizer_forward.43} parent=0 // pred_fallthru
    _
  // Predicated region
  $region30: #{summarizer_forward.43} parent=0 // pred_check
    _
  $region31: #{summarizer_forward.43} parent=0 // pred_check_branch
    %230 = sbr.rel (0) target = $region33
  $region32: #{summarizer_forward.43} parent=0 // pred_region
    _
  $region33: #{summarizer_forward.43} parent=0 // pred_fallthru
    _

// kernel: summarizer_forward.34
$region0: #{summarizer_forward.34}
  #allocation0 [shape = 'u32[]', space=smem, size = 0x4, offset = 0x4, fixed_abs, tag = 'smem constant byte address 0x4 - core index']
  #allocation1 [shape = 'u32[144,128]{1,0:T(1,128)}', space=vmem, size = 0x12000, scoped, tag = 'internal scratch']
  %s0 = inlined_call_operand.vmem [shape: bf16[2,4,8,32], index: 0, kind: input, shape index: {}]
  %s1 = inlined_call_operand.vmem [shape: bf16[2,4,128,32], index: 1, kind: input, shape index: {}]
  %s2 = inlined_call_operand.vmem [shape: bf16[2,4,128,32], index: 2, kind: input, shape index: {}]
  %s3 = inlined_call_operand.vmem [shape: f32[2,1,128], index: 3, kind: input, shape index: {}]
  %s4 = inlined_call_operand.vmem [shape: f32[2,8,128], index: 4, kind: input, shape index: {}]
  %s5 = inlined_call_operand.vmem [shape: bf16[4,128,32], index: 5, kind: input, shape index: {}]
  %s6 = inlined_call_operand.vmem [shape: f32[1,128], index: 6, kind: input, shape index: {}]
  %s7 = inlined_call_operand.vmem [shape: f32[2,8,128], index: 7, kind: output, shape index: {}]
  %s8 = sld [smem:[#allocation0]]
  $region61: #{summarizer_forward.34} parent=0
    _
  %s10 = ssub.s32 1, %s8
  %s11 = scalar_select 0, %s10, %s8
  loop: start=0, step=1, limit=4
  $region2: #{summarizer_forward.34} parent=0 // loop_pre_header
    _
  $region3: #{summarizer_forward.34} parent=0 // loop_header
    %s13 = sphi 0, %s17
    %p14 = scmp.ge.s32.totalorder %s13, 4
    %s23 = sphi 0, %s25
    %s26 = sphi 0, %s23
    %s27 = sphi 0, %s26
    %s43 = sphi 0, %s27
    %s49 = sphi 0, %s51
    %s52 = sphi 0, %s49
    %s53 = sphi 0, %s52
    %s69 = sphi 0, %s53
    %s75 = sphi 0, %s77
    %s78 = sphi 0, %s75
    %s79 = sphi 0, %s78
    %s95 = sphi 0, %s79
    %s101 = sphi 0, %s103
    %s104 = sphi 0, %s101
    %s105 = sphi 0, %s104
    %s121 = sphi 0, %s105
    %s127 = sphi 0, %s129
    %s130 = sphi 0, %s127
    %s131 = sphi 0, %s130
    %s147 = sphi 0, %s131
    %s151 = sphi 0, %s151
    %s153 = sphi 0, %s151
    %s154 = sphi 0, %s153
    %s168 = sphi 0, %s154
    %s172 = sphi 0, %s172
    %s174 = sphi 0, %s172
    %s175 = sphi 0, %s174
    %s189 = sphi 0, %s175
    %s195 = sphi 0, %s197
    %s198 = sphi 0, %s195
    %s199 = sphi 0, %s198
    %s215 = sphi 0, %s199
  $region4: #{summarizer_forward.34} parent=0 // loop_header_branch
    %16 = sbr.rel (%p14) target = $region8
  $region5: #{summarizer_forward.34} parent=0 // loop_body
    %s18 = ssub.s32 %s13, 1
    %s19 = ssub.s32 %s13, 2
    %s20 = sadd.s32 %s13, 1
    %s21 = ssub.s32 %s13, %s20
    %p22 = scmp.eq.s32.totalorder %s21, 0
    %s24 = sadd.s32 %s23, 1
    %s25 = scalar_select %p22, %s23, %s24
    %p28 = pneg %p22
    %p29 = scmp.eq.s32.totalorder %s13, 1
    %p30 = por %p28, %p29
    %p31 = scmp.ne.s32.totalorder %s23, %s26
    %p32 = scmp.eq.s32.totalorder %s13, 0
    %p33 = por %p31, %p32
    %p34 = scmp.ne.s32.totalorder %s23, %s26
    %p35 = scmp.eq.s32.totalorder %s18, 1
    %p36 = por %p34, %p35
    %p37 = scmp.ne.s32.totalorder %s26, %s27
    %p38 = scmp.eq.s32.totalorder %s18, 0
    %p39 = por %p37, %p38
    %p40 = scmp.ne.s32.totalorder %s26, %s27
    %p41 = scmp.eq.s32.totalorder %s19, 1
    %p42 = por %p40, %p41
    %p44 = scmp.ne.s32.totalorder %s27, %s43
    %p45 = scmp.eq.s32.totalorder %s19, 0
    %p46 = por %p44, %p45
    %s47 = ssub.s32 %s13, %s20
    %p48 = scmp.eq.s32.totalorder %s47, 0
    %s50 = sadd.s32 %s49, 1
    %s51 = scalar_select %p48, %s49, %s50
    %p54 = pneg %p48
    %p55 = scmp.eq.s32.totalorder %s13, 1
    %p56 = por %p54, %p55
    %p57 = scmp.ne.s32.totalorder %s49, %s52
    %p58 = scmp.eq.s32.totalorder %s13, 0
    %p59 = por %p57, %p58
    %p60 = scmp.ne.s32.totalorder %s49, %s52
    %p61 = scmp.eq.s32.totalorder %s18, 1
    %p62 = por %p60, %p61
    %p63 = scmp.ne.s32.totalorder %s52, %s53
    %p64 = scmp.eq.s32.totalorder %s18, 0
    %p65 = por %p63, %p64
    %p66 = scmp.ne.s32.totalorder %s52, %s53
    %p67 = scmp.eq.s32.totalorder %s19, 1
    %p68 = por %p66, %p67
    %p70 = scmp.ne.s32.totalorder %s53, %s69
    %p71 = scmp.eq.s32.totalorder %s19, 0
    %p72 = por %p70, %p71
    %s73 = ssub.s32 %s13, %s20
    %p74 = scmp.eq.s32.totalorder %s73, 0
    %s76 = sadd.s32 %s75, 1
    %s77 = scalar_select %p74, %s75, %s76
    %p80 = pneg %p74
    %p81 = scmp.eq.s32.totalorder %s13, 1
    %p82 = por %p80, %p81
    %p83 = scmp.ne.s32.totalorder %s75, %s78
    %p84 = scmp.eq.s32.totalorder %s13, 0
    %p85 = por %p83, %p84
    %p86 = scmp.ne.s32.totalorder %s75, %s78
    %p87 = scmp.eq.s32.totalorder %s18, 1
    %p88 = por %p86, %p87
    %p89 = scmp.ne.s32.totalorder %s78, %s79
    %p90 = scmp.eq.s32.totalorder %s18, 0
    %p91 = por %p89, %p90
    %p92 = scmp.ne.s32.totalorder %s78, %s79
    %p93 = scmp.eq.s32.totalorder %s19, 1
    %p94 = por %p92, %p93
    %p96 = scmp.ne.s32.totalorder %s79, %s95
    %p97 = scmp.eq.s32.totalorder %s19, 0
    %p98 = por %p96, %p97
    %s99 = ssub.s32 %s13, %s20
    %p100 = scmp.eq.s32.totalorder %s99, 0
    %s102 = sadd.s32 %s101, 1
    %s103 = scalar_select %p100, %s101, %s102
    %p106 = pneg %p100
    %p107 = scmp.eq.s32.totalorder %s13, 1
    %p108 = por %p106, %p107
    %p109 = scmp.ne.s32.totalorder %s101, %s104
    %p110 = scmp.eq.s32.totalorder %s13, 0
    %p111 = por %p109, %p110
    %p112 = scmp.ne.s32.totalorder %s101, %s104
    %p113 = scmp.eq.s32.totalorder %s18, 1
    %p114 = por %p112, %p113
    %p115 = scmp.ne.s32.totalorder %s104, %s105
    %p116 = scmp.eq.s32.totalorder %s18, 0
    %p117 = por %p115, %p116
    %p118 = scmp.ne.s32.totalorder %s104, %s105
    %p119 = scmp.eq.s32.totalorder %s19, 1
    %p120 = por %p118, %p119
    %p122 = scmp.ne.s32.totalorder %s105, %s121
    %p123 = scmp.eq.s32.totalorder %s19, 0
    %p124 = por %p122, %p123
    %s125 = ssub.s32 %s13, %s20
    %p126 = scmp.eq.s32.totalorder %s125, 0
    %s128 = sadd.s32 %s127, 1
    %s129 = scalar_select %p126, %s127, %s128
    %p132 = pneg %p126
    %p133 = scmp.eq.s32.totalorder %s13, 1
    %p134 = por %p132, %p133
    %p135 = scmp.ne.s32.totalorder %s127, %s130
    %p136 = scmp.eq.s32.totalorder %s13, 0
    %p137 = por %p135, %p136
    %p138 = scmp.ne.s32.totalorder %s127, %s130
    %p139 = scmp.eq.s32.totalorder %s18, 1
    %p140 = por %p138, %p139
    %p141 = scmp.ne.s32.totalorder %s130, %s131
    %p142 = scmp.eq.s32.totalorder %s18, 0
    %p143 = por %p141, %p142
    %p144 = scmp.ne.s32.totalorder %s130, %s131
    %p145 = scmp.eq.s32.totalorder %s19, 1
    %p146 = por %p144, %p145
    %p148 = scmp.ne.s32.totalorder %s131, %s147
    %p149 = scmp.eq.s32.totalorder %s19, 0
    %p150 = por %p148, %p149
    %s152 = sadd.s32 %s151, 1
    %p155 = scmp.eq.s32.totalorder %s13, 1
    %p156 = scmp.ne.s32.totalorder %s151, %s153
    %p157 = scmp.eq.s32.totalorder %s13, 0
    %p158 = por %p156, %p157
    %p159 = scmp.ne.s32.totalorder %s151, %s153
    %p160 = scmp.eq.s32.totalorder %s18, 1
    %p161 = por %p159, %p160
    %p162 = scmp.ne.s32.totalorder %s153, %s154
    %p163 = scmp.eq.s32.totalorder %s18, 0
    %p164 = por %p162, %p163
    %p165 = scmp.ne.s32.totalorder %s153, %s154
    %p166 = scmp.eq.s32.totalorder %s19, 1
    %p167 = por %p165, %p166
    %p169 = scmp.ne.s32.totalorder %s154, %s168
    %p170 = scmp.eq.s32.totalorder %s19, 0
    %p171 = por %p169, %p170
    %s173 = sadd.s32 %s172, 1
    %p176 = scmp.eq.s32.totalorder %s13, 1
    %p177 = scmp.ne.s32.totalorder %s172, %s174
    %p178 = scmp.eq.s32.totalorder %s13, 0
    %p179 = por %p177, %p178
    %p180 = scmp.ne.s32.totalorder %s172, %s174
    %p181 = scmp.eq.s32.totalorder %s18, 1
    %p182 = por %p180, %p181
    %p183 = scmp.ne.s32.totalorder %s174, %s175
    %p184 = scmp.eq.s32.totalorder %s18, 0
    %p185 = por %p183, %p184
    %p186 = scmp.ne.s32.totalorder %s174, %s175
    %p187 = scmp.eq.s32.totalorder %s19, 1
    %p188 = por %p186, %p187
    %p190 = scmp.ne.s32.totalorder %s175, %s189
    %p191 = scmp.eq.s32.totalorder %s19, 0
    %p192 = por %p190, %p191
    %s193 = ssub.s32 %s13, %s20
    %p194 = scmp.eq.s32.totalorder %s193, 0
    %s196 = sadd.s32 %s195, 1
    %s197 = scalar_select %p194, %s195, %s196
    %p200 = pneg %p194
    %p201 = scmp.eq.s32.totalorder %s13, 1
    %p202 = por %p200, %p201
    %p203 = scmp.ne.s32.totalorder %s195, %s198
    %p204 = scmp.eq.s32.totalorder %s13, 0
    %p205 = por %p203, %p204
    %p206 = scmp.ne.s32.totalorder %s195, %s198
    %p207 = scmp.eq.s32.totalorder %s18, 1
    %p208 = por %p206, %p207
    %p209 = scmp.ne.s32.totalorder %s198, %s199
    %p210 = scmp.eq.s32.totalorder %s18, 0
    %p211 = por %p209, %p210
    %p212 = scmp.ne.s32.totalorder %s198, %s199
    %p213 = scmp.eq.s32.totalorder %s19, 1
    %p214 = por %p212, %p213
    %p216 = scmp.ne.s32.totalorder %s199, %s215
    %p217 = scmp.eq.s32.totalorder %s19, 0
    %p218 = por %p216, %p217
    %p219 = scmp.le.s32.totalorder 1, %s13
    %p220 = scmp.lt.s32.totalorder %s13, 3
    %p221 = pnand %p219, %p220
    %p222 = pneg %p221
    // Predicated region
    $region9: #{summarizer_forward.34} parent=5 // pred_check
      _
    $region10: #{summarizer_forward.34} parent=5 // pred_check_branch
      %224 = sbr.rel (%p221) target = $region12
    $region11: #{summarizer_forward.34} parent=5 // pred_region
      %s225 = ssub.s32 %s13, 1
      // Predicated region
      $region13: #{summarizer_forward.34} parent=11 // pred_check
        %p226 = pneg %p164
      $region14: #{summarizer_forward.34} parent=11 // pred_check_branch
        %228 = sbr.rel (%p226) target = $region16
      $region15: #{summarizer_forward.34} parent=11 // pred_region
        _
      $region16: #{summarizer_forward.34} parent=11 // pred_fallthru
        _
      // Predicated region
      $region17: #{summarizer_forward.34} parent=11 // pred_check
        %p229 = pneg %p185
      $region18: #{summarizer_forward.34} parent=11 // pred_check_branch
        %231 = sbr.rel (%p229) target = $region20
      $region19: #{summarizer_forward.34} parent=11 // pred_region
        _
      $region20: #{summarizer_forward.34} parent=11 // pred_fallthru
        _
    $region12: #{summarizer_forward.34} parent=5 // pred_fallthru
      _
    %p232 = scmp.lt.s32.totalorder %s13, 2
    // Predicated region
    $region21: #{summarizer_forward.34} parent=5 // pred_check
      %p233 = pneg %p232
    $region22: #{summarizer_forward.34} parent=5 // pred_check_branch
      %235 = sbr.rel (%p233) target = $region24
    $region23: #{summarizer_forward.34} parent=5 // pred_region
      // Predicated region
      $region25: #{summarizer_forward.34} parent=23 // pred_check
        %p236 = pneg %p33
      $region26: #{summarizer_forward.34} parent=23 // pred_check_branch
        %238 = sbr.rel (%p236) target = $region28
      $region27: #{summarizer_forward.34} parent=23 // pred_region
        %p239 = scmp.lt.s32.totalorder %s13, 1
        %s240 = scalar_select %p239, %s13, 1
        %s241 = smul.addr %s240, 4
        %s242 = smul.addr %s241, 4
        %s243 = scalar_lea.vmem %s0, %s242
      $region28: #{summarizer_forward.34} parent=23 // pred_fallthru
        _
      // Predicated region
      $region29: #{summarizer_forward.34} parent=23 // pred_check
        %p244 = pneg %p59
      $region30: #{summarizer_forward.34} parent=23 // pred_check_branch
        %246 = sbr.rel (%p244) target = $region32
      $region31: #{summarizer_forward.34} parent=23 // pred_region
        %p247 = scmp.lt.s32.totalorder %s13, 1
        %s248 = scalar_select %p247, %s13, 1
        %s249 = smul.addr %s248, 64
        %s250 = smul.addr %s249, 4
        %s251 = scalar_lea.vmem %s1, %s250
      $region32: #{summarizer_forward.34} parent=23 // pred_fallthru
        _
      // Predicated region
      $region33: #{summarizer_forward.34} parent=23 // pred_check
        %p252 = pneg %p85
      $region34: #{summarizer_forward.34} parent=23 // pred_check_branch
        %254 = sbr.rel (%p252) target = $region36
      $region35: #{summarizer_forward.34} parent=23 // pred_region
        %p255 = scmp.lt.s32.totalorder %s13, 1
        %s256 = scalar_select %p255, %s13, 1
        %s257 = smul.addr %s256, 64
        %s258 = smul.addr %s257, 4
        %s259 = scalar_lea.vmem %s2, %s258
      $region36: #{summarizer_forward.34} parent=23 // pred_fallthru
        _
      // Predicated region
      $region37: #{summarizer_forward.34} parent=23 // pred_check
        %p260 = pneg %p111
      $region38: #{summarizer_forward.34} parent=23 // pred_check_branch
        %262 = sbr.rel (%p260) target = $region40
      $region39: #{summarizer_forward.34} parent=23 // pred_region
        %p263 = scmp.lt.s32.totalorder %s13, 1
        %s264 = scalar_select %p263, %s13, 1
        %s265 = scalar_lea.vmem %s3, %s264
      $region40: #{summarizer_forward.34} parent=23 // pred_fallthru
        _
      // Predicated region
      $region41: #{summarizer_forward.34} parent=23 // pred_check
        %p266 = pneg %p137
      $region42: #{summarizer_forward.34} parent=23 // pred_check_branch
        %268 = sbr.rel (%p266) target = $region44
      $region43: #{summarizer_forward.34} parent=23 // pred_region
        %p269 = scmp.lt.s32.totalorder %s13, 1
        %s270 = scalar_select %p269, %s13, 1
        %s271 = smul.addr %s270, 8
        %s272 = scalar_lea.vmem %s4, %s271
      $region44: #{summarizer_forward.34} parent=23 // pred_fallthru
        _
    $region24: #{summarizer_forward.34} parent=5 // pred_fallthru
      _
    %p273 = scmp.le.s32.totalorder 1, %s13
    %p274 = scmp.lt.s32.totalorder %s13, 3
    %p275 = pnand %p273, %p274
    %p276 = pneg %p275
    // Predicated region
    $region45: #{summarizer_forward.34} parent=5 // pred_check
      _
    $region46: #{summarizer_forward.34} parent=5 // pred_check_branch
      %278 = sbr.rel (%p275) target = $region48
    $region47: #{summarizer_forward.34} parent=5 // pred_region
      %s279 = ssub.s32 %s13, 1
      %p280 = scmp.lt.s32.totalorder %s18, 1
      %s281 = scalar_select %p280, %s18, 1
      %s282 = smul.addr %s281, 4
      %s283 = smul.addr %s282, 4
      %s284 = scalar_lea.vmem %s0, %s283
      %p285 = pneg %p39
      %p286 = pneg %p36
      %p287 = scmp.lt.s32.totalorder %s18, 1
      %s288 = scalar_select %p287, %s18, 1
      %s289 = smul.addr %s288, 64
      %s290 = smul.addr %s289, 4
      %s291 = scalar_lea.vmem %s1, %s290
      %p292 = pneg %p65
      %p293 = pneg %p62
      %p294 = scmp.lt.s32.totalorder %s18, 1
      %s295 = scalar_select %p294, %s18, 1
      %s296 = smul.addr %s295, 64
      %s297 = smul.addr %s296, 4
      %s298 = scalar_lea.vmem %s2, %s297
      %p299 = pneg %p91
      %p300 = pneg %p88
      %p301 = scmp.lt.s32.totalorder %s18, 1
      %s302 = scalar_select %p301, %s18, 1
      %s303 = scalar_lea.vmem %s3, %s302
      %p304 = pneg %p117
      %p305 = pneg %p114
      %p306 = scmp.lt.s32.totalorder %s18, 1
      %s307 = scalar_select %p306, %s18, 1
      %s308 = smul.addr %s307, 8
      %s309 = scalar_lea.vmem %s4, %s308
      %p310 = pneg %p143
      %p311 = pneg %p140
      %p312 = pneg %p164
      %p313 = pneg %p161
      %p314 = pneg %p185
      %p315 = pneg %p182
      %p316 = pneg %p211
      %p317 = pneg %p208
      %p318 = scmp.lt.s32.totalorder %s18, 1
      %s319 = scalar_select %p318, %s18, 1
      %s320 = smul.addr %s319, 8
      %s321 = scalar_lea.vmem %s7, %s320
      %p322 = scmp.lt.s32.totalorder %s18, 1
      %s323 = scalar_select %p322, %s18, 1
      %s324 = smul.addr %s323, 4
      %s325 = smul.addr %s324, 4
      %s326 = scalar_lea.vmem %s0, %s325
      %p327 = scmp.lt.s32.totalorder %s18, 1
      %s328 = scalar_select %p327, %s18, 1
      %s329 = smul.addr %s328, 64
      %s330 = smul.addr %s329, 4
      %s331 = scalar_lea.vmem %s1, %s330
      %p332 = scmp.lt.s32.totalorder %s18, 1
      %s333 = scalar_select %p332, %s18, 1
      %s334 = smul.addr %s333, 64
      %s335 = smul.addr %s334, 4
      %s336 = scalar_lea.vmem %s2, %s335
      %p337 = scmp.lt.s32.totalorder %s18, 1
      %s338 = scalar_select %p337, %s18, 1
      %s339 = scalar_lea.vmem %s3, %s338
      %p340 = scmp.lt.s32.totalorder %s18, 1
      %s341 = scalar_select %p340, %s18, 1
      %s342 = smul.addr %s341, 8
      %s343 = scalar_lea.vmem %s4, %s342
      %p344 = scmp.lt.s32.totalorder %s18, 1
      %s345 = scalar_select %p344, %s18, 1
      %s346 = smul.addr %s345, 8
      %s347 = scalar_lea.vmem %s7, %s346
      %v349 = vld [vmem:[%s326] sm:$0xf]
      %v350 = vld [vmem:[%s326 + $0x4] sm:$0xf]
      %v351 = vld [vmem:[%s326 + $0x8] sm:$0xf]
      %v352 = vld [vmem:[%s326 + $0xc] sm:$0xf]
      %v353 = vld [vmem:[%s331] sm:$0xf]
      %v354 = vld [vmem:[%s331 + $0x4] sm:$0xf]
      %v355 = vld [vmem:[%s331 + $0x8] sm:$0xf]
      %v356 = vld [vmem:[%s331 + $0xc] sm:$0xf]
      %v357 = vld [vmem:[%s331 + $0x10] sm:$0xf]
      %v358 = vld [vmem:[%s331 + $0x14] sm:$0xf]
      %v359 = vld [vmem:[%s331 + $0x18] sm:$0xf]
      %v360 = vld [vmem:[%s331 + $0x1c] sm:$0xf]
      %v361 = vld [vmem:[%s331 + $0x20] sm:$0xf]
      %v362 = vld [vmem:[%s331 + $0x24] sm:$0xf]
      %v363 = vld [vmem:[%s331 + $0x28] sm:$0xf]
      %v364 = vld [vmem:[%s331 + $0x2c] sm:$0xf]
      %v365 = vld [vmem:[%s331 + $0x30] sm:$0xf]
      %v366 = vld [vmem:[%s331 + $0x34] sm:$0xf]
      %v367 = vld [vmem:[%s331 + $0x38] sm:$0xf]
      %v368 = vld [vmem:[%s331 + $0x3c] sm:$0xf]
      %v369 = vld [vmem:[%s331 + $0x40] sm:$0xf]
      %v370 = vld [vmem:[%s331 + $0x44] sm:$0xf]
      %v371 = vld [vmem:[%s331 + $0x48] sm:$0xf]
      %v372 = vld [vmem:[%s331 + $0x4c] sm:$0xf]
      %v373 = vld [vmem:[%s331 + $0x50] sm:$0xf]
      %v374 = vld [vmem:[%s331 + $0x54] sm:$0xf]
      %v375 = vld [vmem:[%s331 + $0x58] sm:$0xf]
      %v376 = vld [vmem:[%s331 + $0x5c] sm:$0xf]
      %v377 = vld [vmem:[%s331 + $0x60] sm:$0xf]
      %v378 = vld [vmem:[%s331 + $0x64] sm:$0xf]
      %v379 = vld [vmem:[%s331 + $0x68] sm:$0xf]
      %v380 = vld [vmem:[%s331 + $0x6c] sm:$0xf]
      %v381 = vld [vmem:[%s331 + $0x70] sm:$0xf]
      %v382 = vld [vmem:[%s331 + $0x74] sm:$0xf]
      %v383 = vld [vmem:[%s331 + $0x78] sm:$0xf]
      %v384 = vld [vmem:[%s331 + $0x7c] sm:$0xf]
      %v385 = vld [vmem:[%s331 + $0x80] sm:$0xf]
      %v386 = vld [vmem:[%s331 + $0x84] sm:$0xf]
      %v387 = vld [vmem:[%s331 + $0x88] sm:$0xf]
      %v388 = vld [vmem:[%s331 + $0x8c] sm:$0xf]
      %v389 = vld [vmem:[%s331 + $0x90] sm:$0xf]
      %v390 = vld [vmem:[%s331 + $0x94] sm:$0xf]
      %v391 = vld [vmem:[%s331 + $0x98] sm:$0xf]
      %v392 = vld [vmem:[%s331 + $0x9c] sm:$0xf]
      %v393 = vld [vmem:[%s331 + $0xa0] sm:$0xf]
      %v394 = vld [vmem:[%s331 + $0xa4] sm:$0xf]
      %v395 = vld [vmem:[%s331 + $0xa8] sm:$0xf]
      %v396 = vld [vmem:[%s331 + $0xac] sm:$0xf]
      %v397 = vld [vmem:[%s331 + $0xb0] sm:$0xf]
      %v398 = vld [vmem:[%s331 + $0xb4] sm:$0xf]
      %v399 = vld [vmem:[%s331 + $0xb8] sm:$0xf]
      %v400 = vld [vmem:[%s331 + $0xbc] sm:$0xf]
      %v401 = vld [vmem:[%s331 + $0xc0] sm:$0xf]
      %v402 = vld [vmem:[%s331 + $0xc4] sm:$0xf]
      %v403 = vld [vmem:[%s331 + $0xc8] sm:$0xf]
      %v404 = vld [vmem:[%s331 + $0xcc] sm:$0xf]
      %v405 = vld [vmem:[%s331 + $0xd0] sm:$0xf]
      %v406 = vld [vmem:[%s331 + $0xd4] sm:$0xf]
      %v407 = vld [vmem:[%s331 + $0xd8] sm:$0xf]
      %v408 = vld [vmem:[%s331 + $0xdc] sm:$0xf]
      %v409 = vld [vmem:[%s331 + $0xe0] sm:$0xf]
      %v410 = vld [vmem:[%s331 + $0xe4] sm:$0xf]
      %v411 = vld [vmem:[%s331 + $0xe8] sm:$0xf]
      %v412 = vld [vmem:[%s331 + $0xec] sm:$0xf]
      %v413 = vld [vmem:[%s331 + $0xf0] sm:$0xf]
      %v414 = vld [vmem:[%s331 + $0xf4] sm:$0xf]
      %v415 = vld [vmem:[%s331 + $0xf8] sm:$0xf]
      %v416 = vld [vmem:[%s331 + $0xfc] sm:$0xf]
      %v417 = vld [vmem:[%s336] sm:$0xf]
      %v418 = vld [vmem:[%s336 + $0x4] sm:$0xf]
      %v419 = vld [vmem:[%s336 + $0x8] sm:$0xf]
      %v420 = vld [vmem:[%s336 + $0xc] sm:$0xf]
      %v421 = vld [vmem:[%s336 + $0x10] sm:$0xf]
      %v422 = vld [vmem:[%s336 + $0x14] sm:$0xf]
      %v423 = vld [vmem:[%s336 + $0x18] sm:$0xf]
      %v424 = vld [vmem:[%s336 + $0x1c] sm:$0xf]
      %v425 = vld [vmem:[%s336 + $0x20] sm:$0xf]
      %v426 = vld [vmem:[%s336 + $0x24] sm:$0xf]
      %v427 = vld [vmem:[%s336 + $0x28] sm:$0xf]
      %v428 = vld [vmem:[%s336 + $0x2c] sm:$0xf]
      %v429 = vld [vmem:[%s336 + $0x30] sm:$0xf]
      %v430 = vld [vmem:[%s336 + $0x34] sm:$0xf]
      %v431 = vld [vmem:[%s336 + $0x38] sm:$0xf]
      %v432 = vld [vmem:[%s336 + $0x3c] sm:$0xf]
      %v433 = vld [vmem:[%s336 + $0x40] sm:$0xf]
      %v434 = vld [vmem:[%s336 + $0x44] sm:$0xf]
      %v435 = vld [vmem:[%s336 + $0x48] sm:$0xf]
      %v436 = vld [vmem:[%s336 + $0x4c] sm:$0xf]
      %v437 = vld [vmem:[%s336 + $0x50] sm:$0xf]
      %v438 = vld [vmem:[%s336 + $0x54] sm:$0xf]
      %v439 = vld [vmem:[%s336 + $0x58] sm:$0xf]
      %v440 = vld [vmem:[%s336 + $0x5c] sm:$0xf]
      %v441 = vld [vmem:[%s336 + $0x60] sm:$0xf]
      %v442 = vld [vmem:[%s336 + $0x64] sm:$0xf]
      %v443 = vld [vmem:[%s336 + $0x68] sm:$0xf]
      %v444 = vld [vmem:[%s336 + $0x6c] sm:$0xf]
      %v445 = vld [vmem:[%s336 + $0x70] sm:$0xf]
      %v446 = vld [vmem:[%s336 + $0x74] sm:$0xf]
      %v447 = vld [vmem:[%s336 + $0x78] sm:$0xf]
      %v448 = vld [vmem:[%s336 + $0x7c] sm:$0xf]
      %v449 = vld [vmem:[%s336 + $0x80] sm:$0xf]
      %v450 = vld [vmem:[%s336 + $0x84] sm:$0xf]
      %v451 = vld [vmem:[%s336 + $0x88] sm:$0xf]
      %v452 = vld [vmem:[%s336 + $0x8c] sm:$0xf]
      %v453 = vld [vmem:[%s336 + $0x90] sm:$0xf]
      %v454 = vld [vmem:[%s336 + $0x94] sm:$0xf]
      %v455 = vld [vmem:[%s336 + $0x98] sm:$0xf]
      %v456 = vld [vmem:[%s336 + $0x9c] sm:$0xf]
      %v457 = vld [vmem:[%s336 + $0xa0] sm:$0xf]
      %v458 = vld [vmem:[%s336 + $0xa4] sm:$0xf]
      %v459 = vld [vmem:[%s336 + $0xa8] sm:$0xf]
      %v460 = vld [vmem:[%s336 + $0xac] sm:$0xf]
      %v461 = vld [vmem:[%s336 + $0xb0] sm:$0xf]
      %v462 = vld [vmem:[%s336 + $0xb4] sm:$0xf]
      %v463 = vld [vmem:[%s336 + $0xb8] sm:$0xf]
      %v464 = vld [vmem:[%s336 + $0xbc] sm:$0xf]
      %v465 = vld [vmem:[%s336 + $0xc0] sm:$0xf]
      %v466 = vld [vmem:[%s336 + $0xc4] sm:$0xf]
      %v467 = vld [vmem:[%s336 + $0xc8] sm:$0xf]
      %v468 = vld [vmem:[%s336 + $0xcc] sm:$0xf]
      %v469 = vld [vmem:[%s336 + $0xd0] sm:$0xf]
      %v470 = vld [vmem:[%s336 + $0xd4] sm:$0xf]
      %v471 = vld [vmem:[%s336 + $0xd8] sm:$0xf]
      %v472 = vld [vmem:[%s336 + $0xdc] sm:$0xf]
      %v473 = vld [vmem:[%s336 + $0xe0] sm:$0xf]
      %v474 = vld [vmem:[%s336 + $0xe4] sm:$0xf]
      %v475 = vld [vmem:[%s336 + $0xe8] sm:$0xf]
      %v476 = vld [vmem:[%s336 + $0xec] sm:$0xf]
      %v477 = vld [vmem:[%s336 + $0xf0] sm:$0xf]
      %v478 = vld [vmem:[%s336 + $0xf4] sm:$0xf]
      %v479 = vld [vmem:[%s336 + $0xf8] sm:$0xf]
      %v480 = vld [vmem:[%s336 + $0xfc] sm:$0xf]
      %v497 = vunpack.c.l.b16 %v353
      %v498 = vunpack.c.l.b16 %v354
      %v499 = vunpack.c.l.b16 %v355
      %v500 = vunpack.c.l.b16 %v356
      %v501 = vunpack.c.l.b16 %v357
      %v502 = vunpack.c.l.b16 %v358
      %v503 = vunpack.c.l.b16 %v359
      %v504 = vunpack.c.l.b16 %v360
      %v505 = vunpack.c.l.b16 %v361
      %v506 = vunpack.c.l.b16 %v362
      %v507 = vunpack.c.l.b16 %v363
      %v508 = vunpack.c.l.b16 %v364
      %v509 = vunpack.c.l.b16 %v365
      %v510 = vunpack.c.l.b16 %v366
      %v511 = vunpack.c.l.b16 %v367
      %v512 = vunpack.c.l.b16 %v368
      %v513 = vpack.c.b16 %v498, %v497
      %v514 = vpack.c.b16 %v500, %v499
      %v515 = vpack.c.b16 %v502, %v501
      %v516 = vpack.c.b16 %v504, %v503
      %v517 = vpack.c.b16 %v506, %v505
      %v518 = vpack.c.b16 %v508, %v507
      %v519 = vpack.c.b16 %v510, %v509
      %v520 = vpack.c.b16 %v512, %v511
      %vm521 = vcmask 261120
      %v523 = vsel %vm521, %v349, 0
      %v526 = vsel %vm521, %v513, 0
      %v529 = vsel %vm521, %v514, 0
      %v532 = vsel %vm521, %v515, 0
      %v535 = vsel %vm521, %v516, 0
      %v538 = vsel %vm521, %v517, 0
      %v541 = vsel %vm521, %v518, 0
      %v544 = vsel %vm521, %v519, 0
      %v547 = vsel %vm521, %v520, 0
      %549 = vmatprep.subr.bf16.mxu0 0
      %550 = vmatpush1.bf16.xpose.msra.mxu0 %v547
      %551 = vmatprep.subr.bf16.mxu0 0
      %552 = vmatpush1.bf16.xpose.msra.mxu0 %v544
      %553 = vmatprep.subr.bf16.mxu0 0
      %554 = vmatpush1.bf16.xpose.msra.mxu0 %v541
      %555 = vmatprep.subr.bf16.mxu0 0
      %556 = vmatpush1.bf16.xpose.msra.mxu0 %v538
      %557 = vmatprep.subr.bf16.mxu0 0
      %558 = vmatpush1.bf16.xpose.msra.mxu0 %v535
      %559 = vmatprep.subr.bf16.mxu0 0
      %560 = vmatpush1.bf16.xpose.msra.mxu0 %v532
      %561 = vmatprep.subr.bf16.mxu0 0
      %562 = vmatpush1.bf16.xpose.msra.mxu0 %v529
      %563 = vmatprep.subr.bf16.mxu0 0
      %564 = vmatpush1.bf16.xpose.msra.mxu0 %v526
      %565 = vmatprep.subr.bf16.mxu0 0
      %566 = vmatpush2.bf16.xpose.msra.mxu0 0
      %567 = vmatprep.subr.bf16.mxu0 0
      %568 = vmatpush2.bf16.xpose.msra.mxu0 0
      %569 = vmatprep.subr.bf16.mxu0 0
      %570 = vmatpush2.bf16.xpose.msra.mxu0 0
      %571 = vmatprep.subr.bf16.mxu0 0
      %572 = vmatpush2.bf16.xpose.msra.mxu0 0
      %573 = vmatprep.subr.bf16.mxu0 0
      %574 = vmatpush2.bf16.xpose.msra.mxu0 0
      %575 = vmatprep.subr.bf16.mxu0 0
      %576 = vmatpush2.bf16.xpose.msra.mxu0 0
      %577 = vmatprep.subr.bf16.mxu0 0
      %578 = vmatpush2.bf16.xpose.msra.mxu0 0
      %579 = vmatprep.subr.bf16.mxu0 0
      %580 = vmatpush2.bf16.xpose.msra.mxu0 0
      %581 = vmatprep.mubr.bf16.mxu0 0
      %582 = vmatmul.mubr.bf16.gmra.mxu0 %v523
      %v583 = vpop.f32.mrf.mxu0
      %v584 = vadd.f32 0.0, %v583
      %v585 = vpop.f32.mrf.mxu0
      %v586 = vpop.f32.mrf.mxu0
      %v587 = vpop.f32.mrf.mxu0
      %588 = vdwg.mxu0
      %v605 = vunpack.c.l.b16 %v369
      %v606 = vunpack.c.l.b16 %v370
      %v607 = vunpack.c.l.b16 %v371
      %v608 = vunpack.c.l.b16 %v372
      %v609 = vunpack.c.l.b16 %v373
      %v610 = vunpack.c.l.b16 %v374
      %v611 = vunpack.c.l.b16 %v375
      %v612 = vunpack.c.l.b16 %v376
      %v613 = vunpack.c.l.b16 %v377
      %v614 = vunpack.c.l.b16 %v378
      %v615 = vunpack.c.l.b16 %v379
      %v616 = vunpack.c.l.b16 %v380
      %v617 = vunpack.c.l.b16 %v381
      %v618 = vunpack.c.l.b16 %v382
      %v619 = vunpack.c.l.b16 %v383
      %v620 = vunpack.c.l.b16 %v384
      %v621 = vpack.c.b16 %v606, %v605
      %v622 = vpack.c.b16 %v608, %v607
      %v623 = vpack.c.b16 %v610, %v609
      %v624 = vpack.c.b16 %v612, %v611
      %v625 = vpack.c.b16 %v614, %v613
      %v626 = vpack.c.b16 %v616, %v615
      %v627 = vpack.c.b16 %v618, %v617
      %v628 = vpack.c.b16 %v620, %v619
      %v630 = vsel %vm521, %v350, 0
      %v633 = vsel %vm521, %v621, 0
      %v636 = vsel %vm521, %v622, 0
      %v639 = vsel %vm521, %v623, 0
      %v642 = vsel %vm521, %v624, 0
      %v645 = vsel %vm521, %v625, 0
      %v648 = vsel %vm521, %v626, 0
      %v651 = vsel %vm521, %v627, 0
      %v654 = vsel %vm521, %v628, 0
      %656 = vmatprep.subr.bf16.mxu0 0
      %657 = vmatpush1.bf16.xpose.msra.mxu0 %v654
      %658 = vmatprep.subr.bf16.mxu0 0
      %659 = vmatpush1.bf16.xpose.msra.mxu0 %v651
      %660 = vmatprep.subr.bf16.mxu0 0
      %661 = vmatpush1.bf16.xpose.msra.mxu0 %v648
      %662 = vmatprep.subr.bf16.mxu0 0
      %663 = vmatpush1.bf16.xpose.msra.mxu0 %v645
      %664 = vmatprep.subr.bf16.mxu0 0
      %665 = vmatpush1.bf16.xpose.msra.mxu0 %v642
      %666 = vmatprep.subr.bf16.mxu0 0
      %667 = vmatpush1.bf16.xpose.msra.mxu0 %v639
      %668 = vmatprep.subr.bf16.mxu0 0
      %669 = vmatpush1.bf16.xpose.msra.mxu0 %v636
      %670 = vmatprep.subr.bf16.mxu0 0
      %671 = vmatpush1.bf16.xpose.msra.mxu0 %v633
      %672 = vmatprep.subr.bf16.mxu0 0
      %673 = vmatpush2.bf16.xpose.msra.mxu0 0
      %674 = vmatprep.subr.bf16.mxu0 0
      %675 = vmatpush2.bf16.xpose.msra.mxu0 0
      %676 = vmatprep.subr.bf16.mxu0 0
      %677 = vmatpush2.bf16.xpose.msra.mxu0 0
      %678 = vmatprep.subr.bf16.mxu0 0
      %679 = vmatpush2.bf16.xpose.msra.mxu0 0
      %680 = vmatprep.subr.bf16.mxu0 0
      %681 = vmatpush2.bf16.xpose.msra.mxu0 0
      %682 = vmatprep.subr.bf16.mxu0 0
      %683 = vmatpush2.bf16.xpose.msra.mxu0 0
      %684 = vmatprep.subr.bf16.mxu0 0
      %685 = vmatpush2.bf16.xpose.msra.mxu0 0
      %686 = vmatprep.subr.bf16.mxu0 0
      %687 = vmatpush2.bf16.xpose.msra.mxu0 0
      %688 = vmatprep.mubr.bf16.mxu0 0
      %689 = vmatmul.mubr.bf16.gmra.mxu0 %v630
      %v690 = vpop.f32.mrf.mxu0
      %v691 = vadd.f32 0.0, %v690
      %v692 = vpop.f32.mrf.mxu0
      %v693 = vpop.f32.mrf.mxu0
      %v694 = vpop.f32.mrf.mxu0
      %695 = vdwg.mxu0
      %v712 = vunpack.c.l.b16 %v385
      %v713 = vunpack.c.l.b16 %v386
      %v714 = vunpack.c.l.b16 %v387
      %v715 = vunpack.c.l.b16 %v388
      %v716 = vunpack.c.l.b16 %v389
      %v717 = vunpack.c.l.b16 %v390
      %v718 = vunpack.c.l.b16 %v391
      %v719 = vunpack.c.l.b16 %v392
      %v720 = vunpack.c.l.b16 %v393
      %v721 = vunpack.c.l.b16 %v394
      %v722 = vunpack.c.l.b16 %v395
      %v723 = vunpack.c.l.b16 %v396
      %v724 = vunpack.c.l.b16 %v397
      %v725 = vunpack.c.l.b16 %v398
      %v726 = vunpack.c.l.b16 %v399
      %v727 = vunpack.c.l.b16 %v400
      %v728 = vpack.c.b16 %v713, %v712
      %v729 = vpack.c.b16 %v715, %v714
      %v730 = vpack.c.b16 %v717, %v716
      %v731 = vpack.c.b16 %v719, %v718
      %v732 = vpack.c.b16 %v721, %v720
      %v733 = vpack.c.b16 %v723, %v722
      %v734 = vpack.c.b16 %v725, %v724
      %v735 = vpack.c.b16 %v727, %v726
      %v737 = vsel %vm521, %v351, 0
      %v740 = vsel %vm521, %v728, 0
      %v743 = vsel %vm521, %v729, 0
      %v746 = vsel %vm521, %v730, 0
      %v749 = vsel %vm521, %v731, 0
      %v752 = vsel %vm521, %v732, 0
      %v755 = vsel %vm521, %v733, 0
      %v758 = vsel %vm521, %v734, 0
      %v761 = vsel %vm521, %v735, 0
      %763 = vmatprep.subr.bf16.mxu0 0
      %764 = vmatpush1.bf16.xpose.msra.mxu0 %v761
      %765 = vmatprep.subr.bf16.mxu0 0
      %766 = vmatpush1.bf16.xpose.msra.mxu0 %v758
      %767 = vmatprep.subr.bf16.mxu0 0
      %768 = vmatpush1.bf16.xpose.msra.mxu0 %v755
      %769 = vmatprep.subr.bf16.mxu0 0
      %770 = vmatpush1.bf16.xpose.msra.mxu0 %v752
      %771 = vmatprep.subr.bf16.mxu0 0
      %772 = vmatpush1.bf16.xpose.msra.mxu0 %v749
      %773 = vmatprep.subr.bf16.mxu0 0
      %774 = vmatpush1.bf16.xpose.msra.mxu0 %v746
      %775 = vmatprep.subr.bf16.mxu0 0
      %776 = vmatpush1.bf16.xpose.msra.mxu0 %v743
      %777 = vmatprep.subr.bf16.mxu0 0
      %778 = vmatpush1.bf16.xpose.msra.mxu0 %v740
      %779 = vmatprep.subr.bf16.mxu0 0
      %780 = vmatpush2.bf16.xpose.msra.mxu0 0
      %781 = vmatprep.subr.bf16.mxu0 0
      %782 = vmatpush2.bf16.xpose.msra.mxu0 0
      %783 = vmatprep.subr.bf16.mxu0 0
      %784 = vmatpush2.bf16.xpose.msra.mxu0 0
      %785 = vmatprep.subr.bf16.mxu0 0
      %786 = vmatpush2.bf16.xpose.msra.mxu0 0
      %787 = vmatprep.subr.bf16.mxu0 0
      %788 = vmatpush2.bf16.xpose.msra.mxu0 0
      %789 = vmatprep.subr.bf16.mxu0 0
      %790 = vmatpush2.bf16.xpose.msra.mxu0 0
      %791 = vmatprep.subr.bf16.mxu0 0
      %792 = vmatpush2.bf16.xpose.msra.mxu0 0
      %793 = vmatprep.subr.bf16.mxu0 0
      %794 = vmatpush2.bf16.xpose.msra.mxu0 0
      %795 = vmatprep.mubr.bf16.mxu0 0
      %796 = vmatmul.mubr.bf16.gmra.mxu0 %v737
      %v797 = vpop.f32.mrf.mxu0
      %v798 = vadd.f32 0.0, %v797
      %v799 = vpop.f32.mrf.mxu0
      %v800 = vpop.f32.mrf.mxu0
      %v801 = vpop.f32.mrf.mxu0
      %802 = vdwg.mxu0
      %v819 = vunpack.c.l.b16 %v401
      %v820 = vunpack.c.l.b16 %v402
      %v821 = vunpack.c.l.b16 %v403
      %v822 = vunpack.c.l.b16 %v404
      %v823 = vunpack.c.l.b16 %v405
      %v824 = vunpack.c.l.b16 %v406
      %v825 = vunpack.c.l.b16 %v407
      %v826 = vunpack.c.l.b16 %v408
      %v827 = vunpack.c.l.b16 %v409
      %v828 = vunpack.c.l.b16 %v410
      %v829 = vunpack.c.l.b16 %v411
      %v830 = vunpack.c.l.b16 %v412
      %v831 = vunpack.c.l.b16 %v413
      %v832 = vunpack.c.l.b16 %v414
      %v833 = vunpack.c.l.b16 %v415
      %v834 = vunpack.c.l.b16 %v416
      %v835 = vpack.c.b16 %v820, %v819
      %v836 = vpack.c.b16 %v822, %v821
      %v837 = vpack.c.b16 %v824, %v823
      %v838 = vpack.c.b16 %v826, %v825
      %v839 = vpack.c.b16 %v828, %v827
      %v840 = vpack.c.b16 %v830, %v829
      %v841 = vpack.c.b16 %v832, %v831
      %v842 = vpack.c.b16 %v834, %v833
      %v844 = vsel %vm521, %v352, 0
      %v847 = vsel %vm521, %v835, 0
      %v850 = vsel %vm521, %v836, 0
      %v853 = vsel %vm521, %v837, 0
      %v856 = vsel %vm521, %v838, 0
      %v859 = vsel %vm521, %v839, 0
      %v862 = vsel %vm521, %v840, 0
      %v865 = vsel %vm521, %v841, 0
      %v868 = vsel %vm521, %v842, 0
      %870 = vmatprep.subr.bf16.mxu0 0
      %871 = vmatpush1.bf16.xpose.msra.mxu0 %v868
      %872 = vmatprep.subr.bf16.mxu0 0
      %873 = vmatpush1.bf16.xpose.msra.mxu0 %v865
      %874 = vmatprep.subr.bf16.mxu0 0
      %875 = vmatpush1.bf16.xpose.msra.mxu0 %v862
      %876 = vmatprep.subr.bf16.mxu0 0
      %877 = vmatpush1.bf16.xpose.msra.mxu0 %v859
      %878 = vmatprep.subr.bf16.mxu0 0
      %879 = vmatpush1.bf16.xpose.msra.mxu0 %v856
      %880 = vmatprep.subr.bf16.mxu0 0
      %881 = vmatpush1.bf16.xpose.msra.mxu0 %v853
      %882 = vmatprep.subr.bf16.mxu0 0
      %883 = vmatpush1.bf16.xpose.msra.mxu0 %v850
      %884 = vmatprep.subr.bf16.mxu0 0
      %885 = vmatpush1.bf16.xpose.msra.mxu0 %v847
      %886 = vmatprep.subr.bf16.mxu0 0
      %887 = vmatpush2.bf16.xpose.msra.mxu0 0
      %888 = vmatprep.subr.bf16.mxu0 0
      %889 = vmatpush2.bf16.xpose.msra.mxu0 0
      %890 = vmatprep.subr.bf16.mxu0 0
      %891 = vmatpush2.bf16.xpose.msra.mxu0 0
      %892 = vmatprep.subr.bf16.mxu0 0
      %893 = vmatpush2.bf16.xpose.msra.mxu0 0
      %894 = vmatprep.subr.bf16.mxu0 0
      %895 = vmatpush2.bf16.xpose.msra.mxu0 0
      %896 = vmatprep.subr.bf16.mxu0 0
      %897 = vmatpush2.bf16.xpose.msra.mxu0 0
      %898 = vmatprep.subr.bf16.mxu0 0
      %899 = vmatpush2.bf16.xpose.msra.mxu0 0
      %900 = vmatprep.subr.bf16.mxu0 0
      %901 = vmatpush2.bf16.xpose.msra.mxu0 0
      %902 = vmatprep.mubr.bf16.mxu0 0
      %903 = vmatmul.mubr.bf16.gmra.mxu0 %v844
      %v904 = vpop.f32.mrf.mxu0
      %v905 = vadd.f32 0.0, %v904
      %v906 = vpop.f32.mrf.mxu0
      %v907 = vpop.f32.mrf.mxu0
      %v908 = vpop.f32.mrf.mxu0
      %909 = vdwg.mxu0
      %v910 = vmul.f32 %v584, 0.17677669
      %v911 = vmul.f32 %v691, 0.17677669
      %v912 = vmul.f32 %v798, 0.17677669
      %v913 = vmul.f32 %v905, 0.17677669
      %v914 = vld [vmem:[%s339] sm:$0x1]
      %v916 = vlaneseq
      %v917 = vshrl.u32 %v916, 7
      %v918 = vsub.s32 0, %v917
      %v919 = vrot.slane %v914, %v918
      %v921 = vadd.f32 %v910, %v919
      %v922 = vadd.f32 %v911, %v919
      %v923 = vadd.f32 %v912, %v919
      %v924 = vadd.f32 %v913, %v919
      %925 = vmax.xlane.f32.xlu0 %v921
      %v926 = vpop.xlane.xlu0 %925
      %927 = vmax.xlane.f32.xlu0 %v922
      %v928 = vpop.xlane.xlu0 %927
      %929 = vmax.xlane.f32.xlu0 %v923
      %v930 = vpop.xlane.xlu0 %929
      %931 = vmax.xlane.f32.xlu0 %v924
      %v932 = vpop.xlane.xlu0 %931
      %v933 = vsub.f32 %v921, %v926
      %v934 = vsub.f32 %v922, %v928
      %v935 = vsub.f32 %v923, %v930
      %v936 = vsub.f32 %v924, %v932
      %v937 = vmul.f32 %v933, 1.442695
      %v938 = vpow.pop %v937
      %v939 = vmul.f32 %v934, 1.442695
      %v940 = vpow.pop %v939
      %v941 = vmul.f32 %v935, 1.442695
      %v942 = vpow.pop %v941
      %v943 = vmul.f32 %v936, 1.442695
      %v944 = vpow.pop %v943
      %945 = vadd.xlane.f32.xlu0 %v938
      %v946 = vpop.xlane.xlu0 %945
      %947 = vadd.xlane.f32.xlu0 %v940
      %v948 = vpop.xlane.xlu0 %947
      %949 = vadd.xlane.f32.xlu0 %v942
      %v950 = vpop.xlane.xlu0 %949
      %951 = vadd.xlane.f32.xlu0 %v944
      %v952 = vpop.xlane.xlu0 %951
      %v953 = vpack.c.bf16 %v938, %v938
      %v954 = vpack.c.bf16 %v940, %v940
      %v955 = vpack.c.bf16 %v942, %v942
      %v956 = vpack.c.bf16 %v944, %v944
      %v973 = vunpack.c.l.b16 %v417
      %v974 = vunpack.c.l.b16 %v418
      %v975 = vunpack.c.l.b16 %v419
      %v976 = vunpack.c.l.b16 %v420
      %v977 = vunpack.c.l.b16 %v421
      %v978 = vunpack.c.l.b16 %v422
      %v979 = vunpack.c.l.b16 %v423
      %v980 = vunpack.c.l.b16 %v424
      %v981 = vunpack.c.l.b16 %v425
      %v982 = vunpack.c.l.b16 %v426
      %v983 = vunpack.c.l.b16 %v427
      %v984 = vunpack.c.l.b16 %v428
      %v985 = vunpack.c.l.b16 %v429
      %v986 = vunpack.c.l.b16 %v430
      %v987 = vunpack.c.l.b16 %v431
      %v988 = vunpack.c.l.b16 %v432
      %v989 = vpack.c.b16 %v974, %v973
      %v990 = vpack.c.b16 %v976, %v975
      %v991 = vpack.c.b16 %v978, %v977
      %v992 = vpack.c.b16 %v980, %v979
      %v993 = vpack.c.b16 %v982, %v981
      %v994 = vpack.c.b16 %v984, %v983
      %v995 = vpack.c.b16 %v986, %v985
      %v996 = vpack.c.b16 %v988, %v987
      %1005 = vmatprep.subr.bf16.mxu0 0
      %1006 = vmatpush1.bf16.msra.mxu0 %v996
      %1007 = vmatprep.subr.bf16.mxu0 0
      %1008 = vmatpush1.bf16.msra.mxu0 %v995
      %1009 = vmatprep.subr.bf16.mxu0 0
      %1010 = vmatpush1.bf16.msra.mxu0 %v994
      %1011 = vmatprep.subr.bf16.mxu0 0
      %1012 = vmatpush1.bf16.msra.mxu0 %v993
      %1013 = vmatprep.subr.bf16.mxu0 0
      %1014 = vmatpush1.bf16.msra.mxu0 %v992
      %1015 = vmatprep.subr.bf16.mxu0 0
      %1016 = vmatpush1.bf16.msra.mxu0 %v991
      %1017 = vmatprep.subr.bf16.mxu0 0
      %1018 = vmatpush1.bf16.msra.mxu0 %v990
      %1019 = vmatprep.subr.bf16.mxu0 0
      %1020 = vmatpush1.bf16.msra.mxu0 %v989
      %1021 = vmatprep.subr.bf16.mxu0 0
      %1022 = vmatpush2.bf16.msra.mxu0 0
      %1023 = vmatprep.subr.bf16.mxu0 0
      %1024 = vmatpush2.bf16.msra.mxu0 0
      %1025 = vmatprep.subr.bf16.mxu0 0
      %1026 = vmatpush2.bf16.msra.mxu0 0
      %1027 = vmatprep.subr.bf16.mxu0 0
      %1028 = vmatpush2.bf16.msra.mxu0 0
      %1029 = vmatprep.subr.bf16.mxu0 0
      %1030 = vmatpush2.bf16.msra.mxu0 0
      %1031 = vmatprep.subr.bf16.mxu0 0
      %1032 = vmatpush2.bf16.msra.mxu0 0
      %1033 = vmatprep.subr.bf16.mxu0 0
      %1034 = vmatpush2.bf16.msra.mxu0 0
      %1035 = vmatprep.subr.bf16.mxu0 0
      %1036 = vmatpush2.bf16.msra.mxu0 0
      %1037 = vmatprep.mubr.bf16.mxu0 0
      %1038 = vmatmul.mubr.bf16.gmra.mxu0 %v953
      %v1039 = vpop.f32.mrf.mxu0
      %v1040 = vadd.f32 0.0, %v1039
      %v1041 = vpop.f32.mrf.mxu0
      %v1042 = vpop.f32.mrf.mxu0
      %v1043 = vpop.f32.mrf.mxu0
      %1044 = vdwg.mxu0
      %v1061 = vunpack.c.l.b16 %v433
      %v1062 = vunpack.c.l.b16 %v434
      %v1063 = vunpack.c.l.b16 %v435
      %v1064 = vunpack.c.l.b16 %v436
      %v1065 = vunpack.c.l.b16 %v437
      %v1066 = vunpack.c.l.b16 %v438
      %v1067 = vunpack.c.l.b16 %v439
      %v1068 = vunpack.c.l.b16 %v440
      %v1069 = vunpack.c.l.b16 %v441
      %v1070 = vunpack.c.l.b16 %v442
      %v1071 = vunpack.c.l.b16 %v443
      %v1072 = vunpack.c.l.b16 %v444
      %v1073 = vunpack.c.l.b16 %v445
      %v1074 = vunpack.c.l.b16 %v446
      %v1075 = vunpack.c.l.b16 %v447
      %v1076 = vunpack.c.l.b16 %v448
      %v1077 = vpack.c.b16 %v1062, %v1061
      %v1078 = vpack.c.b16 %v1064, %v1063
      %v1079 = vpack.c.b16 %v1066, %v1065
      %v1080 = vpack.c.b16 %v1068, %v1067
      %v1081 = vpack.c.b16 %v1070, %v1069
      %v1082 = vpack.c.b16 %v1072, %v1071
      %v1083 = vpack.c.b16 %v1074, %v1073
      %v1084 = vpack.c.b16 %v1076, %v1075
      %1093 = vmatprep.subr.bf16.mxu0 0
      %1094 = vmatpush1.bf16.msra.mxu0 %v1084
      %1095 = vmatprep.subr.bf16.mxu0 0
      %1096 = vmatpush1.bf16.msra.mxu0 %v1083
      %1097 = vmatprep.subr.bf16.mxu0 0
      %1098 = vmatpush1.bf16.msra.mxu0 %v1082
      %1099 = vmatprep.subr.bf16.mxu0 0
      %1100 = vmatpush1.bf16.msra.mxu0 %v1081
      %1101 = vmatprep.subr.bf16.mxu0 0
      %1102 = vmatpush1.bf16.msra.mxu0 %v1080
      %1103 = vmatprep.subr.bf16.mxu0 0
      %1104 = vmatpush1.bf16.msra.mxu0 %v1079
      %1105 = vmatprep.subr.bf16.mxu0 0
      %1106 = vmatpush1.bf16.msra.mxu0 %v1078
      %1107 = vmatprep.subr.bf16.mxu0 0
      %1108 = vmatpush1.bf16.msra.mxu0 %v1077
      %1109 = vmatprep.subr.bf16.mxu0 0
      %1110 = vmatpush2.bf16.msra.mxu0 0
      %1111 = vmatprep.subr.bf16.mxu0 0
      %1112 = vmatpush2.bf16.msra.mxu0 0
      %1113 = vmatprep.subr.bf16.mxu0 0
      %1114 = vmatpush2.bf16.msra.mxu0 0
      %1115 = vmatprep.subr.bf16.mxu0 0
      %1116 = vmatpush2.bf16.msra.mxu0 0
      %1117 = vmatprep.subr.bf16.mxu0 0
      %1118 = vmatpush2.bf16.msra.mxu0 0
      %1119 = vmatprep.subr.bf16.mxu0 0
      %1120 = vmatpush2.bf16.msra.mxu0 0
      %1121 = vmatprep.subr.bf16.mxu0 0
      %1122 = vmatpush2.bf16.msra.mxu0 0
      %1123 = vmatprep.subr.bf16.mxu0 0
      %1124 = vmatpush2.bf16.msra.mxu0 0
      %1125 = vmatprep.mubr.bf16.mxu0 0
      %1126 = vmatmul.mubr.bf16.gmra.mxu0 %v954
      %v1127 = vpop.f32.mrf.mxu0
      %v1128 = vadd.f32 0.0, %v1127
      %v1129 = vpop.f32.mrf.mxu0
      %v1130 = vpop.f32.mrf.mxu0
      %v1131 = vpop.f32.mrf.mxu0
      %1132 = vdwg.mxu0
      %v1149 = vunpack.c.l.b16 %v449
      %v1150 = vunpack.c.l.b16 %v450
      %v1151 = vunpack.c.l.b16 %v451
      %v1152 = vunpack.c.l.b16 %v452
      %v1153 = vunpack.c.l.b16 %v453
      %v1154 = vunpack.c.l.b16 %v454
      %v1155 = vunpack.c.l.b16 %v455
      %v1156 = vunpack.c.l.b16 %v456
      %v1157 = vunpack.c.l.b16 %v457
      %v1158 = vunpack.c.l.b16 %v458
      %v1159 = vunpack.c.l.b16 %v459
      %v1160 = vunpack.c.l.b16 %v460
      %v1161 = vunpack.c.l.b16 %v461
      %v1162 = vunpack.c.l.b16 %v462
      %v1163 = vunpack.c.l.b16 %v463
      %v1164 = vunpack.c.l.b16 %v464
      %v1165 = vpack.c.b16 %v1150, %v1149
      %v1166 = vpack.c.b16 %v1152, %v1151
      %v1167 = vpack.c.b16 %v1154, %v1153
      %v1168 = vpack.c.b16 %v1156, %v1155
      %v1169 = vpack.c.b16 %v1158, %v1157
      %v1170 = vpack.c.b16 %v1160, %v1159
      %v1171 = vpack.c.b16 %v1162, %v1161
      %v1172 = vpack.c.b16 %v1164, %v1163
      %1181 = vmatprep.subr.bf16.mxu0 0
      %1182 = vmatpush1.bf16.msra.mxu0 %v1172
      %1183 = vmatprep.subr.bf16.mxu0 0
      %1184 = vmatpush1.bf16.msra.mxu0 %v1171
      %1185 = vmatprep.subr.bf16.mxu0 0
      %1186 = vmatpush1.bf16.msra.mxu0 %v1170
      %1187 = vmatprep.subr.bf16.mxu0 0
      %1188 = vmatpush1.bf16.msra.mxu0 %v1169
      %1189 = vmatprep.subr.bf16.mxu0 0
      %1190 = vmatpush1.bf16.msra.mxu0 %v1168
      %1191 = vmatprep.subr.bf16.mxu0 0
      %1192 = vmatpush1.bf16.msra.mxu0 %v1167
      %1193 = vmatprep.subr.bf16.mxu0 0
      %1194 = vmatpush1.bf16.msra.mxu0 %v1166
      %1195 = vmatprep.subr.bf16.mxu0 0
      %1196 = vmatpush1.bf16.msra.mxu0 %v1165
      %1197 = vmatprep.subr.bf16.mxu0 0
      %1198 = vmatpush2.bf16.msra.mxu0 0
      %1199 = vmatprep.subr.bf16.mxu0 0
      %1200 = vmatpush2.bf16.msra.mxu0 0
      %1201 = vmatprep.subr.bf16.mxu0 0
      %1202 = vmatpush2.bf16.msra.mxu0 0
      %1203 = vmatprep.subr.bf16.mxu0 0
      %1204 = vmatpush2.bf16.msra.mxu0 0
      %1205 = vmatprep.subr.bf16.mxu0 0
      %1206 = vmatpush2.bf16.msra.mxu0 0
      %1207 = vmatprep.subr.bf16.mxu0 0
      %1208 = vmatpush2.bf16.msra.mxu0 0
      %1209 = vmatprep.subr.bf16.mxu0 0
      %1210 = vmatpush2.bf16.msra.mxu0 0
      %1211 = vmatprep.subr.bf16.mxu0 0
      %1212 = vmatpush2.bf16.msra.mxu0 0
      %1213 = vmatprep.mubr.bf16.mxu0 0
      %1214 = vmatmul.mubr.bf16.gmra.mxu0 %v955
      %v1215 = vpop.f32.mrf.mxu0
      %v1216 = vadd.f32 0.0, %v1215
      %v1217 = vpop.f32.mrf.mxu0
      %v1218 = vpop.f32.mrf.mxu0
      %v1219 = vpop.f32.mrf.mxu0
      %1220 = vdwg.mxu0
      %v1237 = vunpack.c.l.b16 %v465
      %v1238 = vunpack.c.l.b16 %v466
      %v1239 = vunpack.c.l.b16 %v467
      %v1240 = vunpack.c.l.b16 %v468
      %v1241 = vunpack.c.l.b16 %v469
      %v1242 = vunpack.c.l.b16 %v470
      %v1243 = vunpack.c.l.b16 %v471
      %v1244 = vunpack.c.l.b16 %v472
      %v1245 = vunpack.c.l.b16 %v473
      %v1246 = vunpack.c.l.b16 %v474
      %v1247 = vunpack.c.l.b16 %v475
      %v1248 = vunpack.c.l.b16 %v476
      %v1249 = vunpack.c.l.b16 %v477
      %v1250 = vunpack.c.l.b16 %v478
      %v1251 = vunpack.c.l.b16 %v479
      %v1252 = vunpack.c.l.b16 %v480
      %v1253 = vpack.c.b16 %v1238, %v1237
      %v1254 = vpack.c.b16 %v1240, %v1239
      %v1255 = vpack.c.b16 %v1242, %v1241
      %v1256 = vpack.c.b16 %v1244, %v1243
      %v1257 = vpack.c.b16 %v1246, %v1245
      %v1258 = vpack.c.b16 %v1248, %v1247
      %v1259 = vpack.c.b16 %v1250, %v1249
      %v1260 = vpack.c.b16 %v1252, %v1251
      %1269 = vmatprep.subr.bf16.mxu0 0
      %1270 = vmatpush1.bf16.msra.mxu0 %v1260
      %1271 = vmatprep.subr.bf16.mxu0 0
      %1272 = vmatpush1.bf16.msra.mxu0 %v1259
      %1273 = vmatprep.subr.bf16.mxu0 0
      %1274 = vmatpush1.bf16.msra.mxu0 %v1258
      %1275 = vmatprep.subr.bf16.mxu0 0
      %1276 = vmatpush1.bf16.msra.mxu0 %v1257
      %1277 = vmatprep.subr.bf16.mxu0 0
      %1278 = vmatpush1.bf16.msra.mxu0 %v1256
      %1279 = vmatprep.subr.bf16.mxu0 0
      %1280 = vmatpush1.bf16.msra.mxu0 %v1255
      %1281 = vmatprep.subr.bf16.mxu0 0
      %1282 = vmatpush1.bf16.msra.mxu0 %v1254
      %1283 = vmatprep.subr.bf16.mxu0 0
      %1284 = vmatpush1.bf16.msra.mxu0 %v1253
      %1285 = vmatprep.subr.bf16.mxu0 0
      %1286 = vmatpush2.bf16.msra.mxu0 0
      %1287 = vmatprep.subr.bf16.mxu0 0
      %1288 = vmatpush2.bf16.msra.mxu0 0
      %1289 = vmatprep.subr.bf16.mxu0 0
      %1290 = vmatpush2.bf16.msra.mxu0 0
      %1291 = vmatprep.subr.bf16.mxu0 0
      %1292 = vmatpush2.bf16.msra.mxu0 0
      %1293 = vmatprep.subr.bf16.mxu0 0
      %1294 = vmatpush2.bf16.msra.mxu0 0
      %1295 = vmatprep.subr.bf16.mxu0 0
      %1296 = vmatpush2.bf16.msra.mxu0 0
      %1297 = vmatprep.subr.bf16.mxu0 0
      %1298 = vmatpush2.bf16.msra.mxu0 0
      %1299 = vmatprep.subr.bf16.mxu0 0
      %1300 = vmatpush2.bf16.msra.mxu0 0
      %1301 = vmatprep.mubr.bf16.mxu0 0
      %1302 = vmatmul.mubr.bf16.gmra.mxu0 %v956
      %v1303 = vpop.f32.mrf.mxu0
      %v1304 = vadd.f32 0.0, %v1303
      %v1305 = vpop.f32.mrf.mxu0
      %v1306 = vpop.f32.mrf.mxu0
      %v1307 = vpop.f32.mrf.mxu0
      %1308 = vdwg.mxu0
      %v1309 = vrcp.pop %v946
      %v1310 = vrcp.pop %v948
      %v1311 = vrcp.pop %v950
      %v1312 = vrcp.pop %v952
      %v1313 = vmul.f32 %v1040, %v1309
      %v1314 = vmul.f32 %v1128, %v1310
      %v1315 = vmul.f32 %v1216, %v1311
      %v1316 = vmul.f32 %v1304, %v1312
      %v1317 = vld [vmem:[%s5] sm:$0xf]
      %v1318 = vld [vmem:[%s5 + $0x4] sm:$0xf]
      %v1319 = vld [vmem:[%s5 + $0x8] sm:$0xf]
      %v1320 = vld [vmem:[%s5 + $0xc] sm:$0xf]
      %v1321 = vld [vmem:[%s5 + $0x10] sm:$0xf]
      %v1322 = vld [vmem:[%s5 + $0x14] sm:$0xf]
      %v1323 = vld [vmem:[%s5 + $0x18] sm:$0xf]
      %v1324 = vld [vmem:[%s5 + $0x1c] sm:$0xf]
      %v1325 = vld [vmem:[%s5 + $0x20] sm:$0xf]
      %v1326 = vld [vmem:[%s5 + $0x24] sm:$0xf]
      %v1327 = vld [vmem:[%s5 + $0x28] sm:$0xf]
      %v1328 = vld [vmem:[%s5 + $0x2c] sm:$0xf]
      %v1329 = vld [vmem:[%s5 + $0x30] sm:$0xf]
      %v1330 = vld [vmem:[%s5 + $0x34] sm:$0xf]
      %v1331 = vld [vmem:[%s5 + $0x38] sm:$0xf]
      %v1332 = vld [vmem:[%s5 + $0x3c] sm:$0xf]
      %v1333 = vld [vmem:[%s5 + $0x40] sm:$0xf]
      %v1334 = vld [vmem:[%s5 + $0x44] sm:$0xf]
      %v1335 = vld [vmem:[%s5 + $0x48] sm:$0xf]
      %v1336 = vld [vmem:[%s5 + $0x4c] sm:$0xf]
      %v1337 = vld [vmem:[%s5 + $0x50] sm:$0xf]
      %v1338 = vld [vmem:[%s5 + $0x54] sm:$0xf]
      %v1339 = vld [vmem:[%s5 + $0x58] sm:$0xf]
      %v1340 = vld [vmem:[%s5 + $0x5c] sm:$0xf]
      %v1341 = vld [vmem:[%s5 + $0x60] sm:$0xf]
      %v1342 = vld [vmem:[%s5 + $0x64] sm:$0xf]
      %v1343 = vld [vmem:[%s5 + $0x68] sm:$0xf]
      %v1344 = vld [vmem:[%s5 + $0x6c] sm:$0xf]
      %v1345 = vld [vmem:[%s5 + $0x70] sm:$0xf]
      %v1346 = vld [vmem:[%s5 + $0x74] sm:$0xf]
      %v1347 = vld [vmem:[%s5 + $0x78] sm:$0xf]
      %v1348 = vld [vmem:[%s5 + $0x7c] sm:$0xf]
      %v1349 = vld [vmem:[%s5 + $0x80] sm:$0xf]
      %v1350 = vld [vmem:[%s5 + $0x84] sm:$0xf]
      %v1351 = vld [vmem:[%s5 + $0x88] sm:$0xf]
      %v1352 = vld [vmem:[%s5 + $0x8c] sm:$0xf]
      %v1353 = vld [vmem:[%s5 + $0x90] sm:$0xf]
      %v1354 = vld [vmem:[%s5 + $0x94] sm:$0xf]
      %v1355 = vld [vmem:[%s5 + $0x98] sm:$0xf]
      %v1356 = vld [vmem:[%s5 + $0x9c] sm:$0xf]
      %v1357 = vld [vmem:[%s5 + $0xa0] sm:$0xf]
      %v1358 = vld [vmem:[%s5 + $0xa4] sm:$0xf]
      %v1359 = vld [vmem:[%s5 + $0xa8] sm:$0xf]
      %v1360 = vld [vmem:[%s5 + $0xac] sm:$0xf]
      %v1361 = vld [vmem:[%s5 + $0xb0] sm:$0xf]
      %v1362 = vld [vmem:[%s5 + $0xb4] sm:$0xf]
      %v1363 = vld [vmem:[%s5 + $0xb8] sm:$0xf]
      %v1364 = vld [vmem:[%s5 + $0xbc] sm:$0xf]
      %v1365 = vld [vmem:[%s5 + $0xc0] sm:$0xf]
      %v1366 = vld [vmem:[%s5 + $0xc4] sm:$0xf]
      %v1367 = vld [vmem:[%s5 + $0xc8] sm:$0xf]
      %v1368 = vld [vmem:[%s5 + $0xcc] sm:$0xf]
      %v1369 = vld [vmem:[%s5 + $0xd0] sm:$0xf]
      %v1370 = vld [vmem:[%s5 + $0xd4] sm:$0xf]
      %v1371 = vld [vmem:[%s5 + $0xd8] sm:$0xf]
      %v1372 = vld [vmem:[%s5 + $0xdc] sm:$0xf]
      %v1373 = vld [vmem:[%s5 + $0xe0] sm:$0xf]
      %v1374 = vld [vmem:[%s5 + $0xe4] sm:$0xf]
      %v1375 = vld [vmem:[%s5 + $0xe8] sm:$0xf]
      %v1376 = vld [vmem:[%s5 + $0xec] sm:$0xf]
      %v1377 = vld [vmem:[%s5 + $0xf0] sm:$0xf]
      %v1378 = vld [vmem:[%s5 + $0xf4] sm:$0xf]
      %v1379 = vld [vmem:[%s5 + $0xf8] sm:$0xf]
      %v1380 = vld [vmem:[%s5 + $0xfc] sm:$0xf]
      %v1381 = vld [vmem:[%s343] sm:$0xff]
      %v1382 = vld [vmem:[%s6] sm:$0x1]
      %v1384 = vlaneseq
      %v1385 = vshrl.u32 %v1384, 7
      %v1386 = vsub.s32 0, %v1385
      %v1387 = vrot.slane %v1382, %v1386
      %v1389 = vadd.f32 %v1381, %v1387
      %v1390 = vpack.c.bf16 %v1313, %v1313
      %v1407 = vunpack.c.l.b16 %v1317
      %v1408 = vunpack.c.l.b16 %v1318
      %v1409 = vunpack.c.l.b16 %v1319
      %v1410 = vunpack.c.l.b16 %v1320
      %v1411 = vunpack.c.l.b16 %v1321
      %v1412 = vunpack.c.l.b16 %v1322
      %v1413 = vunpack.c.l.b16 %v1323
      %v1414 = vunpack.c.l.b16 %v1324
      %v1415 = vunpack.c.l.b16 %v1325
      %v1416 = vunpack.c.l.b16 %v1326
      %v1417 = vunpack.c.l.b16 %v1327
      %v1418 = vunpack.c.l.b16 %v1328
      %v1419 = vunpack.c.l.b16 %v1329
      %v1420 = vunpack.c.l.b16 %v1330
      %v1421 = vunpack.c.l.b16 %v1331
      %v1422 = vunpack.c.l.b16 %v1332
      %v1423 = vpack.c.b16 %v1408, %v1407
      %v1424 = vpack.c.b16 %v1410, %v1409
      %v1425 = vpack.c.b16 %v1412, %v1411
      %v1426 = vpack.c.b16 %v1414, %v1413
      %v1427 = vpack.c.b16 %v1416, %v1415
      %v1428 = vpack.c.b16 %v1418, %v1417
      %v1429 = vpack.c.b16 %v1420, %v1419
      %v1430 = vpack.c.b16 %v1422, %v1421
      %v1432 = vsel %vm521, %v1390, 0
      %v1435 = vsel %vm521, %v1423, 0
      %v1438 = vsel %vm521, %v1424, 0
      %v1441 = vsel %vm521, %v1425, 0
      %v1444 = vsel %vm521, %v1426, 0
      %v1447 = vsel %vm521, %v1427, 0
      %v1450 = vsel %vm521, %v1428, 0
      %v1453 = vsel %vm521, %v1429, 0
      %v1456 = vsel %vm521, %v1430, 0
      %1458 = vmatprep.subr.bf16.mxu0 0
      %1459 = vmatpush1.bf16.xpose.msra.mxu0 %v1456
      %1460 = vmatprep.subr.bf16.mxu0 0
      %1461 = vmatpush1.bf16.xpose.msra.mxu0 %v1453
      %1462 = vmatprep.subr.bf16.mxu0 0
      %1463 = vmatpush1.bf16.xpose.msra.mxu0 %v1450
      %1464 = vmatprep.subr.bf16.mxu0 0
      %1465 = vmatpush1.bf16.xpose.msra.mxu0 %v1447
      %1466 = vmatprep.subr.bf16.mxu0 0
      %1467 = vmatpush1.bf16.xpose.msra.mxu0 %v1444
      %1468 = vmatprep.subr.bf16.mxu0 0
      %1469 = vmatpush1.bf16.xpose.msra.mxu0 %v1441
      %1470 = vmatprep.subr.bf16.mxu0 0
      %1471 = vmatpush1.bf16.xpose.msra.mxu0 %v1438
      %1472 = vmatprep.subr.bf16.mxu0 0
      %1473 = vmatpush1.bf16.xpose.msra.mxu0 %v1435
      %1474 = vmatprep.subr.bf16.mxu0 0
      %1475 = vmatpush2.bf16.xpose.msra.mxu0 0
      %1476 = vmatprep.subr.bf16.mxu0 0
      %1477 = vmatpush2.bf16.xpose.msra.mxu0 0
      %1478 = vmatprep.subr.bf16.mxu0 0
      %1479 = vmatpush2.bf16.xpose.msra.mxu0 0
      %1480 = vmatprep.subr.bf16.mxu0 0
      %1481 = vmatpush2.bf16.xpose.msra.mxu0 0
      %1482 = vmatprep.subr.bf16.mxu0 0
      %1483 = vmatpush2.bf16.xpose.msra.mxu0 0
      %1484 = vmatprep.subr.bf16.mxu0 0
      %1485 = vmatpush2.bf16.xpose.msra.mxu0 0
      %1486 = vmatprep.subr.bf16.mxu0 0
      %1487 = vmatpush2.bf16.xpose.msra.mxu0 0
      %1488 = vmatprep.subr.bf16.mxu0 0
      %1489 = vmatpush2.bf16.xpose.msra.mxu0 0
      %1490 = vmatprep.mubr.bf16.mxu0 0
      %1491 = vmatmul.mubr.bf16.gmra.mxu0 %v1432
      %v1492 = vpop.f32.mrf.mxu0
      %v1493 = vadd.f32 0.0, %v1492
      %v1494 = vpop.f32.mrf.mxu0
      %v1495 = vpop.f32.mrf.mxu0
      %v1496 = vpop.f32.mrf.mxu0
      %1497 = vdwg.mxu0
      %v1498 = vadd.f32 %v1389, %v1493
      %v1499 = vpack.c.bf16 %v1314, %v1314
      %v1516 = vunpack.c.l.b16 %v1333
      %v1517 = vunpack.c.l.b16 %v1334
      %v1518 = vunpack.c.l.b16 %v1335
      %v1519 = vunpack.c.l.b16 %v1336
      %v1520 = vunpack.c.l.b16 %v1337
      %v1521 = vunpack.c.l.b16 %v1338
      %v1522 = vunpack.c.l.b16 %v1339
      %v1523 = vunpack.c.l.b16 %v1340
      %v1524 = vunpack.c.l.b16 %v1341
      %v1525 = vunpack.c.l.b16 %v1342
      %v1526 = vunpack.c.l.b16 %v1343
      %v1527 = vunpack.c.l.b16 %v1344
      %v1528 = vunpack.c.l.b16 %v1345
      %v1529 = vunpack.c.l.b16 %v1346
      %v1530 = vunpack.c.l.b16 %v1347
      %v1531 = vunpack.c.l.b16 %v1348
      %v1532 = vpack.c.b16 %v1517, %v1516
      %v1533 = vpack.c.b16 %v1519, %v1518
      %v1534 = vpack.c.b16 %v1521, %v1520
      %v1535 = vpack.c.b16 %v1523, %v1522
      %v1536 = vpack.c.b16 %v1525, %v1524
      %v1537 = vpack.c.b16 %v1527, %v1526
      %v1538 = vpack.c.b16 %v1529, %v1528
      %v1539 = vpack.c.b16 %v1531, %v1530
      %v1541 = vsel %vm521, %v1499, 0
      %v1544 = vsel %vm521, %v1532, 0
      %v1547 = vsel %vm521, %v1533, 0
      %v1550 = vsel %vm521, %v1534, 0
      %v1553 = vsel %vm521, %v1535, 0
      %v1556 = vsel %vm521, %v1536, 0
      %v1559 = vsel %vm521, %v1537, 0
      %v1562 = vsel %vm521, %v1538, 0
      %v1565 = vsel %vm521, %v1539, 0
      %1567 = vmatprep.subr.bf16.mxu0 0
      %1568 = vmatpush1.bf16.xpose.msra.mxu0 %v1565
      %1569 = vmatprep.subr.bf16.mxu0 0
      %1570 = vmatpush1.bf16.xpose.msra.mxu0 %v1562
      %1571 = vmatprep.subr.bf16.mxu0 0
      %1572 = vmatpush1.bf16.xpose.msra.mxu0 %v1559
      %1573 = vmatprep.subr.bf16.mxu0 0
      %1574 = vmatpush1.bf16.xpose.msra.mxu0 %v1556
      %1575 = vmatprep.subr.bf16.mxu0 0
      %1576 = vmatpush1.bf16.xpose.msra.mxu0 %v1553
      %1577 = vmatprep.subr.bf16.mxu0 0
      %1578 = vmatpush1.bf16.xpose.msra.mxu0 %v1550
      %1579 = vmatprep.subr.bf16.mxu0 0
      %1580 = vmatpush1.bf16.xpose.msra.mxu0 %v1547
      %1581 = vmatprep.subr.bf16.mxu0 0
      %1582 = vmatpush1.bf16.xpose.msra.mxu0 %v1544
      %1583 = vmatprep.subr.bf16.mxu0 0
      %1584 = vmatpush2.bf16.xpose.msra.mxu0 0
      %1585 = vmatprep.subr.bf16.mxu0 0
      %1586 = vmatpush2.bf16.xpose.msra.mxu0 0
      %1587 = vmatprep.subr.bf16.mxu0 0
      %1588 = vmatpush2.bf16.xpose.msra.mxu0 0
      %1589 = vmatprep.subr.bf16.mxu0 0
      %1590 = vmatpush2.bf16.xpose.msra.mxu0 0
      %1591 = vmatprep.subr.bf16.mxu0 0
      %1592 = vmatpush2.bf16.xpose.msra.mxu0 0
      %1593 = vmatprep.subr.bf16.mxu0 0
      %1594 = vmatpush2.bf16.xpose.msra.mxu0 0
      %1595 = vmatprep.subr.bf16.mxu0 0
      %1596 = vmatpush2.bf16.xpose.msra.mxu0 0
      %1597 = vmatprep.subr.bf16.mxu0 0
      %1598 = vmatpush2.bf16.xpose.msra.mxu0 0
      %1599 = vmatprep.mubr.bf16.mxu0 0
      %1600 = vmatmul.mubr.bf16.gmra.mxu0 %v1541
      %v1601 = vpop.f32.mrf.mxu0
      %v1602 = vadd.f32 0.0, %v1601
      %v1603 = vpop.f32.mrf.mxu0
      %v1604 = vpop.f32.mrf.mxu0
      %v1605 = vpop.f32.mrf.mxu0
      %1606 = vdwg.mxu0
      %v1607 = vadd.f32 %v1498, %v1602
      %v1608 = vpack.c.bf16 %v1315, %v1315
      %v1625 = vunpack.c.l.b16 %v1349
      %v1626 = vunpack.c.l.b16 %v1350
      %v1627 = vunpack.c.l.b16 %v1351
      %v1628 = vunpack.c.l.b16 %v1352
      %v1629 = vunpack.c.l.b16 %v1353
      %v1630 = vunpack.c.l.b16 %v1354
      %v1631 = vunpack.c.l.b16 %v1355
      %v1632 = vunpack.c.l.b16 %v1356
      %v1633 = vunpack.c.l.b16 %v1357
      %v1634 = vunpack.c.l.b16 %v1358
      %v1635 = vunpack.c.l.b16 %v1359
      %v1636 = vunpack.c.l.b16 %v1360
      %v1637 = vunpack.c.l.b16 %v1361
      %v1638 = vunpack.c.l.b16 %v1362
      %v1639 = vunpack.c.l.b16 %v1363
      %v1640 = vunpack.c.l.b16 %v1364
      %v1641 = vpack.c.b16 %v1626, %v1625
      %v1642 = vpack.c.b16 %v1628, %v1627
      %v1643 = vpack.c.b16 %v1630, %v1629
      %v1644 = vpack.c.b16 %v1632, %v1631
      %v1645 = vpack.c.b16 %v1634, %v1633
      %v1646 = vpack.c.b16 %v1636, %v1635
      %v1647 = vpack.c.b16 %v1638, %v1637
      %v1648 = vpack.c.b16 %v1640, %v1639
      %v1650 = vsel %vm521, %v1608, 0
      %v1653 = vsel %vm521, %v1641, 0
      %v1656 = vsel %vm521, %v1642, 0
      %v1659 = vsel %vm521, %v1643, 0
      %v1662 = vsel %vm521, %v1644, 0
      %v1665 = vsel %vm521, %v1645, 0
      %v1668 = vsel %vm521, %v1646, 0
      %v1671 = vsel %vm521, %v1647, 0
      %v1674 = vsel %vm521, %v1648, 0
      %1676 = vmatprep.subr.bf16.mxu0 0
      %1677 = vmatpush1.bf16.xpose.msra.mxu0 %v1674
      %1678 = vmatprep.subr.bf16.mxu0 0
      %1679 = vmatpush1.bf16.xpose.msra.mxu0 %v1671
      %1680 = vmatprep.subr.bf16.mxu0 0
      %1681 = vmatpush1.bf16.xpose.msra.mxu0 %v1668
      %1682 = vmatprep.subr.bf16.mxu0 0
      %1683 = vmatpush1.bf16.xpose.msra.mxu0 %v1665
      %1684 = vmatprep.subr.bf16.mxu0 0
      %1685 = vmatpush1.bf16.xpose.msra.mxu0 %v1662
      %1686 = vmatprep.subr.bf16.mxu0 0
      %1687 = vmatpush1.bf16.xpose.msra.mxu0 %v1659
      %1688 = vmatprep.subr.bf16.mxu0 0
      %1689 = vmatpush1.bf16.xpose.msra.mxu0 %v1656
      %1690 = vmatprep.subr.bf16.mxu0 0
      %1691 = vmatpush1.bf16.xpose.msra.mxu0 %v1653
      %1692 = vmatprep.subr.bf16.mxu0 0
      %1693 = vmatpush2.bf16.xpose.msra.mxu0 0
      %1694 = vmatprep.subr.bf16.mxu0 0
      %1695 = vmatpush2.bf16.xpose.msra.mxu0 0
      %1696 = vmatprep.subr.bf16.mxu0 0
      %1697 = vmatpush2.bf16.xpose.msra.mxu0 0
      %1698 = vmatprep.subr.bf16.mxu0 0
      %1699 = vmatpush2.bf16.xpose.msra.mxu0 0
      %1700 = vmatprep.subr.bf16.mxu0 0
      %1701 = vmatpush2.bf16.xpose.msra.mxu0 0
      %1702 = vmatprep.subr.bf16.mxu0 0
      %1703 = vmatpush2.bf16.xpose.msra.mxu0 0
      %1704 = vmatprep.subr.bf16.mxu0 0
      %1705 = vmatpush2.bf16.xpose.msra.mxu0 0
      %1706 = vmatprep.subr.bf16.mxu0 0
      %1707 = vmatpush2.bf16.xpose.msra.mxu0 0
      %1708 = vmatprep.mubr.bf16.mxu0 0
      %1709 = vmatmul.mubr.bf16.gmra.mxu0 %v1650
      %v1710 = vpop.f32.mrf.mxu0
      %v1711 = vadd.f32 0.0, %v1710
      %v1712 = vpop.f32.mrf.mxu0
      %v1713 = vpop.f32.mrf.mxu0
      %v1714 = vpop.f32.mrf.mxu0
      %1715 = vdwg.mxu0
      %v1716 = vadd.f32 %v1607, %v1711
      %v1717 = vpack.c.bf16 %v1316, %v1316
      %v1734 = vunpack.c.l.b16 %v1365
      %v1735 = vunpack.c.l.b16 %v1366
      %v1736 = vunpack.c.l.b16 %v1367
      %v1737 = vunpack.c.l.b16 %v1368
      %v1738 = vunpack.c.l.b16 %v1369
      %v1739 = vunpack.c.l.b16 %v1370
      %v1740 = vunpack.c.l.b16 %v1371
      %v1741 = vunpack.c.l.b16 %v1372
      %v1742 = vunpack.c.l.b16 %v1373
      %v1743 = vunpack.c.l.b16 %v1374
      %v1744 = vunpack.c.l.b16 %v1375
      %v1745 = vunpack.c.l.b16 %v1376
      %v1746 = vunpack.c.l.b16 %v1377
      %v1747 = vunpack.c.l.b16 %v1378
      %v1748 = vunpack.c.l.b16 %v1379
      %v1749 = vunpack.c.l.b16 %v1380
      %v1750 = vpack.c.b16 %v1735, %v1734
      %v1751 = vpack.c.b16 %v1737, %v1736
      %v1752 = vpack.c.b16 %v1739, %v1738
      %v1753 = vpack.c.b16 %v1741, %v1740
      %v1754 = vpack.c.b16 %v1743, %v1742
      %v1755 = vpack.c.b16 %v1745, %v1744
      %v1756 = vpack.c.b16 %v1747, %v1746
      %v1757 = vpack.c.b16 %v1749, %v1748
      %v1759 = vsel %vm521, %v1717, 0
      %v1762 = vsel %vm521, %v1750, 0
      %v1765 = vsel %vm521, %v1751, 0
      %v1768 = vsel %vm521, %v1752, 0
      %v1771 = vsel %vm521, %v1753, 0
      %v1774 = vsel %vm521, %v1754, 0
      %v1777 = vsel %vm521, %v1755, 0
      %v1780 = vsel %vm521, %v1756, 0
      %v1783 = vsel %vm521, %v1757, 0
      %1785 = vmatprep.subr.bf16.mxu0 0
      %1786 = vmatpush1.bf16.xpose.msra.mxu0 %v1783
      %1787 = vmatprep.subr.bf16.mxu0 0
      %1788 = vmatpush1.bf16.xpose.msra.mxu0 %v1780
      %1789 = vmatprep.subr.bf16.mxu0 0
      %1790 = vmatpush1.bf16.xpose.msra.mxu0 %v1777
      %1791 = vmatprep.subr.bf16.mxu0 0
      %1792 = vmatpush1.bf16.xpose.msra.mxu0 %v1774
      %1793 = vmatprep.subr.bf16.mxu0 0
      %1794 = vmatpush1.bf16.xpose.msra.mxu0 %v1771
      %1795 = vmatprep.subr.bf16.mxu0 0
      %1796 = vmatpush1.bf16.xpose.msra.mxu0 %v1768
      %1797 = vmatprep.subr.bf16.mxu0 0
      %1798 = vmatpush1.bf16.xpose.msra.mxu0 %v1765
      %1799 = vmatprep.subr.bf16.mxu0 0
      %1800 = vmatpush1.bf16.xpose.msra.mxu0 %v1762
      %1801 = vmatprep.subr.bf16.mxu0 0
      %1802 = vmatpush2.bf16.xpose.msra.mxu0 0
      %1803 = vmatprep.subr.bf16.mxu0 0
      %1804 = vmatpush2.bf16.xpose.msra.mxu0 0
      %1805 = vmatprep.subr.bf16.mxu0 0
      %1806 = vmatpush2.bf16.xpose.msra.mxu0 0
      %1807 = vmatprep.subr.bf16.mxu0 0
      %1808 = vmatpush2.bf16.xpose.msra.mxu0 0
      %1809 = vmatprep.subr.bf16.mxu0 0
      %1810 = vmatpush2.bf16.xpose.msra.mxu0 0
      %1811 = vmatprep.subr.bf16.mxu0 0
      %1812 = vmatpush2.bf16.xpose.msra.mxu0 0
      %1813 = vmatprep.subr.bf16.mxu0 0
      %1814 = vmatpush2.bf16.xpose.msra.mxu0 0
      %1815 = vmatprep.subr.bf16.mxu0 0
      %1816 = vmatpush2.bf16.xpose.msra.mxu0 0
      %1817 = vmatprep.mubr.bf16.mxu0 0
      %1818 = vmatmul.mubr.bf16.gmra.mxu0 %v1759
      %v1819 = vpop.f32.mrf.mxu0
      %v1820 = vadd.f32 0.0, %v1819
      %v1821 = vpop.f32.mrf.mxu0
      %v1822 = vpop.f32.mrf.mxu0
      %v1823 = vpop.f32.mrf.mxu0
      %1824 = vdwg.mxu0
      %v1825 = vadd.f32 %v1716, %v1820
      %1826 = vst [vmem:[%s347] sm:$0xff] %v1825
      %p1827 = scmp.lt.s32.totalorder %s18, 1
      %s1828 = scalar_select %p1827, %s18, 1
      %s1829 = smul.addr %s1828, 8
      %s1830 = scalar_lea.vmem %s7, %s1829
      // Predicated region
      $region49: #{summarizer_forward.34} parent=47 // pred_check
        %p1831 = pneg %p208
      $region50: #{summarizer_forward.34} parent=47 // pred_check_branch
        %1833 = sbr.rel (%p1831) target = $region52
      $region51: #{summarizer_forward.34} parent=47 // pred_region
        _
      $region52: #{summarizer_forward.34} parent=47 // pred_fallthru
        _
    $region48: #{summarizer_forward.34} parent=5 // pred_fallthru
      _
    %p1834 = scmp.le.s32.totalorder 2, %s13
    // Predicated region
    $region53: #{summarizer_forward.34} parent=5 // pred_check
      %p1835 = pneg %p1834
    $region54: #{summarizer_forward.34} parent=5 // pred_check_branch
      %1837 = sbr.rel (%p1835) target = $region56
    $region55: #{summarizer_forward.34} parent=5 // pred_region
      %s1838 = ssub.s32 %s13, 2
      // Predicated region
      $region57: #{summarizer_forward.34} parent=55 // pred_check
        %p1839 = pneg %p214
      $region58: #{summarizer_forward.34} parent=55 // pred_check_branch
        %1841 = sbr.rel (%p1839) target = $region60
      $region59: #{summarizer_forward.34} parent=55 // pred_region
        %p1842 = scmp.lt.s32.totalorder %s19, 1
        %s1843 = scalar_select %p1842, %s19, 1
        %s1844 = smul.addr %s1843, 8
        %s1845 = scalar_lea.vmem %s7, %s1844
      $region60: #{summarizer_forward.34} parent=55 // pred_fallthru
        _
    $region56: #{summarizer_forward.34} parent=5 // pred_fallthru
      _
  $region6: #{summarizer_forward.34} parent=0 // loop_footer
    %s17 = sadd.s32 1, %s13
  $region7: #{summarizer_forward.34} parent=0 // loop_footer_branch
    %12 = sbr.rel target = $region3
  $region8: #{summarizer_forward.34} parent=0 // loop_exit
    _

</llo_original>
